<compile_context>
chip_gen: v6e
topology: v6e:2x2x1
jax: 0.10.0
libtpu: 0.0.40
codegen_flags: <defaults>
</compile_context>

<pallas_src>
import functools

import jax
import jax.numpy as jnp
from jax.experimental import pallas as pl
from jax.experimental.pallas import tpu as pltpu


def _inject_block_kernel(x_ref, w1_ref, scale_ref, shift_ref, wk_ref, wv_ref,
                         o_ref, pad_sc, patch_sc, *, H, W, Cp, Kp, K, temp):
    # x_ref    : (1, H, W, Cp)   f32 input tile (channels zero-padded to Cp lanes)
    # w1_ref   : (9*Cp, Cp)      bf16 conv1 3x3 weights, im2col-flattened (tap-major)
    # scale/shift_ref : (1, Cp)  f32 folded eval-mode BatchNorm affine
    # wk_ref   : (9*Cp, Kp)      bf16 HashConv.key_op 3x3 weights, im2col-flattened
    # wv_ref   : (Kp, Cp)        bf16 HashConv.val_op 1x1 weights
    # o_ref    : (1, H, W, Cp)
    # pad_sc   : VMEM (H+2, W+2, Cp) bf16 — shared zero-halo scratch (x, then y)
    # patch_sc : VMEM (H*W, 9*Cp)    bf16 — shared im2col buffer for both 3x3 convs
    f32 = jnp.float32
    bf16 = jnp.bfloat16

    # Zero only the 1-wide halo border (4 thin slabs). Re-done every grid step so it is
    # correct even when the batch axis is sharded across TensorCores (per-core scratch
    # would never see a program_id==0-only init); still ~O(perimeter) vs O(area).
    pad_sc[0:1, :, :] = jnp.zeros((1, W + 2, Cp), bf16)
    pad_sc[H + 1:H + 2, :, :] = jnp.zeros((1, W + 2, Cp), bf16)
    pad_sc[:, 0:1, :] = jnp.zeros((H + 2, 1, Cp), bf16)
    pad_sc[:, W + 1:W + 2, :] = jnp.zeros((H + 2, 1, Cp), bf16)

    x = x_ref[0]                                            # (H, W, Cp) f32
    pad_sc[1:H + 1, 1:W + 1, :] = x.astype(bf16)

    def im2col():
        # Pack the 9 shifted taps into one lane-aligned (H*W, 9*Cp) bf16 buffer.
        for dy in range(3):
            for dx in range(3):
                d = dy * 3 + dx
                patch_sc[:, d * Cp:(d + 1) * Cp] = (
                    pad_sc[dy:dy + H, dx:dx + W, :].reshape(H * W, Cp))

    # ---- conv1 (3x3, pad=1, no bias): single MXU matmul, contraction depth 9*Cp ----
    im2col()
    acc = jnp.dot(patch_sc[...], w1_ref[...], preferred_element_type=f32)   # (H*W, Cp)

    # ---- bn1 (eval-mode per-channel affine) + ReLU, in f32 ----
    y = jnp.maximum(acc * scale_ref[0] + shift_ref[0], 0.0)                 # (H*W, Cp)

    # ---- HashConv.key_op (3x3 conv Cp -> Kp): reuse the same halo + im2col scratch ----
    pad_sc[1:H + 1, 1:W + 1, :] = y.reshape(H, W, Cp).astype(bf16)
    im2col()
    sims = jnp.dot(patch_sc[...], wk_ref[...], preferred_element_type=f32)  # (H*W, Kp)

    # ---- softmax over keys (dim=1 in NCHW == last axis here); mask padded key lanes ----
    s = sims * (1.0 / temp)
    lane = jax.lax.broadcasted_iota(jnp.int32, (H * W, Kp), 1)
    s = jnp.where(lane < K, s, -1e30)
    m = jnp.max(s, axis=-1, keepdims=True)
    e = jnp.exp(s - m)
    attn = e * pl.reciprocal(jnp.sum(e, axis=-1, keepdims=True), approx=True)

    # ---- HashConv.val_op: 1x1 conv Kp -> Cp (no bias) ----
    v = jnp.dot(attn.astype(bf16), wv_ref[...], preferred_element_type=f32)  # (H*W, Cp)

    # ---- residual add (identity = x, f32) + ReLU ----
    out = jnp.maximum(v + x.reshape(H * W, Cp), 0.0)
    o_ref[0] = out.reshape(H, W, Cp).astype(o_ref.dtype)


def _round_up(n, m):
    return ((n + m - 1) // m) * m


def inject_block_forward(x_nchw, w1_oihw, bn_gamma, bn_beta, bn_mean, bn_var,
                         wk_oihw, wv_oihw, *, temperature=1.0, eps=1e-5):
    N, C, H, W = x_nchw.shape
    K = wk_oihw.shape[0]
    Cp = max(128, _round_up(C, 128))   # lane-dense channel width
    Kp = max(128, _round_up(K, 128))   # lane-dense key width

    # NCHW -> NHWC and zero-pad channels to Cp (no-op when C is already 128-aligned).
    x_nhwc = jnp.transpose(x_nchw, (0, 2, 3, 1)).astype(jnp.float32)
    x_nhwc = jnp.pad(x_nhwc, ((0, 0), (0, 0), (0, 0), (0, Cp - C)))

    # conv1 3x3: OIHW -> HWIO, pad to (3,3,Cp,Cp), flatten taps -> (9*Cp, Cp), bf16.
    w1 = jnp.transpose(w1_oihw, (2, 3, 1, 0))
    w1 = jnp.pad(w1, ((0, 0), (0, 0), (0, Cp - C), (0, Cp - C)))
    w1 = w1.reshape(9 * Cp, Cp).astype(jnp.bfloat16)

    # key_op 3x3: OIHW -> HWIO, pad to (3,3,Cp,Kp), flatten taps -> (9*Cp, Kp), bf16.
    wk = jnp.transpose(wk_oihw, (2, 3, 1, 0))
    wk = jnp.pad(wk, ((0, 0), (0, 0), (0, Cp - C), (0, Kp - K)))
    wk = wk.reshape(9 * Cp, Kp).astype(jnp.bfloat16)

    # val_op 1x1: (Cout, K, 1, 1) -> (K, Cout), pad -> (Kp, Cp), bf16.
    wv = jnp.transpose(wv_oihw[:, :, 0, 0], (1, 0))
    wv = jnp.pad(wv, ((0, Kp - K), (0, Cp - C))).astype(jnp.bfloat16)

    # Folded eval-mode BN affine (padded channels get scale=0/shift=0 and stay zero).
    inv_std = 1.0 / jnp.sqrt(bn_var + eps)
    scale = jnp.pad(bn_gamma * inv_std, (0, Cp - C)).reshape(1, Cp).astype(jnp.float32)
    shift = jnp.pad(bn_beta - bn_mean * bn_gamma * inv_std,
                    (0, Cp - C)).reshape(1, Cp).astype(jnp.float32)

    kernel = functools.partial(_inject_block_kernel, H=H, W=W, Cp=Cp, Kp=Kp, K=K,
                               temp=float(temperature))

    out_nhwc = pl.pallas_call(
        kernel,
        out_shape=jax.ShapeDtypeStruct((N, H, W, Cp), jnp.float32),
        grid_spec=pltpu.PrefetchScalarGridSpec(
            num_scalar_prefetch=0,
            grid=(N,),
            in_specs=[
                pl.BlockSpec((1, H, W, Cp), lambda b: (b, 0, 0, 0)),
                pl.BlockSpec((9 * Cp, Cp), lambda b: (0, 0)),
                pl.BlockSpec((1, Cp), lambda b: (0, 0)),
                pl.BlockSpec((1, Cp), lambda b: (0, 0)),
                pl.BlockSpec((9 * Cp, Kp), lambda b: (0, 0)),
                pl.BlockSpec((Kp, Cp), lambda b: (0, 0)),
            ],
            out_specs=pl.BlockSpec((1, H, W, Cp), lambda b: (b, 0, 0, 0)),
            scratch_shapes=[
                pltpu.VMEM((H + 2, W + 2, Cp), jnp.bfloat16),   # shared halo scratch
                pltpu.VMEM((H * W, 9 * Cp), jnp.bfloat16),      # shared im2col buffer
            ],
        ),
        compiler_params=pltpu.CompilerParams(
            dimension_semantics=("parallel",),      # batch elements are independent
            vmem_limit_bytes=32 * 1024 * 1024,
        ),
    )(x_nhwc, w1, scale, shift, wk, wv)

    # Drop padded channels, back to NCHW (kept only because the spec's interface is NCHW).
    return jnp.transpose(out_nhwc[..., :C], (0, 3, 1, 2))


def _ref_forward(x, w1, gamma, beta, mean, var, wk, wv, temperature, eps=1e-5):
    """Pure-JAX reference of InjectBlock.forward (NCHW, eval-mode BN)."""
    dn = ('NCHW', 'OIHW', 'NCHW')

    def conv(a, w, pad):
        return jax.lax.conv_general_dilated(a, w, (1, 1), pad,
                                            dimension_numbers=dn,
                                            precision=jax.lax.Precision.HIGHEST)

    out = conv(x, w1, ((1, 1), (1, 1)))
    out = (out - mean[None, :, None, None]) / jnp.sqrt(var + eps)[None, :, None, None]
    out = out * gamma[None, :, None, None] + beta[None, :, None, None]
    out = jnp.maximum(out, 0.0)
    sims = conv(out, wk, ((1, 1), (1, 1)))
    attn = jax.nn.softmax(sims / temperature, axis=1)
    out = conv(attn, wv, ((0, 0), (0, 0)))
    out = out + x                      # residual: identity = x (downsample=None)
    return jnp.maximum(out, 0.0)       # bn2 == Pass (remove_bn2 with inject_conv='hash')


if __name__ == "__main__":
    # Small shapes: inplanes == planes (required by the residual add with no downsample).
    N, C, H, W, K = 2, 8, 16, 16, 32
    temperature = 1.0

    key = jax.random.PRNGKey(0)
    ks = jax.random.split(key, 8)
    x = jax.random.normal(ks[0], (N, C, H, W), jnp.float32)
    w1 = 0.1 * jax.random.normal(ks[1], (C, C, 3, 3), jnp.float32)    # conv3x3(inplanes, planes)
    wk = 0.1 * jax.random.normal(ks[2], (K, C, 3, 3), jnp.float32)    # HashConv.key_op
    wv = 0.1 * jax.random.normal(ks[3], (C, K, 1, 1), jnp.float32)    # HashConv.val_op
    gamma = 1.0 + 0.1 * jax.random.normal(ks[4], (C,), jnp.float32)   # bn1 weight
    beta = 0.1 * jax.random.normal(ks[5], (C,), jnp.float32)          # bn1 bias
    mean = 0.1 * jax.random.normal(ks[6], (C,), jnp.float32)          # bn1 running_mean
    var = 1.0 + 0.1 * jax.random.uniform(ks[7], (C,), jnp.float32)    # bn1 running_var

    out = inject_block_forward(x, w1, gamma, beta, mean, var, wk, wv,
                               temperature=temperature)
    out = jax.block_until_ready(out)
    assert out.shape == (N, C, H, W)

    ref = _ref_forward(x, w1, gamma, beta, mean, var, wk, wv, temperature)
    max_err = float(jnp.max(jnp.abs(out - ref)))
    assert jnp.allclose(out, ref, rtol=1e-2, atol=1e-2), f"max abs err {max_err}"

    print("KERNEL_OK")
</pallas_src>

<mosaic_0001>
module attributes {stable_mosaic.version = 11 : i64} {
  func.func @_inject_block_kernel(%arg0: i32, %arg1: memref<1x16x16x128xf32, #tpu.memory_space<vmem>>, %arg2: memref<1152x128xbf16, #tpu.memory_space<vmem>>, %arg3: memref<1x128xf32, #tpu.memory_space<vmem>>, %arg4: memref<1x128xf32, #tpu.memory_space<vmem>>, %arg5: memref<1152x128xbf16, #tpu.memory_space<vmem>>, %arg6: memref<128x128xbf16, #tpu.memory_space<vmem>>, %arg7: memref<1x16x16x128xf32, #tpu.memory_space<vmem>>, %arg8: memref<18x18x128xbf16, #tpu.memory_space<vmem>>, %arg9: memref<256x1152xbf16, #tpu.memory_space<vmem>>) attributes {dimension_semantics = [#tpu.dimension_semantics<parallel>], iteration_bounds = array<i64: 2>, scalar_prefetch = 0 : i64, scratch_operands = 2 : i64, tpu.core_type = #tpu.core_type<tc>, window_params = [{transform_indices = @transform_0, window_bounds = array<i64: 1, 16, 16, 128>}, {pipeline_mode = #tpu.pipeline_mode<synchronous>, transform_indices = @transform_1, window_bounds = array<i64: 1152, 128>}, {pipeline_mode = #tpu.pipeline_mode<synchronous>, transform_indices = @transform_2, window_bounds = array<i64: 1, 128>}, {pipeline_mode = #tpu.pipeline_mode<synchronous>, transform_indices = @transform_3, window_bounds = array<i64: 1, 128>}, {pipeline_mode = #tpu.pipeline_mode<synchronous>, transform_indices = @transform_4, window_bounds = array<i64: 1152, 128>}, {pipeline_mode = #tpu.pipeline_mode<synchronous>, transform_indices = @transform_5, window_bounds = array<i64: 128, 128>}, {transform_indices = @transform_6, window_bounds = array<i64: 1, 16, 16, 128>}]} {
    %cst = arith.constant 0.000000e+00 : bf16
    %0 = vector.broadcast %cst : bf16 to vector<1x18x128xbf16>
    %c0 = arith.constant 0 : index
    %c0_0 = arith.constant 0 : index
    %c0_1 = arith.constant 0 : index
    %1 = vector.load %arg8[%c0, %c0_0, %c0_1] : memref<18x18x128xbf16, #tpu.memory_space<vmem>>, vector<1x18x128xbf16>
    tpu.vector_store %arg8[%c0, %c0_0, %c0_1], %0 {strides = array<i32>} : memref<18x18x128xbf16, #tpu.memory_space<vmem>>, vector<1x18x128xbf16>,
    %cst_2 = arith.constant 0.000000e+00 : bf16
    %2 = vector.broadcast %cst_2 : bf16 to vector<1x18x128xbf16>
    %c17 = arith.constant 17 : index
    %c0_3 = arith.constant 0 : index
    %c0_4 = arith.constant 0 : index
    %3 = vector.load %arg8[%c17, %c0_3, %c0_4] : memref<18x18x128xbf16, #tpu.memory_space<vmem>>, vector<1x18x128xbf16>
    tpu.vector_store %arg8[%c17, %c0_3, %c0_4], %2 {strides = array<i32>} : memref<18x18x128xbf16, #tpu.memory_space<vmem>>, vector<1x18x128xbf16>,
    %cst_5 = arith.constant 0.000000e+00 : bf16
    %4 = vector.broadcast %cst_5 : bf16 to vector<18x1x128xbf16>
    %c0_6 = arith.constant 0 : index
    %c0_7 = arith.constant 0 : index
    %c0_8 = arith.constant 0 : index
    %5 = vector.load %arg8[%c0_6, %c0_7, %c0_8] : memref<18x18x128xbf16, #tpu.memory_space<vmem>>, vector<18x1x128xbf16>
    tpu.vector_store %arg8[%c0_6, %c0_7, %c0_8], %4 {strides = array<i32>} : memref<18x18x128xbf16, #tpu.memory_space<vmem>>, vector<18x1x128xbf16>,
    %cst_9 = arith.constant 0.000000e+00 : bf16
    %6 = vector.broadcast %cst_9 : bf16 to vector<18x1x128xbf16>
    %c0_10 = arith.constant 0 : index
    %c17_11 = arith.constant 17 : index
    %c0_12 = arith.constant 0 : index
    %7 = vector.load %arg8[%c0_10, %c17_11, %c0_12] : memref<18x18x128xbf16, #tpu.memory_space<vmem>>, vector<18x1x128xbf16>
    tpu.vector_store %arg8[%c0_10, %c17_11, %c0_12], %6 {strides = array<i32>} : memref<18x18x128xbf16, #tpu.memory_space<vmem>>, vector<18x1x128xbf16>,
    %c0_13 = arith.constant 0 : index
    %c0_14 = arith.constant 0 : index
    %c0_15 = arith.constant 0 : index
    %c0_16 = arith.constant 0 : index
    %8 = vector.load %arg1[%c0_13, %c0_14, %c0_15, %c0_16] : memref<1x16x16x128xf32, #tpu.memory_space<vmem>>, vector<1x16x16x128xf32>
    %9 = vector.shape_cast %8 : vector<1x16x16x128xf32> to vector<16x16x128xf32>
    %10 = arith.truncf %9 : vector<16x16x128xf32> to vector<16x16x128xbf16>
    %c1 = arith.constant 1 : index
    %c1_17 = arith.constant 1 : index
    %c0_18 = arith.constant 0 : index
    %11 = vector.load %arg8[%c1, %c1_17, %c0_18] : memref<18x18x128xbf16, #tpu.memory_space<vmem>>, vector<16x16x128xbf16>
    tpu.vector_store %arg8[%c1, %c1_17, %c0_18], %10 {strides = array<i32>} : memref<18x18x128xbf16, #tpu.memory_space<vmem>>, vector<16x16x128xbf16>,
    %c0_19 = arith.constant 0 : index
    %c0_20 = arith.constant 0 : index
    %c0_21 = arith.constant 0 : index
    %12 = vector.load %arg8[%c0_19, %c0_20, %c0_21] : memref<18x18x128xbf16, #tpu.memory_space<vmem>>, vector<16x16x128xbf16>
    %13 = vector.shape_cast %12 : vector<16x16x128xbf16> to vector<256x128xbf16>
    %c0_22 = arith.constant 0 : index
    %c0_23 = arith.constant 0 : index
    %14 = vector.load %arg9[%c0_22, %c0_23] : memref<256x1152xbf16, #tpu.memory_space<vmem>>, vector<256x128xbf16>
    tpu.vector_store %arg9[%c0_22, %c0_23], %13 {strides = array<i32>} : memref<256x1152xbf16, #tpu.memory_space<vmem>>, vector<256x128xbf16>,
    %c0_24 = arith.constant 0 : index
    %c1_25 = arith.constant 1 : index
    %c0_26 = arith.constant 0 : index
    %15 = vector.load %arg8[%c0_24, %c1_25, %c0_26] : memref<18x18x128xbf16, #tpu.memory_space<vmem>>, vector<16x16x128xbf16>
    %16 = vector.shape_cast %15 : vector<16x16x128xbf16> to vector<256x128xbf16>
    %c0_27 = arith.constant 0 : index
    %c128 = arith.constant 128 : index
    %17 = vector.load %arg9[%c0_27, %c128] : memref<256x1152xbf16, #tpu.memory_space<vmem>>, vector<256x128xbf16>
    tpu.vector_store %arg9[%c0_27, %c128], %16 {strides = array<i32>} : memref<256x1152xbf16, #tpu.memory_space<vmem>>, vector<256x128xbf16>,
    %c0_28 = arith.constant 0 : index
    %c2 = arith.constant 2 : index
    %c0_29 = arith.constant 0 : index
    %18 = vector.load %arg8[%c0_28, %c2, %c0_29] : memref<18x18x128xbf16, #tpu.memory_space<vmem>>, vector<16x16x128xbf16>
    %19 = vector.shape_cast %18 : vector<16x16x128xbf16> to vector<256x128xbf16>
    %c0_30 = arith.constant 0 : index
    %c256 = arith.constant 256 : index
    %20 = vector.load %arg9[%c0_30, %c256] : memref<256x1152xbf16, #tpu.memory_space<vmem>>, vector<256x128xbf16>
    tpu.vector_store %arg9[%c0_30, %c256], %19 {strides = array<i32>} : memref<256x1152xbf16, #tpu.memory_space<vmem>>, vector<256x128xbf16>,
    %c1_31 = arith.constant 1 : index
    %c0_32 = arith.constant 0 : index
    %c0_33 = arith.constant 0 : index
    %21 = vector.load %arg8[%c1_31, %c0_32, %c0_33] : memref<18x18x128xbf16, #tpu.memory_space<vmem>>, vector<16x16x128xbf16>
    %22 = vector.shape_cast %21 : vector<16x16x128xbf16> to vector<256x128xbf16>
    %c0_34 = arith.constant 0 : index
    %c384 = arith.constant 384 : index
    %23 = vector.load %arg9[%c0_34, %c384] : memref<256x1152xbf16, #tpu.memory_space<vmem>>, vector<256x128xbf16>
    tpu.vector_store %arg9[%c0_34, %c384], %22 {strides = array<i32>} : memref<256x1152xbf16, #tpu.memory_space<vmem>>, vector<256x128xbf16>,
    %c1_35 = arith.constant 1 : index
    %c1_36 = arith.constant 1 : index
    %c0_37 = arith.constant 0 : index
    %24 = vector.load %arg8[%c1_35, %c1_36, %c0_37] : memref<18x18x128xbf16, #tpu.memory_space<vmem>>, vector<16x16x128xbf16>
    %25 = vector.shape_cast %24 : vector<16x16x128xbf16> to vector<256x128xbf16>
    %c0_38 = arith.constant 0 : index
    %c512 = arith.constant 512 : index
    %26 = vector.load %arg9[%c0_38, %c512] : memref<256x1152xbf16, #tpu.memory_space<vmem>>, vector<256x128xbf16>
    tpu.vector_store %arg9[%c0_38, %c512], %25 {strides = array<i32>} : memref<256x1152xbf16, #tpu.memory_space<vmem>>, vector<256x128xbf16>,
    %c1_39 = arith.constant 1 : index
    %c2_40 = arith.constant 2 : index
    %c0_41 = arith.constant 0 : index
    %27 = vector.load %arg8[%c1_39, %c2_40, %c0_41] : memref<18x18x128xbf16, #tpu.memory_space<vmem>>, vector<16x16x128xbf16>
    %28 = vector.shape_cast %27 : vector<16x16x128xbf16> to vector<256x128xbf16>
    %c0_42 = arith.constant 0 : index
    %c640 = arith.constant 640 : index
    %29 = vector.load %arg9[%c0_42, %c640] : memref<256x1152xbf16, #tpu.memory_space<vmem>>, vector<256x128xbf16>
    tpu.vector_store %arg9[%c0_42, %c640], %28 {strides = array<i32>} : memref<256x1152xbf16, #tpu.memory_space<vmem>>, vector<256x128xbf16>,
    %c2_43 = arith.constant 2 : index
    %c0_44 = arith.constant 0 : index
    %c0_45 = arith.constant 0 : index
    %30 = vector.load %arg8[%c2_43, %c0_44, %c0_45] : memref<18x18x128xbf16, #tpu.memory_space<vmem>>, vector<16x16x128xbf16>
    %31 = vector.shape_cast %30 : vector<16x16x128xbf16> to vector<256x128xbf16>
    %c0_46 = arith.constant 0 : index
    %c768 = arith.constant 768 : index
    %32 = vector.load %arg9[%c0_46, %c768] : memref<256x1152xbf16, #tpu.memory_space<vmem>>, vector<256x128xbf16>
    tpu.vector_store %arg9[%c0_46, %c768], %31 {strides = array<i32>} : memref<256x1152xbf16, #tpu.memory_space<vmem>>, vector<256x128xbf16>,
    %c2_47 = arith.constant 2 : index
    %c1_48 = arith.constant 1 : index
    %c0_49 = arith.constant 0 : index
    %33 = vector.load %arg8[%c2_47, %c1_48, %c0_49] : memref<18x18x128xbf16, #tpu.memory_space<vmem>>, vector<16x16x128xbf16>
    %34 = vector.shape_cast %33 : vector<16x16x128xbf16> to vector<256x128xbf16>
    %c0_50 = arith.constant 0 : index
    %c896 = arith.constant 896 : index
    %35 = vector.load %arg9[%c0_50, %c896] : memref<256x1152xbf16, #tpu.memory_space<vmem>>, vector<256x128xbf16>
    tpu.vector_store %arg9[%c0_50, %c896], %34 {strides = array<i32>} : memref<256x1152xbf16, #tpu.memory_space<vmem>>, vector<256x128xbf16>,
    %c2_51 = arith.constant 2 : index
    %c2_52 = arith.constant 2 : index
    %c0_53 = arith.constant 0 : index
    %36 = vector.load %arg8[%c2_51, %c2_52, %c0_53] : memref<18x18x128xbf16, #tpu.memory_space<vmem>>, vector<16x16x128xbf16>
    %37 = vector.shape_cast %36 : vector<16x16x128xbf16> to vector<256x128xbf16>
    %c0_54 = arith.constant 0 : index
    %c1024 = arith.constant 1024 : index
    %38 = vector.load %arg9[%c0_54, %c1024] : memref<256x1152xbf16, #tpu.memory_space<vmem>>, vector<256x128xbf16>
    tpu.vector_store %arg9[%c0_54, %c1024], %37 {strides = array<i32>} : memref<256x1152xbf16, #tpu.memory_space<vmem>>, vector<256x128xbf16>,
    %c0_55 = arith.constant 0 : index
    %c0_56 = arith.constant 0 : index
    %39 = vector.load %arg9[%c0_55, %c0_56] : memref<256x1152xbf16, #tpu.memory_space<vmem>>, vector<256x1152xbf16>
    %c0_57 = arith.constant 0 : index
    %c0_58 = arith.constant 0 : index
    %40 = vector.load %arg2[%c0_57, %c0_58] : memref<1152x128xbf16, #tpu.memory_space<vmem>>, vector<1152x128xbf16>
    %cst_59 = arith.constant dense<0.000000e+00> : vector<256x128xf32>
    %41 = tpu.matmul %39, %40, %cst_59 {dimension_numbers = #tpu.dot_dimension_numbers<[1], [0], [0], [1], [0, 0, 1, 1], [], []>} : vector<256x1152xbf16>, vector<1152x128xbf16>, vector<256x128xf32> -> vector<256x128xf32>
    %c0_60 = arith.constant 0 : index
    %c0_61 = arith.constant 0 : index
    %42 = vector.load %arg3[%c0_60, %c0_61] : memref<1x128xf32, #tpu.memory_space<vmem>>, vector<1x128xf32>
    %43 = vector.shape_cast %42 : vector<1x128xf32> to vector<128xf32>
    %44 = vector.shape_cast %43 : vector<128xf32> to vector<1x128xf32>
    %45 = vector.broadcast %44 : vector<1x128xf32> to vector<256x128xf32>
    %46 = arith.mulf %41, %45 : vector<256x128xf32>
    %c0_62 = arith.constant 0 : index
    %c0_63 = arith.constant 0 : index
    %47 = vector.load %arg4[%c0_62, %c0_63] : memref<1x128xf32, #tpu.memory_space<vmem>>, vector<1x128xf32>
    %48 = vector.shape_cast %47 : vector<1x128xf32> to vector<128xf32>
    %49 = vector.shape_cast %48 : vector<128xf32> to vector<1x128xf32>
    %50 = vector.broadcast %49 : vector<1x128xf32> to vector<256x128xf32>
    %51 = arith.addf %46, %50 : vector<256x128xf32>
    %cst_64 = arith.constant 0.000000e+00 : f32
    %52 = vector.broadcast %cst_64 : f32 to vector<256x128xf32>
    %53 = arith.maximumf %51, %52 : vector<256x128xf32>
    %54 = vector.shape_cast %53 : vector<256x128xf32> to vector<16x16x128xf32>
    %55 = arith.truncf %54 : vector<16x16x128xf32> to vector<16x16x128xbf16>
    %c1_65 = arith.constant 1 : index
    %c1_66 = arith.constant 1 : index
    %c0_67 = arith.constant 0 : index
    %56 = vector.load %arg8[%c1_65, %c1_66, %c0_67] : memref<18x18x128xbf16, #tpu.memory_space<vmem>>, vector<16x16x128xbf16>
    tpu.vector_store %arg8[%c1_65, %c1_66, %c0_67], %55 {strides = array<i32>} : memref<18x18x128xbf16, #tpu.memory_space<vmem>>, vector<16x16x128xbf16>,
    %c0_68 = arith.constant 0 : index
    %c0_69 = arith.constant 0 : index
    %c0_70 = arith.constant 0 : index
    %57 = vector.load %arg8[%c0_68, %c0_69, %c0_70] : memref<18x18x128xbf16, #tpu.memory_space<vmem>>, vector<16x16x128xbf16>
    %58 = vector.shape_cast %57 : vector<16x16x128xbf16> to vector<256x128xbf16>
    %c0_71 = arith.constant 0 : index
    %c0_72 = arith.constant 0 : index
    %59 = vector.load %arg9[%c0_71, %c0_72] : memref<256x1152xbf16, #tpu.memory_space<vmem>>, vector<256x128xbf16>
    tpu.vector_store %arg9[%c0_71, %c0_72], %58 {strides = array<i32>} : memref<256x1152xbf16, #tpu.memory_space<vmem>>, vector<256x128xbf16>,
    %c0_73 = arith.constant 0 : index
    %c1_74 = arith.constant 1 : index
    %c0_75 = arith.constant 0 : index
    %60 = vector.load %arg8[%c0_73, %c1_74, %c0_75] : memref<18x18x128xbf16, #tpu.memory_space<vmem>>, vector<16x16x128xbf16>
    %61 = vector.shape_cast %60 : vector<16x16x128xbf16> to vector<256x128xbf16>
    %c0_76 = arith.constant 0 : index
    %c128_77 = arith.constant 128 : index
    %62 = vector.load %arg9[%c0_76, %c128_77] : memref<256x1152xbf16, #tpu.memory_space<vmem>>, vector<256x128xbf16>
    tpu.vector_store %arg9[%c0_76, %c128_77], %61 {strides = array<i32>} : memref<256x1152xbf16, #tpu.memory_space<vmem>>, vector<256x128xbf16>,
    %c0_78 = arith.constant 0 : index
    %c2_79 = arith.constant 2 : index
    %c0_80 = arith.constant 0 : index
    %63 = vector.load %arg8[%c0_78, %c2_79, %c0_80] : memref<18x18x128xbf16, #tpu.memory_space<vmem>>, vector<16x16x128xbf16>
    %64 = vector.shape_cast %63 : vector<16x16x128xbf16> to vector<256x128xbf16>
    %c0_81 = arith.constant 0 : index
    %c256_82 = arith.constant 256 : index
    %65 = vector.load %arg9[%c0_81, %c256_82] : memref<256x1152xbf16, #tpu.memory_space<vmem>>, vector<256x128xbf16>
    tpu.vector_store %arg9[%c0_81, %c256_82], %64 {strides = array<i32>} : memref<256x1152xbf16, #tpu.memory_space<vmem>>, vector<256x128xbf16>,
    %c1_83 = arith.constant 1 : index
    %c0_84 = arith.constant 0 : index
    %c0_85 = arith.constant 0 : index
    %66 = vector.load %arg8[%c1_83, %c0_84, %c0_85] : memref<18x18x128xbf16, #tpu.memory_space<vmem>>, vector<16x16x128xbf16>
    %67 = vector.shape_cast %66 : vector<16x16x128xbf16> to vector<256x128xbf16>
    %c0_86 = arith.constant 0 : index
    %c384_87 = arith.constant 384 : index
    %68 = vector.load %arg9[%c0_86, %c384_87] : memref<256x1152xbf16, #tpu.memory_space<vmem>>, vector<256x128xbf16>
    tpu.vector_store %arg9[%c0_86, %c384_87], %67 {strides = array<i32>} : memref<256x1152xbf16, #tpu.memory_space<vmem>>, vector<256x128xbf16>,
    %c1_88 = arith.constant 1 : index
    %c1_89 = arith.constant 1 : index
    %c0_90 = arith.constant 0 : index
    %69 = vector.load %arg8[%c1_88, %c1_89, %c0_90] : memref<18x18x128xbf16, #tpu.memory_space<vmem>>, vector<16x16x128xbf16>
    %70 = vector.shape_cast %69 : vector<16x16x128xbf16> to vector<256x128xbf16>
    %c0_91 = arith.constant 0 : index
    %c512_92 = arith.constant 512 : index
    %71 = vector.load %arg9[%c0_91, %c512_92] : memref<256x1152xbf16, #tpu.memory_space<vmem>>, vector<256x128xbf16>
    tpu.vector_store %arg9[%c0_91, %c512_92], %70 {strides = array<i32>} : memref<256x1152xbf16, #tpu.memory_space<vmem>>, vector<256x128xbf16>,
    %c1_93 = arith.constant 1 : index
    %c2_94 = arith.constant 2 : index
    %c0_95 = arith.constant 0 : index
    %72 = vector.load %arg8[%c1_93, %c2_94, %c0_95] : memref<18x18x128xbf16, #tpu.memory_space<vmem>>, vector<16x16x128xbf16>
    %73 = vector.shape_cast %72 : vector<16x16x128xbf16> to vector<256x128xbf16>
    %c0_96 = arith.constant 0 : index
    %c640_97 = arith.constant 640 : index
    %74 = vector.load %arg9[%c0_96, %c640_97] : memref<256x1152xbf16, #tpu.memory_space<vmem>>, vector<256x128xbf16>
    tpu.vector_store %arg9[%c0_96, %c640_97], %73 {strides = array<i32>} : memref<256x1152xbf16, #tpu.memory_space<vmem>>, vector<256x128xbf16>,
    %c2_98 = arith.constant 2 : index
    %c0_99 = arith.constant 0 : index
    %c0_100 = arith.constant 0 : index
    %75 = vector.load %arg8[%c2_98, %c0_99, %c0_100] : memref<18x18x128xbf16, #tpu.memory_space<vmem>>, vector<16x16x128xbf16>
    %76 = vector.shape_cast %75 : vector<16x16x128xbf16> to vector<256x128xbf16>
    %c0_101 = arith.constant 0 : index
    %c768_102 = arith.constant 768 : index
    %77 = vector.load %arg9[%c0_101, %c768_102] : memref<256x1152xbf16, #tpu.memory_space<vmem>>, vector<256x128xbf16>
    tpu.vector_store %arg9[%c0_101, %c768_102], %76 {strides = array<i32>} : memref<256x1152xbf16, #tpu.memory_space<vmem>>, vector<256x128xbf16>,
    %c2_103 = arith.constant 2 : index
    %c1_104 = arith.constant 1 : index
    %c0_105 = arith.constant 0 : index
    %78 = vector.load %arg8[%c2_103, %c1_104, %c0_105] : memref<18x18x128xbf16, #tpu.memory_space<vmem>>, vector<16x16x128xbf16>
    %79 = vector.shape_cast %78 : vector<16x16x128xbf16> to vector<256x128xbf16>
    %c0_106 = arith.constant 0 : index
    %c896_107 = arith.constant 896 : index
    %80 = vector.load %arg9[%c0_106, %c896_107] : memref<256x1152xbf16, #tpu.memory_space<vmem>>, vector<256x128xbf16>
    tpu.vector_store %arg9[%c0_106, %c896_107], %79 {strides = array<i32>} : memref<256x1152xbf16, #tpu.memory_space<vmem>>, vector<256x128xbf16>,
    %c2_108 = arith.constant 2 : index
    %c2_109 = arith.constant 2 : index
    %c0_110 = arith.constant 0 : index
    %81 = vector.load %arg8[%c2_108, %c2_109, %c0_110] : memref<18x18x128xbf16, #tpu.memory_space<vmem>>, vector<16x16x128xbf16>
    %82 = vector.shape_cast %81 : vector<16x16x128xbf16> to vector<256x128xbf16>
    %c0_111 = arith.constant 0 : index
    %c1024_112 = arith.constant 1024 : index
    %83 = vector.load %arg9[%c0_111, %c1024_112] : memref<256x1152xbf16, #tpu.memory_space<vmem>>, vector<256x128xbf16>
    tpu.vector_store %arg9[%c0_111, %c1024_112], %82 {strides = array<i32>} : memref<256x1152xbf16, #tpu.memory_space<vmem>>, vector<256x128xbf16>,
    %c0_113 = arith.constant 0 : index
    %c0_114 = arith.constant 0 : index
    %84 = vector.load %arg9[%c0_113, %c0_114] : memref<256x1152xbf16, #tpu.memory_space<vmem>>, vector<256x1152xbf16>
    %c0_115 = arith.constant 0 : index
    %c0_116 = arith.constant 0 : index
    %85 = vector.load %arg5[%c0_115, %c0_116] : memref<1152x128xbf16, #tpu.memory_space<vmem>>, vector<1152x128xbf16>
    %cst_117 = arith.constant dense<0.000000e+00> : vector<256x128xf32>
    %86 = tpu.matmul %84, %85, %cst_117 {dimension_numbers = #tpu.dot_dimension_numbers<[1], [0], [0], [1], [0, 0, 1, 1], [], []>} : vector<256x1152xbf16>, vector<1152x128xbf16>, vector<256x128xf32> -> vector<256x128xf32>
    %cst_118 = arith.constant 1.000000e+00 : f32
    %87 = vector.broadcast %cst_118 : f32 to vector<256x128xf32>
    %88 = arith.mulf %86, %87 : vector<256x128xf32>
    %89 = tpu.iota {dimensions = array<i32: 1>} : vector<256x128xi32>
    %c32_i32 = arith.constant 32 : i32
    %90 = vector.broadcast %c32_i32 : i32 to vector<256x128xi32>
    %91 = arith.cmpi slt, %89, %90 : vector<256x128xi32>
    %cst_119 = arith.constant -1.000000e+30 : f32
    %92 = vector.broadcast %cst_119 : f32 to vector<256x128xf32>
    %93 = arith.select %91, %88, %92 : vector<256x128xi1>, vector<256x128xf32>
    %cst_120 = arith.constant dense<0xFF800000> : vector<256xf32>
    %94 = vector.multi_reduction <maximumf>, %93, %cst_120 [1] : vector<256x128xf32> to vector<256xf32>
    %95 = vector.shape_cast %94 : vector<256xf32> to vector<256x1xf32>
    %96 = vector.broadcast %95 : vector<256x1xf32> to vector<256x128xf32>
    %97 = arith.subf %93, %96 : vector<256x128xf32>
    %98 = math.exp %97 : vector<256x128xf32>
    %cst_121 = arith.constant dense<0.000000e+00> : vector<256xf32>
    %99 = vector.multi_reduction <add>, %98, %cst_121 [1] : vector<256x128xf32> to vector<256xf32>
    %100 = vector.shape_cast %99 : vector<256xf32> to vector<256x1xf32>
    %101 = tpu.reciprocal %100 {approx = true} : vector<256x1xf32> -> vector<256x1xf32>
    %102 = vector.broadcast %101 : vector<256x1xf32> to vector<256x128xf32>
    %103 = arith.mulf %98, %102 : vector<256x128xf32>
    %104 = arith.truncf %103 : vector<256x128xf32> to vector<256x128xbf16>
    %c0_122 = arith.constant 0 : index
    %c0_123 = arith.constant 0 : index
    %105 = vector.load %arg6[%c0_122, %c0_123] : memref<128x128xbf16, #tpu.memory_space<vmem>>, vector<128x128xbf16>
    %cst_124 = arith.constant dense<0.000000e+00> : vector<256x128xf32>
    %106 = tpu.matmul %104, %105, %cst_124 {dimension_numbers = #tpu.dot_dimension_numbers<[1], [0], [0], [1], [0, 0, 1, 1], [], []>} : vector<256x128xbf16>, vector<128x128xbf16>, vector<256x128xf32> -> vector<256x128xf32>
    %107 = vector.shape_cast %9 : vector<16x16x128xf32> to vector<256x128xf32>
    %108 = arith.addf %106, %107 : vector<256x128xf32>
    %cst_125 = arith.constant 0.000000e+00 : f32
    %109 = vector.broadcast %cst_125 : f32 to vector<256x128xf32>
    %110 = arith.maximumf %108, %109 : vector<256x128xf32>
    %111 = vector.shape_cast %110 : vector<256x128xf32> to vector<16x16x128xf32>
    %c0_126 = arith.constant 0 : index
    %c0_127 = arith.constant 0 : index
    %c0_128 = arith.constant 0 : index
    %c0_129 = arith.constant 0 : index
    %112 = vector.load %arg7[%c0_126, %c0_127, %c0_128, %c0_129] : memref<1x16x16x128xf32, #tpu.memory_space<vmem>>, vector<1x16x16x128xf32>
    %113 = vector.shape_cast %112 : vector<1x16x16x128xf32> to vector<16x16x128xf32>
    %114 = vector.shape_cast %111 : vector<16x16x128xf32> to vector<1x16x16x128xf32>
    tpu.vector_store %arg7[%c0_126, %c0_127, %c0_128, %c0_129], %114 {strides = array<i32>} : memref<1x16x16x128xf32, #tpu.memory_space<vmem>>, vector<1x16x16x128xf32>,
    return
  }
  func.func @transform_0(%arg0: i32) -> (i32, i32, i32, i32) {
    %c0_i32 = arith.constant 0 : i32
    %c0_i32_0 = arith.constant 0 : i32
    %c0_i32_1 = arith.constant 0 : i32
    %c0_i32_2 = arith.constant 0 : i32
    return %arg0, %c0_i32, %c0_i32_0, %c0_i32_1 : i32, i32, i32, i32
  }
  func.func @transform_1(%arg0: i32) -> (i32, i32) {
    %c0_i32 = arith.constant 0 : i32
    %c0_i32_0 = arith.constant 0 : i32
    %c0_i32_1 = arith.constant 0 : i32
    return %c0_i32, %c0_i32_0 : i32, i32
  }
  func.func @transform_2(%arg0: i32) -> (i32, i32) {
    %c0_i32 = arith.constant 0 : i32
    %c0_i32_0 = arith.constant 0 : i32
    %c0_i32_1 = arith.constant 0 : i32
    return %c0_i32, %c0_i32_0 : i32, i32
  }
  func.func @transform_3(%arg0: i32) -> (i32, i32) {
    %c0_i32 = arith.constant 0 : i32
    %c0_i32_0 = arith.constant 0 : i32
    %c0_i32_1 = arith.constant 0 : i32
    return %c0_i32, %c0_i32_0 : i32, i32
  }
  func.func @transform_4(%arg0: i32) -> (i32, i32) {
    %c0_i32 = arith.constant 0 : i32
    %c0_i32_0 = arith.constant 0 : i32
    %c0_i32_1 = arith.constant 0 : i32
    return %c0_i32, %c0_i32_0 : i32, i32
  }
  func.func @transform_5(%arg0: i32) -> (i32, i32) {
    %c0_i32 = arith.constant 0 : i32
    %c0_i32_0 = arith.constant 0 : i32
    %c0_i32_1 = arith.constant 0 : i32
    return %c0_i32, %c0_i32_0 : i32, i32
  }
  func.func @transform_6(%arg0: i32) -> (i32, i32, i32, i32) {
    %c0_i32 = arith.constant 0 : i32
    %c0_i32_0 = arith.constant 0 : i32
    %c0_i32_1 = arith.constant 0 : i32
    %c0_i32_2 = arith.constant 0 : i32
    return %arg0, %c0_i32, %c0_i32_0, %c0_i32_1 : i32, i32, i32, i32
  }
}

</mosaic_0001>

<llo_original>
// kernel: tpu_custom_call.1
$region0: #{tpu_custom_call.1}
  #allocation0 [shape = 'u32[]', space=smem, size = 0x4, offset = 0x4, fixed_abs, tag = 'smem constant byte address 0x4 - core index']
  #allocation1 [shape = 'u32[144,128]{1,0:T(1,128)}', space=vmem, size = 0x12000, scoped, tag = 'internal scratch']
  #allocation2 [shape = 'bf16[18,18,128]{2,1,0:T(8,128)(2,1)}', space=vmem, size = 0x1b000, scoped, tag = 'scratch operand']
  #allocation3 [shape = 'bf16[256,1152]{1,0:T(8,128)(2,1)}', space=vmem, size = 0x90000, scoped, tag = 'scratch operand']
  %s0 = inlined_call_operand.hbm [shape: f32[2,16,16,128], index: 0, kind: input, shape index: {}]
  %s1 = inlined_call_operand.hbm [shape: bf16[1152,128], index: 1, kind: input, shape index: {}]
  %s2 = inlined_call_operand.vmem [shape: f32[1,128], index: 2, kind: input, shape index: {}]
  %s3 = inlined_call_operand.vmem [shape: f32[1,128], index: 3, kind: input, shape index: {}]
  %s4 = inlined_call_operand.hbm [shape: bf16[1152,128], index: 4, kind: input, shape index: {}]
  %s5 = inlined_call_operand.hbm [shape: bf16[128,128], index: 5, kind: input, shape index: {}]
  %s6 = inlined_call_operand.hbm [shape: f32[2,16,16,128], index: 6, kind: output, shape index: {}]
  %s7 = sld [smem:[#allocation0]]
  $region73: #{tpu_custom_call.1} parent=0
    _
  %s9 = ssub.s32 1, %s7
  %s10 = scalar_select 0, %s9, %s7
  $region1: #{tpu_custom_call.1} parent=0
    #allocation4 [shape = 'u8[262144]{0}', space=vmem, size = 0x40000, scoped, tag = 'input window, operand 0']
    #allocation5 [shape = 's32[2]{0}', space=sflag, size = 0x8, scoped, tag = 'scoped memory for tpu_custom_call.1']
    #allocation6 [shape = 's32[2]{0}', space=sflag, size = 0x8, scoped, tag = 'scoped memory for tpu_custom_call.1']
    #allocation7 [shape = 'u8[294912]{0}', space=vmem, size = 0x48000, scoped, tag = 'input window, operand 1, single buffered']
    #allocation8 [shape = 's32[1]{0}', space=sflag, size = 0x4, scoped, tag = 'scoped memory for tpu_custom_call.1']
    #allocation9 [shape = 'u8[294912]{0}', space=vmem, size = 0x48000, scoped, tag = 'input window, operand 4, single buffered']
    #allocation10 [shape = 'u8[32768]{0}', space=vmem, size = 0x8000, scoped, tag = 'input window, operand 5, single buffered']
    #allocation11 [shape = 's32[1]{0}', space=sflag, size = 0x4, scoped, tag = 'scoped memory for tpu_custom_call.1']
    #allocation12 [shape = 'u8[262144]{0}', space=vmem, size = 0x40000, scoped, tag = 'output window, operand 0']
    %11 = vsyncpa [#allocation5], 0
    %s12 = scalar_lea.sflag [#allocation5], 1
    %13 = vsyncpa %s12, 0
    %14 = vsyncpa [#allocation8], 0
    %15 = vsyncpa [#allocation11], 0
    %16 = vsyncpa [#allocation6], 0
    %s17 = scalar_lea.sflag [#allocation6], 1
    %18 = vsyncpa %s17, 0
    loop: start=0, step=1, limit=4
    $region2: #{tpu_custom_call.1} parent=1 // loop_pre_header
      _
    $region3: #{tpu_custom_call.1} parent=1 // loop_header
      %s20 = sphi 0, %s24
      %p21 = scmp.ge.s32.totalorder %s20, 4
      %s30 = sphi 0, %s32
      %s33 = sphi 0, %s30
      %s34 = sphi 0, %s33
      %s50 = sphi 0, %s34
      %s54 = sphi 0, %s54
      %s56 = sphi 0, %s54
      %s57 = sphi 0, %s56
      %s71 = sphi 0, %s57
      %s75 = sphi 0, %s75
      %s77 = sphi 0, %s75
      %s78 = sphi 0, %s77
      %s92 = sphi 0, %s78
      %s96 = sphi 0, %s96
      %s98 = sphi 0, %s96
      %s99 = sphi 0, %s98
      %s113 = sphi 0, %s99
      %s117 = sphi 0, %s117
      %s119 = sphi 0, %s117
      %s120 = sphi 0, %s119
      %s134 = sphi 0, %s120
      %s138 = sphi 0, %s138
      %s140 = sphi 0, %s138
      %s141 = sphi 0, %s140
      %s155 = sphi 0, %s141
      %s161 = sphi 0, %s163
      %s164 = sphi 0, %s161
      %s165 = sphi 0, %s164
      %s181 = sphi 0, %s165
    $region4: #{tpu_custom_call.1} parent=1 // loop_header_branch
      %23 = sbr.rel (%p21) target = $region8
    $region5: #{tpu_custom_call.1} parent=1 // loop_body
      %s25 = ssub.s32 %s20, 1
      %s26 = ssub.s32 %s20, 2
      %s27 = sadd.s32 %s20, 1
      %s28 = ssub.s32 %s20, %s27
      %p29 = scmp.eq.s32.totalorder %s28, 0
      %s31 = sadd.s32 %s30, 1
      %s32 = scalar_select %p29, %s30, %s31
      %p35 = pneg %p29
      %p36 = scmp.eq.s32.totalorder %s20, 1
      %p37 = por %p35, %p36
      %p38 = scmp.ne.s32.totalorder %s30, %s33
      %p39 = scmp.eq.s32.totalorder %s20, 0
      %p40 = por %p38, %p39
      %p41 = scmp.ne.s32.totalorder %s30, %s33
      %p42 = scmp.eq.s32.totalorder %s25, 1
      %p43 = por %p41, %p42
      %p44 = scmp.ne.s32.totalorder %s33, %s34
      %p45 = scmp.eq.s32.totalorder %s25, 0
      %p46 = por %p44, %p45
      %p47 = scmp.ne.s32.totalorder %s33, %s34
      %p48 = scmp.eq.s32.totalorder %s26, 1
      %p49 = por %p47, %p48
      %p51 = scmp.ne.s32.totalorder %s34, %s50
      %p52 = scmp.eq.s32.totalorder %s26, 0
      %p53 = por %p51, %p52
      %s55 = sadd.s32 %s54, 1
      %p58 = scmp.eq.s32.totalorder %s20, 1
      %p59 = scmp.ne.s32.totalorder %s54, %s56
      %p60 = scmp.eq.s32.totalorder %s20, 0
      %p61 = por %p59, %p60
      %p62 = scmp.ne.s32.totalorder %s54, %s56
      %p63 = scmp.eq.s32.totalorder %s25, 1
      %p64 = por %p62, %p63
      %p65 = scmp.ne.s32.totalorder %s56, %s57
      %p66 = scmp.eq.s32.totalorder %s25, 0
      %p67 = por %p65, %p66
      %p68 = scmp.ne.s32.totalorder %s56, %s57
      %p69 = scmp.eq.s32.totalorder %s26, 1
      %p70 = por %p68, %p69
      %p72 = scmp.ne.s32.totalorder %s57, %s71
      %p73 = scmp.eq.s32.totalorder %s26, 0
      %p74 = por %p72, %p73
      %s76 = sadd.s32 %s75, 1
      %p79 = scmp.eq.s32.totalorder %s20, 1
      %p80 = scmp.ne.s32.totalorder %s75, %s77
      %p81 = scmp.eq.s32.totalorder %s20, 0
      %p82 = por %p80, %p81
      %p83 = scmp.ne.s32.totalorder %s75, %s77
      %p84 = scmp.eq.s32.totalorder %s25, 1
      %p85 = por %p83, %p84
      %p86 = scmp.ne.s32.totalorder %s77, %s78
      %p87 = scmp.eq.s32.totalorder %s25, 0
      %p88 = por %p86, %p87
      %p89 = scmp.ne.s32.totalorder %s77, %s78
      %p90 = scmp.eq.s32.totalorder %s26, 1
      %p91 = por %p89, %p90
      %p93 = scmp.ne.s32.totalorder %s78, %s92
      %p94 = scmp.eq.s32.totalorder %s26, 0
      %p95 = por %p93, %p94
      %s97 = sadd.s32 %s96, 1
      %p100 = scmp.eq.s32.totalorder %s20, 1
      %p101 = scmp.ne.s32.totalorder %s96, %s98
      %p102 = scmp.eq.s32.totalorder %s20, 0
      %p103 = por %p101, %p102
      %p104 = scmp.ne.s32.totalorder %s96, %s98
      %p105 = scmp.eq.s32.totalorder %s25, 1
      %p106 = por %p104, %p105
      %p107 = scmp.ne.s32.totalorder %s98, %s99
      %p108 = scmp.eq.s32.totalorder %s25, 0
      %p109 = por %p107, %p108
      %p110 = scmp.ne.s32.totalorder %s98, %s99
      %p111 = scmp.eq.s32.totalorder %s26, 1
      %p112 = por %p110, %p111
      %p114 = scmp.ne.s32.totalorder %s99, %s113
      %p115 = scmp.eq.s32.totalorder %s26, 0
      %p116 = por %p114, %p115
      %s118 = sadd.s32 %s117, 1
      %p121 = scmp.eq.s32.totalorder %s20, 1
      %p122 = scmp.ne.s32.totalorder %s117, %s119
      %p123 = scmp.eq.s32.totalorder %s20, 0
      %p124 = por %p122, %p123
      %p125 = scmp.ne.s32.totalorder %s117, %s119
      %p126 = scmp.eq.s32.totalorder %s25, 1
      %p127 = por %p125, %p126
      %p128 = scmp.ne.s32.totalorder %s119, %s120
      %p129 = scmp.eq.s32.totalorder %s25, 0
      %p130 = por %p128, %p129
      %p131 = scmp.ne.s32.totalorder %s119, %s120
      %p132 = scmp.eq.s32.totalorder %s26, 1
      %p133 = por %p131, %p132
      %p135 = scmp.ne.s32.totalorder %s120, %s134
      %p136 = scmp.eq.s32.totalorder %s26, 0
      %p137 = por %p135, %p136
      %s139 = sadd.s32 %s138, 1
      %p142 = scmp.eq.s32.totalorder %s20, 1
      %p143 = scmp.ne.s32.totalorder %s138, %s140
      %p144 = scmp.eq.s32.totalorder %s20, 0
      %p145 = por %p143, %p144
      %p146 = scmp.ne.s32.totalorder %s138, %s140
      %p147 = scmp.eq.s32.totalorder %s25, 1
      %p148 = por %p146, %p147
      %p149 = scmp.ne.s32.totalorder %s140, %s141
      %p150 = scmp.eq.s32.totalorder %s25, 0
      %p151 = por %p149, %p150
      %p152 = scmp.ne.s32.totalorder %s140, %s141
      %p153 = scmp.eq.s32.totalorder %s26, 1
      %p154 = por %p152, %p153
      %p156 = scmp.ne.s32.totalorder %s141, %s155
      %p157 = scmp.eq.s32.totalorder %s26, 0
      %p158 = por %p156, %p157
      %s159 = ssub.s32 %s20, %s27
      %p160 = scmp.eq.s32.totalorder %s159, 0
      %s162 = sadd.s32 %s161, 1
      %s163 = scalar_select %p160, %s161, %s162
      %p166 = pneg %p160
      %p167 = scmp.eq.s32.totalorder %s20, 1
      %p168 = por %p166, %p167
      %p169 = scmp.ne.s32.totalorder %s161, %s164
      %p170 = scmp.eq.s32.totalorder %s20, 0
      %p171 = por %p169, %p170
      %p172 = scmp.ne.s32.totalorder %s161, %s164
      %p173 = scmp.eq.s32.totalorder %s25, 1
      %p174 = por %p172, %p173
      %p175 = scmp.ne.s32.totalorder %s164, %s165
      %p176 = scmp.eq.s32.totalorder %s25, 0
      %p177 = por %p175, %p176
      %p178 = scmp.ne.s32.totalorder %s164, %s165
      %p179 = scmp.eq.s32.totalorder %s26, 1
      %p180 = por %p178, %p179
      %p182 = scmp.ne.s32.totalorder %s165, %s181
      %p183 = scmp.eq.s32.totalorder %s26, 0
      %p184 = por %p182, %p183
      %p185 = scmp.le.s32.totalorder 1, %s20
      %p186 = scmp.lt.s32.totalorder %s20, 3
      %p187 = pnand %p185, %p186
      %p188 = pneg %p187
      // Predicated region
      $region9: #{tpu_custom_call.1} parent=5 // pred_check
        _
      $region10: #{tpu_custom_call.1} parent=5 // pred_check_branch
        %190 = sbr.rel (%p187) target = $region12
      $region11: #{tpu_custom_call.1} parent=5 // pred_region
        %s191 = ssub.s32 %s20, 1
        // Predicated region
        $region13: #{tpu_custom_call.1} parent=11 // pred_check
          %p192 = pneg %p67
        $region14: #{tpu_custom_call.1} parent=11 // pred_check_branch
          %194 = sbr.rel (%p192) target = $region16
        $region15: #{tpu_custom_call.1} parent=11 // pred_region
          %s196 = ssub.s32 9216, 9216
          %197 = vsyncadd [#allocation8], %s196
          %s198 = sshll.u32 [#allocation7], 4
          %s199 = int_to_ptr.vmem [resolvable:$true] %s198
          %204 = dma.hbm_to_vmem [thread:$0]  %s1, 9216, %s199, [#allocation8], 64, 64, 4
        $region16: #{tpu_custom_call.1} parent=11 // pred_fallthru
          _
        // Predicated region
        $region17: #{tpu_custom_call.1} parent=11 // pred_check
          %p205 = pneg %p88
        $region18: #{tpu_custom_call.1} parent=11 // pred_check_branch
          %207 = sbr.rel (%p205) target = $region20
        $region19: #{tpu_custom_call.1} parent=11 // pred_region
          _
        $region20: #{tpu_custom_call.1} parent=11 // pred_fallthru
          _
        // Predicated region
        $region21: #{tpu_custom_call.1} parent=11 // pred_check
          %p208 = pneg %p109
        $region22: #{tpu_custom_call.1} parent=11 // pred_check_branch
          %210 = sbr.rel (%p208) target = $region24
        $region23: #{tpu_custom_call.1} parent=11 // pred_region
          _
        $region24: #{tpu_custom_call.1} parent=11 // pred_fallthru
          _
        // Predicated region
        $region25: #{tpu_custom_call.1} parent=11 // pred_check
          %p211 = pneg %p130
        $region26: #{tpu_custom_call.1} parent=11 // pred_check_branch
          %213 = sbr.rel (%p211) target = $region28
        $region27: #{tpu_custom_call.1} parent=11 // pred_region
          %s215 = ssub.s32 9216, 9216
          %216 = vsyncadd [#allocation8], %s215
          %s217 = sshll.u32 [#allocation9], 4
          %s218 = int_to_ptr.vmem [resolvable:$true] %s217
          %223 = dma.hbm_to_vmem [thread:$0]  %s4, 9216, %s218, [#allocation8], 64, 64, 4
        $region28: #{tpu_custom_call.1} parent=11 // pred_fallthru
          _
        // Predicated region
        $region29: #{tpu_custom_call.1} parent=11 // pred_check
          %p224 = pneg %p151
        $region30: #{tpu_custom_call.1} parent=11 // pred_check_branch
          %226 = sbr.rel (%p224) target = $region32
        $region31: #{tpu_custom_call.1} parent=11 // pred_region
          %s228 = ssub.s32 1024, 1024
          %229 = vsyncadd [#allocation11], %s228
          %s230 = sshll.u32 [#allocation10], 4
          %s231 = int_to_ptr.vmem [resolvable:$true] %s230
          %236 = dma.hbm_to_vmem [thread:$0]  %s5, 1024, %s231, [#allocation11], 64, 64, 4
        $region32: #{tpu_custom_call.1} parent=11 // pred_fallthru
          _
      $region12: #{tpu_custom_call.1} parent=5 // pred_fallthru
        _
      %p237 = scmp.lt.s32.totalorder %s20, 2
      // Predicated region
      $region33: #{tpu_custom_call.1} parent=5 // pred_check
        %p238 = pneg %p237
      $region34: #{tpu_custom_call.1} parent=5 // pred_check_branch
        %240 = sbr.rel (%p238) target = $region36
      $region35: #{tpu_custom_call.1} parent=5 // pred_region
        // Predicated region
        $region37: #{tpu_custom_call.1} parent=35 // pred_check
          %p241 = pneg %p40
        $region38: #{tpu_custom_call.1} parent=35 // pred_check_branch
          %243 = sbr.rel (%p241) target = $region40
        $region39: #{tpu_custom_call.1} parent=35 // pred_region
          %s244 = sand.u32 %s30, 1
          %s245 = scalar_lea.sflag [#allocation5], %s244
          %s246 = sand.u32 %s30, 1
          %s247 = smul.addr %s246, 256
          %s248 = scalar_lea.vmem [#allocation4], %s247
          %s250 = ssub.s32 4096, 4096
          %251 = vsyncadd %s245, %s250
          %s252 = smul.addr %s20, 32
          %s253 = smul.addr %s252, 128
          %s254 = scalar_lea.hbm %s0, %s253
          %s255 = sshll.u32 %s248, 4
          %s256 = int_to_ptr.vmem [resolvable:$true] %s255
          %261 = dma.hbm_to_vmem [thread:$0]  %s254, 4096, %s256, %s245, 128, 128, 8
        $region40: #{tpu_custom_call.1} parent=35 // pred_fallthru
          _
      $region36: #{tpu_custom_call.1} parent=5 // pred_fallthru
        _
      %p262 = scmp.le.s32.totalorder 1, %s20
      %p263 = scmp.lt.s32.totalorder %s20, 3
      %p264 = pnand %p262, %p263
      %p265 = pneg %p264
      // Predicated region
      $region41: #{tpu_custom_call.1} parent=5 // pred_check
        _
      $region42: #{tpu_custom_call.1} parent=5 // pred_check_branch
        %267 = sbr.rel (%p264) target = $region44
      $region43: #{tpu_custom_call.1} parent=5 // pred_region
        %s268 = ssub.s32 %s20, 1
        %s269 = sand.u32 %s33, 1
        %s270 = scalar_lea.sflag [#allocation5], %s269
        %s271 = sand.u32 %s33, 1
        %s272 = smul.addr %s271, 256
        %s273 = scalar_lea.vmem [#allocation4], %s272
        // Predicated region
        $region45: #{tpu_custom_call.1} parent=43 // pred_check
          %p274 = pneg %p46
        $region46: #{tpu_custom_call.1} parent=43 // pred_check_branch
          %276 = sbr.rel (%p274) target = $region48
        $region47: #{tpu_custom_call.1} parent=43 // pred_region
          %277 = dma.done %s270, 4096
        $region48: #{tpu_custom_call.1} parent=43 // pred_fallthru
          _
        // Predicated region
        $region49: #{tpu_custom_call.1} parent=43 // pred_check
          %p278 = pneg %p67
        $region50: #{tpu_custom_call.1} parent=43 // pred_check_branch
          %280 = sbr.rel (%p278) target = $region52
        $region51: #{tpu_custom_call.1} parent=43 // pred_region
          %281 = dma.done [#allocation8], 9216
        $region52: #{tpu_custom_call.1} parent=43 // pred_fallthru
          _
        // Predicated region
        $region53: #{tpu_custom_call.1} parent=43 // pred_check
          %p282 = pneg %p130
        $region54: #{tpu_custom_call.1} parent=43 // pred_check_branch
          %284 = sbr.rel (%p282) target = $region56
        $region55: #{tpu_custom_call.1} parent=43 // pred_region
          %285 = dma.done [#allocation8], 9216
        $region56: #{tpu_custom_call.1} parent=43 // pred_fallthru
          _
        // Predicated region
        $region57: #{tpu_custom_call.1} parent=43 // pred_check
          %p286 = pneg %p151
        $region58: #{tpu_custom_call.1} parent=43 // pred_check_branch
          %288 = sbr.rel (%p286) target = $region60
        $region59: #{tpu_custom_call.1} parent=43 // pred_region
          %289 = dma.done [#allocation11], 1024
        $region60: #{tpu_custom_call.1} parent=43 // pred_fallthru
          _
        %s290 = sand.u32 %s33, 1
        %s291 = scalar_lea.sflag [#allocation5], %s290
        %s292 = sand.u32 %s33, 1
        %s293 = smul.addr %s292, 256
        %s294 = scalar_lea.vmem [#allocation4], %s293
        %p295 = pneg %p46
        %p296 = pneg %p43
        %p297 = pneg %p67
        %p298 = pneg %p64
        %p299 = pneg %p88
        %p300 = pneg %p85
        %p301 = pneg %p109
        %p302 = pneg %p106
        %p303 = pneg %p130
        %p304 = pneg %p127
        %p305 = pneg %p151
        %p306 = pneg %p148
        %p307 = pneg %p177
        %p308 = pneg %p174
        %s309 = sand.u32 %s164, 1
        %s310 = scalar_lea.sflag [#allocation6], %s309
        %s311 = sand.u32 %s164, 1
        %s312 = smul.addr %s311, 256
        %s313 = scalar_lea.vmem [#allocation12], %s312
        %315 = vst [vmem:[#allocation2] sm:$0xf] 0
        %316 = vst [vmem:[#allocation2 + $0x4] sm:$0xf] 0
        %317 = vst [vmem:[#allocation2 + $0x8] sm:$0x1] 0
        %s318 = scalar_lea.vmem [#allocation2], 204
        %319 = vst [vmem:[%s318] sm:$0xf] 0
        %320 = vst [vmem:[%s318 + $0x4] sm:$0xf] 0
        %321 = vst [vmem:[%s318 + $0x8] sm:$0x1] 0
        %vm322 = vcmask 1040384
        %vm323 = vsmask.f32 256
        %vm324 = vmand %vm322, %vm323
        %v325 = vld [vmem:[#allocation2] sm:$0x1]
        %v326 = vsel %vm324, 0, %v325
        %327 = vst [vmem:[#allocation2] sm:$0x1] %v326
        %v328 = vld [vmem:[#allocation2 + $0xc] sm:$0x1]
        %v329 = vsel %vm324, 0, %v328
        %330 = vst [vmem:[#allocation2 + $0xc] sm:$0x1] %v329
        %v331 = vld [vmem:[#allocation2 + $0x18] sm:$0x1]
        %v332 = vsel %vm324, 0, %v331
        %333 = vst [vmem:[#allocation2 + $0x18] sm:$0x1] %v332
        %v334 = vld [vmem:[#allocation2 + $0x24] sm:$0x1]
        %v335 = vsel %vm324, 0, %v334
        %336 = vst [vmem:[#allocation2 + $0x24] sm:$0x1] %v335
        %v337 = vld [vmem:[#allocation2 + $0x30] sm:$0x1]
        %v338 = vsel %vm324, 0, %v337
        %339 = vst [vmem:[#allocation2 + $0x30] sm:$0x1] %v338
        %v340 = vld [vmem:[#allocation2 + $0x3c] sm:$0x1]
        %v341 = vsel %vm324, 0, %v340
        %342 = vst [vmem:[#allocation2 + $0x3c] sm:$0x1] %v341
        %v343 = vld [vmem:[#allocation2 + $0x48] sm:$0x1]
        %v344 = vsel %vm324, 0, %v343
        %345 = vst [vmem:[#allocation2 + $0x48] sm:$0x1] %v344
        %v346 = vld [vmem:[#allocation2 + $0x54] sm:$0x1]
        %v347 = vsel %vm324, 0, %v346
        %348 = vst [vmem:[#allocation2 + $0x54] sm:$0x1] %v347
        %v349 = vld [vmem:[#allocation2 + $0x60] sm:$0x1]
        %v350 = vsel %vm324, 0, %v349
        %351 = vst [vmem:[#allocation2 + $0x60] sm:$0x1] %v350
        %v352 = vld [vmem:[#allocation2 + $0x6c] sm:$0x1]
        %v353 = vsel %vm324, 0, %v352
        %354 = vst [vmem:[#allocation2 + $0x6c] sm:$0x1] %v353
        %v355 = vld [vmem:[#allocation2 + $0x78] sm:$0x1]
        %v356 = vsel %vm324, 0, %v355
        %357 = vst [vmem:[#allocation2 + $0x78] sm:$0x1] %v356
        %v358 = vld [vmem:[#allocation2 + $0x84] sm:$0x1]
        %v359 = vsel %vm324, 0, %v358
        %360 = vst [vmem:[#allocation2 + $0x84] sm:$0x1] %v359
        %v361 = vld [vmem:[#allocation2 + $0x90] sm:$0x1]
        %v362 = vsel %vm324, 0, %v361
        %363 = vst [vmem:[#allocation2 + $0x90] sm:$0x1] %v362
        %v364 = vld [vmem:[#allocation2 + $0x9c] sm:$0x1]
        %v365 = vsel %vm324, 0, %v364
        %366 = vst [vmem:[#allocation2 + $0x9c] sm:$0x1] %v365
        %v367 = vld [vmem:[#allocation2 + $0xa8] sm:$0x1]
        %v368 = vsel %vm324, 0, %v367
        %369 = vst [vmem:[#allocation2 + $0xa8] sm:$0x1] %v368
        %v370 = vld [vmem:[#allocation2 + $0xb4] sm:$0x1]
        %v371 = vsel %vm324, 0, %v370
        %372 = vst [vmem:[#allocation2 + $0xb4] sm:$0x1] %v371
        %v373 = vld [vmem:[#allocation2 + $0xc0] sm:$0x1]
        %v374 = vsel %vm324, 0, %v373
        %375 = vst [vmem:[#allocation2 + $0xc0] sm:$0x1] %v374
        %v376 = vld [vmem:[#allocation2 + $0xcc] sm:$0x1]
        %v377 = vsel %vm324, 0, %v376
        %378 = vst [vmem:[#allocation2 + $0xcc] sm:$0x1] %v377
        %vm379 = vsmask.f32 7938
        %vm380 = vmand %vm322, %vm379
        %v381 = vld [vmem:[#allocation2 + $0x8] sm:$0x1]
        %v382 = vsel %vm380, 0, %v381
        %383 = vst [vmem:[#allocation2 + $0x8] sm:$0x1] %v382
        %v384 = vld [vmem:[#allocation2 + $0x14] sm:$0x1]
        %v385 = vsel %vm380, 0, %v384
        %386 = vst [vmem:[#allocation2 + $0x14] sm:$0x1] %v385
        %v387 = vld [vmem:[#allocation2 + $0x20] sm:$0x1]
        %v388 = vsel %vm380, 0, %v387
        %389 = vst [vmem:[#allocation2 + $0x20] sm:$0x1] %v388
        %v390 = vld [vmem:[#allocation2 + $0x2c] sm:$0x1]
        %v391 = vsel %vm380, 0, %v390
        %392 = vst [vmem:[#allocation2 + $0x2c] sm:$0x1] %v391
        %v393 = vld [vmem:[#allocation2 + $0x38] sm:$0x1]
        %v394 = vsel %vm380, 0, %v393
        %395 = vst [vmem:[#allocation2 + $0x38] sm:$0x1] %v394
        %v396 = vld [vmem:[#allocation2 + $0x44] sm:$0x1]
        %v397 = vsel %vm380, 0, %v396
        %398 = vst [vmem:[#allocation2 + $0x44] sm:$0x1] %v397
        %v399 = vld [vmem:[#allocation2 + $0x50] sm:$0x1]
        %v400 = vsel %vm380, 0, %v399
        %401 = vst [vmem:[#allocation2 + $0x50] sm:$0x1] %v400
        %v402 = vld [vmem:[#allocation2 + $0x5c] sm:$0x1]
        %v403 = vsel %vm380, 0, %v402
        %404 = vst [vmem:[#allocation2 + $0x5c] sm:$0x1] %v403
        %v405 = vld [vmem:[#allocation2 + $0x68] sm:$0x1]
        %v406 = vsel %vm380, 0, %v405
        %407 = vst [vmem:[#allocation2 + $0x68] sm:$0x1] %v406
        %v408 = vld [vmem:[#allocation2 + $0x74] sm:$0x1]
        %v409 = vsel %vm380, 0, %v408
        %410 = vst [vmem:[#allocation2 + $0x74] sm:$0x1] %v409
        %v411 = vld [vmem:[#allocation2 + $0x80] sm:$0x1]
        %v412 = vsel %vm380, 0, %v411
        %413 = vst [vmem:[#allocation2 + $0x80] sm:$0x1] %v412
        %v414 = vld [vmem:[#allocation2 + $0x8c] sm:$0x1]
        %v415 = vsel %vm380, 0, %v414
        %416 = vst [vmem:[#allocation2 + $0x8c] sm:$0x1] %v415
        %v417 = vld [vmem:[#allocation2 + $0x98] sm:$0x1]
        %v418 = vsel %vm380, 0, %v417
        %419 = vst [vmem:[#allocation2 + $0x98] sm:$0x1] %v418
        %v420 = vld [vmem:[#allocation2 + $0xa4] sm:$0x1]
        %v421 = vsel %vm380, 0, %v420
        %422 = vst [vmem:[#allocation2 + $0xa4] sm:$0x1] %v421
        %v423 = vld [vmem:[#allocation2 + $0xb0] sm:$0x1]
        %v424 = vsel %vm380, 0, %v423
        %425 = vst [vmem:[#allocation2 + $0xb0] sm:$0x1] %v424
        %v426 = vld [vmem:[#allocation2 + $0xbc] sm:$0x1]
        %v427 = vsel %vm380, 0, %v426
        %428 = vst [vmem:[#allocation2 + $0xbc] sm:$0x1] %v427
        %v429 = vld [vmem:[#allocation2 + $0xc8] sm:$0x1]
        %v430 = vsel %vm380, 0, %v429
        %431 = vst [vmem:[#allocation2 + $0xc8] sm:$0x1] %v430
        %v432 = vld [vmem:[#allocation2 + $0xd4] sm:$0x1]
        %v433 = vsel %vm380, 0, %v432
        %434 = vst [vmem:[#allocation2 + $0xd4] sm:$0x1] %v433
        %v435 = vld [vmem:[%s273] sm:$0xff]
        %v436 = vld [vmem:[%s273 + $0x8] sm:$0xff]
        %v437 = vld [vmem:[%s273 + $0x10] sm:$0xff]
        %v438 = vld [vmem:[%s273 + $0x18] sm:$0xff]
        %v439 = vld [vmem:[%s273 + $0x20] sm:$0xff]
        %v440 = vld [vmem:[%s273 + $0x28] sm:$0xff]
        %v441 = vld [vmem:[%s273 + $0x30] sm:$0xff]
        %v442 = vld [vmem:[%s273 + $0x38] sm:$0xff]
        %v443 = vld [vmem:[%s273 + $0x40] sm:$0xff]
        %v444 = vld [vmem:[%s273 + $0x48] sm:$0xff]
        %v445 = vld [vmem:[%s273 + $0x50] sm:$0xff]
        %v446 = vld [vmem:[%s273 + $0x58] sm:$0xff]
        %v447 = vld [vmem:[%s273 + $0x60] sm:$0xff]
        %v448 = vld [vmem:[%s273 + $0x68] sm:$0xff]
        %v449 = vld [vmem:[%s273 + $0x70] sm:$0xff]
        %v450 = vld [vmem:[%s273 + $0x78] sm:$0xff]
        %v451 = vld [vmem:[%s273 + $0x80] sm:$0xff]
        %v452 = vld [vmem:[%s273 + $0x88] sm:$0xff]
        %v453 = vld [vmem:[%s273 + $0x90] sm:$0xff]
        %v454 = vld [vmem:[%s273 + $0x98] sm:$0xff]
        %v455 = vld [vmem:[%s273 + $0xa0] sm:$0xff]
        %v456 = vld [vmem:[%s273 + $0xa8] sm:$0xff]
        %v457 = vld [vmem:[%s273 + $0xb0] sm:$0xff]
        %v458 = vld [vmem:[%s273 + $0xb8] sm:$0xff]
        %v459 = vld [vmem:[%s273 + $0xc0] sm:$0xff]
        %v460 = vld [vmem:[%s273 + $0xc8] sm:$0xff]
        %v461 = vld [vmem:[%s273 + $0xd0] sm:$0xff]
        %v462 = vld [vmem:[%s273 + $0xd8] sm:$0xff]
        %v463 = vld [vmem:[%s273 + $0xe0] sm:$0xff]
        %v464 = vld [vmem:[%s273 + $0xe8] sm:$0xff]
        %v465 = vld [vmem:[%s273 + $0xf0] sm:$0xff]
        %v466 = vld [vmem:[%s273 + $0xf8] sm:$0xff]
        %v467 = vpack.c.bf16 %v436, %v435
        %v468 = vpack.c.bf16 %v438, %v437
        %v469 = vpack.c.bf16 %v440, %v439
        %v470 = vpack.c.bf16 %v442, %v441
        %v471 = vpack.c.bf16 %v444, %v443
        %v472 = vpack.c.bf16 %v446, %v445
        %v473 = vpack.c.bf16 %v448, %v447
        %v474 = vpack.c.bf16 %v450, %v449
        %v475 = vpack.c.bf16 %v452, %v451
        %v476 = vpack.c.bf16 %v454, %v453
        %v477 = vpack.c.bf16 %v456, %v455
        %v478 = vpack.c.bf16 %v458, %v457
        %v479 = vpack.c.bf16 %v460, %v459
        %v480 = vpack.c.bf16 %v462, %v461
        %v481 = vpack.c.bf16 %v464, %v463
        %v482 = vpack.c.bf16 %v466, %v465
        %v499 = vunpack.c.l.b16 %v467
        %v500 = vunpack.c.h.b16 %v467
        %v501 = vunpack.c.l.b16 %v468
        %v502 = vunpack.c.h.b16 %v468
        %v503 = vunpack.c.l.b16 %v469
        %v504 = vunpack.c.h.b16 %v469
        %v505 = vunpack.c.l.b16 %v470
        %v506 = vunpack.c.h.b16 %v470
        %v507 = vunpack.c.l.b16 %v471
        %v508 = vunpack.c.h.b16 %v471
        %v509 = vunpack.c.l.b16 %v472
        %v510 = vunpack.c.h.b16 %v472
        %v511 = vunpack.c.l.b16 %v473
        %v512 = vunpack.c.h.b16 %v473
        %v513 = vunpack.c.l.b16 %v474
        %v514 = vunpack.c.h.b16 %v474
        %v515 = vunpack.c.l.b16 %v475
        %v516 = vunpack.c.h.b16 %v475
        %v517 = vunpack.c.l.b16 %v476
        %v518 = vunpack.c.h.b16 %v476
        %v519 = vunpack.c.l.b16 %v477
        %v520 = vunpack.c.h.b16 %v477
        %v521 = vunpack.c.l.b16 %v478
        %v522 = vunpack.c.h.b16 %v478
        %v523 = vunpack.c.l.b16 %v479
        %v524 = vunpack.c.h.b16 %v479
        %v525 = vunpack.c.l.b16 %v480
        %v526 = vunpack.c.h.b16 %v480
        %v527 = vunpack.c.l.b16 %v481
        %v528 = vunpack.c.h.b16 %v481
        %v529 = vunpack.c.l.b16 %v482
        %v530 = vunpack.c.h.b16 %v482
        %v531 = vpack.c.b16 %v499, %v499
        %v532 = vpack.c.b16 %v500, %v500
        %v533 = vpack.c.b16 %v501, %v501
        %v534 = vpack.c.b16 %v502, %v502
        %v535 = vpack.c.b16 %v503, %v503
        %v536 = vpack.c.b16 %v504, %v504
        %v537 = vpack.c.b16 %v505, %v505
        %v538 = vpack.c.b16 %v506, %v506
        %v539 = vpack.c.b16 %v507, %v507
        %v540 = vpack.c.b16 %v508, %v508
        %v541 = vpack.c.b16 %v509, %v509
        %v542 = vpack.c.b16 %v510, %v510
        %v543 = vpack.c.b16 %v511, %v511
        %v544 = vpack.c.b16 %v512, %v512
        %v545 = vpack.c.b16 %v513, %v513
        %v546 = vpack.c.b16 %v514, %v514
        %v547 = vpack.c.b16 %v515, %v515
        %v548 = vpack.c.b16 %v516, %v516
        %v549 = vpack.c.b16 %v517, %v517
        %v550 = vpack.c.b16 %v518, %v518
        %v551 = vpack.c.b16 %v519, %v519
        %v552 = vpack.c.b16 %v520, %v520
        %v553 = vpack.c.b16 %v521, %v521
        %v554 = vpack.c.b16 %v522, %v522
        %v555 = vpack.c.b16 %v523, %v523
        %v556 = vpack.c.b16 %v524, %v524
        %v557 = vpack.c.b16 %v525, %v525
        %v558 = vpack.c.b16 %v526, %v526
        %v559 = vpack.c.b16 %v527, %v527
        %v560 = vpack.c.b16 %v528, %v528
        %v561 = vpack.c.b16 %v529, %v529
        %v562 = vpack.c.b16 %v530, %v530
        %vm563 = vsmask.f32 4368
        %vm564 = vmor %vm323, %vm563
        %v566 = vshrl.u32 %v531, 16
        %v568 = vrot.slane %v566, 7
        %v569 = vshll.u32 %v531, 16
        %v571 = vor.u32 %v568, %v569
        %v572 = vrot.slane %v568, 4
        %v574 = vshrl.u32 %v532, 16
        %v576 = vrot.slane %v574, 7
        %v577 = vshll.u32 %v532, 16
        %v579 = vor.u32 %v576, %v577
        %v580 = vsel %vm564, %v572, %v579
        %v581 = vrot.slane %v576, 4
        %v583 = vshrl.u32 %v533, 16
        %v585 = vrot.slane %v583, 7
        %v586 = vshll.u32 %v533, 16
        %v588 = vor.u32 %v585, %v586
        %v589 = vrot.slane %v585, 4
        %v591 = vshrl.u32 %v534, 16
        %v593 = vrot.slane %v591, 7
        %v594 = vshll.u32 %v534, 16
        %v596 = vor.u32 %v593, %v594
        %v597 = vsel %vm564, %v589, %v596
        %v598 = vrot.slane %v593, 4
        %v600 = vshrl.u32 %v535, 16
        %v602 = vrot.slane %v600, 7
        %v603 = vshll.u32 %v535, 16
        %v605 = vor.u32 %v602, %v603
        %v606 = vrot.slane %v602, 4
        %v608 = vshrl.u32 %v536, 16
        %v610 = vrot.slane %v608, 7
        %v611 = vshll.u32 %v536, 16
        %v613 = vor.u32 %v610, %v611
        %v614 = vsel %vm564, %v606, %v613
        %v615 = vrot.slane %v610, 4
        %v617 = vshrl.u32 %v537, 16
        %v619 = vrot.slane %v617, 7
        %v620 = vshll.u32 %v537, 16
        %v622 = vor.u32 %v619, %v620
        %v623 = vrot.slane %v619, 4
        %v625 = vshrl.u32 %v538, 16
        %v627 = vrot.slane %v625, 7
        %v628 = vshll.u32 %v538, 16
        %v630 = vor.u32 %v627, %v628
        %v631 = vsel %vm564, %v623, %v630
        %v632 = vrot.slane %v627, 4
        %v634 = vshrl.u32 %v539, 16
        %v636 = vrot.slane %v634, 7
        %v637 = vshll.u32 %v539, 16
        %v639 = vor.u32 %v636, %v637
        %v640 = vrot.slane %v636, 4
        %v642 = vshrl.u32 %v540, 16
        %v644 = vrot.slane %v642, 7
        %v645 = vshll.u32 %v540, 16
        %v647 = vor.u32 %v644, %v645
        %v648 = vsel %vm564, %v640, %v647
        %v649 = vrot.slane %v644, 4
        %v651 = vshrl.u32 %v541, 16
        %v653 = vrot.slane %v651, 7
        %v654 = vshll.u32 %v541, 16
        %v656 = vor.u32 %v653, %v654
        %v657 = vrot.slane %v653, 4
        %v659 = vshrl.u32 %v542, 16
        %v661 = vrot.slane %v659, 7
        %v662 = vshll.u32 %v542, 16
        %v664 = vor.u32 %v661, %v662
        %v665 = vsel %vm564, %v657, %v664
        %v666 = vrot.slane %v661, 4
        %v668 = vshrl.u32 %v543, 16
        %v670 = vrot.slane %v668, 7
        %v671 = vshll.u32 %v543, 16
        %v673 = vor.u32 %v670, %v671
        %v674 = vrot.slane %v670, 4
        %v676 = vshrl.u32 %v544, 16
        %v678 = vrot.slane %v676, 7
        %v679 = vshll.u32 %v544, 16
        %v681 = vor.u32 %v678, %v679
        %v682 = vsel %vm564, %v674, %v681
        %v683 = vrot.slane %v678, 4
        %v685 = vshrl.u32 %v545, 16
        %v687 = vrot.slane %v685, 7
        %v688 = vshll.u32 %v545, 16
        %v690 = vor.u32 %v687, %v688
        %v691 = vrot.slane %v687, 4
        %v693 = vshrl.u32 %v546, 16
        %v695 = vrot.slane %v693, 7
        %v696 = vshll.u32 %v546, 16
        %v698 = vor.u32 %v695, %v696
        %v699 = vsel %vm564, %v691, %v698
        %v700 = vrot.slane %v695, 4
        %v702 = vshrl.u32 %v547, 16
        %v704 = vrot.slane %v702, 7
        %v705 = vshll.u32 %v547, 16
        %v707 = vor.u32 %v704, %v705
        %v708 = vrot.slane %v704, 4
        %v710 = vshrl.u32 %v548, 16
        %v712 = vrot.slane %v710, 7
        %v713 = vshll.u32 %v548, 16
        %v715 = vor.u32 %v712, %v713
        %v716 = vsel %vm564, %v708, %v715
        %v717 = vrot.slane %v712, 4
        %v719 = vshrl.u32 %v549, 16
        %v721 = vrot.slane %v719, 7
        %v722 = vshll.u32 %v549, 16
        %v724 = vor.u32 %v721, %v722
        %v725 = vrot.slane %v721, 4
        %v727 = vshrl.u32 %v550, 16
        %v729 = vrot.slane %v727, 7
        %v730 = vshll.u32 %v550, 16
        %v732 = vor.u32 %v729, %v730
        %v733 = vsel %vm564, %v725, %v732
        %v734 = vrot.slane %v729, 4
        %v736 = vshrl.u32 %v551, 16
        %v738 = vrot.slane %v736, 7
        %v739 = vshll.u32 %v551, 16
        %v741 = vor.u32 %v738, %v739
        %v742 = vrot.slane %v738, 4
        %v744 = vshrl.u32 %v552, 16
        %v746 = vrot.slane %v744, 7
        %v747 = vshll.u32 %v552, 16
        %v749 = vor.u32 %v746, %v747
        %v750 = vsel %vm564, %v742, %v749
        %v751 = vrot.slane %v746, 4
        %v753 = vshrl.u32 %v553, 16
        %v755 = vrot.slane %v753, 7
        %v756 = vshll.u32 %v553, 16
        %v758 = vor.u32 %v755, %v756
        %v759 = vrot.slane %v755, 4
        %v761 = vshrl.u32 %v554, 16
        %v763 = vrot.slane %v761, 7
        %v764 = vshll.u32 %v554, 16
        %v766 = vor.u32 %v763, %v764
        %v767 = vsel %vm564, %v759, %v766
        %v768 = vrot.slane %v763, 4
        %v770 = vshrl.u32 %v555, 16
        %v772 = vrot.slane %v770, 7
        %v773 = vshll.u32 %v555, 16
        %v775 = vor.u32 %v772, %v773
        %v776 = vrot.slane %v772, 4
        %v778 = vshrl.u32 %v556, 16
        %v780 = vrot.slane %v778, 7
        %v781 = vshll.u32 %v556, 16
        %v783 = vor.u32 %v780, %v781
        %v784 = vsel %vm564, %v776, %v783
        %v785 = vrot.slane %v780, 4
        %v787 = vshrl.u32 %v557, 16
        %v789 = vrot.slane %v787, 7
        %v790 = vshll.u32 %v557, 16
        %v792 = vor.u32 %v789, %v790
        %v793 = vrot.slane %v789, 4
        %v795 = vshrl.u32 %v558, 16
        %v797 = vrot.slane %v795, 7
        %v798 = vshll.u32 %v558, 16
        %v800 = vor.u32 %v797, %v798
        %v801 = vsel %vm564, %v793, %v800
        %v802 = vrot.slane %v797, 4
        %v804 = vshrl.u32 %v559, 16
        %v806 = vrot.slane %v804, 7
        %v807 = vshll.u32 %v559, 16
        %v809 = vor.u32 %v806, %v807
        %v810 = vrot.slane %v806, 4
        %v812 = vshrl.u32 %v560, 16
        %v814 = vrot.slane %v812, 7
        %v815 = vshll.u32 %v560, 16
        %v817 = vor.u32 %v814, %v815
        %v818 = vsel %vm564, %v810, %v817
        %v819 = vrot.slane %v814, 4
        %v821 = vshrl.u32 %v561, 16
        %v823 = vrot.slane %v821, 7
        %v824 = vshll.u32 %v561, 16
        %v826 = vor.u32 %v823, %v824
        %v827 = vrot.slane %v823, 4
        %v829 = vshrl.u32 %v562, 16
        %v831 = vrot.slane %v829, 7
        %v832 = vshll.u32 %v562, 16
        %v834 = vor.u32 %v831, %v832
        %v835 = vsel %vm564, %v827, %v834
        %v836 = vrot.slane %v831, 4
        %s885 = scalar_lea.vmem [#allocation2], 12
        %vm886 = vcmask 1043456
        %vm887 = vmand %vm886, %vm379
        %v888 = vld [vmem:[%s885] sm:$0xf]
        %v889 = vsel %vm887, %v571, %v888
        %890 = vst [vmem:[%s885] sm:$0xf] %v889
        %891 = vst [vmem:[%s885 + $0x4] sm:$0xf] %v580
        %v892 = vld [vmem:[%s885 + $0x8] sm:$0x1]
        %v893 = vsel %vm324, %v581, %v892
        %894 = vst [vmem:[%s885 + $0x8] sm:$0x1] %v893
        %v895 = vld [vmem:[%s885 + $0xc] sm:$0xf]
        %v896 = vsel %vm887, %v588, %v895
        %897 = vst [vmem:[%s885 + $0xc] sm:$0xf] %v896
        %898 = vst [vmem:[%s885 + $0x10] sm:$0xf] %v597
        %v899 = vld [vmem:[%s885 + $0x14] sm:$0x1]
        %v900 = vsel %vm324, %v598, %v899
        %901 = vst [vmem:[%s885 + $0x14] sm:$0x1] %v900
        %v902 = vld [vmem:[%s885 + $0x18] sm:$0xf]
        %v903 = vsel %vm887, %v605, %v902
        %904 = vst [vmem:[%s885 + $0x18] sm:$0xf] %v903
        %905 = vst [vmem:[%s885 + $0x1c] sm:$0xf] %v614
        %v906 = vld [vmem:[%s885 + $0x20] sm:$0x1]
        %v907 = vsel %vm324, %v615, %v906
        %908 = vst [vmem:[%s885 + $0x20] sm:$0x1] %v907
        %v909 = vld [vmem:[%s885 + $0x24] sm:$0xf]
        %v910 = vsel %vm887, %v622, %v909
        %911 = vst [vmem:[%s885 + $0x24] sm:$0xf] %v910
        %912 = vst [vmem:[%s885 + $0x28] sm:$0xf] %v631
        %v913 = vld [vmem:[%s885 + $0x2c] sm:$0x1]
        %v914 = vsel %vm324, %v632, %v913
        %915 = vst [vmem:[%s885 + $0x2c] sm:$0x1] %v914
        %v916 = vld [vmem:[%s885 + $0x30] sm:$0xf]
        %v917 = vsel %vm887, %v639, %v916
        %918 = vst [vmem:[%s885 + $0x30] sm:$0xf] %v917
        %919 = vst [vmem:[%s885 + $0x34] sm:$0xf] %v648
        %v920 = vld [vmem:[%s885 + $0x38] sm:$0x1]
        %v921 = vsel %vm324, %v649, %v920
        %922 = vst [vmem:[%s885 + $0x38] sm:$0x1] %v921
        %v923 = vld [vmem:[%s885 + $0x3c] sm:$0xf]
        %v924 = vsel %vm887, %v656, %v923
        %925 = vst [vmem:[%s885 + $0x3c] sm:$0xf] %v924
        %926 = vst [vmem:[%s885 + $0x40] sm:$0xf] %v665
        %v927 = vld [vmem:[%s885 + $0x44] sm:$0x1]
        %v928 = vsel %vm324, %v666, %v927
        %929 = vst [vmem:[%s885 + $0x44] sm:$0x1] %v928
        %v930 = vld [vmem:[%s885 + $0x48] sm:$0xf]
        %v931 = vsel %vm887, %v673, %v930
        %932 = vst [vmem:[%s885 + $0x48] sm:$0xf] %v931
        %933 = vst [vmem:[%s885 + $0x4c] sm:$0xf] %v682
        %v934 = vld [vmem:[%s885 + $0x50] sm:$0x1]
        %v935 = vsel %vm324, %v683, %v934
        %936 = vst [vmem:[%s885 + $0x50] sm:$0x1] %v935
        %v937 = vld [vmem:[%s885 + $0x54] sm:$0xf]
        %v938 = vsel %vm887, %v690, %v937
        %939 = vst [vmem:[%s885 + $0x54] sm:$0xf] %v938
        %940 = vst [vmem:[%s885 + $0x58] sm:$0xf] %v699
        %v941 = vld [vmem:[%s885 + $0x5c] sm:$0x1]
        %v942 = vsel %vm324, %v700, %v941
        %943 = vst [vmem:[%s885 + $0x5c] sm:$0x1] %v942
        %v944 = vld [vmem:[%s885 + $0x60] sm:$0xf]
        %v945 = vsel %vm887, %v707, %v944
        %946 = vst [vmem:[%s885 + $0x60] sm:$0xf] %v945
        %947 = vst [vmem:[%s885 + $0x64] sm:$0xf] %v716
        %v948 = vld [vmem:[%s885 + $0x68] sm:$0x1]
        %v949 = vsel %vm324, %v717, %v948
        %950 = vst [vmem:[%s885 + $0x68] sm:$0x1] %v949
        %v951 = vld [vmem:[%s885 + $0x6c] sm:$0xf]
        %v952 = vsel %vm887, %v724, %v951
        %953 = vst [vmem:[%s885 + $0x6c] sm:$0xf] %v952
        %954 = vst [vmem:[%s885 + $0x70] sm:$0xf] %v733
        %v955 = vld [vmem:[%s885 + $0x74] sm:$0x1]
        %v956 = vsel %vm324, %v734, %v955
        %957 = vst [vmem:[%s885 + $0x74] sm:$0x1] %v956
        %v958 = vld [vmem:[%s885 + $0x78] sm:$0xf]
        %v959 = vsel %vm887, %v741, %v958
        %960 = vst [vmem:[%s885 + $0x78] sm:$0xf] %v959
        %961 = vst [vmem:[%s885 + $0x7c] sm:$0xf] %v750
        %v962 = vld [vmem:[%s885 + $0x80] sm:$0x1]
        %v963 = vsel %vm324, %v751, %v962
        %964 = vst [vmem:[%s885 + $0x80] sm:$0x1] %v963
        %v965 = vld [vmem:[%s885 + $0x84] sm:$0xf]
        %v966 = vsel %vm887, %v758, %v965
        %967 = vst [vmem:[%s885 + $0x84] sm:$0xf] %v966
        %968 = vst [vmem:[%s885 + $0x88] sm:$0xf] %v767
        %v969 = vld [vmem:[%s885 + $0x8c] sm:$0x1]
        %v970 = vsel %vm324, %v768, %v969
        %971 = vst [vmem:[%s885 + $0x8c] sm:$0x1] %v970
        %v972 = vld [vmem:[%s885 + $0x90] sm:$0xf]
        %v973 = vsel %vm887, %v775, %v972
        %974 = vst [vmem:[%s885 + $0x90] sm:$0xf] %v973
        %975 = vst [vmem:[%s885 + $0x94] sm:$0xf] %v784
        %v976 = vld [vmem:[%s885 + $0x98] sm:$0x1]
        %v977 = vsel %vm324, %v785, %v976
        %978 = vst [vmem:[%s885 + $0x98] sm:$0x1] %v977
        %v979 = vld [vmem:[%s885 + $0x9c] sm:$0xf]
        %v980 = vsel %vm887, %v792, %v979
        %981 = vst [vmem:[%s885 + $0x9c] sm:$0xf] %v980
        %982 = vst [vmem:[%s885 + $0xa0] sm:$0xf] %v801
        %v983 = vld [vmem:[%s885 + $0xa4] sm:$0x1]
        %v984 = vsel %vm324, %v802, %v983
        %985 = vst [vmem:[%s885 + $0xa4] sm:$0x1] %v984
        %v986 = vld [vmem:[%s885 + $0xa8] sm:$0xf]
        %v987 = vsel %vm887, %v809, %v986
        %988 = vst [vmem:[%s885 + $0xa8] sm:$0xf] %v987
        %989 = vst [vmem:[%s885 + $0xac] sm:$0xf] %v818
        %v990 = vld [vmem:[%s885 + $0xb0] sm:$0x1]
        %v991 = vsel %vm324, %v819, %v990
        %992 = vst [vmem:[%s885 + $0xb0] sm:$0x1] %v991
        %v993 = vld [vmem:[%s885 + $0xb4] sm:$0xf]
        %v994 = vsel %vm887, %v826, %v993
        %995 = vst [vmem:[%s885 + $0xb4] sm:$0xf] %v994
        %996 = vst [vmem:[%s885 + $0xb8] sm:$0xf] %v835
        %v997 = vld [vmem:[%s885 + $0xbc] sm:$0x1]
        %v998 = vsel %vm324, %v836, %v997
        %999 = vst [vmem:[%s885 + $0xbc] sm:$0x1] %v998
        %v1000 = vld [vmem:[#allocation2] sm:$0xf]
        %v1001 = vld [vmem:[#allocation2 + $0x4] sm:$0xf]
        %v1002 = vld [vmem:[#allocation2 + $0xc] sm:$0xf]
        %v1003 = vld [vmem:[#allocation2 + $0x10] sm:$0xf]
        %v1004 = vld [vmem:[#allocation2 + $0x18] sm:$0xf]
        %v1005 = vld [vmem:[#allocation2 + $0x1c] sm:$0xf]
        %v1006 = vld [vmem:[#allocation2 + $0x24] sm:$0xf]
        %v1007 = vld [vmem:[#allocation2 + $0x28] sm:$0xf]
        %v1008 = vld [vmem:[#allocation2 + $0x30] sm:$0xf]
        %v1009 = vld [vmem:[#allocation2 + $0x34] sm:$0xf]
        %v1010 = vld [vmem:[#allocation2 + $0x3c] sm:$0xf]
        %v1011 = vld [vmem:[#allocation2 + $0x40] sm:$0xf]
        %v1012 = vld [vmem:[#allocation2 + $0x48] sm:$0xf]
        %v1013 = vld [vmem:[#allocation2 + $0x4c] sm:$0xf]
        %v1014 = vld [vmem:[#allocation2 + $0x54] sm:$0xf]
        %v1015 = vld [vmem:[#allocation2 + $0x58] sm:$0xf]
        %v1016 = vld [vmem:[#allocation2 + $0x60] sm:$0xf]
        %v1017 = vld [vmem:[#allocation2 + $0x64] sm:$0xf]
        %v1018 = vld [vmem:[#allocation2 + $0x6c] sm:$0xf]
        %v1019 = vld [vmem:[#allocation2 + $0x70] sm:$0xf]
        %v1020 = vld [vmem:[#allocation2 + $0x78] sm:$0xf]
        %v1021 = vld [vmem:[#allocation2 + $0x7c] sm:$0xf]
        %v1022 = vld [vmem:[#allocation2 + $0x84] sm:$0xf]
        %v1023 = vld [vmem:[#allocation2 + $0x88] sm:$0xf]
        %v1024 = vld [vmem:[#allocation2 + $0x90] sm:$0xf]
        %v1025 = vld [vmem:[#allocation2 + $0x94] sm:$0xf]
        %v1026 = vld [vmem:[#allocation2 + $0x9c] sm:$0xf]
        %v1027 = vld [vmem:[#allocation2 + $0xa0] sm:$0xf]
        %v1028 = vld [vmem:[#allocation2 + $0xa8] sm:$0xf]
        %v1029 = vld [vmem:[#allocation2 + $0xac] sm:$0xf]
        %v1030 = vld [vmem:[#allocation2 + $0xb4] sm:$0xf]
        %v1031 = vld [vmem:[#allocation2 + $0xb8] sm:$0xf]
        %1032 = vst [vmem:[#allocation3] sm:$0xf] %v1000
        %1033 = vst [vmem:[#allocation3 + $0x24] sm:$0xf] %v1001
        %1034 = vst [vmem:[#allocation3 + $0x48] sm:$0xf] %v1002
        %1035 = vst [vmem:[#allocation3 + $0x6c] sm:$0xf] %v1003
        %1036 = vst [vmem:[#allocation3 + $0x90] sm:$0xf] %v1004
        %1037 = vst [vmem:[#allocation3 + $0xb4] sm:$0xf] %v1005
        %1038 = vst [vmem:[#allocation3 + $0xd8] sm:$0xf] %v1006
        %1039 = vst [vmem:[#allocation3 + $0xfc] sm:$0xf] %v1007
        %1040 = vst [vmem:[#allocation3 + $0x120] sm:$0xf] %v1008
        %1041 = vst [vmem:[#allocation3 + $0x144] sm:$0xf] %v1009
        %1042 = vst [vmem:[#allocation3 + $0x168] sm:$0xf] %v1010
        %1043 = vst [vmem:[#allocation3 + $0x18c] sm:$0xf] %v1011
        %1044 = vst [vmem:[#allocation3 + $0x1b0] sm:$0xf] %v1012
        %1045 = vst [vmem:[#allocation3 + $0x1d4] sm:$0xf] %v1013
        %1046 = vst [vmem:[#allocation3 + $0x1f8] sm:$0xf] %v1014
        %1047 = vst [vmem:[#allocation3 + $0x21c] sm:$0xf] %v1015
        %1048 = vst [vmem:[#allocation3 + $0x240] sm:$0xf] %v1016
        %1049 = vst [vmem:[#allocation3 + $0x264] sm:$0xf] %v1017
        %1050 = vst [vmem:[#allocation3 + $0x288] sm:$0xf] %v1018
        %1051 = vst [vmem:[#allocation3 + $0x2ac] sm:$0xf] %v1019
        %1052 = vst [vmem:[#allocation3 + $0x2d0] sm:$0xf] %v1020
        %1053 = vst [vmem:[#allocation3 + $0x2f4] sm:$0xf] %v1021
        %1054 = vst [vmem:[#allocation3 + $0x318] sm:$0xf] %v1022
        %1055 = vst [vmem:[#allocation3 + $0x33c] sm:$0xf] %v1023
        %1056 = vst [vmem:[#allocation3 + $0x360] sm:$0xf] %v1024
        %1057 = vst [vmem:[#allocation3 + $0x384] sm:$0xf] %v1025
        %1058 = vst [vmem:[#allocation3 + $0x3a8] sm:$0xf] %v1026
        %1059 = vst [vmem:[#allocation3 + $0x3cc] sm:$0xf] %v1027
        %1060 = vst [vmem:[#allocation3 + $0x3f0] sm:$0xf] %v1028
        %1061 = vst [vmem:[#allocation3 + $0x414] sm:$0xf] %v1029
        %1062 = vst [vmem:[#allocation3 + $0x438] sm:$0xf] %v1030
        %1063 = vst [vmem:[#allocation3 + $0x45c] sm:$0xf] %v1031
        %v1064 = vld [vmem:[#allocation2] sm:$0xf]
        %v1065 = vld [vmem:[#allocation2 + $0x4] sm:$0xf]
        %v1066 = vld [vmem:[#allocation2 + $0x8] sm:$0x1]
        %v1067 = vld [vmem:[#allocation2 + $0xc] sm:$0xf]
        %v1068 = vld [vmem:[#allocation2 + $0x10] sm:$0xf]
        %v1069 = vld [vmem:[#allocation2 + $0x14] sm:$0x1]
        %v1070 = vld [vmem:[#allocation2 + $0x18] sm:$0xf]
        %v1071 = vld [vmem:[#allocation2 + $0x1c] sm:$0xf]
        %v1072 = vld [vmem:[#allocation2 + $0x20] sm:$0x1]
        %v1073 = vld [vmem:[#allocation2 + $0x24] sm:$0xf]
        %v1074 = vld [vmem:[#allocation2 + $0x28] sm:$0xf]
        %v1075 = vld [vmem:[#allocation2 + $0x2c] sm:$0x1]
        %v1076 = vld [vmem:[#allocation2 + $0x30] sm:$0xf]
        %v1077 = vld [vmem:[#allocation2 + $0x34] sm:$0xf]
        %v1078 = vld [vmem:[#allocation2 + $0x38] sm:$0x1]
        %v1079 = vld [vmem:[#allocation2 + $0x3c] sm:$0xf]
        %v1080 = vld [vmem:[#allocation2 + $0x40] sm:$0xf]
        %v1081 = vld [vmem:[#allocation2 + $0x44] sm:$0x1]
        %v1082 = vld [vmem:[#allocation2 + $0x48] sm:$0xf]
        %v1083 = vld [vmem:[#allocation2 + $0x4c] sm:$0xf]
        %v1084 = vld [vmem:[#allocation2 + $0x50] sm:$0x1]
        %v1085 = vld [vmem:[#allocation2 + $0x54] sm:$0xf]
        %v1086 = vld [vmem:[#allocation2 + $0x58] sm:$0xf]
        %v1087 = vld [vmem:[#allocation2 + $0x5c] sm:$0x1]
        %v1088 = vld [vmem:[#allocation2 + $0x60] sm:$0xf]
        %v1089 = vld [vmem:[#allocation2 + $0x64] sm:$0xf]
        %v1090 = vld [vmem:[#allocation2 + $0x68] sm:$0x1]
        %v1091 = vld [vmem:[#allocation2 + $0x6c] sm:$0xf]
        %v1092 = vld [vmem:[#allocation2 + $0x70] sm:$0xf]
        %v1093 = vld [vmem:[#allocation2 + $0x74] sm:$0x1]
        %v1094 = vld [vmem:[#allocation2 + $0x78] sm:$0xf]
        %v1095 = vld [vmem:[#allocation2 + $0x7c] sm:$0xf]
        %v1096 = vld [vmem:[#allocation2 + $0x80] sm:$0x1]
        %v1097 = vld [vmem:[#allocation2 + $0x84] sm:$0xf]
        %v1098 = vld [vmem:[#allocation2 + $0x88] sm:$0xf]
        %v1099 = vld [vmem:[#allocation2 + $0x8c] sm:$0x1]
        %v1100 = vld [vmem:[#allocation2 + $0x90] sm:$0xf]
        %v1101 = vld [vmem:[#allocation2 + $0x94] sm:$0xf]
        %v1102 = vld [vmem:[#allocation2 + $0x98] sm:$0x1]
        %v1103 = vld [vmem:[#allocation2 + $0x9c] sm:$0xf]
        %v1104 = vld [vmem:[#allocation2 + $0xa0] sm:$0xf]
        %v1105 = vld [vmem:[#allocation2 + $0xa4] sm:$0x1]
        %v1106 = vld [vmem:[#allocation2 + $0xa8] sm:$0xf]
        %v1107 = vld [vmem:[#allocation2 + $0xac] sm:$0xf]
        %v1108 = vld [vmem:[#allocation2 + $0xb0] sm:$0x1]
        %v1109 = vld [vmem:[#allocation2 + $0xb4] sm:$0xf]
        %v1110 = vld [vmem:[#allocation2 + $0xb8] sm:$0xf]
        %v1111 = vld [vmem:[#allocation2 + $0xbc] sm:$0x1]
        %vm1112 = vsmask.f32 3328
        %vm1113 = vsmask.f32 7440
        %vm1114 = vmor %vm1112, %vm1113
        %v1116 = vshrl.u32 %v1064, 16
        %v1118 = vrot.slane %v1116, 4
        %v1119 = vshll.u32 %v1064, 16
        %v1121 = vrot.slane %v1119, 5
        %v1122 = vor.u32 %v1118, %v1121
        %v1123 = vrot.slane %v1122, 4
        %v1125 = vshll.u32 %v1065, 16
        %v1127 = vrot.slane %v1125, 5
        %v1128 = vsel %vm1114, %v1123, %v1127
        %v1129 = vshrl.u32 %v1065, 16
        %v1131 = vrot.slane %v1129, 4
        %v1132 = vor.u32 %v1131, %v1127
        %v1133 = vrot.slane %v1132, 4
        %v1135 = vshll.u32 %v1066, 16
        %v1137 = vrot.slane %v1135, 5
        %v1138 = vsel %vm1114, %v1133, %v1137
        %v1140 = vshrl.u32 %v1067, 16
        %v1142 = vrot.slane %v1140, 4
        %v1143 = vshll.u32 %v1067, 16
        %v1145 = vrot.slane %v1143, 5
        %v1146 = vor.u32 %v1142, %v1145
        %v1147 = vrot.slane %v1146, 4
        %v1149 = vshll.u32 %v1068, 16
        %v1151 = vrot.slane %v1149, 5
        %v1152 = vsel %vm1114, %v1147, %v1151
        %v1153 = vshrl.u32 %v1068, 16
        %v1155 = vrot.slane %v1153, 4
        %v1156 = vor.u32 %v1155, %v1151
        %v1157 = vrot.slane %v1156, 4
        %v1159 = vshll.u32 %v1069, 16
        %v1161 = vrot.slane %v1159, 5
        %v1162 = vsel %vm1114, %v1157, %v1161
        %v1164 = vshrl.u32 %v1070, 16
        %v1166 = vrot.slane %v1164, 4
        %v1167 = vshll.u32 %v1070, 16
        %v1169 = vrot.slane %v1167, 5
        %v1170 = vor.u32 %v1166, %v1169
        %v1171 = vrot.slane %v1170, 4
        %v1173 = vshll.u32 %v1071, 16
        %v1175 = vrot.slane %v1173, 5
        %v1176 = vsel %vm1114, %v1171, %v1175
        %v1177 = vshrl.u32 %v1071, 16
        %v1179 = vrot.slane %v1177, 4
        %v1180 = vor.u32 %v1179, %v1175
        %v1181 = vrot.slane %v1180, 4
        %v1183 = vshll.u32 %v1072, 16
        %v1185 = vrot.slane %v1183, 5
        %v1186 = vsel %vm1114, %v1181, %v1185
        %v1188 = vshrl.u32 %v1073, 16
        %v1190 = vrot.slane %v1188, 4
        %v1191 = vshll.u32 %v1073, 16
        %v1193 = vrot.slane %v1191, 5
        %v1194 = vor.u32 %v1190, %v1193
        %v1195 = vrot.slane %v1194, 4
        %v1197 = vshll.u32 %v1074, 16
        %v1199 = vrot.slane %v1197, 5
        %v1200 = vsel %vm1114, %v1195, %v1199
        %v1201 = vshrl.u32 %v1074, 16
        %v1203 = vrot.slane %v1201, 4
        %v1204 = vor.u32 %v1203, %v1199
        %v1205 = vrot.slane %v1204, 4
        %v1207 = vshll.u32 %v1075, 16
        %v1209 = vrot.slane %v1207, 5
        %v1210 = vsel %vm1114, %v1205, %v1209
        %v1212 = vshrl.u32 %v1076, 16
        %v1214 = vrot.slane %v1212, 4
        %v1215 = vshll.u32 %v1076, 16
        %v1217 = vrot.slane %v1215, 5
        %v1218 = vor.u32 %v1214, %v1217
        %v1219 = vrot.slane %v1218, 4
        %v1221 = vshll.u32 %v1077, 16
        %v1223 = vrot.slane %v1221, 5
        %v1224 = vsel %vm1114, %v1219, %v1223
        %v1225 = vshrl.u32 %v1077, 16
        %v1227 = vrot.slane %v1225, 4
        %v1228 = vor.u32 %v1227, %v1223
        %v1229 = vrot.slane %v1228, 4
        %v1231 = vshll.u32 %v1078, 16
        %v1233 = vrot.slane %v1231, 5
        %v1234 = vsel %vm1114, %v1229, %v1233
        %v1236 = vshrl.u32 %v1079, 16
        %v1238 = vrot.slane %v1236, 4
        %v1239 = vshll.u32 %v1079, 16
        %v1241 = vrot.slane %v1239, 5
        %v1242 = vor.u32 %v1238, %v1241
        %v1243 = vrot.slane %v1242, 4
        %v1245 = vshll.u32 %v1080, 16
        %v1247 = vrot.slane %v1245, 5
        %v1248 = vsel %vm1114, %v1243, %v1247
        %v1249 = vshrl.u32 %v1080, 16
        %v1251 = vrot.slane %v1249, 4
        %v1252 = vor.u32 %v1251, %v1247
        %v1253 = vrot.slane %v1252, 4
        %v1255 = vshll.u32 %v1081, 16
        %v1257 = vrot.slane %v1255, 5
        %v1258 = vsel %vm1114, %v1253, %v1257
        %v1260 = vshrl.u32 %v1082, 16
        %v1262 = vrot.slane %v1260, 4
        %v1263 = vshll.u32 %v1082, 16
        %v1265 = vrot.slane %v1263, 5
        %v1266 = vor.u32 %v1262, %v1265
        %v1267 = vrot.slane %v1266, 4
        %v1269 = vshll.u32 %v1083, 16
        %v1271 = vrot.slane %v1269, 5
        %v1272 = vsel %vm1114, %v1267, %v1271
        %v1273 = vshrl.u32 %v1083, 16
        %v1275 = vrot.slane %v1273, 4
        %v1276 = vor.u32 %v1275, %v1271
        %v1277 = vrot.slane %v1276, 4
        %v1279 = vshll.u32 %v1084, 16
        %v1281 = vrot.slane %v1279, 5
        %v1282 = vsel %vm1114, %v1277, %v1281
        %v1284 = vshrl.u32 %v1085, 16
        %v1286 = vrot.slane %v1284, 4
        %v1287 = vshll.u32 %v1085, 16
        %v1289 = vrot.slane %v1287, 5
        %v1290 = vor.u32 %v1286, %v1289
        %v1291 = vrot.slane %v1290, 4
        %v1293 = vshll.u32 %v1086, 16
        %v1295 = vrot.slane %v1293, 5
        %v1296 = vsel %vm1114, %v1291, %v1295
        %v1297 = vshrl.u32 %v1086, 16
        %v1299 = vrot.slane %v1297, 4
        %v1300 = vor.u32 %v1299, %v1295
        %v1301 = vrot.slane %v1300, 4
        %v1303 = vshll.u32 %v1087, 16
        %v1305 = vrot.slane %v1303, 5
        %v1306 = vsel %vm1114, %v1301, %v1305
        %v1308 = vshrl.u32 %v1088, 16
        %v1310 = vrot.slane %v1308, 4
        %v1311 = vshll.u32 %v1088, 16
        %v1313 = vrot.slane %v1311, 5
        %v1314 = vor.u32 %v1310, %v1313
        %v1315 = vrot.slane %v1314, 4
        %v1317 = vshll.u32 %v1089, 16
        %v1319 = vrot.slane %v1317, 5
        %v1320 = vsel %vm1114, %v1315, %v1319
        %v1321 = vshrl.u32 %v1089, 16
        %v1323 = vrot.slane %v1321, 4
        %v1324 = vor.u32 %v1323, %v1319
        %v1325 = vrot.slane %v1324, 4
        %v1327 = vshll.u32 %v1090, 16
        %v1329 = vrot.slane %v1327, 5
        %v1330 = vsel %vm1114, %v1325, %v1329
        %v1332 = vshrl.u32 %v1091, 16
        %v1334 = vrot.slane %v1332, 4
        %v1335 = vshll.u32 %v1091, 16
        %v1337 = vrot.slane %v1335, 5
        %v1338 = vor.u32 %v1334, %v1337
        %v1339 = vrot.slane %v1338, 4
        %v1341 = vshll.u32 %v1092, 16
        %v1343 = vrot.slane %v1341, 5
        %v1344 = vsel %vm1114, %v1339, %v1343
        %v1345 = vshrl.u32 %v1092, 16
        %v1347 = vrot.slane %v1345, 4
        %v1348 = vor.u32 %v1347, %v1343
        %v1349 = vrot.slane %v1348, 4
        %v1351 = vshll.u32 %v1093, 16
        %v1353 = vrot.slane %v1351, 5
        %v1354 = vsel %vm1114, %v1349, %v1353
        %v1356 = vshrl.u32 %v1094, 16
        %v1358 = vrot.slane %v1356, 4
        %v1359 = vshll.u32 %v1094, 16
        %v1361 = vrot.slane %v1359, 5
        %v1362 = vor.u32 %v1358, %v1361
        %v1363 = vrot.slane %v1362, 4
        %v1365 = vshll.u32 %v1095, 16
        %v1367 = vrot.slane %v1365, 5
        %v1368 = vsel %vm1114, %v1363, %v1367
        %v1369 = vshrl.u32 %v1095, 16
        %v1371 = vrot.slane %v1369, 4
        %v1372 = vor.u32 %v1371, %v1367
        %v1373 = vrot.slane %v1372, 4
        %v1375 = vshll.u32 %v1096, 16
        %v1377 = vrot.slane %v1375, 5
        %v1378 = vsel %vm1114, %v1373, %v1377
        %v1380 = vshrl.u32 %v1097, 16
        %v1382 = vrot.slane %v1380, 4
        %v1383 = vshll.u32 %v1097, 16
        %v1385 = vrot.slane %v1383, 5
        %v1386 = vor.u32 %v1382, %v1385
        %v1387 = vrot.slane %v1386, 4
        %v1389 = vshll.u32 %v1098, 16
        %v1391 = vrot.slane %v1389, 5
        %v1392 = vsel %vm1114, %v1387, %v1391
        %v1393 = vshrl.u32 %v1098, 16
        %v1395 = vrot.slane %v1393, 4
        %v1396 = vor.u32 %v1395, %v1391
        %v1397 = vrot.slane %v1396, 4
        %v1399 = vshll.u32 %v1099, 16
        %v1401 = vrot.slane %v1399, 5
        %v1402 = vsel %vm1114, %v1397, %v1401
        %v1404 = vshrl.u32 %v1100, 16
        %v1406 = vrot.slane %v1404, 4
        %v1407 = vshll.u32 %v1100, 16
        %v1409 = vrot.slane %v1407, 5
        %v1410 = vor.u32 %v1406, %v1409
        %v1411 = vrot.slane %v1410, 4
        %v1413 = vshll.u32 %v1101, 16
        %v1415 = vrot.slane %v1413, 5
        %v1416 = vsel %vm1114, %v1411, %v1415
        %v1417 = vshrl.u32 %v1101, 16
        %v1419 = vrot.slane %v1417, 4
        %v1420 = vor.u32 %v1419, %v1415
        %v1421 = vrot.slane %v1420, 4
        %v1423 = vshll.u32 %v1102, 16
        %v1425 = vrot.slane %v1423, 5
        %v1426 = vsel %vm1114, %v1421, %v1425
        %v1428 = vshrl.u32 %v1103, 16
        %v1430 = vrot.slane %v1428, 4
        %v1431 = vshll.u32 %v1103, 16
        %v1433 = vrot.slane %v1431, 5
        %v1434 = vor.u32 %v1430, %v1433
        %v1435 = vrot.slane %v1434, 4
        %v1437 = vshll.u32 %v1104, 16
        %v1439 = vrot.slane %v1437, 5
        %v1440 = vsel %vm1114, %v1435, %v1439
        %v1441 = vshrl.u32 %v1104, 16
        %v1443 = vrot.slane %v1441, 4
        %v1444 = vor.u32 %v1443, %v1439
        %v1445 = vrot.slane %v1444, 4
        %v1447 = vshll.u32 %v1105, 16
        %v1449 = vrot.slane %v1447, 5
        %v1450 = vsel %vm1114, %v1445, %v1449
        %v1452 = vshrl.u32 %v1106, 16
        %v1454 = vrot.slane %v1452, 4
        %v1455 = vshll.u32 %v1106, 16
        %v1457 = vrot.slane %v1455, 5
        %v1458 = vor.u32 %v1454, %v1457
        %v1459 = vrot.slane %v1458, 4
        %v1461 = vshll.u32 %v1107, 16
        %v1463 = vrot.slane %v1461, 5
        %v1464 = vsel %vm1114, %v1459, %v1463
        %v1465 = vshrl.u32 %v1107, 16
        %v1467 = vrot.slane %v1465, 4
        %v1468 = vor.u32 %v1467, %v1463
        %v1469 = vrot.slane %v1468, 4
        %v1471 = vshll.u32 %v1108, 16
        %v1473 = vrot.slane %v1471, 5
        %v1474 = vsel %vm1114, %v1469, %v1473
        %v1476 = vshrl.u32 %v1109, 16
        %v1478 = vrot.slane %v1476, 4
        %v1479 = vshll.u32 %v1109, 16
        %v1481 = vrot.slane %v1479, 5
        %v1482 = vor.u32 %v1478, %v1481
        %v1483 = vrot.slane %v1482, 4
        %v1485 = vshll.u32 %v1110, 16
        %v1487 = vrot.slane %v1485, 5
        %v1488 = vsel %vm1114, %v1483, %v1487
        %v1489 = vshrl.u32 %v1110, 16
        %v1491 = vrot.slane %v1489, 4
        %v1492 = vor.u32 %v1491, %v1487
        %v1493 = vrot.slane %v1492, 4
        %v1495 = vshll.u32 %v1111, 16
        %v1497 = vrot.slane %v1495, 5
        %v1498 = vsel %vm1114, %v1493, %v1497
        %1531 = vst [vmem:[#allocation3 + $0x4] sm:$0xf] %v1128
        %1532 = vst [vmem:[#allocation3 + $0x28] sm:$0xf] %v1138
        %1533 = vst [vmem:[#allocation3 + $0x4c] sm:$0xf] %v1152
        %1534 = vst [vmem:[#allocation3 + $0x70] sm:$0xf] %v1162
        %1535 = vst [vmem:[#allocation3 + $0x94] sm:$0xf] %v1176
        %1536 = vst [vmem:[#allocation3 + $0xb8] sm:$0xf] %v1186
        %1537 = vst [vmem:[#allocation3 + $0xdc] sm:$0xf] %v1200
        %1538 = vst [vmem:[#allocation3 + $0x100] sm:$0xf] %v1210
        %1539 = vst [vmem:[#allocation3 + $0x124] sm:$0xf] %v1224
        %1540 = vst [vmem:[#allocation3 + $0x148] sm:$0xf] %v1234
        %1541 = vst [vmem:[#allocation3 + $0x16c] sm:$0xf] %v1248
        %1542 = vst [vmem:[#allocation3 + $0x190] sm:$0xf] %v1258
        %1543 = vst [vmem:[#allocation3 + $0x1b4] sm:$0xf] %v1272
        %1544 = vst [vmem:[#allocation3 + $0x1d8] sm:$0xf] %v1282
        %1545 = vst [vmem:[#allocation3 + $0x1fc] sm:$0xf] %v1296
        %1546 = vst [vmem:[#allocation3 + $0x220] sm:$0xf] %v1306
        %1547 = vst [vmem:[#allocation3 + $0x244] sm:$0xf] %v1320
        %1548 = vst [vmem:[#allocation3 + $0x268] sm:$0xf] %v1330
        %1549 = vst [vmem:[#allocation3 + $0x28c] sm:$0xf] %v1344
        %1550 = vst [vmem:[#allocation3 + $0x2b0] sm:$0xf] %v1354
        %1551 = vst [vmem:[#allocation3 + $0x2d4] sm:$0xf] %v1368
        %1552 = vst [vmem:[#allocation3 + $0x2f8] sm:$0xf] %v1378
        %1553 = vst [vmem:[#allocation3 + $0x31c] sm:$0xf] %v1392
        %1554 = vst [vmem:[#allocation3 + $0x340] sm:$0xf] %v1402
        %1555 = vst [vmem:[#allocation3 + $0x364] sm:$0xf] %v1416
        %1556 = vst [vmem:[#allocation3 + $0x388] sm:$0xf] %v1426
        %1557 = vst [vmem:[#allocation3 + $0x3ac] sm:$0xf] %v1440
        %1558 = vst [vmem:[#allocation3 + $0x3d0] sm:$0xf] %v1450
        %1559 = vst [vmem:[#allocation3 + $0x3f4] sm:$0xf] %v1464
        %1560 = vst [vmem:[#allocation3 + $0x418] sm:$0xf] %v1474
        %1561 = vst [vmem:[#allocation3 + $0x43c] sm:$0xf] %v1488
        %1562 = vst [vmem:[#allocation3 + $0x460] sm:$0xf] %v1498
        %v1563 = vld [vmem:[#allocation2] sm:$0xe]
        %v1564 = vld [vmem:[#allocation2 + $0x4] sm:$0xf]
        %v1565 = vld [vmem:[#allocation2 + $0x8] sm:$0x1]
        %v1566 = vld [vmem:[#allocation2 + $0xc] sm:$0xe]
        %v1567 = vld [vmem:[#allocation2 + $0x10] sm:$0xf]
        %v1568 = vld [vmem:[#allocation2 + $0x14] sm:$0x1]
        %v1569 = vld [vmem:[#allocation2 + $0x18] sm:$0xe]
        %v1570 = vld [vmem:[#allocation2 + $0x1c] sm:$0xf]
        %v1571 = vld [vmem:[#allocation2 + $0x20] sm:$0x1]
        %v1572 = vld [vmem:[#allocation2 + $0x24] sm:$0xe]
        %v1573 = vld [vmem:[#allocation2 + $0x28] sm:$0xf]
        %v1574 = vld [vmem:[#allocation2 + $0x2c] sm:$0x1]
        %v1575 = vld [vmem:[#allocation2 + $0x30] sm:$0xe]
        %v1576 = vld [vmem:[#allocation2 + $0x34] sm:$0xf]
        %v1577 = vld [vmem:[#allocation2 + $0x38] sm:$0x1]
        %v1578 = vld [vmem:[#allocation2 + $0x3c] sm:$0xe]
        %v1579 = vld [vmem:[#allocation2 + $0x40] sm:$0xf]
        %v1580 = vld [vmem:[#allocation2 + $0x44] sm:$0x1]
        %v1581 = vld [vmem:[#allocation2 + $0x48] sm:$0xe]
        %v1582 = vld [vmem:[#allocation2 + $0x4c] sm:$0xf]
        %v1583 = vld [vmem:[#allocation2 + $0x50] sm:$0x1]
        %v1584 = vld [vmem:[#allocation2 + $0x54] sm:$0xe]
        %v1585 = vld [vmem:[#allocation2 + $0x58] sm:$0xf]
        %v1586 = vld [vmem:[#allocation2 + $0x5c] sm:$0x1]
        %v1587 = vld [vmem:[#allocation2 + $0x60] sm:$0xe]
        %v1588 = vld [vmem:[#allocation2 + $0x64] sm:$0xf]
        %v1589 = vld [vmem:[#allocation2 + $0x68] sm:$0x1]
        %v1590 = vld [vmem:[#allocation2 + $0x6c] sm:$0xe]
        %v1591 = vld [vmem:[#allocation2 + $0x70] sm:$0xf]
        %v1592 = vld [vmem:[#allocation2 + $0x74] sm:$0x1]
        %v1593 = vld [vmem:[#allocation2 + $0x78] sm:$0xe]
        %v1594 = vld [vmem:[#allocation2 + $0x7c] sm:$0xf]
        %v1595 = vld [vmem:[#allocation2 + $0x80] sm:$0x1]
        %v1596 = vld [vmem:[#allocation2 + $0x84] sm:$0xe]
        %v1597 = vld [vmem:[#allocation2 + $0x88] sm:$0xf]
        %v1598 = vld [vmem:[#allocation2 + $0x8c] sm:$0x1]
        %v1599 = vld [vmem:[#allocation2 + $0x90] sm:$0xe]
        %v1600 = vld [vmem:[#allocation2 + $0x94] sm:$0xf]
        %v1601 = vld [vmem:[#allocation2 + $0x98] sm:$0x1]
        %v1602 = vld [vmem:[#allocation2 + $0x9c] sm:$0xe]
        %v1603 = vld [vmem:[#allocation2 + $0xa0] sm:$0xf]
        %v1604 = vld [vmem:[#allocation2 + $0xa4] sm:$0x1]
        %v1605 = vld [vmem:[#allocation2 + $0xa8] sm:$0xe]
        %v1606 = vld [vmem:[#allocation2 + $0xac] sm:$0xf]
        %v1607 = vld [vmem:[#allocation2 + $0xb0] sm:$0x1]
        %v1608 = vld [vmem:[#allocation2 + $0xb4] sm:$0xe]
        %v1609 = vld [vmem:[#allocation2 + $0xb8] sm:$0xf]
        %v1610 = vld [vmem:[#allocation2 + $0xbc] sm:$0x1]
        %vm1659 = vcmask 1042432
        %vm1660 = vcmask 1046532
        %vm1661 = vmor %vm1659, %vm1660
        %v1662 = vrot.slane %v1563, 5
        %v1663 = vrot.slane %v1662, 4
        %v1664 = vrot.slane %v1564, 5
        %v1665 = vsel %vm1661, %v1663, %v1664
        %v1666 = vrot.slane %v1664, 4
        %v1667 = vrot.slane %v1565, 5
        %v1668 = vsel %vm1661, %v1666, %v1667
        %v1669 = vrot.slane %v1566, 5
        %v1670 = vrot.slane %v1669, 4
        %v1671 = vrot.slane %v1567, 5
        %v1672 = vsel %vm1661, %v1670, %v1671
        %v1673 = vrot.slane %v1671, 4
        %v1674 = vrot.slane %v1568, 5
        %v1675 = vsel %vm1661, %v1673, %v1674
        %v1676 = vrot.slane %v1569, 5
        %v1677 = vrot.slane %v1676, 4
        %v1678 = vrot.slane %v1570, 5
        %v1679 = vsel %vm1661, %v1677, %v1678
        %v1680 = vrot.slane %v1678, 4
        %v1681 = vrot.slane %v1571, 5
        %v1682 = vsel %vm1661, %v1680, %v1681
        %v1683 = vrot.slane %v1572, 5
        %v1684 = vrot.slane %v1683, 4
        %v1685 = vrot.slane %v1573, 5
        %v1686 = vsel %vm1661, %v1684, %v1685
        %v1687 = vrot.slane %v1685, 4
        %v1688 = vrot.slane %v1574, 5
        %v1689 = vsel %vm1661, %v1687, %v1688
        %v1690 = vrot.slane %v1575, 5
        %v1691 = vrot.slane %v1690, 4
        %v1692 = vrot.slane %v1576, 5
        %v1693 = vsel %vm1661, %v1691, %v1692
        %v1694 = vrot.slane %v1692, 4
        %v1695 = vrot.slane %v1577, 5
        %v1696 = vsel %vm1661, %v1694, %v1695
        %v1697 = vrot.slane %v1578, 5
        %v1698 = vrot.slane %v1697, 4
        %v1699 = vrot.slane %v1579, 5
        %v1700 = vsel %vm1661, %v1698, %v1699
        %v1701 = vrot.slane %v1699, 4
        %v1702 = vrot.slane %v1580, 5
        %v1703 = vsel %vm1661, %v1701, %v1702
        %v1704 = vrot.slane %v1581, 5
        %v1705 = vrot.slane %v1704, 4
        %v1706 = vrot.slane %v1582, 5
        %v1707 = vsel %vm1661, %v1705, %v1706
        %v1708 = vrot.slane %v1706, 4
        %v1709 = vrot.slane %v1583, 5
        %v1710 = vsel %vm1661, %v1708, %v1709
        %v1711 = vrot.slane %v1584, 5
        %v1712 = vrot.slane %v1711, 4
        %v1713 = vrot.slane %v1585, 5
        %v1714 = vsel %vm1661, %v1712, %v1713
        %v1715 = vrot.slane %v1713, 4
        %v1716 = vrot.slane %v1586, 5
        %v1717 = vsel %vm1661, %v1715, %v1716
        %v1718 = vrot.slane %v1587, 5
        %v1719 = vrot.slane %v1718, 4
        %v1720 = vrot.slane %v1588, 5
        %v1721 = vsel %vm1661, %v1719, %v1720
        %v1722 = vrot.slane %v1720, 4
        %v1723 = vrot.slane %v1589, 5
        %v1724 = vsel %vm1661, %v1722, %v1723
        %v1725 = vrot.slane %v1590, 5
        %v1726 = vrot.slane %v1725, 4
        %v1727 = vrot.slane %v1591, 5
        %v1728 = vsel %vm1661, %v1726, %v1727
        %v1729 = vrot.slane %v1727, 4
        %v1730 = vrot.slane %v1592, 5
        %v1731 = vsel %vm1661, %v1729, %v1730
        %v1732 = vrot.slane %v1593, 5
        %v1733 = vrot.slane %v1732, 4
        %v1734 = vrot.slane %v1594, 5
        %v1735 = vsel %vm1661, %v1733, %v1734
        %v1736 = vrot.slane %v1734, 4
        %v1737 = vrot.slane %v1595, 5
        %v1738 = vsel %vm1661, %v1736, %v1737
        %v1739 = vrot.slane %v1596, 5
        %v1740 = vrot.slane %v1739, 4
        %v1741 = vrot.slane %v1597, 5
        %v1742 = vsel %vm1661, %v1740, %v1741
        %v1743 = vrot.slane %v1741, 4
        %v1744 = vrot.slane %v1598, 5
        %v1745 = vsel %vm1661, %v1743, %v1744
        %v1746 = vrot.slane %v1599, 5
        %v1747 = vrot.slane %v1746, 4
        %v1748 = vrot.slane %v1600, 5
        %v1749 = vsel %vm1661, %v1747, %v1748
        %v1750 = vrot.slane %v1748, 4
        %v1751 = vrot.slane %v1601, 5
        %v1752 = vsel %vm1661, %v1750, %v1751
        %v1753 = vrot.slane %v1602, 5
        %v1754 = vrot.slane %v1753, 4
        %v1755 = vrot.slane %v1603, 5
        %v1756 = vsel %vm1661, %v1754, %v1755
        %v1757 = vrot.slane %v1755, 4
        %v1758 = vrot.slane %v1604, 5
        %v1759 = vsel %vm1661, %v1757, %v1758
        %v1760 = vrot.slane %v1605, 5
        %v1761 = vrot.slane %v1760, 4
        %v1762 = vrot.slane %v1606, 5
        %v1763 = vsel %vm1661, %v1761, %v1762
        %v1764 = vrot.slane %v1762, 4
        %v1765 = vrot.slane %v1607, 5
        %v1766 = vsel %vm1661, %v1764, %v1765
        %v1767 = vrot.slane %v1608, 5
        %v1768 = vrot.slane %v1767, 4
        %v1769 = vrot.slane %v1609, 5
        %v1770 = vsel %vm1661, %v1768, %v1769
        %v1771 = vrot.slane %v1769, 4
        %v1772 = vrot.slane %v1610, 5
        %v1773 = vsel %vm1661, %v1771, %v1772
        %1806 = vst [vmem:[#allocation3 + $0x8] sm:$0xf] %v1665
        %1807 = vst [vmem:[#allocation3 + $0x2c] sm:$0xf] %v1668
        %1808 = vst [vmem:[#allocation3 + $0x50] sm:$0xf] %v1672
        %1809 = vst [vmem:[#allocation3 + $0x74] sm:$0xf] %v1675
        %1810 = vst [vmem:[#allocation3 + $0x98] sm:$0xf] %v1679
        %1811 = vst [vmem:[#allocation3 + $0xbc] sm:$0xf] %v1682
        %1812 = vst [vmem:[#allocation3 + $0xe0] sm:$0xf] %v1686
        %1813 = vst [vmem:[#allocation3 + $0x104] sm:$0xf] %v1689
        %1814 = vst [vmem:[#allocation3 + $0x128] sm:$0xf] %v1693
        %1815 = vst [vmem:[#allocation3 + $0x14c] sm:$0xf] %v1696
        %1816 = vst [vmem:[#allocation3 + $0x170] sm:$0xf] %v1700
        %1817 = vst [vmem:[#allocation3 + $0x194] sm:$0xf] %v1703
        %1818 = vst [vmem:[#allocation3 + $0x1b8] sm:$0xf] %v1707
        %1819 = vst [vmem:[#allocation3 + $0x1dc] sm:$0xf] %v1710
        %1820 = vst [vmem:[#allocation3 + $0x200] sm:$0xf] %v1714
        %1821 = vst [vmem:[#allocation3 + $0x224] sm:$0xf] %v1717
        %1822 = vst [vmem:[#allocation3 + $0x248] sm:$0xf] %v1721
        %1823 = vst [vmem:[#allocation3 + $0x26c] sm:$0xf] %v1724
        %1824 = vst [vmem:[#allocation3 + $0x290] sm:$0xf] %v1728
        %1825 = vst [vmem:[#allocation3 + $0x2b4] sm:$0xf] %v1731
        %1826 = vst [vmem:[#allocation3 + $0x2d8] sm:$0xf] %v1735
        %1827 = vst [vmem:[#allocation3 + $0x2fc] sm:$0xf] %v1738
        %1828 = vst [vmem:[#allocation3 + $0x320] sm:$0xf] %v1742
        %1829 = vst [vmem:[#allocation3 + $0x344] sm:$0xf] %v1745
        %1830 = vst [vmem:[#allocation3 + $0x368] sm:$0xf] %v1749
        %1831 = vst [vmem:[#allocation3 + $0x38c] sm:$0xf] %v1752
        %1832 = vst [vmem:[#allocation3 + $0x3b0] sm:$0xf] %v1756
        %1833 = vst [vmem:[#allocation3 + $0x3d4] sm:$0xf] %v1759
        %1834 = vst [vmem:[#allocation3 + $0x3f8] sm:$0xf] %v1763
        %1835 = vst [vmem:[#allocation3 + $0x41c] sm:$0xf] %v1766
        %1836 = vst [vmem:[#allocation3 + $0x440] sm:$0xf] %v1770
        %1837 = vst [vmem:[#allocation3 + $0x464] sm:$0xf] %v1773
        %v1838 = vld [vmem:[%s885] sm:$0xf]
        %v1839 = vld [vmem:[%s885 + $0x4] sm:$0xf]
        %v1840 = vld [vmem:[%s885 + $0xc] sm:$0xf]
        %v1841 = vld [vmem:[%s885 + $0x10] sm:$0xf]
        %v1842 = vld [vmem:[%s885 + $0x18] sm:$0xf]
        %v1843 = vld [vmem:[%s885 + $0x1c] sm:$0xf]
        %v1844 = vld [vmem:[%s885 + $0x24] sm:$0xf]
        %v1845 = vld [vmem:[%s885 + $0x28] sm:$0xf]
        %v1846 = vld [vmem:[%s885 + $0x30] sm:$0xf]
        %v1847 = vld [vmem:[%s885 + $0x34] sm:$0xf]
        %v1848 = vld [vmem:[%s885 + $0x3c] sm:$0xf]
        %v1849 = vld [vmem:[%s885 + $0x40] sm:$0xf]
        %v1850 = vld [vmem:[%s885 + $0x48] sm:$0xf]
        %v1851 = vld [vmem:[%s885 + $0x4c] sm:$0xf]
        %v1852 = vld [vmem:[%s885 + $0x54] sm:$0xf]
        %v1853 = vld [vmem:[%s885 + $0x58] sm:$0xf]
        %v1854 = vld [vmem:[%s885 + $0x60] sm:$0xf]
        %v1855 = vld [vmem:[%s885 + $0x64] sm:$0xf]
        %v1856 = vld [vmem:[%s885 + $0x6c] sm:$0xf]
        %v1857 = vld [vmem:[%s885 + $0x70] sm:$0xf]
        %v1858 = vld [vmem:[%s885 + $0x78] sm:$0xf]
        %v1859 = vld [vmem:[%s885 + $0x7c] sm:$0xf]
        %v1860 = vld [vmem:[%s885 + $0x84] sm:$0xf]
        %v1861 = vld [vmem:[%s885 + $0x88] sm:$0xf]
        %v1862 = vld [vmem:[%s885 + $0x90] sm:$0xf]
        %v1863 = vld [vmem:[%s885 + $0x94] sm:$0xf]
        %v1864 = vld [vmem:[%s885 + $0x9c] sm:$0xf]
        %v1865 = vld [vmem:[%s885 + $0xa0] sm:$0xf]
        %v1866 = vld [vmem:[%s885 + $0xa8] sm:$0xf]
        %v1867 = vld [vmem:[%s885 + $0xac] sm:$0xf]
        %v1868 = vld [vmem:[%s885 + $0xb4] sm:$0xf]
        %v1869 = vld [vmem:[%s885 + $0xb8] sm:$0xf]
        %1870 = vst [vmem:[#allocation3 + $0xc] sm:$0xf] %v1838
        %1871 = vst [vmem:[#allocation3 + $0x30] sm:$0xf] %v1839
        %1872 = vst [vmem:[#allocation3 + $0x54] sm:$0xf] %v1840
        %1873 = vst [vmem:[#allocation3 + $0x78] sm:$0xf] %v1841
        %1874 = vst [vmem:[#allocation3 + $0x9c] sm:$0xf] %v1842
        %1875 = vst [vmem:[#allocation3 + $0xc0] sm:$0xf] %v1843
        %1876 = vst [vmem:[#allocation3 + $0xe4] sm:$0xf] %v1844
        %1877 = vst [vmem:[#allocation3 + $0x108] sm:$0xf] %v1845
        %1878 = vst [vmem:[#allocation3 + $0x12c] sm:$0xf] %v1846
        %1879 = vst [vmem:[#allocation3 + $0x150] sm:$0xf] %v1847
        %1880 = vst [vmem:[#allocation3 + $0x174] sm:$0xf] %v1848
        %1881 = vst [vmem:[#allocation3 + $0x198] sm:$0xf] %v1849
        %1882 = vst [vmem:[#allocation3 + $0x1bc] sm:$0xf] %v1850
        %1883 = vst [vmem:[#allocation3 + $0x1e0] sm:$0xf] %v1851
        %1884 = vst [vmem:[#allocation3 + $0x204] sm:$0xf] %v1852
        %1885 = vst [vmem:[#allocation3 + $0x228] sm:$0xf] %v1853
        %1886 = vst [vmem:[#allocation3 + $0x24c] sm:$0xf] %v1854
        %1887 = vst [vmem:[#allocation3 + $0x270] sm:$0xf] %v1855
        %1888 = vst [vmem:[#allocation3 + $0x294] sm:$0xf] %v1856
        %1889 = vst [vmem:[#allocation3 + $0x2b8] sm:$0xf] %v1857
        %1890 = vst [vmem:[#allocation3 + $0x2dc] sm:$0xf] %v1858
        %1891 = vst [vmem:[#allocation3 + $0x300] sm:$0xf] %v1859
        %1892 = vst [vmem:[#allocation3 + $0x324] sm:$0xf] %v1860
        %1893 = vst [vmem:[#allocation3 + $0x348] sm:$0xf] %v1861
        %1894 = vst [vmem:[#allocation3 + $0x36c] sm:$0xf] %v1862
        %1895 = vst [vmem:[#allocation3 + $0x390] sm:$0xf] %v1863
        %1896 = vst [vmem:[#allocation3 + $0x3b4] sm:$0xf] %v1864
        %1897 = vst [vmem:[#allocation3 + $0x3d8] sm:$0xf] %v1865
        %1898 = vst [vmem:[#allocation3 + $0x3fc] sm:$0xf] %v1866
        %1899 = vst [vmem:[#allocation3 + $0x420] sm:$0xf] %v1867
        %1900 = vst [vmem:[#allocation3 + $0x444] sm:$0xf] %v1868
        %1901 = vst [vmem:[#allocation3 + $0x468] sm:$0xf] %v1869
        %v1902 = vld [vmem:[%s885] sm:$0xf]
        %v1903 = vld [vmem:[%s885 + $0x4] sm:$0xf]
        %v1904 = vld [vmem:[%s885 + $0x8] sm:$0x1]
        %v1905 = vld [vmem:[%s885 + $0xc] sm:$0xf]
        %v1906 = vld [vmem:[%s885 + $0x10] sm:$0xf]
        %v1907 = vld [vmem:[%s885 + $0x14] sm:$0x1]
        %v1908 = vld [vmem:[%s885 + $0x18] sm:$0xf]
        %v1909 = vld [vmem:[%s885 + $0x1c] sm:$0xf]
        %v1910 = vld [vmem:[%s885 + $0x20] sm:$0x1]
        %v1911 = vld [vmem:[%s885 + $0x24] sm:$0xf]
        %v1912 = vld [vmem:[%s885 + $0x28] sm:$0xf]
        %v1913 = vld [vmem:[%s885 + $0x2c] sm:$0x1]
        %v1914 = vld [vmem:[%s885 + $0x30] sm:$0xf]
        %v1915 = vld [vmem:[%s885 + $0x34] sm:$0xf]
        %v1916 = vld [vmem:[%s885 + $0x38] sm:$0x1]
        %v1917 = vld [vmem:[%s885 + $0x3c] sm:$0xf]
        %v1918 = vld [vmem:[%s885 + $0x40] sm:$0xf]
        %v1919 = vld [vmem:[%s885 + $0x44] sm:$0x1]
        %v1920 = vld [vmem:[%s885 + $0x48] sm:$0xf]
        %v1921 = vld [vmem:[%s885 + $0x4c] sm:$0xf]
        %v1922 = vld [vmem:[%s885 + $0x50] sm:$0x1]
        %v1923 = vld [vmem:[%s885 + $0x54] sm:$0xf]
        %v1924 = vld [vmem:[%s885 + $0x58] sm:$0xf]
        %v1925 = vld [vmem:[%s885 + $0x5c] sm:$0x1]
        %v1926 = vld [vmem:[%s885 + $0x60] sm:$0xf]
        %v1927 = vld [vmem:[%s885 + $0x64] sm:$0xf]
        %v1928 = vld [vmem:[%s885 + $0x68] sm:$0x1]
        %v1929 = vld [vmem:[%s885 + $0x6c] sm:$0xf]
        %v1930 = vld [vmem:[%s885 + $0x70] sm:$0xf]
        %v1931 = vld [vmem:[%s885 + $0x74] sm:$0x1]
        %v1932 = vld [vmem:[%s885 + $0x78] sm:$0xf]
        %v1933 = vld [vmem:[%s885 + $0x7c] sm:$0xf]
        %v1934 = vld [vmem:[%s885 + $0x80] sm:$0x1]
        %v1935 = vld [vmem:[%s885 + $0x84] sm:$0xf]
        %v1936 = vld [vmem:[%s885 + $0x88] sm:$0xf]
        %v1937 = vld [vmem:[%s885 + $0x8c] sm:$0x1]
        %v1938 = vld [vmem:[%s885 + $0x90] sm:$0xf]
        %v1939 = vld [vmem:[%s885 + $0x94] sm:$0xf]
        %v1940 = vld [vmem:[%s885 + $0x98] sm:$0x1]
        %v1941 = vld [vmem:[%s885 + $0x9c] sm:$0xf]
        %v1942 = vld [vmem:[%s885 + $0xa0] sm:$0xf]
        %v1943 = vld [vmem:[%s885 + $0xa4] sm:$0x1]
        %v1944 = vld [vmem:[%s885 + $0xa8] sm:$0xf]
        %v1945 = vld [vmem:[%s885 + $0xac] sm:$0xf]
        %v1946 = vld [vmem:[%s885 + $0xb0] sm:$0x1]
        %v1947 = vld [vmem:[%s885 + $0xb4] sm:$0xf]
        %v1948 = vld [vmem:[%s885 + $0xb8] sm:$0xf]
        %v1949 = vld [vmem:[%s885 + $0xbc] sm:$0x1]
        %v1951 = vshrl.u32 %v1902, 16
        %v1953 = vrot.slane %v1951, 4
        %v1954 = vshll.u32 %v1902, 16
        %v1956 = vrot.slane %v1954, 5
        %v1957 = vor.u32 %v1953, %v1956
        %v1958 = vrot.slane %v1957, 4
        %v1960 = vshll.u32 %v1903, 16
        %v1962 = vrot.slane %v1960, 5
        %v1963 = vsel %vm1114, %v1958, %v1962
        %v1964 = vshrl.u32 %v1903, 16
        %v1966 = vrot.slane %v1964, 4
        %v1967 = vor.u32 %v1966, %v1962
        %v1968 = vrot.slane %v1967, 4
        %v1970 = vshll.u32 %v1904, 16
        %v1972 = vrot.slane %v1970, 5
        %v1973 = vsel %vm1114, %v1968, %v1972
        %v1975 = vshrl.u32 %v1905, 16
        %v1977 = vrot.slane %v1975, 4
        %v1978 = vshll.u32 %v1905, 16
        %v1980 = vrot.slane %v1978, 5
        %v1981 = vor.u32 %v1977, %v1980
        %v1982 = vrot.slane %v1981, 4
        %v1984 = vshll.u32 %v1906, 16
        %v1986 = vrot.slane %v1984, 5
        %v1987 = vsel %vm1114, %v1982, %v1986
        %v1988 = vshrl.u32 %v1906, 16
        %v1990 = vrot.slane %v1988, 4
        %v1991 = vor.u32 %v1990, %v1986
        %v1992 = vrot.slane %v1991, 4
        %v1994 = vshll.u32 %v1907, 16
        %v1996 = vrot.slane %v1994, 5
        %v1997 = vsel %vm1114, %v1992, %v1996
        %v1999 = vshrl.u32 %v1908, 16
        %v2001 = vrot.slane %v1999, 4
        %v2002 = vshll.u32 %v1908, 16
        %v2004 = vrot.slane %v2002, 5
        %v2005 = vor.u32 %v2001, %v2004
        %v2006 = vrot.slane %v2005, 4
        %v2008 = vshll.u32 %v1909, 16
        %v2010 = vrot.slane %v2008, 5
        %v2011 = vsel %vm1114, %v2006, %v2010
        %v2012 = vshrl.u32 %v1909, 16
        %v2014 = vrot.slane %v2012, 4
        %v2015 = vor.u32 %v2014, %v2010
        %v2016 = vrot.slane %v2015, 4
        %v2018 = vshll.u32 %v1910, 16
        %v2020 = vrot.slane %v2018, 5
        %v2021 = vsel %vm1114, %v2016, %v2020
        %v2023 = vshrl.u32 %v1911, 16
        %v2025 = vrot.slane %v2023, 4
        %v2026 = vshll.u32 %v1911, 16
        %v2028 = vrot.slane %v2026, 5
        %v2029 = vor.u32 %v2025, %v2028
        %v2030 = vrot.slane %v2029, 4
        %v2032 = vshll.u32 %v1912, 16
        %v2034 = vrot.slane %v2032, 5
        %v2035 = vsel %vm1114, %v2030, %v2034
        %v2036 = vshrl.u32 %v1912, 16
        %v2038 = vrot.slane %v2036, 4
        %v2039 = vor.u32 %v2038, %v2034
        %v2040 = vrot.slane %v2039, 4
        %v2042 = vshll.u32 %v1913, 16
        %v2044 = vrot.slane %v2042, 5
        %v2045 = vsel %vm1114, %v2040, %v2044
        %v2047 = vshrl.u32 %v1914, 16
        %v2049 = vrot.slane %v2047, 4
        %v2050 = vshll.u32 %v1914, 16
        %v2052 = vrot.slane %v2050, 5
        %v2053 = vor.u32 %v2049, %v2052
        %v2054 = vrot.slane %v2053, 4
        %v2056 = vshll.u32 %v1915, 16
        %v2058 = vrot.slane %v2056, 5
        %v2059 = vsel %vm1114, %v2054, %v2058
        %v2060 = vshrl.u32 %v1915, 16
        %v2062 = vrot.slane %v2060, 4
        %v2063 = vor.u32 %v2062, %v2058
        %v2064 = vrot.slane %v2063, 4
        %v2066 = vshll.u32 %v1916, 16
        %v2068 = vrot.slane %v2066, 5
        %v2069 = vsel %vm1114, %v2064, %v2068
        %v2071 = vshrl.u32 %v1917, 16
        %v2073 = vrot.slane %v2071, 4
        %v2074 = vshll.u32 %v1917, 16
        %v2076 = vrot.slane %v2074, 5
        %v2077 = vor.u32 %v2073, %v2076
        %v2078 = vrot.slane %v2077, 4
        %v2080 = vshll.u32 %v1918, 16
        %v2082 = vrot.slane %v2080, 5
        %v2083 = vsel %vm1114, %v2078, %v2082
        %v2084 = vshrl.u32 %v1918, 16
        %v2086 = vrot.slane %v2084, 4
        %v2087 = vor.u32 %v2086, %v2082
        %v2088 = vrot.slane %v2087, 4
        %v2090 = vshll.u32 %v1919, 16
        %v2092 = vrot.slane %v2090, 5
        %v2093 = vsel %vm1114, %v2088, %v2092
        %v2095 = vshrl.u32 %v1920, 16
        %v2097 = vrot.slane %v2095, 4
        %v2098 = vshll.u32 %v1920, 16
        %v2100 = vrot.slane %v2098, 5
        %v2101 = vor.u32 %v2097, %v2100
        %v2102 = vrot.slane %v2101, 4
        %v2104 = vshll.u32 %v1921, 16
        %v2106 = vrot.slane %v2104, 5
        %v2107 = vsel %vm1114, %v2102, %v2106
        %v2108 = vshrl.u32 %v1921, 16
        %v2110 = vrot.slane %v2108, 4
        %v2111 = vor.u32 %v2110, %v2106
        %v2112 = vrot.slane %v2111, 4
        %v2114 = vshll.u32 %v1922, 16
        %v2116 = vrot.slane %v2114, 5
        %v2117 = vsel %vm1114, %v2112, %v2116
        %v2119 = vshrl.u32 %v1923, 16
        %v2121 = vrot.slane %v2119, 4
        %v2122 = vshll.u32 %v1923, 16
        %v2124 = vrot.slane %v2122, 5
        %v2125 = vor.u32 %v2121, %v2124
        %v2126 = vrot.slane %v2125, 4
        %v2128 = vshll.u32 %v1924, 16
        %v2130 = vrot.slane %v2128, 5
        %v2131 = vsel %vm1114, %v2126, %v2130
        %v2132 = vshrl.u32 %v1924, 16
        %v2134 = vrot.slane %v2132, 4
        %v2135 = vor.u32 %v2134, %v2130
        %v2136 = vrot.slane %v2135, 4
        %v2138 = vshll.u32 %v1925, 16
        %v2140 = vrot.slane %v2138, 5
        %v2141 = vsel %vm1114, %v2136, %v2140
        %v2143 = vshrl.u32 %v1926, 16
        %v2145 = vrot.slane %v2143, 4
        %v2146 = vshll.u32 %v1926, 16
        %v2148 = vrot.slane %v2146, 5
        %v2149 = vor.u32 %v2145, %v2148
        %v2150 = vrot.slane %v2149, 4
        %v2152 = vshll.u32 %v1927, 16
        %v2154 = vrot.slane %v2152, 5
        %v2155 = vsel %vm1114, %v2150, %v2154
        %v2156 = vshrl.u32 %v1927, 16
        %v2158 = vrot.slane %v2156, 4
        %v2159 = vor.u32 %v2158, %v2154
        %v2160 = vrot.slane %v2159, 4
        %v2162 = vshll.u32 %v1928, 16
        %v2164 = vrot.slane %v2162, 5
        %v2165 = vsel %vm1114, %v2160, %v2164
        %v2167 = vshrl.u32 %v1929, 16
        %v2169 = vrot.slane %v2167, 4
        %v2170 = vshll.u32 %v1929, 16
        %v2172 = vrot.slane %v2170, 5
        %v2173 = vor.u32 %v2169, %v2172
        %v2174 = vrot.slane %v2173, 4
        %v2176 = vshll.u32 %v1930, 16
        %v2178 = vrot.slane %v2176, 5
        %v2179 = vsel %vm1114, %v2174, %v2178
        %v2180 = vshrl.u32 %v1930, 16
        %v2182 = vrot.slane %v2180, 4
        %v2183 = vor.u32 %v2182, %v2178
        %v2184 = vrot.slane %v2183, 4
        %v2186 = vshll.u32 %v1931, 16
        %v2188 = vrot.slane %v2186, 5
        %v2189 = vsel %vm1114, %v2184, %v2188
        %v2191 = vshrl.u32 %v1932, 16
        %v2193 = vrot.slane %v2191, 4
        %v2194 = vshll.u32 %v1932, 16
        %v2196 = vrot.slane %v2194, 5
        %v2197 = vor.u32 %v2193, %v2196
        %v2198 = vrot.slane %v2197, 4
        %v2200 = vshll.u32 %v1933, 16
        %v2202 = vrot.slane %v2200, 5
        %v2203 = vsel %vm1114, %v2198, %v2202
        %v2204 = vshrl.u32 %v1933, 16
        %v2206 = vrot.slane %v2204, 4
        %v2207 = vor.u32 %v2206, %v2202
        %v2208 = vrot.slane %v2207, 4
        %v2210 = vshll.u32 %v1934, 16
        %v2212 = vrot.slane %v2210, 5
        %v2213 = vsel %vm1114, %v2208, %v2212
        %v2215 = vshrl.u32 %v1935, 16
        %v2217 = vrot.slane %v2215, 4
        %v2218 = vshll.u32 %v1935, 16
        %v2220 = vrot.slane %v2218, 5
        %v2221 = vor.u32 %v2217, %v2220
        %v2222 = vrot.slane %v2221, 4
        %v2224 = vshll.u32 %v1936, 16
        %v2226 = vrot.slane %v2224, 5
        %v2227 = vsel %vm1114, %v2222, %v2226
        %v2228 = vshrl.u32 %v1936, 16
        %v2230 = vrot.slane %v2228, 4
        %v2231 = vor.u32 %v2230, %v2226
        %v2232 = vrot.slane %v2231, 4
        %v2234 = vshll.u32 %v1937, 16
        %v2236 = vrot.slane %v2234, 5
        %v2237 = vsel %vm1114, %v2232, %v2236
        %v2239 = vshrl.u32 %v1938, 16
        %v2241 = vrot.slane %v2239, 4
        %v2242 = vshll.u32 %v1938, 16
        %v2244 = vrot.slane %v2242, 5
        %v2245 = vor.u32 %v2241, %v2244
        %v2246 = vrot.slane %v2245, 4
        %v2248 = vshll.u32 %v1939, 16
        %v2250 = vrot.slane %v2248, 5
        %v2251 = vsel %vm1114, %v2246, %v2250
        %v2252 = vshrl.u32 %v1939, 16
        %v2254 = vrot.slane %v2252, 4
        %v2255 = vor.u32 %v2254, %v2250
        %v2256 = vrot.slane %v2255, 4
        %v2258 = vshll.u32 %v1940, 16
        %v2260 = vrot.slane %v2258, 5
        %v2261 = vsel %vm1114, %v2256, %v2260
        %v2263 = vshrl.u32 %v1941, 16
        %v2265 = vrot.slane %v2263, 4
        %v2266 = vshll.u32 %v1941, 16
        %v2268 = vrot.slane %v2266, 5
        %v2269 = vor.u32 %v2265, %v2268
        %v2270 = vrot.slane %v2269, 4
        %v2272 = vshll.u32 %v1942, 16
        %v2274 = vrot.slane %v2272, 5
        %v2275 = vsel %vm1114, %v2270, %v2274
        %v2276 = vshrl.u32 %v1942, 16
        %v2278 = vrot.slane %v2276, 4
        %v2279 = vor.u32 %v2278, %v2274
        %v2280 = vrot.slane %v2279, 4
        %v2282 = vshll.u32 %v1943, 16
        %v2284 = vrot.slane %v2282, 5
        %v2285 = vsel %vm1114, %v2280, %v2284
        %v2287 = vshrl.u32 %v1944, 16
        %v2289 = vrot.slane %v2287, 4
        %v2290 = vshll.u32 %v1944, 16
        %v2292 = vrot.slane %v2290, 5
        %v2293 = vor.u32 %v2289, %v2292
        %v2294 = vrot.slane %v2293, 4
        %v2296 = vshll.u32 %v1945, 16
        %v2298 = vrot.slane %v2296, 5
        %v2299 = vsel %vm1114, %v2294, %v2298
        %v2300 = vshrl.u32 %v1945, 16
        %v2302 = vrot.slane %v2300, 4
        %v2303 = vor.u32 %v2302, %v2298
        %v2304 = vrot.slane %v2303, 4
        %v2306 = vshll.u32 %v1946, 16
        %v2308 = vrot.slane %v2306, 5
        %v2309 = vsel %vm1114, %v2304, %v2308
        %v2311 = vshrl.u32 %v1947, 16
        %v2313 = vrot.slane %v2311, 4
        %v2314 = vshll.u32 %v1947, 16
        %v2316 = vrot.slane %v2314, 5
        %v2317 = vor.u32 %v2313, %v2316
        %v2318 = vrot.slane %v2317, 4
        %v2320 = vshll.u32 %v1948, 16
        %v2322 = vrot.slane %v2320, 5
        %v2323 = vsel %vm1114, %v2318, %v2322
        %v2324 = vshrl.u32 %v1948, 16
        %v2326 = vrot.slane %v2324, 4
        %v2327 = vor.u32 %v2326, %v2322
        %v2328 = vrot.slane %v2327, 4
        %v2330 = vshll.u32 %v1949, 16
        %v2332 = vrot.slane %v2330, 5
        %v2333 = vsel %vm1114, %v2328, %v2332
        %2366 = vst [vmem:[#allocation3 + $0x10] sm:$0xf] %v1963
        %2367 = vst [vmem:[#allocation3 + $0x34] sm:$0xf] %v1973
        %2368 = vst [vmem:[#allocation3 + $0x58] sm:$0xf] %v1987
        %2369 = vst [vmem:[#allocation3 + $0x7c] sm:$0xf] %v1997
        %2370 = vst [vmem:[#allocation3 + $0xa0] sm:$0xf] %v2011
        %2371 = vst [vmem:[#allocation3 + $0xc4] sm:$0xf] %v2021
        %2372 = vst [vmem:[#allocation3 + $0xe8] sm:$0xf] %v2035
        %2373 = vst [vmem:[#allocation3 + $0x10c] sm:$0xf] %v2045
        %2374 = vst [vmem:[#allocation3 + $0x130] sm:$0xf] %v2059
        %2375 = vst [vmem:[#allocation3 + $0x154] sm:$0xf] %v2069
        %2376 = vst [vmem:[#allocation3 + $0x178] sm:$0xf] %v2083
        %2377 = vst [vmem:[#allocation3 + $0x19c] sm:$0xf] %v2093
        %2378 = vst [vmem:[#allocation3 + $0x1c0] sm:$0xf] %v2107
        %2379 = vst [vmem:[#allocation3 + $0x1e4] sm:$0xf] %v2117
        %2380 = vst [vmem:[#allocation3 + $0x208] sm:$0xf] %v2131
        %2381 = vst [vmem:[#allocation3 + $0x22c] sm:$0xf] %v2141
        %2382 = vst [vmem:[#allocation3 + $0x250] sm:$0xf] %v2155
        %2383 = vst [vmem:[#allocation3 + $0x274] sm:$0xf] %v2165
        %2384 = vst [vmem:[#allocation3 + $0x298] sm:$0xf] %v2179
        %2385 = vst [vmem:[#allocation3 + $0x2bc] sm:$0xf] %v2189
        %2386 = vst [vmem:[#allocation3 + $0x2e0] sm:$0xf] %v2203
        %2387 = vst [vmem:[#allocation3 + $0x304] sm:$0xf] %v2213
        %2388 = vst [vmem:[#allocation3 + $0x328] sm:$0xf] %v2227
        %2389 = vst [vmem:[#allocation3 + $0x34c] sm:$0xf] %v2237
        %2390 = vst [vmem:[#allocation3 + $0x370] sm:$0xf] %v2251
        %2391 = vst [vmem:[#allocation3 + $0x394] sm:$0xf] %v2261
        %2392 = vst [vmem:[#allocation3 + $0x3b8] sm:$0xf] %v2275
        %2393 = vst [vmem:[#allocation3 + $0x3dc] sm:$0xf] %v2285
        %2394 = vst [vmem:[#allocation3 + $0x400] sm:$0xf] %v2299
        %2395 = vst [vmem:[#allocation3 + $0x424] sm:$0xf] %v2309
        %2396 = vst [vmem:[#allocation3 + $0x448] sm:$0xf] %v2323
        %2397 = vst [vmem:[#allocation3 + $0x46c] sm:$0xf] %v2333
        %v2398 = vld [vmem:[%s885] sm:$0xe]
        %v2399 = vld [vmem:[%s885 + $0x4] sm:$0xf]
        %v2400 = vld [vmem:[%s885 + $0x8] sm:$0x1]
        %v2401 = vld [vmem:[%s885 + $0xc] sm:$0xe]
        %v2402 = vld [vmem:[%s885 + $0x10] sm:$0xf]
        %v2403 = vld [vmem:[%s885 + $0x14] sm:$0x1]
        %v2404 = vld [vmem:[%s885 + $0x18] sm:$0xe]
        %v2405 = vld [vmem:[%s885 + $0x1c] sm:$0xf]
        %v2406 = vld [vmem:[%s885 + $0x20] sm:$0x1]
        %v2407 = vld [vmem:[%s885 + $0x24] sm:$0xe]
        %v2408 = vld [vmem:[%s885 + $0x28] sm:$0xf]
        %v2409 = vld [vmem:[%s885 + $0x2c] sm:$0x1]
        %v2410 = vld [vmem:[%s885 + $0x30] sm:$0xe]
        %v2411 = vld [vmem:[%s885 + $0x34] sm:$0xf]
        %v2412 = vld [vmem:[%s885 + $0x38] sm:$0x1]
        %v2413 = vld [vmem:[%s885 + $0x3c] sm:$0xe]
        %v2414 = vld [vmem:[%s885 + $0x40] sm:$0xf]
        %v2415 = vld [vmem:[%s885 + $0x44] sm:$0x1]
        %v2416 = vld [vmem:[%s885 + $0x48] sm:$0xe]
        %v2417 = vld [vmem:[%s885 + $0x4c] sm:$0xf]
        %v2418 = vld [vmem:[%s885 + $0x50] sm:$0x1]
        %v2419 = vld [vmem:[%s885 + $0x54] sm:$0xe]
        %v2420 = vld [vmem:[%s885 + $0x58] sm:$0xf]
        %v2421 = vld [vmem:[%s885 + $0x5c] sm:$0x1]
        %v2422 = vld [vmem:[%s885 + $0x60] sm:$0xe]
        %v2423 = vld [vmem:[%s885 + $0x64] sm:$0xf]
        %v2424 = vld [vmem:[%s885 + $0x68] sm:$0x1]
        %v2425 = vld [vmem:[%s885 + $0x6c] sm:$0xe]
        %v2426 = vld [vmem:[%s885 + $0x70] sm:$0xf]
        %v2427 = vld [vmem:[%s885 + $0x74] sm:$0x1]
        %v2428 = vld [vmem:[%s885 + $0x78] sm:$0xe]
        %v2429 = vld [vmem:[%s885 + $0x7c] sm:$0xf]
        %v2430 = vld [vmem:[%s885 + $0x80] sm:$0x1]
        %v2431 = vld [vmem:[%s885 + $0x84] sm:$0xe]
        %v2432 = vld [vmem:[%s885 + $0x88] sm:$0xf]
        %v2433 = vld [vmem:[%s885 + $0x8c] sm:$0x1]
        %v2434 = vld [vmem:[%s885 + $0x90] sm:$0xe]
        %v2435 = vld [vmem:[%s885 + $0x94] sm:$0xf]
        %v2436 = vld [vmem:[%s885 + $0x98] sm:$0x1]
        %v2437 = vld [vmem:[%s885 + $0x9c] sm:$0xe]
        %v2438 = vld [vmem:[%s885 + $0xa0] sm:$0xf]
        %v2439 = vld [vmem:[%s885 + $0xa4] sm:$0x1]
        %v2440 = vld [vmem:[%s885 + $0xa8] sm:$0xe]
        %v2441 = vld [vmem:[%s885 + $0xac] sm:$0xf]
        %v2442 = vld [vmem:[%s885 + $0xb0] sm:$0x1]
        %v2443 = vld [vmem:[%s885 + $0xb4] sm:$0xe]
        %v2444 = vld [vmem:[%s885 + $0xb8] sm:$0xf]
        %v2445 = vld [vmem:[%s885 + $0xbc] sm:$0x1]
        %v2494 = vrot.slane %v2398, 5
        %v2495 = vrot.slane %v2494, 4
        %v2496 = vrot.slane %v2399, 5
        %v2497 = vsel %vm1661, %v2495, %v2496
        %v2498 = vrot.slane %v2496, 4
        %v2499 = vrot.slane %v2400, 5
        %v2500 = vsel %vm1661, %v2498, %v2499
        %v2501 = vrot.slane %v2401, 5
        %v2502 = vrot.slane %v2501, 4
        %v2503 = vrot.slane %v2402, 5
        %v2504 = vsel %vm1661, %v2502, %v2503
        %v2505 = vrot.slane %v2503, 4
        %v2506 = vrot.slane %v2403, 5
        %v2507 = vsel %vm1661, %v2505, %v2506
        %v2508 = vrot.slane %v2404, 5
        %v2509 = vrot.slane %v2508, 4
        %v2510 = vrot.slane %v2405, 5
        %v2511 = vsel %vm1661, %v2509, %v2510
        %v2512 = vrot.slane %v2510, 4
        %v2513 = vrot.slane %v2406, 5
        %v2514 = vsel %vm1661, %v2512, %v2513
        %v2515 = vrot.slane %v2407, 5
        %v2516 = vrot.slane %v2515, 4
        %v2517 = vrot.slane %v2408, 5
        %v2518 = vsel %vm1661, %v2516, %v2517
        %v2519 = vrot.slane %v2517, 4
        %v2520 = vrot.slane %v2409, 5
        %v2521 = vsel %vm1661, %v2519, %v2520
        %v2522 = vrot.slane %v2410, 5
        %v2523 = vrot.slane %v2522, 4
        %v2524 = vrot.slane %v2411, 5
        %v2525 = vsel %vm1661, %v2523, %v2524
        %v2526 = vrot.slane %v2524, 4
        %v2527 = vrot.slane %v2412, 5
        %v2528 = vsel %vm1661, %v2526, %v2527
        %v2529 = vrot.slane %v2413, 5
        %v2530 = vrot.slane %v2529, 4
        %v2531 = vrot.slane %v2414, 5
        %v2532 = vsel %vm1661, %v2530, %v2531
        %v2533 = vrot.slane %v2531, 4
        %v2534 = vrot.slane %v2415, 5
        %v2535 = vsel %vm1661, %v2533, %v2534
        %v2536 = vrot.slane %v2416, 5
        %v2537 = vrot.slane %v2536, 4
        %v2538 = vrot.slane %v2417, 5
        %v2539 = vsel %vm1661, %v2537, %v2538
        %v2540 = vrot.slane %v2538, 4
        %v2541 = vrot.slane %v2418, 5
        %v2542 = vsel %vm1661, %v2540, %v2541
        %v2543 = vrot.slane %v2419, 5
        %v2544 = vrot.slane %v2543, 4
        %v2545 = vrot.slane %v2420, 5
        %v2546 = vsel %vm1661, %v2544, %v2545
        %v2547 = vrot.slane %v2545, 4
        %v2548 = vrot.slane %v2421, 5
        %v2549 = vsel %vm1661, %v2547, %v2548
        %v2550 = vrot.slane %v2422, 5
        %v2551 = vrot.slane %v2550, 4
        %v2552 = vrot.slane %v2423, 5
        %v2553 = vsel %vm1661, %v2551, %v2552
        %v2554 = vrot.slane %v2552, 4
        %v2555 = vrot.slane %v2424, 5
        %v2556 = vsel %vm1661, %v2554, %v2555
        %v2557 = vrot.slane %v2425, 5
        %v2558 = vrot.slane %v2557, 4
        %v2559 = vrot.slane %v2426, 5
        %v2560 = vsel %vm1661, %v2558, %v2559
        %v2561 = vrot.slane %v2559, 4
        %v2562 = vrot.slane %v2427, 5
        %v2563 = vsel %vm1661, %v2561, %v2562
        %v2564 = vrot.slane %v2428, 5
        %v2565 = vrot.slane %v2564, 4
        %v2566 = vrot.slane %v2429, 5
        %v2567 = vsel %vm1661, %v2565, %v2566
        %v2568 = vrot.slane %v2566, 4
        %v2569 = vrot.slane %v2430, 5
        %v2570 = vsel %vm1661, %v2568, %v2569
        %v2571 = vrot.slane %v2431, 5
        %v2572 = vrot.slane %v2571, 4
        %v2573 = vrot.slane %v2432, 5
        %v2574 = vsel %vm1661, %v2572, %v2573
        %v2575 = vrot.slane %v2573, 4
        %v2576 = vrot.slane %v2433, 5
        %v2577 = vsel %vm1661, %v2575, %v2576
        %v2578 = vrot.slane %v2434, 5
        %v2579 = vrot.slane %v2578, 4
        %v2580 = vrot.slane %v2435, 5
        %v2581 = vsel %vm1661, %v2579, %v2580
        %v2582 = vrot.slane %v2580, 4
        %v2583 = vrot.slane %v2436, 5
        %v2584 = vsel %vm1661, %v2582, %v2583
        %v2585 = vrot.slane %v2437, 5
        %v2586 = vrot.slane %v2585, 4
        %v2587 = vrot.slane %v2438, 5
        %v2588 = vsel %vm1661, %v2586, %v2587
        %v2589 = vrot.slane %v2587, 4
        %v2590 = vrot.slane %v2439, 5
        %v2591 = vsel %vm1661, %v2589, %v2590
        %v2592 = vrot.slane %v2440, 5
        %v2593 = vrot.slane %v2592, 4
        %v2594 = vrot.slane %v2441, 5
        %v2595 = vsel %vm1661, %v2593, %v2594
        %v2596 = vrot.slane %v2594, 4
        %v2597 = vrot.slane %v2442, 5
        %v2598 = vsel %vm1661, %v2596, %v2597
        %v2599 = vrot.slane %v2443, 5
        %v2600 = vrot.slane %v2599, 4
        %v2601 = vrot.slane %v2444, 5
        %v2602 = vsel %vm1661, %v2600, %v2601
        %v2603 = vrot.slane %v2601, 4
        %v2604 = vrot.slane %v2445, 5
        %v2605 = vsel %vm1661, %v2603, %v2604
        %2638 = vst [vmem:[#allocation3 + $0x14] sm:$0xf] %v2497
        %2639 = vst [vmem:[#allocation3 + $0x38] sm:$0xf] %v2500
        %2640 = vst [vmem:[#allocation3 + $0x5c] sm:$0xf] %v2504
        %2641 = vst [vmem:[#allocation3 + $0x80] sm:$0xf] %v2507
        %2642 = vst [vmem:[#allocation3 + $0xa4] sm:$0xf] %v2511
        %2643 = vst [vmem:[#allocation3 + $0xc8] sm:$0xf] %v2514
        %2644 = vst [vmem:[#allocation3 + $0xec] sm:$0xf] %v2518
        %2645 = vst [vmem:[#allocation3 + $0x110] sm:$0xf] %v2521
        %2646 = vst [vmem:[#allocation3 + $0x134] sm:$0xf] %v2525
        %2647 = vst [vmem:[#allocation3 + $0x158] sm:$0xf] %v2528
        %2648 = vst [vmem:[#allocation3 + $0x17c] sm:$0xf] %v2532
        %2649 = vst [vmem:[#allocation3 + $0x1a0] sm:$0xf] %v2535
        %2650 = vst [vmem:[#allocation3 + $0x1c4] sm:$0xf] %v2539
        %2651 = vst [vmem:[#allocation3 + $0x1e8] sm:$0xf] %v2542
        %2652 = vst [vmem:[#allocation3 + $0x20c] sm:$0xf] %v2546
        %2653 = vst [vmem:[#allocation3 + $0x230] sm:$0xf] %v2549
        %2654 = vst [vmem:[#allocation3 + $0x254] sm:$0xf] %v2553
        %2655 = vst [vmem:[#allocation3 + $0x278] sm:$0xf] %v2556
        %2656 = vst [vmem:[#allocation3 + $0x29c] sm:$0xf] %v2560
        %2657 = vst [vmem:[#allocation3 + $0x2c0] sm:$0xf] %v2563
        %2658 = vst [vmem:[#allocation3 + $0x2e4] sm:$0xf] %v2567
        %2659 = vst [vmem:[#allocation3 + $0x308] sm:$0xf] %v2570
        %2660 = vst [vmem:[#allocation3 + $0x32c] sm:$0xf] %v2574
        %2661 = vst [vmem:[#allocation3 + $0x350] sm:$0xf] %v2577
        %2662 = vst [vmem:[#allocation3 + $0x374] sm:$0xf] %v2581
        %2663 = vst [vmem:[#allocation3 + $0x398] sm:$0xf] %v2584
        %2664 = vst [vmem:[#allocation3 + $0x3bc] sm:$0xf] %v2588
        %2665 = vst [vmem:[#allocation3 + $0x3e0] sm:$0xf] %v2591
        %2666 = vst [vmem:[#allocation3 + $0x404] sm:$0xf] %v2595
        %2667 = vst [vmem:[#allocation3 + $0x428] sm:$0xf] %v2598
        %2668 = vst [vmem:[#allocation3 + $0x44c] sm:$0xf] %v2602
        %2669 = vst [vmem:[#allocation3 + $0x470] sm:$0xf] %v2605
        %s2670 = scalar_lea.vmem [#allocation2], 24
        %v2671 = vld [vmem:[%s2670] sm:$0xf]
        %v2672 = vld [vmem:[%s2670 + $0x4] sm:$0xf]
        %v2673 = vld [vmem:[%s2670 + $0xc] sm:$0xf]
        %v2674 = vld [vmem:[%s2670 + $0x10] sm:$0xf]
        %v2675 = vld [vmem:[%s2670 + $0x18] sm:$0xf]
        %v2676 = vld [vmem:[%s2670 + $0x1c] sm:$0xf]
        %v2677 = vld [vmem:[%s2670 + $0x24] sm:$0xf]
        %v2678 = vld [vmem:[%s2670 + $0x28] sm:$0xf]
        %v2679 = vld [vmem:[%s2670 + $0x30] sm:$0xf]
        %v2680 = vld [vmem:[%s2670 + $0x34] sm:$0xf]
        %v2681 = vld [vmem:[%s2670 + $0x3c] sm:$0xf]
        %v2682 = vld [vmem:[%s2670 + $0x40] sm:$0xf]
        %v2683 = vld [vmem:[%s2670 + $0x48] sm:$0xf]
        %v2684 = vld [vmem:[%s2670 + $0x4c] sm:$0xf]
        %v2685 = vld [vmem:[%s2670 + $0x54] sm:$0xf]
        %v2686 = vld [vmem:[%s2670 + $0x58] sm:$0xf]
        %v2687 = vld [vmem:[%s2670 + $0x60] sm:$0xf]
        %v2688 = vld [vmem:[%s2670 + $0x64] sm:$0xf]
        %v2689 = vld [vmem:[%s2670 + $0x6c] sm:$0xf]
        %v2690 = vld [vmem:[%s2670 + $0x70] sm:$0xf]
        %v2691 = vld [vmem:[%s2670 + $0x78] sm:$0xf]
        %v2692 = vld [vmem:[%s2670 + $0x7c] sm:$0xf]
        %v2693 = vld [vmem:[%s2670 + $0x84] sm:$0xf]
        %v2694 = vld [vmem:[%s2670 + $0x88] sm:$0xf]
        %v2695 = vld [vmem:[%s2670 + $0x90] sm:$0xf]
        %v2696 = vld [vmem:[%s2670 + $0x94] sm:$0xf]
        %v2697 = vld [vmem:[%s2670 + $0x9c] sm:$0xf]
        %v2698 = vld [vmem:[%s2670 + $0xa0] sm:$0xf]
        %v2699 = vld [vmem:[%s2670 + $0xa8] sm:$0xf]
        %v2700 = vld [vmem:[%s2670 + $0xac] sm:$0xf]
        %v2701 = vld [vmem:[%s2670 + $0xb4] sm:$0xf]
        %v2702 = vld [vmem:[%s2670 + $0xb8] sm:$0xf]
        %2703 = vst [vmem:[#allocation3 + $0x18] sm:$0xf] %v2671
        %2704 = vst [vmem:[#allocation3 + $0x3c] sm:$0xf] %v2672
        %2705 = vst [vmem:[#allocation3 + $0x60] sm:$0xf] %v2673
        %2706 = vst [vmem:[#allocation3 + $0x84] sm:$0xf] %v2674
        %2707 = vst [vmem:[#allocation3 + $0xa8] sm:$0xf] %v2675
        %2708 = vst [vmem:[#allocation3 + $0xcc] sm:$0xf] %v2676
        %2709 = vst [vmem:[#allocation3 + $0xf0] sm:$0xf] %v2677
        %2710 = vst [vmem:[#allocation3 + $0x114] sm:$0xf] %v2678
        %2711 = vst [vmem:[#allocation3 + $0x138] sm:$0xf] %v2679
        %2712 = vst [vmem:[#allocation3 + $0x15c] sm:$0xf] %v2680
        %2713 = vst [vmem:[#allocation3 + $0x180] sm:$0xf] %v2681
        %2714 = vst [vmem:[#allocation3 + $0x1a4] sm:$0xf] %v2682
        %2715 = vst [vmem:[#allocation3 + $0x1c8] sm:$0xf] %v2683
        %2716 = vst [vmem:[#allocation3 + $0x1ec] sm:$0xf] %v2684
        %2717 = vst [vmem:[#allocation3 + $0x210] sm:$0xf] %v2685
        %2718 = vst [vmem:[#allocation3 + $0x234] sm:$0xf] %v2686
        %2719 = vst [vmem:[#allocation3 + $0x258] sm:$0xf] %v2687
        %2720 = vst [vmem:[#allocation3 + $0x27c] sm:$0xf] %v2688
        %2721 = vst [vmem:[#allocation3 + $0x2a0] sm:$0xf] %v2689
        %2722 = vst [vmem:[#allocation3 + $0x2c4] sm:$0xf] %v2690
        %2723 = vst [vmem:[#allocation3 + $0x2e8] sm:$0xf] %v2691
        %2724 = vst [vmem:[#allocation3 + $0x30c] sm:$0xf] %v2692
        %2725 = vst [vmem:[#allocation3 + $0x330] sm:$0xf] %v2693
        %2726 = vst [vmem:[#allocation3 + $0x354] sm:$0xf] %v2694
        %2727 = vst [vmem:[#allocation3 + $0x378] sm:$0xf] %v2695
        %2728 = vst [vmem:[#allocation3 + $0x39c] sm:$0xf] %v2696
        %2729 = vst [vmem:[#allocation3 + $0x3c0] sm:$0xf] %v2697
        %2730 = vst [vmem:[#allocation3 + $0x3e4] sm:$0xf] %v2698
        %2731 = vst [vmem:[#allocation3 + $0x408] sm:$0xf] %v2699
        %2732 = vst [vmem:[#allocation3 + $0x42c] sm:$0xf] %v2700
        %2733 = vst [vmem:[#allocation3 + $0x450] sm:$0xf] %v2701
        %2734 = vst [vmem:[#allocation3 + $0x474] sm:$0xf] %v2702
        %v2735 = vld [vmem:[%s2670] sm:$0xf]
        %v2736 = vld [vmem:[%s2670 + $0x4] sm:$0xf]
        %v2737 = vld [vmem:[%s2670 + $0x8] sm:$0x1]
        %v2738 = vld [vmem:[%s2670 + $0xc] sm:$0xf]
        %v2739 = vld [vmem:[%s2670 + $0x10] sm:$0xf]
        %v2740 = vld [vmem:[%s2670 + $0x14] sm:$0x1]
        %v2741 = vld [vmem:[%s2670 + $0x18] sm:$0xf]
        %v2742 = vld [vmem:[%s2670 + $0x1c] sm:$0xf]
        %v2743 = vld [vmem:[%s2670 + $0x20] sm:$0x1]
        %v2744 = vld [vmem:[%s2670 + $0x24] sm:$0xf]
        %v2745 = vld [vmem:[%s2670 + $0x28] sm:$0xf]
        %v2746 = vld [vmem:[%s2670 + $0x2c] sm:$0x1]
        %v2747 = vld [vmem:[%s2670 + $0x30] sm:$0xf]
        %v2748 = vld [vmem:[%s2670 + $0x34] sm:$0xf]
        %v2749 = vld [vmem:[%s2670 + $0x38] sm:$0x1]
        %v2750 = vld [vmem:[%s2670 + $0x3c] sm:$0xf]
        %v2751 = vld [vmem:[%s2670 + $0x40] sm:$0xf]
        %v2752 = vld [vmem:[%s2670 + $0x44] sm:$0x1]
        %v2753 = vld [vmem:[%s2670 + $0x48] sm:$0xf]
        %v2754 = vld [vmem:[%s2670 + $0x4c] sm:$0xf]
        %v2755 = vld [vmem:[%s2670 + $0x50] sm:$0x1]
        %v2756 = vld [vmem:[%s2670 + $0x54] sm:$0xf]
        %v2757 = vld [vmem:[%s2670 + $0x58] sm:$0xf]
        %v2758 = vld [vmem:[%s2670 + $0x5c] sm:$0x1]
        %v2759 = vld [vmem:[%s2670 + $0x60] sm:$0xf]
        %v2760 = vld [vmem:[%s2670 + $0x64] sm:$0xf]
        %v2761 = vld [vmem:[%s2670 + $0x68] sm:$0x1]
        %v2762 = vld [vmem:[%s2670 + $0x6c] sm:$0xf]
        %v2763 = vld [vmem:[%s2670 + $0x70] sm:$0xf]
        %v2764 = vld [vmem:[%s2670 + $0x74] sm:$0x1]
        %v2765 = vld [vmem:[%s2670 + $0x78] sm:$0xf]
        %v2766 = vld [vmem:[%s2670 + $0x7c] sm:$0xf]
        %v2767 = vld [vmem:[%s2670 + $0x80] sm:$0x1]
        %v2768 = vld [vmem:[%s2670 + $0x84] sm:$0xf]
        %v2769 = vld [vmem:[%s2670 + $0x88] sm:$0xf]
        %v2770 = vld [vmem:[%s2670 + $0x8c] sm:$0x1]
        %v2771 = vld [vmem:[%s2670 + $0x90] sm:$0xf]
        %v2772 = vld [vmem:[%s2670 + $0x94] sm:$0xf]
        %v2773 = vld [vmem:[%s2670 + $0x98] sm:$0x1]
        %v2774 = vld [vmem:[%s2670 + $0x9c] sm:$0xf]
        %v2775 = vld [vmem:[%s2670 + $0xa0] sm:$0xf]
        %v2776 = vld [vmem:[%s2670 + $0xa4] sm:$0x1]
        %v2777 = vld [vmem:[%s2670 + $0xa8] sm:$0xf]
        %v2778 = vld [vmem:[%s2670 + $0xac] sm:$0xf]
        %v2779 = vld [vmem:[%s2670 + $0xb0] sm:$0x1]
        %v2780 = vld [vmem:[%s2670 + $0xb4] sm:$0xf]
        %v2781 = vld [vmem:[%s2670 + $0xb8] sm:$0xf]
        %v2782 = vld [vmem:[%s2670 + $0xbc] sm:$0x1]
        %v2784 = vshrl.u32 %v2735, 16
        %v2786 = vrot.slane %v2784, 4
        %v2787 = vshll.u32 %v2735, 16
        %v2789 = vrot.slane %v2787, 5
        %v2790 = vor.u32 %v2786, %v2789
        %v2791 = vrot.slane %v2790, 4
        %v2793 = vshll.u32 %v2736, 16
        %v2795 = vrot.slane %v2793, 5
        %v2796 = vsel %vm1114, %v2791, %v2795
        %v2797 = vshrl.u32 %v2736, 16
        %v2799 = vrot.slane %v2797, 4
        %v2800 = vor.u32 %v2799, %v2795
        %v2801 = vrot.slane %v2800, 4
        %v2803 = vshll.u32 %v2737, 16
        %v2805 = vrot.slane %v2803, 5
        %v2806 = vsel %vm1114, %v2801, %v2805
        %v2808 = vshrl.u32 %v2738, 16
        %v2810 = vrot.slane %v2808, 4
        %v2811 = vshll.u32 %v2738, 16
        %v2813 = vrot.slane %v2811, 5
        %v2814 = vor.u32 %v2810, %v2813
        %v2815 = vrot.slane %v2814, 4
        %v2817 = vshll.u32 %v2739, 16
        %v2819 = vrot.slane %v2817, 5
        %v2820 = vsel %vm1114, %v2815, %v2819
        %v2821 = vshrl.u32 %v2739, 16
        %v2823 = vrot.slane %v2821, 4
        %v2824 = vor.u32 %v2823, %v2819
        %v2825 = vrot.slane %v2824, 4
        %v2827 = vshll.u32 %v2740, 16
        %v2829 = vrot.slane %v2827, 5
        %v2830 = vsel %vm1114, %v2825, %v2829
        %v2832 = vshrl.u32 %v2741, 16
        %v2834 = vrot.slane %v2832, 4
        %v2835 = vshll.u32 %v2741, 16
        %v2837 = vrot.slane %v2835, 5
        %v2838 = vor.u32 %v2834, %v2837
        %v2839 = vrot.slane %v2838, 4
        %v2841 = vshll.u32 %v2742, 16
        %v2843 = vrot.slane %v2841, 5
        %v2844 = vsel %vm1114, %v2839, %v2843
        %v2845 = vshrl.u32 %v2742, 16
        %v2847 = vrot.slane %v2845, 4
        %v2848 = vor.u32 %v2847, %v2843
        %v2849 = vrot.slane %v2848, 4
        %v2851 = vshll.u32 %v2743, 16
        %v2853 = vrot.slane %v2851, 5
        %v2854 = vsel %vm1114, %v2849, %v2853
        %v2856 = vshrl.u32 %v2744, 16
        %v2858 = vrot.slane %v2856, 4
        %v2859 = vshll.u32 %v2744, 16
        %v2861 = vrot.slane %v2859, 5
        %v2862 = vor.u32 %v2858, %v2861
        %v2863 = vrot.slane %v2862, 4
        %v2865 = vshll.u32 %v2745, 16
        %v2867 = vrot.slane %v2865, 5
        %v2868 = vsel %vm1114, %v2863, %v2867
        %v2869 = vshrl.u32 %v2745, 16
        %v2871 = vrot.slane %v2869, 4
        %v2872 = vor.u32 %v2871, %v2867
        %v2873 = vrot.slane %v2872, 4
        %v2875 = vshll.u32 %v2746, 16
        %v2877 = vrot.slane %v2875, 5
        %v2878 = vsel %vm1114, %v2873, %v2877
        %v2880 = vshrl.u32 %v2747, 16
        %v2882 = vrot.slane %v2880, 4
        %v2883 = vshll.u32 %v2747, 16
        %v2885 = vrot.slane %v2883, 5
        %v2886 = vor.u32 %v2882, %v2885
        %v2887 = vrot.slane %v2886, 4
        %v2889 = vshll.u32 %v2748, 16
        %v2891 = vrot.slane %v2889, 5
        %v2892 = vsel %vm1114, %v2887, %v2891
        %v2893 = vshrl.u32 %v2748, 16
        %v2895 = vrot.slane %v2893, 4
        %v2896 = vor.u32 %v2895, %v2891
        %v2897 = vrot.slane %v2896, 4
        %v2899 = vshll.u32 %v2749, 16
        %v2901 = vrot.slane %v2899, 5
        %v2902 = vsel %vm1114, %v2897, %v2901
        %v2904 = vshrl.u32 %v2750, 16
        %v2906 = vrot.slane %v2904, 4
        %v2907 = vshll.u32 %v2750, 16
        %v2909 = vrot.slane %v2907, 5
        %v2910 = vor.u32 %v2906, %v2909
        %v2911 = vrot.slane %v2910, 4
        %v2913 = vshll.u32 %v2751, 16
        %v2915 = vrot.slane %v2913, 5
        %v2916 = vsel %vm1114, %v2911, %v2915
        %v2917 = vshrl.u32 %v2751, 16
        %v2919 = vrot.slane %v2917, 4
        %v2920 = vor.u32 %v2919, %v2915
        %v2921 = vrot.slane %v2920, 4
        %v2923 = vshll.u32 %v2752, 16
        %v2925 = vrot.slane %v2923, 5
        %v2926 = vsel %vm1114, %v2921, %v2925
        %v2928 = vshrl.u32 %v2753, 16
        %v2930 = vrot.slane %v2928, 4
        %v2931 = vshll.u32 %v2753, 16
        %v2933 = vrot.slane %v2931, 5
        %v2934 = vor.u32 %v2930, %v2933
        %v2935 = vrot.slane %v2934, 4
        %v2937 = vshll.u32 %v2754, 16
        %v2939 = vrot.slane %v2937, 5
        %v2940 = vsel %vm1114, %v2935, %v2939
        %v2941 = vshrl.u32 %v2754, 16
        %v2943 = vrot.slane %v2941, 4
        %v2944 = vor.u32 %v2943, %v2939
        %v2945 = vrot.slane %v2944, 4
        %v2947 = vshll.u32 %v2755, 16
        %v2949 = vrot.slane %v2947, 5
        %v2950 = vsel %vm1114, %v2945, %v2949
        %v2952 = vshrl.u32 %v2756, 16
        %v2954 = vrot.slane %v2952, 4
        %v2955 = vshll.u32 %v2756, 16
        %v2957 = vrot.slane %v2955, 5
        %v2958 = vor.u32 %v2954, %v2957
        %v2959 = vrot.slane %v2958, 4
        %v2961 = vshll.u32 %v2757, 16
        %v2963 = vrot.slane %v2961, 5
        %v2964 = vsel %vm1114, %v2959, %v2963
        %v2965 = vshrl.u32 %v2757, 16
        %v2967 = vrot.slane %v2965, 4
        %v2968 = vor.u32 %v2967, %v2963
        %v2969 = vrot.slane %v2968, 4
        %v2971 = vshll.u32 %v2758, 16
        %v2973 = vrot.slane %v2971, 5
        %v2974 = vsel %vm1114, %v2969, %v2973
        %v2976 = vshrl.u32 %v2759, 16
        %v2978 = vrot.slane %v2976, 4
        %v2979 = vshll.u32 %v2759, 16
        %v2981 = vrot.slane %v2979, 5
        %v2982 = vor.u32 %v2978, %v2981
        %v2983 = vrot.slane %v2982, 4
        %v2985 = vshll.u32 %v2760, 16
        %v2987 = vrot.slane %v2985, 5
        %v2988 = vsel %vm1114, %v2983, %v2987
        %v2989 = vshrl.u32 %v2760, 16
        %v2991 = vrot.slane %v2989, 4
        %v2992 = vor.u32 %v2991, %v2987
        %v2993 = vrot.slane %v2992, 4
        %v2995 = vshll.u32 %v2761, 16
        %v2997 = vrot.slane %v2995, 5
        %v2998 = vsel %vm1114, %v2993, %v2997
        %v3000 = vshrl.u32 %v2762, 16
        %v3002 = vrot.slane %v3000, 4
        %v3003 = vshll.u32 %v2762, 16
        %v3005 = vrot.slane %v3003, 5
        %v3006 = vor.u32 %v3002, %v3005
        %v3007 = vrot.slane %v3006, 4
        %v3009 = vshll.u32 %v2763, 16
        %v3011 = vrot.slane %v3009, 5
        %v3012 = vsel %vm1114, %v3007, %v3011
        %v3013 = vshrl.u32 %v2763, 16
        %v3015 = vrot.slane %v3013, 4
        %v3016 = vor.u32 %v3015, %v3011
        %v3017 = vrot.slane %v3016, 4
        %v3019 = vshll.u32 %v2764, 16
        %v3021 = vrot.slane %v3019, 5
        %v3022 = vsel %vm1114, %v3017, %v3021
        %v3024 = vshrl.u32 %v2765, 16
        %v3026 = vrot.slane %v3024, 4
        %v3027 = vshll.u32 %v2765, 16
        %v3029 = vrot.slane %v3027, 5
        %v3030 = vor.u32 %v3026, %v3029
        %v3031 = vrot.slane %v3030, 4
        %v3033 = vshll.u32 %v2766, 16
        %v3035 = vrot.slane %v3033, 5
        %v3036 = vsel %vm1114, %v3031, %v3035
        %v3037 = vshrl.u32 %v2766, 16
        %v3039 = vrot.slane %v3037, 4
        %v3040 = vor.u32 %v3039, %v3035
        %v3041 = vrot.slane %v3040, 4
        %v3043 = vshll.u32 %v2767, 16
        %v3045 = vrot.slane %v3043, 5
        %v3046 = vsel %vm1114, %v3041, %v3045
        %v3048 = vshrl.u32 %v2768, 16
        %v3050 = vrot.slane %v3048, 4
        %v3051 = vshll.u32 %v2768, 16
        %v3053 = vrot.slane %v3051, 5
        %v3054 = vor.u32 %v3050, %v3053
        %v3055 = vrot.slane %v3054, 4
        %v3057 = vshll.u32 %v2769, 16
        %v3059 = vrot.slane %v3057, 5
        %v3060 = vsel %vm1114, %v3055, %v3059
        %v3061 = vshrl.u32 %v2769, 16
        %v3063 = vrot.slane %v3061, 4
        %v3064 = vor.u32 %v3063, %v3059
        %v3065 = vrot.slane %v3064, 4
        %v3067 = vshll.u32 %v2770, 16
        %v3069 = vrot.slane %v3067, 5
        %v3070 = vsel %vm1114, %v3065, %v3069
        %v3072 = vshrl.u32 %v2771, 16
        %v3074 = vrot.slane %v3072, 4
        %v3075 = vshll.u32 %v2771, 16
        %v3077 = vrot.slane %v3075, 5
        %v3078 = vor.u32 %v3074, %v3077
        %v3079 = vrot.slane %v3078, 4
        %v3081 = vshll.u32 %v2772, 16
        %v3083 = vrot.slane %v3081, 5
        %v3084 = vsel %vm1114, %v3079, %v3083
        %v3085 = vshrl.u32 %v2772, 16
        %v3087 = vrot.slane %v3085, 4
        %v3088 = vor.u32 %v3087, %v3083
        %v3089 = vrot.slane %v3088, 4
        %v3091 = vshll.u32 %v2773, 16
        %v3093 = vrot.slane %v3091, 5
        %v3094 = vsel %vm1114, %v3089, %v3093
        %v3096 = vshrl.u32 %v2774, 16
        %v3098 = vrot.slane %v3096, 4
        %v3099 = vshll.u32 %v2774, 16
        %v3101 = vrot.slane %v3099, 5
        %v3102 = vor.u32 %v3098, %v3101
        %v3103 = vrot.slane %v3102, 4
        %v3105 = vshll.u32 %v2775, 16
        %v3107 = vrot.slane %v3105, 5
        %v3108 = vsel %vm1114, %v3103, %v3107
        %v3109 = vshrl.u32 %v2775, 16
        %v3111 = vrot.slane %v3109, 4
        %v3112 = vor.u32 %v3111, %v3107
        %v3113 = vrot.slane %v3112, 4
        %v3115 = vshll.u32 %v2776, 16
        %v3117 = vrot.slane %v3115, 5
        %v3118 = vsel %vm1114, %v3113, %v3117
        %v3120 = vshrl.u32 %v2777, 16
        %v3122 = vrot.slane %v3120, 4
        %v3123 = vshll.u32 %v2777, 16
        %v3125 = vrot.slane %v3123, 5
        %v3126 = vor.u32 %v3122, %v3125
        %v3127 = vrot.slane %v3126, 4
        %v3129 = vshll.u32 %v2778, 16
        %v3131 = vrot.slane %v3129, 5
        %v3132 = vsel %vm1114, %v3127, %v3131
        %v3133 = vshrl.u32 %v2778, 16
        %v3135 = vrot.slane %v3133, 4
        %v3136 = vor.u32 %v3135, %v3131
        %v3137 = vrot.slane %v3136, 4
        %v3139 = vshll.u32 %v2779, 16
        %v3141 = vrot.slane %v3139, 5
        %v3142 = vsel %vm1114, %v3137, %v3141
        %v3144 = vshrl.u32 %v2780, 16
        %v3146 = vrot.slane %v3144, 4
        %v3147 = vshll.u32 %v2780, 16
        %v3149 = vrot.slane %v3147, 5
        %v3150 = vor.u32 %v3146, %v3149
        %v3151 = vrot.slane %v3150, 4
        %v3153 = vshll.u32 %v2781, 16
        %v3155 = vrot.slane %v3153, 5
        %v3156 = vsel %vm1114, %v3151, %v3155
        %v3157 = vshrl.u32 %v2781, 16
        %v3159 = vrot.slane %v3157, 4
        %v3160 = vor.u32 %v3159, %v3155
        %v3161 = vrot.slane %v3160, 4
        %v3163 = vshll.u32 %v2782, 16
        %v3165 = vrot.slane %v3163, 5
        %v3166 = vsel %vm1114, %v3161, %v3165
        %3199 = vst [vmem:[#allocation3 + $0x1c] sm:$0xf] %v2796
        %3200 = vst [vmem:[#allocation3 + $0x40] sm:$0xf] %v2806
        %3201 = vst [vmem:[#allocation3 + $0x64] sm:$0xf] %v2820
        %3202 = vst [vmem:[#allocation3 + $0x88] sm:$0xf] %v2830
        %3203 = vst [vmem:[#allocation3 + $0xac] sm:$0xf] %v2844
        %3204 = vst [vmem:[#allocation3 + $0xd0] sm:$0xf] %v2854
        %3205 = vst [vmem:[#allocation3 + $0xf4] sm:$0xf] %v2868
        %3206 = vst [vmem:[#allocation3 + $0x118] sm:$0xf] %v2878
        %3207 = vst [vmem:[#allocation3 + $0x13c] sm:$0xf] %v2892
        %3208 = vst [vmem:[#allocation3 + $0x160] sm:$0xf] %v2902
        %3209 = vst [vmem:[#allocation3 + $0x184] sm:$0xf] %v2916
        %3210 = vst [vmem:[#allocation3 + $0x1a8] sm:$0xf] %v2926
        %3211 = vst [vmem:[#allocation3 + $0x1cc] sm:$0xf] %v2940
        %3212 = vst [vmem:[#allocation3 + $0x1f0] sm:$0xf] %v2950
        %3213 = vst [vmem:[#allocation3 + $0x214] sm:$0xf] %v2964
        %3214 = vst [vmem:[#allocation3 + $0x238] sm:$0xf] %v2974
        %3215 = vst [vmem:[#allocation3 + $0x25c] sm:$0xf] %v2988
        %3216 = vst [vmem:[#allocation3 + $0x280] sm:$0xf] %v2998
        %3217 = vst [vmem:[#allocation3 + $0x2a4] sm:$0xf] %v3012
        %3218 = vst [vmem:[#allocation3 + $0x2c8] sm:$0xf] %v3022
        %3219 = vst [vmem:[#allocation3 + $0x2ec] sm:$0xf] %v3036
        %3220 = vst [vmem:[#allocation3 + $0x310] sm:$0xf] %v3046
        %3221 = vst [vmem:[#allocation3 + $0x334] sm:$0xf] %v3060
        %3222 = vst [vmem:[#allocation3 + $0x358] sm:$0xf] %v3070
        %3223 = vst [vmem:[#allocation3 + $0x37c] sm:$0xf] %v3084
        %3224 = vst [vmem:[#allocation3 + $0x3a0] sm:$0xf] %v3094
        %3225 = vst [vmem:[#allocation3 + $0x3c4] sm:$0xf] %v3108
        %3226 = vst [vmem:[#allocation3 + $0x3e8] sm:$0xf] %v3118
        %3227 = vst [vmem:[#allocation3 + $0x40c] sm:$0xf] %v3132
        %3228 = vst [vmem:[#allocation3 + $0x430] sm:$0xf] %v3142
        %3229 = vst [vmem:[#allocation3 + $0x454] sm:$0xf] %v3156
        %3230 = vst [vmem:[#allocation3 + $0x478] sm:$0xf] %v3166
        %v3231 = vld [vmem:[%s2670] sm:$0xe]
        %v3232 = vld [vmem:[%s2670 + $0x4] sm:$0xf]
        %v3233 = vld [vmem:[%s2670 + $0x8] sm:$0x1]
        %v3234 = vld [vmem:[%s2670 + $0xc] sm:$0xe]
        %v3235 = vld [vmem:[%s2670 + $0x10] sm:$0xf]
        %v3236 = vld [vmem:[%s2670 + $0x14] sm:$0x1]
        %v3237 = vld [vmem:[%s2670 + $0x18] sm:$0xe]
        %v3238 = vld [vmem:[%s2670 + $0x1c] sm:$0xf]
        %v3239 = vld [vmem:[%s2670 + $0x20] sm:$0x1]
        %v3240 = vld [vmem:[%s2670 + $0x24] sm:$0xe]
        %v3241 = vld [vmem:[%s2670 + $0x28] sm:$0xf]
        %v3242 = vld [vmem:[%s2670 + $0x2c] sm:$0x1]
        %v3243 = vld [vmem:[%s2670 + $0x30] sm:$0xe]
        %v3244 = vld [vmem:[%s2670 + $0x34] sm:$0xf]
        %v3245 = vld [vmem:[%s2670 + $0x38] sm:$0x1]
        %v3246 = vld [vmem:[%s2670 + $0x3c] sm:$0xe]
        %v3247 = vld [vmem:[%s2670 + $0x40] sm:$0xf]
        %v3248 = vld [vmem:[%s2670 + $0x44] sm:$0x1]
        %v3249 = vld [vmem:[%s2670 + $0x48] sm:$0xe]
        %v3250 = vld [vmem:[%s2670 + $0x4c] sm:$0xf]
        %v3251 = vld [vmem:[%s2670 + $0x50] sm:$0x1]
        %v3252 = vld [vmem:[%s2670 + $0x54] sm:$0xe]
        %v3253 = vld [vmem:[%s2670 + $0x58] sm:$0xf]
        %v3254 = vld [vmem:[%s2670 + $0x5c] sm:$0x1]
        %v3255 = vld [vmem:[%s2670 + $0x60] sm:$0xe]
        %v3256 = vld [vmem:[%s2670 + $0x64] sm:$0xf]
        %v3257 = vld [vmem:[%s2670 + $0x68] sm:$0x1]
        %v3258 = vld [vmem:[%s2670 + $0x6c] sm:$0xe]
        %v3259 = vld [vmem:[%s2670 + $0x70] sm:$0xf]
        %v3260 = vld [vmem:[%s2670 + $0x74] sm:$0x1]
        %v3261 = vld [vmem:[%s2670 + $0x78] sm:$0xe]
        %v3262 = vld [vmem:[%s2670 + $0x7c] sm:$0xf]
        %v3263 = vld [vmem:[%s2670 + $0x80] sm:$0x1]
        %v3264 = vld [vmem:[%s2670 + $0x84] sm:$0xe]
        %v3265 = vld [vmem:[%s2670 + $0x88] sm:$0xf]
        %v3266 = vld [vmem:[%s2670 + $0x8c] sm:$0x1]
        %v3267 = vld [vmem:[%s2670 + $0x90] sm:$0xe]
        %v3268 = vld [vmem:[%s2670 + $0x94] sm:$0xf]
        %v3269 = vld [vmem:[%s2670 + $0x98] sm:$0x1]
        %v3270 = vld [vmem:[%s2670 + $0x9c] sm:$0xe]
        %v3271 = vld [vmem:[%s2670 + $0xa0] sm:$0xf]
        %v3272 = vld [vmem:[%s2670 + $0xa4] sm:$0x1]
        %v3273 = vld [vmem:[%s2670 + $0xa8] sm:$0xe]
        %v3274 = vld [vmem:[%s2670 + $0xac] sm:$0xf]
        %v3275 = vld [vmem:[%s2670 + $0xb0] sm:$0x1]
        %v3276 = vld [vmem:[%s2670 + $0xb4] sm:$0xe]
        %v3277 = vld [vmem:[%s2670 + $0xb8] sm:$0xf]
        %v3278 = vld [vmem:[%s2670 + $0xbc] sm:$0x1]
        %v3327 = vrot.slane %v3231, 5
        %v3328 = vrot.slane %v3327, 4
        %v3329 = vrot.slane %v3232, 5
        %v3330 = vsel %vm1661, %v3328, %v3329
        %v3331 = vrot.slane %v3329, 4
        %v3332 = vrot.slane %v3233, 5
        %v3333 = vsel %vm1661, %v3331, %v3332
        %v3334 = vrot.slane %v3234, 5
        %v3335 = vrot.slane %v3334, 4
        %v3336 = vrot.slane %v3235, 5
        %v3337 = vsel %vm1661, %v3335, %v3336
        %v3338 = vrot.slane %v3336, 4
        %v3339 = vrot.slane %v3236, 5
        %v3340 = vsel %vm1661, %v3338, %v3339
        %v3341 = vrot.slane %v3237, 5
        %v3342 = vrot.slane %v3341, 4
        %v3343 = vrot.slane %v3238, 5
        %v3344 = vsel %vm1661, %v3342, %v3343
        %v3345 = vrot.slane %v3343, 4
        %v3346 = vrot.slane %v3239, 5
        %v3347 = vsel %vm1661, %v3345, %v3346
        %v3348 = vrot.slane %v3240, 5
        %v3349 = vrot.slane %v3348, 4
        %v3350 = vrot.slane %v3241, 5
        %v3351 = vsel %vm1661, %v3349, %v3350
        %v3352 = vrot.slane %v3350, 4
        %v3353 = vrot.slane %v3242, 5
        %v3354 = vsel %vm1661, %v3352, %v3353
        %v3355 = vrot.slane %v3243, 5
        %v3356 = vrot.slane %v3355, 4
        %v3357 = vrot.slane %v3244, 5
        %v3358 = vsel %vm1661, %v3356, %v3357
        %v3359 = vrot.slane %v3357, 4
        %v3360 = vrot.slane %v3245, 5
        %v3361 = vsel %vm1661, %v3359, %v3360
        %v3362 = vrot.slane %v3246, 5
        %v3363 = vrot.slane %v3362, 4
        %v3364 = vrot.slane %v3247, 5
        %v3365 = vsel %vm1661, %v3363, %v3364
        %v3366 = vrot.slane %v3364, 4
        %v3367 = vrot.slane %v3248, 5
        %v3368 = vsel %vm1661, %v3366, %v3367
        %v3369 = vrot.slane %v3249, 5
        %v3370 = vrot.slane %v3369, 4
        %v3371 = vrot.slane %v3250, 5
        %v3372 = vsel %vm1661, %v3370, %v3371
        %v3373 = vrot.slane %v3371, 4
        %v3374 = vrot.slane %v3251, 5
        %v3375 = vsel %vm1661, %v3373, %v3374
        %v3376 = vrot.slane %v3252, 5
        %v3377 = vrot.slane %v3376, 4
        %v3378 = vrot.slane %v3253, 5
        %v3379 = vsel %vm1661, %v3377, %v3378
        %v3380 = vrot.slane %v3378, 4
        %v3381 = vrot.slane %v3254, 5
        %v3382 = vsel %vm1661, %v3380, %v3381
        %v3383 = vrot.slane %v3255, 5
        %v3384 = vrot.slane %v3383, 4
        %v3385 = vrot.slane %v3256, 5
        %v3386 = vsel %vm1661, %v3384, %v3385
        %v3387 = vrot.slane %v3385, 4
        %v3388 = vrot.slane %v3257, 5
        %v3389 = vsel %vm1661, %v3387, %v3388
        %v3390 = vrot.slane %v3258, 5
        %v3391 = vrot.slane %v3390, 4
        %v3392 = vrot.slane %v3259, 5
        %v3393 = vsel %vm1661, %v3391, %v3392
        %v3394 = vrot.slane %v3392, 4
        %v3395 = vrot.slane %v3260, 5
        %v3396 = vsel %vm1661, %v3394, %v3395
        %v3397 = vrot.slane %v3261, 5
        %v3398 = vrot.slane %v3397, 4
        %v3399 = vrot.slane %v3262, 5
        %v3400 = vsel %vm1661, %v3398, %v3399
        %v3401 = vrot.slane %v3399, 4
        %v3402 = vrot.slane %v3263, 5
        %v3403 = vsel %vm1661, %v3401, %v3402
        %v3404 = vrot.slane %v3264, 5
        %v3405 = vrot.slane %v3404, 4
        %v3406 = vrot.slane %v3265, 5
        %v3407 = vsel %vm1661, %v3405, %v3406
        %v3408 = vrot.slane %v3406, 4
        %v3409 = vrot.slane %v3266, 5
        %v3410 = vsel %vm1661, %v3408, %v3409
        %v3411 = vrot.slane %v3267, 5
        %v3412 = vrot.slane %v3411, 4
        %v3413 = vrot.slane %v3268, 5
        %v3414 = vsel %vm1661, %v3412, %v3413
        %v3415 = vrot.slane %v3413, 4
        %v3416 = vrot.slane %v3269, 5
        %v3417 = vsel %vm1661, %v3415, %v3416
        %v3418 = vrot.slane %v3270, 5
        %v3419 = vrot.slane %v3418, 4
        %v3420 = vrot.slane %v3271, 5
        %v3421 = vsel %vm1661, %v3419, %v3420
        %v3422 = vrot.slane %v3420, 4
        %v3423 = vrot.slane %v3272, 5
        %v3424 = vsel %vm1661, %v3422, %v3423
        %v3425 = vrot.slane %v3273, 5
        %v3426 = vrot.slane %v3425, 4
        %v3427 = vrot.slane %v3274, 5
        %v3428 = vsel %vm1661, %v3426, %v3427
        %v3429 = vrot.slane %v3427, 4
        %v3430 = vrot.slane %v3275, 5
        %v3431 = vsel %vm1661, %v3429, %v3430
        %v3432 = vrot.slane %v3276, 5
        %v3433 = vrot.slane %v3432, 4
        %v3434 = vrot.slane %v3277, 5
        %v3435 = vsel %vm1661, %v3433, %v3434
        %v3436 = vrot.slane %v3434, 4
        %v3437 = vrot.slane %v3278, 5
        %v3438 = vsel %vm1661, %v3436, %v3437
        %3471 = vst [vmem:[#allocation3 + $0x20] sm:$0xf] %v3330
        %3472 = vst [vmem:[#allocation3 + $0x44] sm:$0xf] %v3333
        %3473 = vst [vmem:[#allocation3 + $0x68] sm:$0xf] %v3337
        %3474 = vst [vmem:[#allocation3 + $0x8c] sm:$0xf] %v3340
        %3475 = vst [vmem:[#allocation3 + $0xb0] sm:$0xf] %v3344
        %3476 = vst [vmem:[#allocation3 + $0xd4] sm:$0xf] %v3347
        %3477 = vst [vmem:[#allocation3 + $0xf8] sm:$0xf] %v3351
        %3478 = vst [vmem:[#allocation3 + $0x11c] sm:$0xf] %v3354
        %3479 = vst [vmem:[#allocation3 + $0x140] sm:$0xf] %v3358
        %3480 = vst [vmem:[#allocation3 + $0x164] sm:$0xf] %v3361
        %3481 = vst [vmem:[#allocation3 + $0x188] sm:$0xf] %v3365
        %3482 = vst [vmem:[#allocation3 + $0x1ac] sm:$0xf] %v3368
        %3483 = vst [vmem:[#allocation3 + $0x1d0] sm:$0xf] %v3372
        %3484 = vst [vmem:[#allocation3 + $0x1f4] sm:$0xf] %v3375
        %3485 = vst [vmem:[#allocation3 + $0x218] sm:$0xf] %v3379
        %3486 = vst [vmem:[#allocation3 + $0x23c] sm:$0xf] %v3382
        %3487 = vst [vmem:[#allocation3 + $0x260] sm:$0xf] %v3386
        %3488 = vst [vmem:[#allocation3 + $0x284] sm:$0xf] %v3389
        %3489 = vst [vmem:[#allocation3 + $0x2a8] sm:$0xf] %v3393
        %3490 = vst [vmem:[#allocation3 + $0x2cc] sm:$0xf] %v3396
        %3491 = vst [vmem:[#allocation3 + $0x2f0] sm:$0xf] %v3400
        %3492 = vst [vmem:[#allocation3 + $0x314] sm:$0xf] %v3403
        %3493 = vst [vmem:[#allocation3 + $0x338] sm:$0xf] %v3407
        %3494 = vst [vmem:[#allocation3 + $0x35c] sm:$0xf] %v3410
        %3495 = vst [vmem:[#allocation3 + $0x380] sm:$0xf] %v3414
        %3496 = vst [vmem:[#allocation3 + $0x3a4] sm:$0xf] %v3417
        %3497 = vst [vmem:[#allocation3 + $0x3c8] sm:$0xf] %v3421
        %3498 = vst [vmem:[#allocation3 + $0x3ec] sm:$0xf] %v3424
        %3499 = vst [vmem:[#allocation3 + $0x410] sm:$0xf] %v3428
        %3500 = vst [vmem:[#allocation3 + $0x434] sm:$0xf] %v3431
        %3501 = vst [vmem:[#allocation3 + $0x458] sm:$0xf] %v3435
        %3502 = vst [vmem:[#allocation3 + $0x47c] sm:$0xf] %v3438
        %v3503 = vld [vmem:[#allocation3] sm:$0xff]
        %v3504 = vld [vmem:[#allocation3 + $0x8] sm:$0xff]
        %v3505 = vld [vmem:[#allocation3 + $0x10] sm:$0xff]
        %v3506 = vld [vmem:[#allocation3 + $0x18] sm:$0xff]
        %v3507 = vld [vmem:[#allocation3 + $0x20] sm:$0xf]
        %v3508 = vld [vmem:[#allocation3 + $0x24] sm:$0xff]
        %v3509 = vld [vmem:[#allocation3 + $0x2c] sm:$0xff]
        %v3510 = vld [vmem:[#allocation3 + $0x34] sm:$0xff]
        %v3511 = vld [vmem:[#allocation3 + $0x3c] sm:$0xff]
        %v3512 = vld [vmem:[#allocation3 + $0x44] sm:$0xf]
        %v3513 = vld [vmem:[#allocation3 + $0x48] sm:$0xff]
        %v3514 = vld [vmem:[#allocation3 + $0x50] sm:$0xff]
        %v3515 = vld [vmem:[#allocation3 + $0x58] sm:$0xff]
        %v3516 = vld [vmem:[#allocation3 + $0x60] sm:$0xff]
        %v3517 = vld [vmem:[#allocation3 + $0x68] sm:$0xf]
        %v3518 = vld [vmem:[#allocation3 + $0x6c] sm:$0xff]
        %v3519 = vld [vmem:[#allocation3 + $0x74] sm:$0xff]
        %v3520 = vld [vmem:[#allocation3 + $0x7c] sm:$0xff]
        %v3521 = vld [vmem:[#allocation3 + $0x84] sm:$0xff]
        %v3522 = vld [vmem:[#allocation3 + $0x8c] sm:$0xf]
        %v3523 = vld [vmem:[#allocation3 + $0x90] sm:$0xff]
        %v3524 = vld [vmem:[#allocation3 + $0x98] sm:$0xff]
        %v3525 = vld [vmem:[#allocation3 + $0xa0] sm:$0xff]
        %v3526 = vld [vmem:[#allocation3 + $0xa8] sm:$0xff]
        %v3527 = vld [vmem:[#allocation3 + $0xb0] sm:$0xf]
        %v3528 = vld [vmem:[#allocation3 + $0xb4] sm:$0xff]
        %v3529 = vld [vmem:[#allocation3 + $0xbc] sm:$0xff]
        %v3530 = vld [vmem:[#allocation3 + $0xc4] sm:$0xff]
        %v3531 = vld [vmem:[#allocation3 + $0xcc] sm:$0xff]
        %v3532 = vld [vmem:[#allocation3 + $0xd4] sm:$0xf]
        %v3533 = vld [vmem:[#allocation3 + $0xd8] sm:$0xff]
        %v3534 = vld [vmem:[#allocation3 + $0xe0] sm:$0xff]
        %v3535 = vld [vmem:[#allocation3 + $0xe8] sm:$0xff]
        %v3536 = vld [vmem:[#allocation3 + $0xf0] sm:$0xff]
        %v3537 = vld [vmem:[#allocation3 + $0xf8] sm:$0xf]
        %v3538 = vld [vmem:[#allocation3 + $0xfc] sm:$0xff]
        %v3539 = vld [vmem:[#allocation3 + $0x104] sm:$0xff]
        %v3540 = vld [vmem:[#allocation3 + $0x10c] sm:$0xff]
        %v3541 = vld [vmem:[#allocation3 + $0x114] sm:$0xff]
        %v3542 = vld [vmem:[#allocation3 + $0x11c] sm:$0xf]
        %v3543 = vld [vmem:[#allocation3 + $0x120] sm:$0xff]
        %v3544 = vld [vmem:[#allocation3 + $0x128] sm:$0xff]
        %v3545 = vld [vmem:[#allocation3 + $0x130] sm:$0xff]
        %v3546 = vld [vmem:[#allocation3 + $0x138] sm:$0xff]
        %v3547 = vld [vmem:[#allocation3 + $0x140] sm:$0xf]
        %v3548 = vld [vmem:[#allocation3 + $0x144] sm:$0xff]
        %v3549 = vld [vmem:[#allocation3 + $0x14c] sm:$0xff]
        %v3550 = vld [vmem:[#allocation3 + $0x154] sm:$0xff]
        %v3551 = vld [vmem:[#allocation3 + $0x15c] sm:$0xff]
        %v3552 = vld [vmem:[#allocation3 + $0x164] sm:$0xf]
        %v3553 = vld [vmem:[#allocation3 + $0x168] sm:$0xff]
        %v3554 = vld [vmem:[#allocation3 + $0x170] sm:$0xff]
        %v3555 = vld [vmem:[#allocation3 + $0x178] sm:$0xff]
        %v3556 = vld [vmem:[#allocation3 + $0x180] sm:$0xff]
        %v3557 = vld [vmem:[#allocation3 + $0x188] sm:$0xf]
        %v3558 = vld [vmem:[#allocation3 + $0x18c] sm:$0xff]
        %v3559 = vld [vmem:[#allocation3 + $0x194] sm:$0xff]
        %v3560 = vld [vmem:[#allocation3 + $0x19c] sm:$0xff]
        %v3561 = vld [vmem:[#allocation3 + $0x1a4] sm:$0xff]
        %v3562 = vld [vmem:[#allocation3 + $0x1ac] sm:$0xf]
        %v3563 = vld [vmem:[#allocation3 + $0x1b0] sm:$0xff]
        %v3564 = vld [vmem:[#allocation3 + $0x1b8] sm:$0xff]
        %v3565 = vld [vmem:[#allocation3 + $0x1c0] sm:$0xff]
        %v3566 = vld [vmem:[#allocation3 + $0x1c8] sm:$0xff]
        %v3567 = vld [vmem:[#allocation3 + $0x1d0] sm:$0xf]
        %v3568 = vld [vmem:[#allocation3 + $0x1d4] sm:$0xff]
        %v3569 = vld [vmem:[#allocation3 + $0x1dc] sm:$0xff]
        %v3570 = vld [vmem:[#allocation3 + $0x1e4] sm:$0xff]
        %v3571 = vld [vmem:[#allocation3 + $0x1ec] sm:$0xff]
        %v3572 = vld [vmem:[#allocation3 + $0x1f4] sm:$0xf]
        %v3573 = vld [vmem:[#allocation3 + $0x1f8] sm:$0xff]
        %v3574 = vld [vmem:[#allocation3 + $0x200] sm:$0xff]
        %v3575 = vld [vmem:[#allocation3 + $0x208] sm:$0xff]
        %v3576 = vld [vmem:[#allocation3 + $0x210] sm:$0xff]
        %v3577 = vld [vmem:[#allocation3 + $0x218] sm:$0xf]
        %v3578 = vld [vmem:[#allocation3 + $0x21c] sm:$0xff]
        %v3579 = vld [vmem:[#allocation3 + $0x224] sm:$0xff]
        %v3580 = vld [vmem:[#allocation3 + $0x22c] sm:$0xff]
        %v3581 = vld [vmem:[#allocation3 + $0x234] sm:$0xff]
        %v3582 = vld [vmem:[#allocation3 + $0x23c] sm:$0xf]
        %v3583 = vld [vmem:[#allocation3 + $0x240] sm:$0xff]
        %v3584 = vld [vmem:[#allocation3 + $0x248] sm:$0xff]
        %v3585 = vld [vmem:[#allocation3 + $0x250] sm:$0xff]
        %v3586 = vld [vmem:[#allocation3 + $0x258] sm:$0xff]
        %v3587 = vld [vmem:[#allocation3 + $0x260] sm:$0xf]
        %v3588 = vld [vmem:[#allocation3 + $0x264] sm:$0xff]
        %v3589 = vld [vmem:[#allocation3 + $0x26c] sm:$0xff]
        %v3590 = vld [vmem:[#allocation3 + $0x274] sm:$0xff]
        %v3591 = vld [vmem:[#allocation3 + $0x27c] sm:$0xff]
        %v3592 = vld [vmem:[#allocation3 + $0x284] sm:$0xf]
        %v3593 = vld [vmem:[#allocation3 + $0x288] sm:$0xff]
        %v3594 = vld [vmem:[#allocation3 + $0x290] sm:$0xff]
        %v3595 = vld [vmem:[#allocation3 + $0x298] sm:$0xff]
        %v3596 = vld [vmem:[#allocation3 + $0x2a0] sm:$0xff]
        %v3597 = vld [vmem:[#allocation3 + $0x2a8] sm:$0xf]
        %v3598 = vld [vmem:[#allocation3 + $0x2ac] sm:$0xff]
        %v3599 = vld [vmem:[#allocation3 + $0x2b4] sm:$0xff]
        %v3600 = vld [vmem:[#allocation3 + $0x2bc] sm:$0xff]
        %v3601 = vld [vmem:[#allocation3 + $0x2c4] sm:$0xff]
        %v3602 = vld [vmem:[#allocation3 + $0x2cc] sm:$0xf]
        %v3603 = vld [vmem:[#allocation3 + $0x2d0] sm:$0xff]
        %v3604 = vld [vmem:[#allocation3 + $0x2d8] sm:$0xff]
        %v3605 = vld [vmem:[#allocation3 + $0x2e0] sm:$0xff]
        %v3606 = vld [vmem:[#allocation3 + $0x2e8] sm:$0xff]
        %v3607 = vld [vmem:[#allocation3 + $0x2f0] sm:$0xf]
        %v3608 = vld [vmem:[#allocation3 + $0x2f4] sm:$0xff]
        %v3609 = vld [vmem:[#allocation3 + $0x2fc] sm:$0xff]
        %v3610 = vld [vmem:[#allocation3 + $0x304] sm:$0xff]
        %v3611 = vld [vmem:[#allocation3 + $0x30c] sm:$0xff]
        %v3612 = vld [vmem:[#allocation3 + $0x314] sm:$0xf]
        %v3613 = vld [vmem:[#allocation3 + $0x318] sm:$0xff]
        %v3614 = vld [vmem:[#allocation3 + $0x320] sm:$0xff]
        %v3615 = vld [vmem:[#allocation3 + $0x328] sm:$0xff]
        %v3616 = vld [vmem:[#allocation3 + $0x330] sm:$0xff]
        %v3617 = vld [vmem:[#allocation3 + $0x338] sm:$0xf]
        %v3618 = vld [vmem:[#allocation3 + $0x33c] sm:$0xff]
        %v3619 = vld [vmem:[#allocation3 + $0x344] sm:$0xff]
        %v3620 = vld [vmem:[#allocation3 + $0x34c] sm:$0xff]
        %v3621 = vld [vmem:[#allocation3 + $0x354] sm:$0xff]
        %v3622 = vld [vmem:[#allocation3 + $0x35c] sm:$0xf]
        %v3623 = vld [vmem:[#allocation3 + $0x360] sm:$0xff]
        %v3624 = vld [vmem:[#allocation3 + $0x368] sm:$0xff]
        %v3625 = vld [vmem:[#allocation3 + $0x370] sm:$0xff]
        %v3626 = vld [vmem:[#allocation3 + $0x378] sm:$0xff]
        %v3627 = vld [vmem:[#allocation3 + $0x380] sm:$0xf]
        %v3628 = vld [vmem:[#allocation3 + $0x384] sm:$0xff]
        %v3629 = vld [vmem:[#allocation3 + $0x38c] sm:$0xff]
        %v3630 = vld [vmem:[#allocation3 + $0x394] sm:$0xff]
        %v3631 = vld [vmem:[#allocation3 + $0x39c] sm:$0xff]
        %v3632 = vld [vmem:[#allocation3 + $0x3a4] sm:$0xf]
        %v3633 = vld [vmem:[#allocation3 + $0x3a8] sm:$0xff]
        %v3634 = vld [vmem:[#allocation3 + $0x3b0] sm:$0xff]
        %v3635 = vld [vmem:[#allocation3 + $0x3b8] sm:$0xff]
        %v3636 = vld [vmem:[#allocation3 + $0x3c0] sm:$0xff]
        %v3637 = vld [vmem:[#allocation3 + $0x3c8] sm:$0xf]
        %v3638 = vld [vmem:[#allocation3 + $0x3cc] sm:$0xff]
        %v3639 = vld [vmem:[#allocation3 + $0x3d4] sm:$0xff]
        %v3640 = vld [vmem:[#allocation3 + $0x3dc] sm:$0xff]
        %v3641 = vld [vmem:[#allocation3 + $0x3e4] sm:$0xff]
        %v3642 = vld [vmem:[#allocation3 + $0x3ec] sm:$0xf]
        %v3643 = vld [vmem:[#allocation3 + $0x3f0] sm:$0xff]
        %v3644 = vld [vmem:[#allocation3 + $0x3f8] sm:$0xff]
        %v3645 = vld [vmem:[#allocation3 + $0x400] sm:$0xff]
        %v3646 = vld [vmem:[#allocation3 + $0x408] sm:$0xff]
        %v3647 = vld [vmem:[#allocation3 + $0x410] sm:$0xf]
        %v3648 = vld [vmem:[#allocation3 + $0x414] sm:$0xff]
        %v3649 = vld [vmem:[#allocation3 + $0x41c] sm:$0xff]
        %v3650 = vld [vmem:[#allocation3 + $0x424] sm:$0xff]
        %v3651 = vld [vmem:[#allocation3 + $0x42c] sm:$0xff]
        %v3652 = vld [vmem:[#allocation3 + $0x434] sm:$0xf]
        %v3653 = vld [vmem:[#allocation3 + $0x438] sm:$0xff]
        %v3654 = vld [vmem:[#allocation3 + $0x440] sm:$0xff]
        %v3655 = vld [vmem:[#allocation3 + $0x448] sm:$0xff]
        %v3656 = vld [vmem:[#allocation3 + $0x450] sm:$0xff]
        %v3657 = vld [vmem:[#allocation3 + $0x458] sm:$0xf]
        %v3658 = vld [vmem:[#allocation3 + $0x45c] sm:$0xff]
        %v3659 = vld [vmem:[#allocation3 + $0x464] sm:$0xff]
        %v3660 = vld [vmem:[#allocation3 + $0x46c] sm:$0xff]
        %v3661 = vld [vmem:[#allocation3 + $0x474] sm:$0xff]
        %v3662 = vld [vmem:[#allocation3 + $0x47c] sm:$0xf]
        %v3663 = vld [vmem:[#allocation7] sm:$0xf]
        %v3664 = vld [vmem:[#allocation7 + $0x4] sm:$0xf]
        %v3665 = vld [vmem:[#allocation7 + $0x8] sm:$0xf]
        %v3666 = vld [vmem:[#allocation7 + $0xc] sm:$0xf]
        %v3667 = vld [vmem:[#allocation7 + $0x10] sm:$0xf]
        %v3668 = vld [vmem:[#allocation7 + $0x14] sm:$0xf]
        %v3669 = vld [vmem:[#allocation7 + $0x18] sm:$0xf]
        %v3670 = vld [vmem:[#allocation7 + $0x1c] sm:$0xf]
        %v3671 = vld [vmem:[#allocation7 + $0x20] sm:$0xf]
        %v3672 = vld [vmem:[#allocation7 + $0x24] sm:$0xf]
        %v3673 = vld [vmem:[#allocation7 + $0x28] sm:$0xf]
        %v3674 = vld [vmem:[#allocation7 + $0x2c] sm:$0xf]
        %v3675 = vld [vmem:[#allocation7 + $0x30] sm:$0xf]
        %v3676 = vld [vmem:[#allocation7 + $0x34] sm:$0xf]
        %v3677 = vld [vmem:[#allocation7 + $0x38] sm:$0xf]
        %v3678 = vld [vmem:[#allocation7 + $0x3c] sm:$0xf]
        %v3679 = vld [vmem:[#allocation7 + $0x40] sm:$0xf]
        %v3680 = vld [vmem:[#allocation7 + $0x44] sm:$0xf]
        %v3681 = vld [vmem:[#allocation7 + $0x48] sm:$0xf]
        %v3682 = vld [vmem:[#allocation7 + $0x4c] sm:$0xf]
        %v3683 = vld [vmem:[#allocation7 + $0x50] sm:$0xf]
        %v3684 = vld [vmem:[#allocation7 + $0x54] sm:$0xf]
        %v3685 = vld [vmem:[#allocation7 + $0x58] sm:$0xf]
        %v3686 = vld [vmem:[#allocation7 + $0x5c] sm:$0xf]
        %v3687 = vld [vmem:[#allocation7 + $0x60] sm:$0xf]
        %v3688 = vld [vmem:[#allocation7 + $0x64] sm:$0xf]
        %v3689 = vld [vmem:[#allocation7 + $0x68] sm:$0xf]
        %v3690 = vld [vmem:[#allocation7 + $0x6c] sm:$0xf]
        %v3691 = vld [vmem:[#allocation7 + $0x70] sm:$0xf]
        %v3692 = vld [vmem:[#allocation7 + $0x74] sm:$0xf]
        %v3693 = vld [vmem:[#allocation7 + $0x78] sm:$0xf]
        %v3694 = vld [vmem:[#allocation7 + $0x7c] sm:$0xf]
        %v3695 = vld [vmem:[#allocation7 + $0x80] sm:$0xf]
        %v3696 = vld [vmem:[#allocation7 + $0x84] sm:$0xf]
        %v3697 = vld [vmem:[#allocation7 + $0x88] sm:$0xf]
        %v3698 = vld [vmem:[#allocation7 + $0x8c] sm:$0xf]
        %v3699 = vld [vmem:[#allocation7 + $0x90] sm:$0xf]
        %v3700 = vld [vmem:[#allocation7 + $0x94] sm:$0xf]
        %v3701 = vld [vmem:[#allocation7 + $0x98] sm:$0xf]
        %v3702 = vld [vmem:[#allocation7 + $0x9c] sm:$0xf]
        %v3703 = vld [vmem:[#allocation7 + $0xa0] sm:$0xf]
        %v3704 = vld [vmem:[#allocation7 + $0xa4] sm:$0xf]
        %v3705 = vld [vmem:[#allocation7 + $0xa8] sm:$0xf]
        %v3706 = vld [vmem:[#allocation7 + $0xac] sm:$0xf]
        %v3707 = vld [vmem:[#allocation7 + $0xb0] sm:$0xf]
        %v3708 = vld [vmem:[#allocation7 + $0xb4] sm:$0xf]
        %v3709 = vld [vmem:[#allocation7 + $0xb8] sm:$0xf]
        %v3710 = vld [vmem:[#allocation7 + $0xbc] sm:$0xf]
        %v3711 = vld [vmem:[#allocation7 + $0xc0] sm:$0xf]
        %v3712 = vld [vmem:[#allocation7 + $0xc4] sm:$0xf]
        %v3713 = vld [vmem:[#allocation7 + $0xc8] sm:$0xf]
        %v3714 = vld [vmem:[#allocation7 + $0xcc] sm:$0xf]
        %v3715 = vld [vmem:[#allocation7 + $0xd0] sm:$0xf]
        %v3716 = vld [vmem:[#allocation7 + $0xd4] sm:$0xf]
        %v3717 = vld [vmem:[#allocation7 + $0xd8] sm:$0xf]
        %v3718 = vld [vmem:[#allocation7 + $0xdc] sm:$0xf]
        %v3719 = vld [vmem:[#allocation7 + $0xe0] sm:$0xf]
        %v3720 = vld [vmem:[#allocation7 + $0xe4] sm:$0xf]
        %v3721 = vld [vmem:[#allocation7 + $0xe8] sm:$0xf]
        %v3722 = vld [vmem:[#allocation7 + $0xec] sm:$0xf]
        %v3723 = vld [vmem:[#allocation7 + $0xf0] sm:$0xf]
        %v3724 = vld [vmem:[#allocation7 + $0xf4] sm:$0xf]
        %v3725 = vld [vmem:[#allocation7 + $0xf8] sm:$0xf]
        %v3726 = vld [vmem:[#allocation7 + $0xfc] sm:$0xf]
        %v3727 = vld [vmem:[#allocation7 + $0x100] sm:$0xf]
        %v3728 = vld [vmem:[#allocation7 + $0x104] sm:$0xf]
        %v3729 = vld [vmem:[#allocation7 + $0x108] sm:$0xf]
        %v3730 = vld [vmem:[#allocation7 + $0x10c] sm:$0xf]
        %v3731 = vld [vmem:[#allocation7 + $0x110] sm:$0xf]
        %v3732 = vld [vmem:[#allocation7 + $0x114] sm:$0xf]
        %v3733 = vld [vmem:[#allocation7 + $0x118] sm:$0xf]
        %v3734 = vld [vmem:[#allocation7 + $0x11c] sm:$0xf]
        %v3735 = vld [vmem:[#allocation7 + $0x120] sm:$0xf]
        %v3736 = vld [vmem:[#allocation7 + $0x124] sm:$0xf]
        %v3737 = vld [vmem:[#allocation7 + $0x128] sm:$0xf]
        %v3738 = vld [vmem:[#allocation7 + $0x12c] sm:$0xf]
        %v3739 = vld [vmem:[#allocation7 + $0x130] sm:$0xf]
        %v3740 = vld [vmem:[#allocation7 + $0x134] sm:$0xf]
        %v3741 = vld [vmem:[#allocation7 + $0x138] sm:$0xf]
        %v3742 = vld [vmem:[#allocation7 + $0x13c] sm:$0xf]
        %v3743 = vld [vmem:[#allocation7 + $0x140] sm:$0xf]
        %v3744 = vld [vmem:[#allocation7 + $0x144] sm:$0xf]
        %v3745 = vld [vmem:[#allocation7 + $0x148] sm:$0xf]
        %v3746 = vld [vmem:[#allocation7 + $0x14c] sm:$0xf]
        %v3747 = vld [vmem:[#allocation7 + $0x150] sm:$0xf]
        %v3748 = vld [vmem:[#allocation7 + $0x154] sm:$0xf]
        %v3749 = vld [vmem:[#allocation7 + $0x158] sm:$0xf]
        %v3750 = vld [vmem:[#allocation7 + $0x15c] sm:$0xf]
        %v3751 = vld [vmem:[#allocation7 + $0x160] sm:$0xf]
        %v3752 = vld [vmem:[#allocation7 + $0x164] sm:$0xf]
        %v3753 = vld [vmem:[#allocation7 + $0x168] sm:$0xf]
        %v3754 = vld [vmem:[#allocation7 + $0x16c] sm:$0xf]
        %v3755 = vld [vmem:[#allocation7 + $0x170] sm:$0xf]
        %v3756 = vld [vmem:[#allocation7 + $0x174] sm:$0xf]
        %v3757 = vld [vmem:[#allocation7 + $0x178] sm:$0xf]
        %v3758 = vld [vmem:[#allocation7 + $0x17c] sm:$0xf]
        %v3759 = vld [vmem:[#allocation7 + $0x180] sm:$0xf]
        %v3760 = vld [vmem:[#allocation7 + $0x184] sm:$0xf]
        %v3761 = vld [vmem:[#allocation7 + $0x188] sm:$0xf]
        %v3762 = vld [vmem:[#allocation7 + $0x18c] sm:$0xf]
        %v3763 = vld [vmem:[#allocation7 + $0x190] sm:$0xf]
        %v3764 = vld [vmem:[#allocation7 + $0x194] sm:$0xf]
        %v3765 = vld [vmem:[#allocation7 + $0x198] sm:$0xf]
        %v3766 = vld [vmem:[#allocation7 + $0x19c] sm:$0xf]
        %v3767 = vld [vmem:[#allocation7 + $0x1a0] sm:$0xf]
        %v3768 = vld [vmem:[#allocation7 + $0x1a4] sm:$0xf]
        %v3769 = vld [vmem:[#allocation7 + $0x1a8] sm:$0xf]
        %v3770 = vld [vmem:[#allocation7 + $0x1ac] sm:$0xf]
        %v3771 = vld [vmem:[#allocation7 + $0x1b0] sm:$0xf]
        %v3772 = vld [vmem:[#allocation7 + $0x1b4] sm:$0xf]
        %v3773 = vld [vmem:[#allocation7 + $0x1b8] sm:$0xf]
        %v3774 = vld [vmem:[#allocation7 + $0x1bc] sm:$0xf]
        %v3775 = vld [vmem:[#allocation7 + $0x1c0] sm:$0xf]
        %v3776 = vld [vmem:[#allocation7 + $0x1c4] sm:$0xf]
        %v3777 = vld [vmem:[#allocation7 + $0x1c8] sm:$0xf]
        %v3778 = vld [vmem:[#allocation7 + $0x1cc] sm:$0xf]
        %v3779 = vld [vmem:[#allocation7 + $0x1d0] sm:$0xf]
        %v3780 = vld [vmem:[#allocation7 + $0x1d4] sm:$0xf]
        %v3781 = vld [vmem:[#allocation7 + $0x1d8] sm:$0xf]
        %v3782 = vld [vmem:[#allocation7 + $0x1dc] sm:$0xf]
        %v3783 = vld [vmem:[#allocation7 + $0x1e0] sm:$0xf]
        %v3784 = vld [vmem:[#allocation7 + $0x1e4] sm:$0xf]
        %v3785 = vld [vmem:[#allocation7 + $0x1e8] sm:$0xf]
        %v3786 = vld [vmem:[#allocation7 + $0x1ec] sm:$0xf]
        %v3787 = vld [vmem:[#allocation7 + $0x1f0] sm:$0xf]
        %v3788 = vld [vmem:[#allocation7 + $0x1f4] sm:$0xf]
        %v3789 = vld [vmem:[#allocation7 + $0x1f8] sm:$0xf]
        %v3790 = vld [vmem:[#allocation7 + $0x1fc] sm:$0xf]
        %v3791 = vld [vmem:[#allocation7 + $0x200] sm:$0xf]
        %v3792 = vld [vmem:[#allocation7 + $0x204] sm:$0xf]
        %v3793 = vld [vmem:[#allocation7 + $0x208] sm:$0xf]
        %v3794 = vld [vmem:[#allocation7 + $0x20c] sm:$0xf]
        %v3795 = vld [vmem:[#allocation7 + $0x210] sm:$0xf]
        %v3796 = vld [vmem:[#allocation7 + $0x214] sm:$0xf]
        %v3797 = vld [vmem:[#allocation7 + $0x218] sm:$0xf]
        %v3798 = vld [vmem:[#allocation7 + $0x21c] sm:$0xf]
        %v3799 = vld [vmem:[#allocation7 + $0x220] sm:$0xf]
        %v3800 = vld [vmem:[#allocation7 + $0x224] sm:$0xf]
        %v3801 = vld [vmem:[#allocation7 + $0x228] sm:$0xf]
        %v3802 = vld [vmem:[#allocation7 + $0x22c] sm:$0xf]
        %v3803 = vld [vmem:[#allocation7 + $0x230] sm:$0xf]
        %v3804 = vld [vmem:[#allocation7 + $0x234] sm:$0xf]
        %v3805 = vld [vmem:[#allocation7 + $0x238] sm:$0xf]
        %v3806 = vld [vmem:[#allocation7 + $0x23c] sm:$0xf]
        %v3967 = vunpack.c.l.b16 %v3503
        %v3968 = vunpack.c.h.b16 %v3503
        %v3969 = vunpack.c.l.b16 %v3504
        %v3970 = vunpack.c.h.b16 %v3504
        %v3971 = vunpack.c.l.b16 %v3505
        %v3972 = vunpack.c.h.b16 %v3505
        %v3973 = vunpack.c.l.b16 %v3506
        %v3974 = vunpack.c.h.b16 %v3506
        %v3975 = vunpack.c.l.b16 %v3507
        %v3976 = vunpack.c.l.b16 %v3508
        %v3977 = vunpack.c.h.b16 %v3508
        %v3978 = vunpack.c.l.b16 %v3509
        %v3979 = vunpack.c.h.b16 %v3509
        %v3980 = vunpack.c.l.b16 %v3510
        %v3981 = vunpack.c.h.b16 %v3510
        %v3982 = vunpack.c.l.b16 %v3511
        %v3983 = vunpack.c.h.b16 %v3511
        %v3984 = vunpack.c.l.b16 %v3512
        %v3985 = vunpack.c.l.b16 %v3513
        %v3986 = vunpack.c.h.b16 %v3513
        %v3987 = vunpack.c.l.b16 %v3514
        %v3988 = vunpack.c.h.b16 %v3514
        %v3989 = vunpack.c.l.b16 %v3515
        %v3990 = vunpack.c.h.b16 %v3515
        %v3991 = vunpack.c.l.b16 %v3516
        %v3992 = vunpack.c.h.b16 %v3516
        %v3993 = vunpack.c.l.b16 %v3517
        %v3994 = vunpack.c.l.b16 %v3518
        %v3995 = vunpack.c.h.b16 %v3518
        %v3996 = vunpack.c.l.b16 %v3519
        %v3997 = vunpack.c.h.b16 %v3519
        %v3998 = vunpack.c.l.b16 %v3520
        %v3999 = vunpack.c.h.b16 %v3520
        %v4000 = vunpack.c.l.b16 %v3521
        %v4001 = vunpack.c.h.b16 %v3521
        %v4002 = vunpack.c.l.b16 %v3522
        %v4003 = vunpack.c.l.b16 %v3523
        %v4004 = vunpack.c.h.b16 %v3523
        %v4005 = vunpack.c.l.b16 %v3524
        %v4006 = vunpack.c.h.b16 %v3524
        %v4007 = vunpack.c.l.b16 %v3525
        %v4008 = vunpack.c.h.b16 %v3525
        %v4009 = vunpack.c.l.b16 %v3526
        %v4010 = vunpack.c.h.b16 %v3526
        %v4011 = vunpack.c.l.b16 %v3527
        %v4012 = vunpack.c.l.b16 %v3528
        %v4013 = vunpack.c.h.b16 %v3528
        %v4014 = vunpack.c.l.b16 %v3529
        %v4015 = vunpack.c.h.b16 %v3529
        %v4016 = vunpack.c.l.b16 %v3530
        %v4017 = vunpack.c.h.b16 %v3530
        %v4018 = vunpack.c.l.b16 %v3531
        %v4019 = vunpack.c.h.b16 %v3531
        %v4020 = vunpack.c.l.b16 %v3532
        %v4021 = vunpack.c.l.b16 %v3533
        %v4022 = vunpack.c.h.b16 %v3533
        %v4023 = vunpack.c.l.b16 %v3534
        %v4024 = vunpack.c.h.b16 %v3534
        %v4025 = vunpack.c.l.b16 %v3535
        %v4026 = vunpack.c.h.b16 %v3535
        %v4027 = vunpack.c.l.b16 %v3536
        %v4028 = vunpack.c.h.b16 %v3536
        %v4029 = vunpack.c.l.b16 %v3537
        %v4030 = vunpack.c.l.b16 %v3538
        %v4031 = vunpack.c.h.b16 %v3538
        %v4032 = vunpack.c.l.b16 %v3539
        %v4033 = vunpack.c.h.b16 %v3539
        %v4034 = vunpack.c.l.b16 %v3540
        %v4035 = vunpack.c.h.b16 %v3540
        %v4036 = vunpack.c.l.b16 %v3541
        %v4037 = vunpack.c.h.b16 %v3541
        %v4038 = vunpack.c.l.b16 %v3542
        %v4039 = vunpack.c.l.b16 %v3543
        %v4040 = vunpack.c.h.b16 %v3543
        %v4041 = vunpack.c.l.b16 %v3544
        %v4042 = vunpack.c.h.b16 %v3544
        %v4043 = vunpack.c.l.b16 %v3545
        %v4044 = vunpack.c.h.b16 %v3545
        %v4045 = vunpack.c.l.b16 %v3546
        %v4046 = vunpack.c.h.b16 %v3546
        %v4047 = vunpack.c.l.b16 %v3547
        %v4048 = vunpack.c.l.b16 %v3548
        %v4049 = vunpack.c.h.b16 %v3548
        %v4050 = vunpack.c.l.b16 %v3549
        %v4051 = vunpack.c.h.b16 %v3549
        %v4052 = vunpack.c.l.b16 %v3550
        %v4053 = vunpack.c.h.b16 %v3550
        %v4054 = vunpack.c.l.b16 %v3551
        %v4055 = vunpack.c.h.b16 %v3551
        %v4056 = vunpack.c.l.b16 %v3552
        %v4057 = vunpack.c.l.b16 %v3553
        %v4058 = vunpack.c.h.b16 %v3553
        %v4059 = vunpack.c.l.b16 %v3554
        %v4060 = vunpack.c.h.b16 %v3554
        %v4061 = vunpack.c.l.b16 %v3555
        %v4062 = vunpack.c.h.b16 %v3555
        %v4063 = vunpack.c.l.b16 %v3556
        %v4064 = vunpack.c.h.b16 %v3556
        %v4065 = vunpack.c.l.b16 %v3557
        %v4066 = vunpack.c.l.b16 %v3558
        %v4067 = vunpack.c.h.b16 %v3558
        %v4068 = vunpack.c.l.b16 %v3559
        %v4069 = vunpack.c.h.b16 %v3559
        %v4070 = vunpack.c.l.b16 %v3560
        %v4071 = vunpack.c.h.b16 %v3560
        %v4072 = vunpack.c.l.b16 %v3561
        %v4073 = vunpack.c.h.b16 %v3561
        %v4074 = vunpack.c.l.b16 %v3562
        %v4075 = vunpack.c.l.b16 %v3563
        %v4076 = vunpack.c.h.b16 %v3563
        %v4077 = vunpack.c.l.b16 %v3564
        %v4078 = vunpack.c.h.b16 %v3564
        %v4079 = vunpack.c.l.b16 %v3565
        %v4080 = vunpack.c.h.b16 %v3565
        %v4081 = vunpack.c.l.b16 %v3566
        %v4082 = vunpack.c.h.b16 %v3566
        %v4083 = vunpack.c.l.b16 %v3567
        %v4084 = vunpack.c.l.b16 %v3568
        %v4085 = vunpack.c.h.b16 %v3568
        %v4086 = vunpack.c.l.b16 %v3569
        %v4087 = vunpack.c.h.b16 %v3569
        %v4088 = vunpack.c.l.b16 %v3570
        %v4089 = vunpack.c.h.b16 %v3570
        %v4090 = vunpack.c.l.b16 %v3571
        %v4091 = vunpack.c.h.b16 %v3571
        %v4092 = vunpack.c.l.b16 %v3572
        %v4093 = vunpack.c.l.b16 %v3573
        %v4094 = vunpack.c.h.b16 %v3573
        %v4095 = vunpack.c.l.b16 %v3574
        %v4096 = vunpack.c.h.b16 %v3574
        %v4097 = vunpack.c.l.b16 %v3575
        %v4098 = vunpack.c.h.b16 %v3575
        %v4099 = vunpack.c.l.b16 %v3576
        %v4100 = vunpack.c.h.b16 %v3576
        %v4101 = vunpack.c.l.b16 %v3577
        %v4102 = vunpack.c.l.b16 %v3578
        %v4103 = vunpack.c.h.b16 %v3578
        %v4104 = vunpack.c.l.b16 %v3579
        %v4105 = vunpack.c.h.b16 %v3579
        %v4106 = vunpack.c.l.b16 %v3580
        %v4107 = vunpack.c.h.b16 %v3580
        %v4108 = vunpack.c.l.b16 %v3581
        %v4109 = vunpack.c.h.b16 %v3581
        %v4110 = vunpack.c.l.b16 %v3582
        %v4111 = vunpack.c.l.b16 %v3583
        %v4112 = vunpack.c.h.b16 %v3583
        %v4113 = vunpack.c.l.b16 %v3584
        %v4114 = vunpack.c.h.b16 %v3584
        %v4115 = vunpack.c.l.b16 %v3585
        %v4116 = vunpack.c.h.b16 %v3585
        %v4117 = vunpack.c.l.b16 %v3586
        %v4118 = vunpack.c.h.b16 %v3586
        %v4119 = vunpack.c.l.b16 %v3587
        %v4120 = vunpack.c.l.b16 %v3588
        %v4121 = vunpack.c.h.b16 %v3588
        %v4122 = vunpack.c.l.b16 %v3589
        %v4123 = vunpack.c.h.b16 %v3589
        %v4124 = vunpack.c.l.b16 %v3590
        %v4125 = vunpack.c.h.b16 %v3590
        %v4126 = vunpack.c.l.b16 %v3591
        %v4127 = vunpack.c.h.b16 %v3591
        %v4128 = vunpack.c.l.b16 %v3592
        %v4129 = vunpack.c.l.b16 %v3593
        %v4130 = vunpack.c.h.b16 %v3593
        %v4131 = vunpack.c.l.b16 %v3594
        %v4132 = vunpack.c.h.b16 %v3594
        %v4133 = vunpack.c.l.b16 %v3595
        %v4134 = vunpack.c.h.b16 %v3595
        %v4135 = vunpack.c.l.b16 %v3596
        %v4136 = vunpack.c.h.b16 %v3596
        %v4137 = vunpack.c.l.b16 %v3597
        %v4138 = vunpack.c.l.b16 %v3598
        %v4139 = vunpack.c.h.b16 %v3598
        %v4140 = vunpack.c.l.b16 %v3599
        %v4141 = vunpack.c.h.b16 %v3599
        %v4142 = vunpack.c.l.b16 %v3600
        %v4143 = vunpack.c.h.b16 %v3600
        %v4144 = vunpack.c.l.b16 %v3601
        %v4145 = vunpack.c.h.b16 %v3601
        %v4146 = vunpack.c.l.b16 %v3602
        %v4147 = vunpack.c.l.b16 %v3603
        %v4148 = vunpack.c.h.b16 %v3603
        %v4149 = vunpack.c.l.b16 %v3604
        %v4150 = vunpack.c.h.b16 %v3604
        %v4151 = vunpack.c.l.b16 %v3605
        %v4152 = vunpack.c.h.b16 %v3605
        %v4153 = vunpack.c.l.b16 %v3606
        %v4154 = vunpack.c.h.b16 %v3606
        %v4155 = vunpack.c.l.b16 %v3607
        %v4156 = vunpack.c.l.b16 %v3608
        %v4157 = vunpack.c.h.b16 %v3608
        %v4158 = vunpack.c.l.b16 %v3609
        %v4159 = vunpack.c.h.b16 %v3609
        %v4160 = vunpack.c.l.b16 %v3610
        %v4161 = vunpack.c.h.b16 %v3610
        %v4162 = vunpack.c.l.b16 %v3611
        %v4163 = vunpack.c.h.b16 %v3611
        %v4164 = vunpack.c.l.b16 %v3612
        %v4165 = vunpack.c.l.b16 %v3613
        %v4166 = vunpack.c.h.b16 %v3613
        %v4167 = vunpack.c.l.b16 %v3614
        %v4168 = vunpack.c.h.b16 %v3614
        %v4169 = vunpack.c.l.b16 %v3615
        %v4170 = vunpack.c.h.b16 %v3615
        %v4171 = vunpack.c.l.b16 %v3616
        %v4172 = vunpack.c.h.b16 %v3616
        %v4173 = vunpack.c.l.b16 %v3617
        %v4174 = vunpack.c.l.b16 %v3618
        %v4175 = vunpack.c.h.b16 %v3618
        %v4176 = vunpack.c.l.b16 %v3619
        %v4177 = vunpack.c.h.b16 %v3619
        %v4178 = vunpack.c.l.b16 %v3620
        %v4179 = vunpack.c.h.b16 %v3620
        %v4180 = vunpack.c.l.b16 %v3621
        %v4181 = vunpack.c.h.b16 %v3621
        %v4182 = vunpack.c.l.b16 %v3622
        %v4183 = vunpack.c.l.b16 %v3623
        %v4184 = vunpack.c.h.b16 %v3623
        %v4185 = vunpack.c.l.b16 %v3624
        %v4186 = vunpack.c.h.b16 %v3624
        %v4187 = vunpack.c.l.b16 %v3625
        %v4188 = vunpack.c.h.b16 %v3625
        %v4189 = vunpack.c.l.b16 %v3626
        %v4190 = vunpack.c.h.b16 %v3626
        %v4191 = vunpack.c.l.b16 %v3627
        %v4192 = vunpack.c.l.b16 %v3628
        %v4193 = vunpack.c.h.b16 %v3628
        %v4194 = vunpack.c.l.b16 %v3629
        %v4195 = vunpack.c.h.b16 %v3629
        %v4196 = vunpack.c.l.b16 %v3630
        %v4197 = vunpack.c.h.b16 %v3630
        %v4198 = vunpack.c.l.b16 %v3631
        %v4199 = vunpack.c.h.b16 %v3631
        %v4200 = vunpack.c.l.b16 %v3632
        %v4201 = vunpack.c.l.b16 %v3633
        %v4202 = vunpack.c.h.b16 %v3633
        %v4203 = vunpack.c.l.b16 %v3634
        %v4204 = vunpack.c.h.b16 %v3634
        %v4205 = vunpack.c.l.b16 %v3635
        %v4206 = vunpack.c.h.b16 %v3635
        %v4207 = vunpack.c.l.b16 %v3636
        %v4208 = vunpack.c.h.b16 %v3636
        %v4209 = vunpack.c.l.b16 %v3637
        %v4210 = vunpack.c.l.b16 %v3638
        %v4211 = vunpack.c.h.b16 %v3638
        %v4212 = vunpack.c.l.b16 %v3639
        %v4213 = vunpack.c.h.b16 %v3639
        %v4214 = vunpack.c.l.b16 %v3640
        %v4215 = vunpack.c.h.b16 %v3640
        %v4216 = vunpack.c.l.b16 %v3641
        %v4217 = vunpack.c.h.b16 %v3641
        %v4218 = vunpack.c.l.b16 %v3642
        %v4219 = vunpack.c.l.b16 %v3643
        %v4220 = vunpack.c.h.b16 %v3643
        %v4221 = vunpack.c.l.b16 %v3644
        %v4222 = vunpack.c.h.b16 %v3644
        %v4223 = vunpack.c.l.b16 %v3645
        %v4224 = vunpack.c.h.b16 %v3645
        %v4225 = vunpack.c.l.b16 %v3646
        %v4226 = vunpack.c.h.b16 %v3646
        %v4227 = vunpack.c.l.b16 %v3647
        %v4228 = vunpack.c.l.b16 %v3648
        %v4229 = vunpack.c.h.b16 %v3648
        %v4230 = vunpack.c.l.b16 %v3649
        %v4231 = vunpack.c.h.b16 %v3649
        %v4232 = vunpack.c.l.b16 %v3650
        %v4233 = vunpack.c.h.b16 %v3650
        %v4234 = vunpack.c.l.b16 %v3651
        %v4235 = vunpack.c.h.b16 %v3651
        %v4236 = vunpack.c.l.b16 %v3652
        %v4237 = vunpack.c.l.b16 %v3653
        %v4238 = vunpack.c.h.b16 %v3653
        %v4239 = vunpack.c.l.b16 %v3654
        %v4240 = vunpack.c.h.b16 %v3654
        %v4241 = vunpack.c.l.b16 %v3655
        %v4242 = vunpack.c.h.b16 %v3655
        %v4243 = vunpack.c.l.b16 %v3656
        %v4244 = vunpack.c.h.b16 %v3656
        %v4245 = vunpack.c.l.b16 %v3657
        %v4246 = vunpack.c.l.b16 %v3658
        %v4247 = vunpack.c.h.b16 %v3658
        %v4248 = vunpack.c.l.b16 %v3659
        %v4249 = vunpack.c.h.b16 %v3659
        %v4250 = vunpack.c.l.b16 %v3660
        %v4251 = vunpack.c.h.b16 %v3660
        %v4252 = vunpack.c.l.b16 %v3661
        %v4253 = vunpack.c.h.b16 %v3661
        %v4254 = vunpack.c.l.b16 %v3662
        %v4255 = vpack.c.b16 %v3976, %v3967
        %v4256 = vpack.c.b16 %v3977, %v3968
        %v4257 = vpack.c.b16 %v3978, %v3969
        %v4258 = vpack.c.b16 %v3979, %v3970
        %v4259 = vpack.c.b16 %v3980, %v3971
        %v4260 = vpack.c.b16 %v3981, %v3972
        %v4261 = vpack.c.b16 %v3982, %v3973
        %v4262 = vpack.c.b16 %v3983, %v3974
        %v4263 = vpack.c.b16 %v3984, %v3975
        %v4264 = vpack.c.b16 %v3994, %v3985
        %v4265 = vpack.c.b16 %v3995, %v3986
        %v4266 = vpack.c.b16 %v3996, %v3987
        %v4267 = vpack.c.b16 %v3997, %v3988
        %v4268 = vpack.c.b16 %v3998, %v3989
        %v4269 = vpack.c.b16 %v3999, %v3990
        %v4270 = vpack.c.b16 %v4000, %v3991
        %v4271 = vpack.c.b16 %v4001, %v3992
        %v4272 = vpack.c.b16 %v4002, %v3993
        %v4273 = vpack.c.b16 %v4012, %v4003
        %v4274 = vpack.c.b16 %v4013, %v4004
        %v4275 = vpack.c.b16 %v4014, %v4005
        %v4276 = vpack.c.b16 %v4015, %v4006
        %v4277 = vpack.c.b16 %v4016, %v4007
        %v4278 = vpack.c.b16 %v4017, %v4008
        %v4279 = vpack.c.b16 %v4018, %v4009
        %v4280 = vpack.c.b16 %v4019, %v4010
        %v4281 = vpack.c.b16 %v4020, %v4011
        %v4282 = vpack.c.b16 %v4030, %v4021
        %v4283 = vpack.c.b16 %v4031, %v4022
        %v4284 = vpack.c.b16 %v4032, %v4023
        %v4285 = vpack.c.b16 %v4033, %v4024
        %v4286 = vpack.c.b16 %v4034, %v4025
        %v4287 = vpack.c.b16 %v4035, %v4026
        %v4288 = vpack.c.b16 %v4036, %v4027
        %v4289 = vpack.c.b16 %v4037, %v4028
        %v4290 = vpack.c.b16 %v4038, %v4029
        %v4291 = vpack.c.b16 %v4048, %v4039
        %v4292 = vpack.c.b16 %v4049, %v4040
        %v4293 = vpack.c.b16 %v4050, %v4041
        %v4294 = vpack.c.b16 %v4051, %v4042
        %v4295 = vpack.c.b16 %v4052, %v4043
        %v4296 = vpack.c.b16 %v4053, %v4044
        %v4297 = vpack.c.b16 %v4054, %v4045
        %v4298 = vpack.c.b16 %v4055, %v4046
        %v4299 = vpack.c.b16 %v4056, %v4047
        %v4300 = vpack.c.b16 %v4066, %v4057
        %v4301 = vpack.c.b16 %v4067, %v4058
        %v4302 = vpack.c.b16 %v4068, %v4059
        %v4303 = vpack.c.b16 %v4069, %v4060
        %v4304 = vpack.c.b16 %v4070, %v4061
        %v4305 = vpack.c.b16 %v4071, %v4062
        %v4306 = vpack.c.b16 %v4072, %v4063
        %v4307 = vpack.c.b16 %v4073, %v4064
        %v4308 = vpack.c.b16 %v4074, %v4065
        %v4309 = vpack.c.b16 %v4084, %v4075
        %v4310 = vpack.c.b16 %v4085, %v4076
        %v4311 = vpack.c.b16 %v4086, %v4077
        %v4312 = vpack.c.b16 %v4087, %v4078
        %v4313 = vpack.c.b16 %v4088, %v4079
        %v4314 = vpack.c.b16 %v4089, %v4080
        %v4315 = vpack.c.b16 %v4090, %v4081
        %v4316 = vpack.c.b16 %v4091, %v4082
        %v4317 = vpack.c.b16 %v4092, %v4083
        %v4318 = vpack.c.b16 %v4102, %v4093
        %v4319 = vpack.c.b16 %v4103, %v4094
        %v4320 = vpack.c.b16 %v4104, %v4095
        %v4321 = vpack.c.b16 %v4105, %v4096
        %v4322 = vpack.c.b16 %v4106, %v4097
        %v4323 = vpack.c.b16 %v4107, %v4098
        %v4324 = vpack.c.b16 %v4108, %v4099
        %v4325 = vpack.c.b16 %v4109, %v4100
        %v4326 = vpack.c.b16 %v4110, %v4101
        %v4327 = vpack.c.b16 %v4120, %v4111
        %v4328 = vpack.c.b16 %v4121, %v4112
        %v4329 = vpack.c.b16 %v4122, %v4113
        %v4330 = vpack.c.b16 %v4123, %v4114
        %v4331 = vpack.c.b16 %v4124, %v4115
        %v4332 = vpack.c.b16 %v4125, %v4116
        %v4333 = vpack.c.b16 %v4126, %v4117
        %v4334 = vpack.c.b16 %v4127, %v4118
        %v4335 = vpack.c.b16 %v4128, %v4119
        %v4336 = vpack.c.b16 %v4138, %v4129
        %v4337 = vpack.c.b16 %v4139, %v4130
        %v4338 = vpack.c.b16 %v4140, %v4131
        %v4339 = vpack.c.b16 %v4141, %v4132
        %v4340 = vpack.c.b16 %v4142, %v4133
        %v4341 = vpack.c.b16 %v4143, %v4134
        %v4342 = vpack.c.b16 %v4144, %v4135
        %v4343 = vpack.c.b16 %v4145, %v4136
        %v4344 = vpack.c.b16 %v4146, %v4137
        %v4345 = vpack.c.b16 %v4156, %v4147
        %v4346 = vpack.c.b16 %v4157, %v4148
        %v4347 = vpack.c.b16 %v4158, %v4149
        %v4348 = vpack.c.b16 %v4159, %v4150
        %v4349 = vpack.c.b16 %v4160, %v4151
        %v4350 = vpack.c.b16 %v4161, %v4152
        %v4351 = vpack.c.b16 %v4162, %v4153
        %v4352 = vpack.c.b16 %v4163, %v4154
        %v4353 = vpack.c.b16 %v4164, %v4155
        %v4354 = vpack.c.b16 %v4174, %v4165
        %v4355 = vpack.c.b16 %v4175, %v4166
        %v4356 = vpack.c.b16 %v4176, %v4167
        %v4357 = vpack.c.b16 %v4177, %v4168
        %v4358 = vpack.c.b16 %v4178, %v4169
        %v4359 = vpack.c.b16 %v4179, %v4170
        %v4360 = vpack.c.b16 %v4180, %v4171
        %v4361 = vpack.c.b16 %v4181, %v4172
        %v4362 = vpack.c.b16 %v4182, %v4173
        %v4363 = vpack.c.b16 %v4192, %v4183
        %v4364 = vpack.c.b16 %v4193, %v4184
        %v4365 = vpack.c.b16 %v4194, %v4185
        %v4366 = vpack.c.b16 %v4195, %v4186
        %v4367 = vpack.c.b16 %v4196, %v4187
        %v4368 = vpack.c.b16 %v4197, %v4188
        %v4369 = vpack.c.b16 %v4198, %v4189
        %v4370 = vpack.c.b16 %v4199, %v4190
        %v4371 = vpack.c.b16 %v4200, %v4191
        %v4372 = vpack.c.b16 %v4210, %v4201
        %v4373 = vpack.c.b16 %v4211, %v4202
        %v4374 = vpack.c.b16 %v4212, %v4203
        %v4375 = vpack.c.b16 %v4213, %v4204
        %v4376 = vpack.c.b16 %v4214, %v4205
        %v4377 = vpack.c.b16 %v4215, %v4206
        %v4378 = vpack.c.b16 %v4216, %v4207
        %v4379 = vpack.c.b16 %v4217, %v4208
        %v4380 = vpack.c.b16 %v4218, %v4209
        %v4381 = vpack.c.b16 %v4228, %v4219
        %v4382 = vpack.c.b16 %v4229, %v4220
        %v4383 = vpack.c.b16 %v4230, %v4221
        %v4384 = vpack.c.b16 %v4231, %v4222
        %v4385 = vpack.c.b16 %v4232, %v4223
        %v4386 = vpack.c.b16 %v4233, %v4224
        %v4387 = vpack.c.b16 %v4234, %v4225
        %v4388 = vpack.c.b16 %v4235, %v4226
        %v4389 = vpack.c.b16 %v4236, %v4227
        %v4390 = vpack.c.b16 %v4246, %v4237
        %v4391 = vpack.c.b16 %v4247, %v4238
        %v4392 = vpack.c.b16 %v4248, %v4239
        %v4393 = vpack.c.b16 %v4249, %v4240
        %v4394 = vpack.c.b16 %v4250, %v4241
        %v4395 = vpack.c.b16 %v4251, %v4242
        %v4396 = vpack.c.b16 %v4252, %v4243
        %v4397 = vpack.c.b16 %v4253, %v4244
        %v4398 = vpack.c.b16 %v4254, %v4245
        %v4687 = vunpack.c.l.b16 %v3663
        %v4688 = vunpack.c.l.b16 %v3664
        %v4689 = vunpack.c.l.b16 %v3665
        %v4690 = vunpack.c.l.b16 %v3666
        %v4691 = vunpack.c.l.b16 %v3667
        %v4692 = vunpack.c.l.b16 %v3668
        %v4693 = vunpack.c.l.b16 %v3669
        %v4694 = vunpack.c.l.b16 %v3670
        %v4695 = vunpack.c.l.b16 %v3671
        %v4696 = vunpack.c.l.b16 %v3672
        %v4697 = vunpack.c.l.b16 %v3673
        %v4698 = vunpack.c.l.b16 %v3674
        %v4699 = vunpack.c.l.b16 %v3675
        %v4700 = vunpack.c.l.b16 %v3676
        %v4701 = vunpack.c.l.b16 %v3677
        %v4702 = vunpack.c.l.b16 %v3678
        %v4703 = vunpack.c.l.b16 %v3679
        %v4704 = vunpack.c.l.b16 %v3680
        %v4705 = vunpack.c.l.b16 %v3681
        %v4706 = vunpack.c.l.b16 %v3682
        %v4707 = vunpack.c.l.b16 %v3683
        %v4708 = vunpack.c.l.b16 %v3684
        %v4709 = vunpack.c.l.b16 %v3685
        %v4710 = vunpack.c.l.b16 %v3686
        %v4711 = vunpack.c.l.b16 %v3687
        %v4712 = vunpack.c.l.b16 %v3688
        %v4713 = vunpack.c.l.b16 %v3689
        %v4714 = vunpack.c.l.b16 %v3690
        %v4715 = vunpack.c.l.b16 %v3691
        %v4716 = vunpack.c.l.b16 %v3692
        %v4717 = vunpack.c.l.b16 %v3693
        %v4718 = vunpack.c.l.b16 %v3694
        %v4719 = vunpack.c.l.b16 %v3695
        %v4720 = vunpack.c.l.b16 %v3696
        %v4721 = vunpack.c.l.b16 %v3697
        %v4722 = vunpack.c.l.b16 %v3698
        %v4723 = vunpack.c.l.b16 %v3699
        %v4724 = vunpack.c.l.b16 %v3700
        %v4725 = vunpack.c.l.b16 %v3701
        %v4726 = vunpack.c.l.b16 %v3702
        %v4727 = vunpack.c.l.b16 %v3703
        %v4728 = vunpack.c.l.b16 %v3704
        %v4729 = vunpack.c.l.b16 %v3705
        %v4730 = vunpack.c.l.b16 %v3706
        %v4731 = vunpack.c.l.b16 %v3707
        %v4732 = vunpack.c.l.b16 %v3708
        %v4733 = vunpack.c.l.b16 %v3709
        %v4734 = vunpack.c.l.b16 %v3710
        %v4735 = vunpack.c.l.b16 %v3711
        %v4736 = vunpack.c.l.b16 %v3712
        %v4737 = vunpack.c.l.b16 %v3713
        %v4738 = vunpack.c.l.b16 %v3714
        %v4739 = vunpack.c.l.b16 %v3715
        %v4740 = vunpack.c.l.b16 %v3716
        %v4741 = vunpack.c.l.b16 %v3717
        %v4742 = vunpack.c.l.b16 %v3718
        %v4743 = vunpack.c.l.b16 %v3719
        %v4744 = vunpack.c.l.b16 %v3720
        %v4745 = vunpack.c.l.b16 %v3721
        %v4746 = vunpack.c.l.b16 %v3722
        %v4747 = vunpack.c.l.b16 %v3723
        %v4748 = vunpack.c.l.b16 %v3724
        %v4749 = vunpack.c.l.b16 %v3725
        %v4750 = vunpack.c.l.b16 %v3726
        %v4751 = vunpack.c.l.b16 %v3727
        %v4752 = vunpack.c.l.b16 %v3728
        %v4753 = vunpack.c.l.b16 %v3729
        %v4754 = vunpack.c.l.b16 %v3730
        %v4755 = vunpack.c.l.b16 %v3731
        %v4756 = vunpack.c.l.b16 %v3732
        %v4757 = vunpack.c.l.b16 %v3733
        %v4758 = vunpack.c.l.b16 %v3734
        %v4759 = vunpack.c.l.b16 %v3735
        %v4760 = vunpack.c.l.b16 %v3736
        %v4761 = vunpack.c.l.b16 %v3737
        %v4762 = vunpack.c.l.b16 %v3738
        %v4763 = vunpack.c.l.b16 %v3739
        %v4764 = vunpack.c.l.b16 %v3740
        %v4765 = vunpack.c.l.b16 %v3741
        %v4766 = vunpack.c.l.b16 %v3742
        %v4767 = vunpack.c.l.b16 %v3743
        %v4768 = vunpack.c.l.b16 %v3744
        %v4769 = vunpack.c.l.b16 %v3745
        %v4770 = vunpack.c.l.b16 %v3746
        %v4771 = vunpack.c.l.b16 %v3747
        %v4772 = vunpack.c.l.b16 %v3748
        %v4773 = vunpack.c.l.b16 %v3749
        %v4774 = vunpack.c.l.b16 %v3750
        %v4775 = vunpack.c.l.b16 %v3751
        %v4776 = vunpack.c.l.b16 %v3752
        %v4777 = vunpack.c.l.b16 %v3753
        %v4778 = vunpack.c.l.b16 %v3754
        %v4779 = vunpack.c.l.b16 %v3755
        %v4780 = vunpack.c.l.b16 %v3756
        %v4781 = vunpack.c.l.b16 %v3757
        %v4782 = vunpack.c.l.b16 %v3758
        %v4783 = vunpack.c.l.b16 %v3759
        %v4784 = vunpack.c.l.b16 %v3760
        %v4785 = vunpack.c.l.b16 %v3761
        %v4786 = vunpack.c.l.b16 %v3762
        %v4787 = vunpack.c.l.b16 %v3763
        %v4788 = vunpack.c.l.b16 %v3764
        %v4789 = vunpack.c.l.b16 %v3765
        %v4790 = vunpack.c.l.b16 %v3766
        %v4791 = vunpack.c.l.b16 %v3767
        %v4792 = vunpack.c.l.b16 %v3768
        %v4793 = vunpack.c.l.b16 %v3769
        %v4794 = vunpack.c.l.b16 %v3770
        %v4795 = vunpack.c.l.b16 %v3771
        %v4796 = vunpack.c.l.b16 %v3772
        %v4797 = vunpack.c.l.b16 %v3773
        %v4798 = vunpack.c.l.b16 %v3774
        %v4799 = vunpack.c.l.b16 %v3775
        %v4800 = vunpack.c.l.b16 %v3776
        %v4801 = vunpack.c.l.b16 %v3777
        %v4802 = vunpack.c.l.b16 %v3778
        %v4803 = vunpack.c.l.b16 %v3779
        %v4804 = vunpack.c.l.b16 %v3780
        %v4805 = vunpack.c.l.b16 %v3781
        %v4806 = vunpack.c.l.b16 %v3782
        %v4807 = vunpack.c.l.b16 %v3783
        %v4808 = vunpack.c.l.b16 %v3784
        %v4809 = vunpack.c.l.b16 %v3785
        %v4810 = vunpack.c.l.b16 %v3786
        %v4811 = vunpack.c.l.b16 %v3787
        %v4812 = vunpack.c.l.b16 %v3788
        %v4813 = vunpack.c.l.b16 %v3789
        %v4814 = vunpack.c.l.b16 %v3790
        %v4815 = vunpack.c.l.b16 %v3791
        %v4816 = vunpack.c.l.b16 %v3792
        %v4817 = vunpack.c.l.b16 %v3793
        %v4818 = vunpack.c.l.b16 %v3794
        %v4819 = vunpack.c.l.b16 %v3795
        %v4820 = vunpack.c.l.b16 %v3796
        %v4821 = vunpack.c.l.b16 %v3797
        %v4822 = vunpack.c.l.b16 %v3798
        %v4823 = vunpack.c.l.b16 %v3799
        %v4824 = vunpack.c.l.b16 %v3800
        %v4825 = vunpack.c.l.b16 %v3801
        %v4826 = vunpack.c.l.b16 %v3802
        %v4827 = vunpack.c.l.b16 %v3803
        %v4828 = vunpack.c.l.b16 %v3804
        %v4829 = vunpack.c.l.b16 %v3805
        %v4830 = vunpack.c.l.b16 %v3806
        %v4831 = vpack.c.b16 %v4688, %v4687
        %v4832 = vpack.c.b16 %v4690, %v4689
        %v4833 = vpack.c.b16 %v4692, %v4691
        %v4834 = vpack.c.b16 %v4694, %v4693
        %v4835 = vpack.c.b16 %v4696, %v4695
        %v4836 = vpack.c.b16 %v4698, %v4697
        %v4837 = vpack.c.b16 %v4700, %v4699
        %v4838 = vpack.c.b16 %v4702, %v4701
        %v4839 = vpack.c.b16 %v4704, %v4703
        %v4840 = vpack.c.b16 %v4706, %v4705
        %v4841 = vpack.c.b16 %v4708, %v4707
        %v4842 = vpack.c.b16 %v4710, %v4709
        %v4843 = vpack.c.b16 %v4712, %v4711
        %v4844 = vpack.c.b16 %v4714, %v4713
        %v4845 = vpack.c.b16 %v4716, %v4715
        %v4846 = vpack.c.b16 %v4718, %v4717
        %v4847 = vpack.c.b16 %v4720, %v4719
        %v4848 = vpack.c.b16 %v4722, %v4721
        %v4849 = vpack.c.b16 %v4724, %v4723
        %v4850 = vpack.c.b16 %v4726, %v4725
        %v4851 = vpack.c.b16 %v4728, %v4727
        %v4852 = vpack.c.b16 %v4730, %v4729
        %v4853 = vpack.c.b16 %v4732, %v4731
        %v4854 = vpack.c.b16 %v4734, %v4733
        %v4855 = vpack.c.b16 %v4736, %v4735
        %v4856 = vpack.c.b16 %v4738, %v4737
        %v4857 = vpack.c.b16 %v4740, %v4739
        %v4858 = vpack.c.b16 %v4742, %v4741
        %v4859 = vpack.c.b16 %v4744, %v4743
        %v4860 = vpack.c.b16 %v4746, %v4745
        %v4861 = vpack.c.b16 %v4748, %v4747
        %v4862 = vpack.c.b16 %v4750, %v4749
        %v4863 = vpack.c.b16 %v4752, %v4751
        %v4864 = vpack.c.b16 %v4754, %v4753
        %v4865 = vpack.c.b16 %v4756, %v4755
        %v4866 = vpack.c.b16 %v4758, %v4757
        %v4867 = vpack.c.b16 %v4760, %v4759
        %v4868 = vpack.c.b16 %v4762, %v4761
        %v4869 = vpack.c.b16 %v4764, %v4763
        %v4870 = vpack.c.b16 %v4766, %v4765
        %v4871 = vpack.c.b16 %v4768, %v4767
        %v4872 = vpack.c.b16 %v4770, %v4769
        %v4873 = vpack.c.b16 %v4772, %v4771
        %v4874 = vpack.c.b16 %v4774, %v4773
        %v4875 = vpack.c.b16 %v4776, %v4775
        %v4876 = vpack.c.b16 %v4778, %v4777
        %v4877 = vpack.c.b16 %v4780, %v4779
        %v4878 = vpack.c.b16 %v4782, %v4781
        %v4879 = vpack.c.b16 %v4784, %v4783
        %v4880 = vpack.c.b16 %v4786, %v4785
        %v4881 = vpack.c.b16 %v4788, %v4787
        %v4882 = vpack.c.b16 %v4790, %v4789
        %v4883 = vpack.c.b16 %v4792, %v4791
        %v4884 = vpack.c.b16 %v4794, %v4793
        %v4885 = vpack.c.b16 %v4796, %v4795
        %v4886 = vpack.c.b16 %v4798, %v4797
        %v4887 = vpack.c.b16 %v4800, %v4799
        %v4888 = vpack.c.b16 %v4802, %v4801
        %v4889 = vpack.c.b16 %v4804, %v4803
        %v4890 = vpack.c.b16 %v4806, %v4805
        %v4891 = vpack.c.b16 %v4808, %v4807
        %v4892 = vpack.c.b16 %v4810, %v4809
        %v4893 = vpack.c.b16 %v4812, %v4811
        %v4894 = vpack.c.b16 %v4814, %v4813
        %v4895 = vpack.c.b16 %v4816, %v4815
        %v4896 = vpack.c.b16 %v4818, %v4817
        %v4897 = vpack.c.b16 %v4820, %v4819
        %v4898 = vpack.c.b16 %v4822, %v4821
        %v4899 = vpack.c.b16 %v4824, %v4823
        %v4900 = vpack.c.b16 %v4826, %v4825
        %v4901 = vpack.c.b16 %v4828, %v4827
        %v4902 = vpack.c.b16 %v4830, %v4829
        %4975 = vmatprep.subr.bf16.mxu0 0
        %4976 = vmatpush1.bf16.msra.mxu0 %v4838
        %4977 = vmatprep.subr.bf16.mxu0 0
        %4978 = vmatpush1.bf16.msra.mxu0 %v4837
        %4979 = vmatprep.subr.bf16.mxu0 0
        %4980 = vmatpush1.bf16.msra.mxu0 %v4836
        %4981 = vmatprep.subr.bf16.mxu0 0
        %4982 = vmatpush1.bf16.msra.mxu0 %v4835
        %4983 = vmatprep.subr.bf16.mxu0 0
        %4984 = vmatpush1.bf16.msra.mxu0 %v4834
        %4985 = vmatprep.subr.bf16.mxu0 0
        %4986 = vmatpush1.bf16.msra.mxu0 %v4833
        %4987 = vmatprep.subr.bf16.mxu0 0
        %4988 = vmatpush1.bf16.msra.mxu0 %v4832
        %4989 = vmatprep.subr.bf16.mxu0 0
        %4990 = vmatpush1.bf16.msra.mxu0 %v4831
        %4991 = vmatprep.subr.bf16.mxu0 0
        %4992 = vmatpush2.bf16.msra.mxu0 %v4846
        %4993 = vmatprep.subr.bf16.mxu0 0
        %4994 = vmatpush2.bf16.msra.mxu0 %v4845
        %4995 = vmatprep.subr.bf16.mxu0 0
        %4996 = vmatpush2.bf16.msra.mxu0 %v4844
        %4997 = vmatprep.subr.bf16.mxu0 0
        %4998 = vmatpush2.bf16.msra.mxu0 %v4843
        %4999 = vmatprep.subr.bf16.mxu0 0
        %5000 = vmatpush2.bf16.msra.mxu0 %v4842
        %5001 = vmatprep.subr.bf16.mxu0 0
        %5002 = vmatpush2.bf16.msra.mxu0 %v4841
        %5003 = vmatprep.subr.bf16.mxu0 0
        %5004 = vmatpush2.bf16.msra.mxu0 %v4840
        %5005 = vmatprep.subr.bf16.mxu0 0
        %5006 = vmatpush2.bf16.msra.mxu0 %v4839
        %5007 = vmatprep.mubr.bf16.mxu0 %v4256
        %5008 = vmatmul.mubr.bf16.gmra.mxu0 %v4255
        %v5009 = vpop.f32.mrf.mxu0
        %v5010 = vadd.f32 0.0, %v5009
        %v5011 = vpop.f32.mrf.mxu0
        %v5012 = vpop.f32.mrf.mxu0
        %v5013 = vadd.f32 0.0, %v5012
        %v5014 = vpop.f32.mrf.mxu0
        %5015 = vmatprep.mubr.bf16.mxu0 %v4265
        %5016 = vmatmul.mubr.bf16.gmra.mxu0 %v4264
        %v5017 = vpop.f32.mrf.mxu0
        %v5018 = vadd.f32 0.0, %v5017
        %v5019 = vpop.f32.mrf.mxu0
        %v5020 = vpop.f32.mrf.mxu0
        %v5021 = vadd.f32 0.0, %v5020
        %v5022 = vpop.f32.mrf.mxu0
        %5023 = vmatprep.mubr.bf16.mxu0 %v4274
        %5024 = vmatmul.mubr.bf16.gmra.mxu0 %v4273
        %v5025 = vpop.f32.mrf.mxu0
        %v5026 = vadd.f32 0.0, %v5025
        %v5027 = vpop.f32.mrf.mxu0
        %v5028 = vpop.f32.mrf.mxu0
        %v5029 = vadd.f32 0.0, %v5028
        %v5030 = vpop.f32.mrf.mxu0
        %5031 = vmatprep.mubr.bf16.mxu0 %v4283
        %5032 = vmatmul.mubr.bf16.gmra.mxu0 %v4282
        %v5033 = vpop.f32.mrf.mxu0
        %v5034 = vadd.f32 0.0, %v5033
        %v5035 = vpop.f32.mrf.mxu0
        %v5036 = vpop.f32.mrf.mxu0
        %v5037 = vadd.f32 0.0, %v5036
        %v5038 = vpop.f32.mrf.mxu0
        %5039 = vmatprep.mubr.bf16.mxu0 %v4292
        %5040 = vmatmul.mubr.bf16.gmra.mxu0 %v4291
        %v5041 = vpop.f32.mrf.mxu0
        %v5042 = vadd.f32 0.0, %v5041
        %v5043 = vpop.f32.mrf.mxu0
        %v5044 = vpop.f32.mrf.mxu0
        %v5045 = vadd.f32 0.0, %v5044
        %v5046 = vpop.f32.mrf.mxu0
        %5047 = vmatprep.mubr.bf16.mxu0 %v4301
        %5048 = vmatmul.mubr.bf16.gmra.mxu0 %v4300
        %v5049 = vpop.f32.mrf.mxu0
        %v5050 = vadd.f32 0.0, %v5049
        %v5051 = vpop.f32.mrf.mxu0
        %v5052 = vpop.f32.mrf.mxu0
        %v5053 = vadd.f32 0.0, %v5052
        %v5054 = vpop.f32.mrf.mxu0
        %5055 = vmatprep.mubr.bf16.mxu0 %v4310
        %5056 = vmatmul.mubr.bf16.gmra.mxu0 %v4309
        %v5057 = vpop.f32.mrf.mxu0
        %v5058 = vadd.f32 0.0, %v5057
        %v5059 = vpop.f32.mrf.mxu0
        %v5060 = vpop.f32.mrf.mxu0
        %v5061 = vadd.f32 0.0, %v5060
        %v5062 = vpop.f32.mrf.mxu0
        %5063 = vmatprep.mubr.bf16.mxu0 %v4319
        %5064 = vmatmul.mubr.bf16.gmra.mxu0 %v4318
        %v5065 = vpop.f32.mrf.mxu0
        %v5066 = vadd.f32 0.0, %v5065
        %v5067 = vpop.f32.mrf.mxu0
        %v5068 = vpop.f32.mrf.mxu0
        %v5069 = vadd.f32 0.0, %v5068
        %v5070 = vpop.f32.mrf.mxu0
        %5071 = vmatprep.mubr.bf16.mxu0 %v4328
        %5072 = vmatmul.mubr.bf16.gmra.mxu0 %v4327
        %v5073 = vpop.f32.mrf.mxu0
        %v5074 = vadd.f32 0.0, %v5073
        %v5075 = vpop.f32.mrf.mxu0
        %v5076 = vpop.f32.mrf.mxu0
        %v5077 = vadd.f32 0.0, %v5076
        %v5078 = vpop.f32.mrf.mxu0
        %5079 = vmatprep.mubr.bf16.mxu0 %v4337
        %5080 = vmatmul.mubr.bf16.gmra.mxu0 %v4336
        %v5081 = vpop.f32.mrf.mxu0
        %v5082 = vadd.f32 0.0, %v5081
        %v5083 = vpop.f32.mrf.mxu0
        %v5084 = vpop.f32.mrf.mxu0
        %v5085 = vadd.f32 0.0, %v5084
        %v5086 = vpop.f32.mrf.mxu0
        %5087 = vmatprep.mubr.bf16.mxu0 %v4346
        %5088 = vmatmul.mubr.bf16.gmra.mxu0 %v4345
        %v5089 = vpop.f32.mrf.mxu0
        %v5090 = vadd.f32 0.0, %v5089
        %v5091 = vpop.f32.mrf.mxu0
        %v5092 = vpop.f32.mrf.mxu0
        %v5093 = vadd.f32 0.0, %v5092
        %v5094 = vpop.f32.mrf.mxu0
        %5095 = vmatprep.mubr.bf16.mxu0 %v4355
        %5096 = vmatmul.mubr.bf16.gmra.mxu0 %v4354
        %v5097 = vpop.f32.mrf.mxu0
        %v5098 = vadd.f32 0.0, %v5097
        %v5099 = vpop.f32.mrf.mxu0
        %v5100 = vpop.f32.mrf.mxu0
        %v5101 = vadd.f32 0.0, %v5100
        %v5102 = vpop.f32.mrf.mxu0
        %5103 = vmatprep.mubr.bf16.mxu0 %v4364
        %5104 = vmatmul.mubr.bf16.gmra.mxu0 %v4363
        %v5105 = vpop.f32.mrf.mxu0
        %v5106 = vadd.f32 0.0, %v5105
        %v5107 = vpop.f32.mrf.mxu0
        %v5108 = vpop.f32.mrf.mxu0
        %v5109 = vadd.f32 0.0, %v5108
        %v5110 = vpop.f32.mrf.mxu0
        %5111 = vmatprep.mubr.bf16.mxu0 %v4373
        %5112 = vmatmul.mubr.bf16.gmra.mxu0 %v4372
        %v5113 = vpop.f32.mrf.mxu0
        %v5114 = vadd.f32 0.0, %v5113
        %v5115 = vpop.f32.mrf.mxu0
        %v5116 = vpop.f32.mrf.mxu0
        %v5117 = vadd.f32 0.0, %v5116
        %v5118 = vpop.f32.mrf.mxu0
        %5119 = vmatprep.mubr.bf16.mxu0 %v4382
        %5120 = vmatmul.mubr.bf16.gmra.mxu0 %v4381
        %v5121 = vpop.f32.mrf.mxu0
        %v5122 = vadd.f32 0.0, %v5121
        %v5123 = vpop.f32.mrf.mxu0
        %v5124 = vpop.f32.mrf.mxu0
        %v5125 = vadd.f32 0.0, %v5124
        %v5126 = vpop.f32.mrf.mxu0
        %5127 = vmatprep.mubr.bf16.mxu0 %v4391
        %5128 = vmatmul.mubr.bf16.gmra.mxu0 %v4390
        %v5129 = vpop.f32.mrf.mxu0
        %v5130 = vadd.f32 0.0, %v5129
        %v5131 = vpop.f32.mrf.mxu0
        %v5132 = vpop.f32.mrf.mxu0
        %v5133 = vadd.f32 0.0, %v5132
        %v5134 = vpop.f32.mrf.mxu0
        %5135 = vdwg.mxu0
        %5136 = vmatprep.subr.bf16.mxu0 0
        %5137 = vmatpush1.bf16.msra.mxu0 %v4854
        %5138 = vmatprep.subr.bf16.mxu0 0
        %5139 = vmatpush1.bf16.msra.mxu0 %v4853
        %5140 = vmatprep.subr.bf16.mxu0 0
        %5141 = vmatpush1.bf16.msra.mxu0 %v4852
        %5142 = vmatprep.subr.bf16.mxu0 0
        %5143 = vmatpush1.bf16.msra.mxu0 %v4851
        %5144 = vmatprep.subr.bf16.mxu0 0
        %5145 = vmatpush1.bf16.msra.mxu0 %v4850
        %5146 = vmatprep.subr.bf16.mxu0 0
        %5147 = vmatpush1.bf16.msra.mxu0 %v4849
        %5148 = vmatprep.subr.bf16.mxu0 0
        %5149 = vmatpush1.bf16.msra.mxu0 %v4848
        %5150 = vmatprep.subr.bf16.mxu0 0
        %5151 = vmatpush1.bf16.msra.mxu0 %v4847
        %5152 = vmatprep.subr.bf16.mxu0 0
        %5153 = vmatpush2.bf16.msra.mxu0 %v4862
        %5154 = vmatprep.subr.bf16.mxu0 0
        %5155 = vmatpush2.bf16.msra.mxu0 %v4861
        %5156 = vmatprep.subr.bf16.mxu0 0
        %5157 = vmatpush2.bf16.msra.mxu0 %v4860
        %5158 = vmatprep.subr.bf16.mxu0 0
        %5159 = vmatpush2.bf16.msra.mxu0 %v4859
        %5160 = vmatprep.subr.bf16.mxu0 0
        %5161 = vmatpush2.bf16.msra.mxu0 %v4858
        %5162 = vmatprep.subr.bf16.mxu0 0
        %5163 = vmatpush2.bf16.msra.mxu0 %v4857
        %5164 = vmatprep.subr.bf16.mxu0 0
        %5165 = vmatpush2.bf16.msra.mxu0 %v4856
        %5166 = vmatprep.subr.bf16.mxu0 0
        %5167 = vmatpush2.bf16.msra.mxu0 %v4855
        %5168 = vmatprep.mubr.bf16.mxu0 %v4258
        %5169 = vmatmul.mubr.bf16.gmra.mxu0 %v4257
        %v5170 = vpop.f32.mrf.mxu0
        %v5171 = vadd.f32 %v5010, %v5170
        %v5172 = vpop.f32.mrf.mxu0
        %v5173 = vpop.f32.mrf.mxu0
        %v5174 = vadd.f32 %v5013, %v5173
        %v5175 = vpop.f32.mrf.mxu0
        %5176 = vmatprep.mubr.bf16.mxu0 %v4267
        %5177 = vmatmul.mubr.bf16.gmra.mxu0 %v4266
        %v5178 = vpop.f32.mrf.mxu0
        %v5179 = vadd.f32 %v5018, %v5178
        %v5180 = vpop.f32.mrf.mxu0
        %v5181 = vpop.f32.mrf.mxu0
        %v5182 = vadd.f32 %v5021, %v5181
        %v5183 = vpop.f32.mrf.mxu0
        %5184 = vmatprep.mubr.bf16.mxu0 %v4276
        %5185 = vmatmul.mubr.bf16.gmra.mxu0 %v4275
        %v5186 = vpop.f32.mrf.mxu0
        %v5187 = vadd.f32 %v5026, %v5186
        %v5188 = vpop.f32.mrf.mxu0
        %v5189 = vpop.f32.mrf.mxu0
        %v5190 = vadd.f32 %v5029, %v5189
        %v5191 = vpop.f32.mrf.mxu0
        %5192 = vmatprep.mubr.bf16.mxu0 %v4285
        %5193 = vmatmul.mubr.bf16.gmra.mxu0 %v4284
        %v5194 = vpop.f32.mrf.mxu0
        %v5195 = vadd.f32 %v5034, %v5194
        %v5196 = vpop.f32.mrf.mxu0
        %v5197 = vpop.f32.mrf.mxu0
        %v5198 = vadd.f32 %v5037, %v5197
        %v5199 = vpop.f32.mrf.mxu0
        %5200 = vmatprep.mubr.bf16.mxu0 %v4294
        %5201 = vmatmul.mubr.bf16.gmra.mxu0 %v4293
        %v5202 = vpop.f32.mrf.mxu0
        %v5203 = vadd.f32 %v5042, %v5202
        %v5204 = vpop.f32.mrf.mxu0
        %v5205 = vpop.f32.mrf.mxu0
        %v5206 = vadd.f32 %v5045, %v5205
        %v5207 = vpop.f32.mrf.mxu0
        %5208 = vmatprep.mubr.bf16.mxu0 %v4303
        %5209 = vmatmul.mubr.bf16.gmra.mxu0 %v4302
        %v5210 = vpop.f32.mrf.mxu0
        %v5211 = vadd.f32 %v5050, %v5210
        %v5212 = vpop.f32.mrf.mxu0
        %v5213 = vpop.f32.mrf.mxu0
        %v5214 = vadd.f32 %v5053, %v5213
        %v5215 = vpop.f32.mrf.mxu0
        %5216 = vmatprep.mubr.bf16.mxu0 %v4312
        %5217 = vmatmul.mubr.bf16.gmra.mxu0 %v4311
        %v5218 = vpop.f32.mrf.mxu0
        %v5219 = vadd.f32 %v5058, %v5218
        %v5220 = vpop.f32.mrf.mxu0
        %v5221 = vpop.f32.mrf.mxu0
        %v5222 = vadd.f32 %v5061, %v5221
        %v5223 = vpop.f32.mrf.mxu0
        %5224 = vmatprep.mubr.bf16.mxu0 %v4321
        %5225 = vmatmul.mubr.bf16.gmra.mxu0 %v4320
        %v5226 = vpop.f32.mrf.mxu0
        %v5227 = vadd.f32 %v5066, %v5226
        %v5228 = vpop.f32.mrf.mxu0
        %v5229 = vpop.f32.mrf.mxu0
        %v5230 = vadd.f32 %v5069, %v5229
        %v5231 = vpop.f32.mrf.mxu0
        %5232 = vmatprep.mubr.bf16.mxu0 %v4330
        %5233 = vmatmul.mubr.bf16.gmra.mxu0 %v4329
        %v5234 = vpop.f32.mrf.mxu0
        %v5235 = vadd.f32 %v5074, %v5234
        %v5236 = vpop.f32.mrf.mxu0
        %v5237 = vpop.f32.mrf.mxu0
        %v5238 = vadd.f32 %v5077, %v5237
        %v5239 = vpop.f32.mrf.mxu0
        %5240 = vmatprep.mubr.bf16.mxu0 %v4339
        %5241 = vmatmul.mubr.bf16.gmra.mxu0 %v4338
        %v5242 = vpop.f32.mrf.mxu0
        %v5243 = vadd.f32 %v5082, %v5242
        %v5244 = vpop.f32.mrf.mxu0
        %v5245 = vpop.f32.mrf.mxu0
        %v5246 = vadd.f32 %v5085, %v5245
        %v5247 = vpop.f32.mrf.mxu0
        %5248 = vmatprep.mubr.bf16.mxu0 %v4348
        %5249 = vmatmul.mubr.bf16.gmra.mxu0 %v4347
        %v5250 = vpop.f32.mrf.mxu0
        %v5251 = vadd.f32 %v5090, %v5250
        %v5252 = vpop.f32.mrf.mxu0
        %v5253 = vpop.f32.mrf.mxu0
        %v5254 = vadd.f32 %v5093, %v5253
        %v5255 = vpop.f32.mrf.mxu0
        %5256 = vmatprep.mubr.bf16.mxu0 %v4357
        %5257 = vmatmul.mubr.bf16.gmra.mxu0 %v4356
        %v5258 = vpop.f32.mrf.mxu0
        %v5259 = vadd.f32 %v5098, %v5258
        %v5260 = vpop.f32.mrf.mxu0
        %v5261 = vpop.f32.mrf.mxu0
        %v5262 = vadd.f32 %v5101, %v5261
        %v5263 = vpop.f32.mrf.mxu0
        %5264 = vmatprep.mubr.bf16.mxu0 %v4366
        %5265 = vmatmul.mubr.bf16.gmra.mxu0 %v4365
        %v5266 = vpop.f32.mrf.mxu0
        %v5267 = vadd.f32 %v5106, %v5266
        %v5268 = vpop.f32.mrf.mxu0
        %v5269 = vpop.f32.mrf.mxu0
        %v5270 = vadd.f32 %v5109, %v5269
        %v5271 = vpop.f32.mrf.mxu0
        %5272 = vmatprep.mubr.bf16.mxu0 %v4375
        %5273 = vmatmul.mubr.bf16.gmra.mxu0 %v4374
        %v5274 = vpop.f32.mrf.mxu0
        %v5275 = vadd.f32 %v5114, %v5274
        %v5276 = vpop.f32.mrf.mxu0
        %v5277 = vpop.f32.mrf.mxu0
        %v5278 = vadd.f32 %v5117, %v5277
        %v5279 = vpop.f32.mrf.mxu0
        %5280 = vmatprep.mubr.bf16.mxu0 %v4384
        %5281 = vmatmul.mubr.bf16.gmra.mxu0 %v4383
        %v5282 = vpop.f32.mrf.mxu0
        %v5283 = vadd.f32 %v5122, %v5282
        %v5284 = vpop.f32.mrf.mxu0
        %v5285 = vpop.f32.mrf.mxu0
        %v5286 = vadd.f32 %v5125, %v5285
        %v5287 = vpop.f32.mrf.mxu0
        %5288 = vmatprep.mubr.bf16.mxu0 %v4393
        %5289 = vmatmul.mubr.bf16.gmra.mxu0 %v4392
        %v5290 = vpop.f32.mrf.mxu0
        %v5291 = vadd.f32 %v5130, %v5290
        %v5292 = vpop.f32.mrf.mxu0
        %v5293 = vpop.f32.mrf.mxu0
        %v5294 = vadd.f32 %v5133, %v5293
        %v5295 = vpop.f32.mrf.mxu0
        %5296 = vdwg.mxu0
        %5297 = vmatprep.subr.bf16.mxu0 0
        %5298 = vmatpush1.bf16.msra.mxu0 %v4870
        %5299 = vmatprep.subr.bf16.mxu0 0
        %5300 = vmatpush1.bf16.msra.mxu0 %v4869
        %5301 = vmatprep.subr.bf16.mxu0 0
        %5302 = vmatpush1.bf16.msra.mxu0 %v4868
        %5303 = vmatprep.subr.bf16.mxu0 0
        %5304 = vmatpush1.bf16.msra.mxu0 %v4867
        %5305 = vmatprep.subr.bf16.mxu0 0
        %5306 = vmatpush1.bf16.msra.mxu0 %v4866
        %5307 = vmatprep.subr.bf16.mxu0 0
        %5308 = vmatpush1.bf16.msra.mxu0 %v4865
        %5309 = vmatprep.subr.bf16.mxu0 0
        %5310 = vmatpush1.bf16.msra.mxu0 %v4864
        %5311 = vmatprep.subr.bf16.mxu0 0
        %5312 = vmatpush1.bf16.msra.mxu0 %v4863
        %5313 = vmatprep.subr.bf16.mxu0 0
        %5314 = vmatpush2.bf16.msra.mxu0 %v4878
        %5315 = vmatprep.subr.bf16.mxu0 0
        %5316 = vmatpush2.bf16.msra.mxu0 %v4877
        %5317 = vmatprep.subr.bf16.mxu0 0
        %5318 = vmatpush2.bf16.msra.mxu0 %v4876
        %5319 = vmatprep.subr.bf16.mxu0 0
        %5320 = vmatpush2.bf16.msra.mxu0 %v4875
        %5321 = vmatprep.subr.bf16.mxu0 0
        %5322 = vmatpush2.bf16.msra.mxu0 %v4874
        %5323 = vmatprep.subr.bf16.mxu0 0
        %5324 = vmatpush2.bf16.msra.mxu0 %v4873
        %5325 = vmatprep.subr.bf16.mxu0 0
        %5326 = vmatpush2.bf16.msra.mxu0 %v4872
        %5327 = vmatprep.subr.bf16.mxu0 0
        %5328 = vmatpush2.bf16.msra.mxu0 %v4871
        %5329 = vmatprep.mubr.bf16.mxu0 %v4260
        %5330 = vmatmul.mubr.bf16.gmra.mxu0 %v4259
        %v5331 = vpop.f32.mrf.mxu0
        %v5332 = vadd.f32 %v5171, %v5331
        %v5333 = vpop.f32.mrf.mxu0
        %v5334 = vpop.f32.mrf.mxu0
        %v5335 = vadd.f32 %v5174, %v5334
        %v5336 = vpop.f32.mrf.mxu0
        %5337 = vmatprep.mubr.bf16.mxu0 %v4269
        %5338 = vmatmul.mubr.bf16.gmra.mxu0 %v4268
        %v5339 = vpop.f32.mrf.mxu0
        %v5340 = vadd.f32 %v5179, %v5339
        %v5341 = vpop.f32.mrf.mxu0
        %v5342 = vpop.f32.mrf.mxu0
        %v5343 = vadd.f32 %v5182, %v5342
        %v5344 = vpop.f32.mrf.mxu0
        %5345 = vmatprep.mubr.bf16.mxu0 %v4278
        %5346 = vmatmul.mubr.bf16.gmra.mxu0 %v4277
        %v5347 = vpop.f32.mrf.mxu0
        %v5348 = vadd.f32 %v5187, %v5347
        %v5349 = vpop.f32.mrf.mxu0
        %v5350 = vpop.f32.mrf.mxu0
        %v5351 = vadd.f32 %v5190, %v5350
        %v5352 = vpop.f32.mrf.mxu0
        %5353 = vmatprep.mubr.bf16.mxu0 %v4287
        %5354 = vmatmul.mubr.bf16.gmra.mxu0 %v4286
        %v5355 = vpop.f32.mrf.mxu0
        %v5356 = vadd.f32 %v5195, %v5355
        %v5357 = vpop.f32.mrf.mxu0
        %v5358 = vpop.f32.mrf.mxu0
        %v5359 = vadd.f32 %v5198, %v5358
        %v5360 = vpop.f32.mrf.mxu0
        %5361 = vmatprep.mubr.bf16.mxu0 %v4296
        %5362 = vmatmul.mubr.bf16.gmra.mxu0 %v4295
        %v5363 = vpop.f32.mrf.mxu0
        %v5364 = vadd.f32 %v5203, %v5363
        %v5365 = vpop.f32.mrf.mxu0
        %v5366 = vpop.f32.mrf.mxu0
        %v5367 = vadd.f32 %v5206, %v5366
        %v5368 = vpop.f32.mrf.mxu0
        %5369 = vmatprep.mubr.bf16.mxu0 %v4305
        %5370 = vmatmul.mubr.bf16.gmra.mxu0 %v4304
        %v5371 = vpop.f32.mrf.mxu0
        %v5372 = vadd.f32 %v5211, %v5371
        %v5373 = vpop.f32.mrf.mxu0
        %v5374 = vpop.f32.mrf.mxu0
        %v5375 = vadd.f32 %v5214, %v5374
        %v5376 = vpop.f32.mrf.mxu0
        %5377 = vmatprep.mubr.bf16.mxu0 %v4314
        %5378 = vmatmul.mubr.bf16.gmra.mxu0 %v4313
        %v5379 = vpop.f32.mrf.mxu0
        %v5380 = vadd.f32 %v5219, %v5379
        %v5381 = vpop.f32.mrf.mxu0
        %v5382 = vpop.f32.mrf.mxu0
        %v5383 = vadd.f32 %v5222, %v5382
        %v5384 = vpop.f32.mrf.mxu0
        %5385 = vmatprep.mubr.bf16.mxu0 %v4323
        %5386 = vmatmul.mubr.bf16.gmra.mxu0 %v4322
        %v5387 = vpop.f32.mrf.mxu0
        %v5388 = vadd.f32 %v5227, %v5387
        %v5389 = vpop.f32.mrf.mxu0
        %v5390 = vpop.f32.mrf.mxu0
        %v5391 = vadd.f32 %v5230, %v5390
        %v5392 = vpop.f32.mrf.mxu0
        %5393 = vmatprep.mubr.bf16.mxu0 %v4332
        %5394 = vmatmul.mubr.bf16.gmra.mxu0 %v4331
        %v5395 = vpop.f32.mrf.mxu0
        %v5396 = vadd.f32 %v5235, %v5395
        %v5397 = vpop.f32.mrf.mxu0
        %v5398 = vpop.f32.mrf.mxu0
        %v5399 = vadd.f32 %v5238, %v5398
        %v5400 = vpop.f32.mrf.mxu0
        %5401 = vmatprep.mubr.bf16.mxu0 %v4341
        %5402 = vmatmul.mubr.bf16.gmra.mxu0 %v4340
        %v5403 = vpop.f32.mrf.mxu0
        %v5404 = vadd.f32 %v5243, %v5403
        %v5405 = vpop.f32.mrf.mxu0
        %v5406 = vpop.f32.mrf.mxu0
        %v5407 = vadd.f32 %v5246, %v5406
        %v5408 = vpop.f32.mrf.mxu0
        %5409 = vmatprep.mubr.bf16.mxu0 %v4350
        %5410 = vmatmul.mubr.bf16.gmra.mxu0 %v4349
        %v5411 = vpop.f32.mrf.mxu0
        %v5412 = vadd.f32 %v5251, %v5411
        %v5413 = vpop.f32.mrf.mxu0
        %v5414 = vpop.f32.mrf.mxu0
        %v5415 = vadd.f32 %v5254, %v5414
        %v5416 = vpop.f32.mrf.mxu0
        %5417 = vmatprep.mubr.bf16.mxu0 %v4359
        %5418 = vmatmul.mubr.bf16.gmra.mxu0 %v4358
        %v5419 = vpop.f32.mrf.mxu0
        %v5420 = vadd.f32 %v5259, %v5419
        %v5421 = vpop.f32.mrf.mxu0
        %v5422 = vpop.f32.mrf.mxu0
        %v5423 = vadd.f32 %v5262, %v5422
        %v5424 = vpop.f32.mrf.mxu0
        %5425 = vmatprep.mubr.bf16.mxu0 %v4368
        %5426 = vmatmul.mubr.bf16.gmra.mxu0 %v4367
        %v5427 = vpop.f32.mrf.mxu0
        %v5428 = vadd.f32 %v5267, %v5427
        %v5429 = vpop.f32.mrf.mxu0
        %v5430 = vpop.f32.mrf.mxu0
        %v5431 = vadd.f32 %v5270, %v5430
        %v5432 = vpop.f32.mrf.mxu0
        %5433 = vmatprep.mubr.bf16.mxu0 %v4377
        %5434 = vmatmul.mubr.bf16.gmra.mxu0 %v4376
        %v5435 = vpop.f32.mrf.mxu0
        %v5436 = vadd.f32 %v5275, %v5435
        %v5437 = vpop.f32.mrf.mxu0
        %v5438 = vpop.f32.mrf.mxu0
        %v5439 = vadd.f32 %v5278, %v5438
        %v5440 = vpop.f32.mrf.mxu0
        %5441 = vmatprep.mubr.bf16.mxu0 %v4386
        %5442 = vmatmul.mubr.bf16.gmra.mxu0 %v4385
        %v5443 = vpop.f32.mrf.mxu0
        %v5444 = vadd.f32 %v5283, %v5443
        %v5445 = vpop.f32.mrf.mxu0
        %v5446 = vpop.f32.mrf.mxu0
        %v5447 = vadd.f32 %v5286, %v5446
        %v5448 = vpop.f32.mrf.mxu0
        %5449 = vmatprep.mubr.bf16.mxu0 %v4395
        %5450 = vmatmul.mubr.bf16.gmra.mxu0 %v4394
        %v5451 = vpop.f32.mrf.mxu0
        %v5452 = vadd.f32 %v5291, %v5451
        %v5453 = vpop.f32.mrf.mxu0
        %v5454 = vpop.f32.mrf.mxu0
        %v5455 = vadd.f32 %v5294, %v5454
        %v5456 = vpop.f32.mrf.mxu0
        %5457 = vdwg.mxu0
        %5458 = vmatprep.subr.bf16.mxu0 0
        %5459 = vmatpush1.bf16.msra.mxu0 %v4886
        %5460 = vmatprep.subr.bf16.mxu0 0
        %5461 = vmatpush1.bf16.msra.mxu0 %v4885
        %5462 = vmatprep.subr.bf16.mxu0 0
        %5463 = vmatpush1.bf16.msra.mxu0 %v4884
        %5464 = vmatprep.subr.bf16.mxu0 0
        %5465 = vmatpush1.bf16.msra.mxu0 %v4883
        %5466 = vmatprep.subr.bf16.mxu0 0
        %5467 = vmatpush1.bf16.msra.mxu0 %v4882
        %5468 = vmatprep.subr.bf16.mxu0 0
        %5469 = vmatpush1.bf16.msra.mxu0 %v4881
        %5470 = vmatprep.subr.bf16.mxu0 0
        %5471 = vmatpush1.bf16.msra.mxu0 %v4880
        %5472 = vmatprep.subr.bf16.mxu0 0
        %5473 = vmatpush1.bf16.msra.mxu0 %v4879
        %5474 = vmatprep.subr.bf16.mxu0 0
        %5475 = vmatpush2.bf16.msra.mxu0 %v4894
        %5476 = vmatprep.subr.bf16.mxu0 0
        %5477 = vmatpush2.bf16.msra.mxu0 %v4893
        %5478 = vmatprep.subr.bf16.mxu0 0
        %5479 = vmatpush2.bf16.msra.mxu0 %v4892
        %5480 = vmatprep.subr.bf16.mxu0 0
        %5481 = vmatpush2.bf16.msra.mxu0 %v4891
        %5482 = vmatprep.subr.bf16.mxu0 0
        %5483 = vmatpush2.bf16.msra.mxu0 %v4890
        %5484 = vmatprep.subr.bf16.mxu0 0
        %5485 = vmatpush2.bf16.msra.mxu0 %v4889
        %5486 = vmatprep.subr.bf16.mxu0 0
        %5487 = vmatpush2.bf16.msra.mxu0 %v4888
        %5488 = vmatprep.subr.bf16.mxu0 0
        %5489 = vmatpush2.bf16.msra.mxu0 %v4887
        %5490 = vmatprep.mubr.bf16.mxu0 %v4262
        %5491 = vmatmul.mubr.bf16.gmra.mxu0 %v4261
        %v5492 = vpop.f32.mrf.mxu0
        %v5493 = vadd.f32 %v5332, %v5492
        %v5494 = vpop.f32.mrf.mxu0
        %v5495 = vpop.f32.mrf.mxu0
        %v5496 = vadd.f32 %v5335, %v5495
        %v5497 = vpop.f32.mrf.mxu0
        %5498 = vmatprep.mubr.bf16.mxu0 %v4271
        %5499 = vmatmul.mubr.bf16.gmra.mxu0 %v4270
        %v5500 = vpop.f32.mrf.mxu0
        %v5501 = vadd.f32 %v5340, %v5500
        %v5502 = vpop.f32.mrf.mxu0
        %v5503 = vpop.f32.mrf.mxu0
        %v5504 = vadd.f32 %v5343, %v5503
        %v5505 = vpop.f32.mrf.mxu0
        %5506 = vmatprep.mubr.bf16.mxu0 %v4280
        %5507 = vmatmul.mubr.bf16.gmra.mxu0 %v4279
        %v5508 = vpop.f32.mrf.mxu0
        %v5509 = vadd.f32 %v5348, %v5508
        %v5510 = vpop.f32.mrf.mxu0
        %v5511 = vpop.f32.mrf.mxu0
        %v5512 = vadd.f32 %v5351, %v5511
        %v5513 = vpop.f32.mrf.mxu0
        %5514 = vmatprep.mubr.bf16.mxu0 %v4289
        %5515 = vmatmul.mubr.bf16.gmra.mxu0 %v4288
        %v5516 = vpop.f32.mrf.mxu0
        %v5517 = vadd.f32 %v5356, %v5516
        %v5518 = vpop.f32.mrf.mxu0
        %v5519 = vpop.f32.mrf.mxu0
        %v5520 = vadd.f32 %v5359, %v5519
        %v5521 = vpop.f32.mrf.mxu0
        %5522 = vmatprep.mubr.bf16.mxu0 %v4298
        %5523 = vmatmul.mubr.bf16.gmra.mxu0 %v4297
        %v5524 = vpop.f32.mrf.mxu0
        %v5525 = vadd.f32 %v5364, %v5524
        %v5526 = vpop.f32.mrf.mxu0
        %v5527 = vpop.f32.mrf.mxu0
        %v5528 = vadd.f32 %v5367, %v5527
        %v5529 = vpop.f32.mrf.mxu0
        %5530 = vmatprep.mubr.bf16.mxu0 %v4307
        %5531 = vmatmul.mubr.bf16.gmra.mxu0 %v4306
        %v5532 = vpop.f32.mrf.mxu0
        %v5533 = vadd.f32 %v5372, %v5532
        %v5534 = vpop.f32.mrf.mxu0
        %v5535 = vpop.f32.mrf.mxu0
        %v5536 = vadd.f32 %v5375, %v5535
        %v5537 = vpop.f32.mrf.mxu0
        %5538 = vmatprep.mubr.bf16.mxu0 %v4316
        %5539 = vmatmul.mubr.bf16.gmra.mxu0 %v4315
        %v5540 = vpop.f32.mrf.mxu0
        %v5541 = vadd.f32 %v5380, %v5540
        %v5542 = vpop.f32.mrf.mxu0
        %v5543 = vpop.f32.mrf.mxu0
        %v5544 = vadd.f32 %v5383, %v5543
        %v5545 = vpop.f32.mrf.mxu0
        %5546 = vmatprep.mubr.bf16.mxu0 %v4325
        %5547 = vmatmul.mubr.bf16.gmra.mxu0 %v4324
        %v5548 = vpop.f32.mrf.mxu0
        %v5549 = vadd.f32 %v5388, %v5548
        %v5550 = vpop.f32.mrf.mxu0
        %v5551 = vpop.f32.mrf.mxu0
        %v5552 = vadd.f32 %v5391, %v5551
        %v5553 = vpop.f32.mrf.mxu0
        %5554 = vmatprep.mubr.bf16.mxu0 %v4334
        %5555 = vmatmul.mubr.bf16.gmra.mxu0 %v4333
        %v5556 = vpop.f32.mrf.mxu0
        %v5557 = vadd.f32 %v5396, %v5556
        %v5558 = vpop.f32.mrf.mxu0
        %v5559 = vpop.f32.mrf.mxu0
        %v5560 = vadd.f32 %v5399, %v5559
        %v5561 = vpop.f32.mrf.mxu0
        %5562 = vmatprep.mubr.bf16.mxu0 %v4343
        %5563 = vmatmul.mubr.bf16.gmra.mxu0 %v4342
        %v5564 = vpop.f32.mrf.mxu0
        %v5565 = vadd.f32 %v5404, %v5564
        %v5566 = vpop.f32.mrf.mxu0
        %v5567 = vpop.f32.mrf.mxu0
        %v5568 = vadd.f32 %v5407, %v5567
        %v5569 = vpop.f32.mrf.mxu0
        %5570 = vmatprep.mubr.bf16.mxu0 %v4352
        %5571 = vmatmul.mubr.bf16.gmra.mxu0 %v4351
        %v5572 = vpop.f32.mrf.mxu0
        %v5573 = vadd.f32 %v5412, %v5572
        %v5574 = vpop.f32.mrf.mxu0
        %v5575 = vpop.f32.mrf.mxu0
        %v5576 = vadd.f32 %v5415, %v5575
        %v5577 = vpop.f32.mrf.mxu0
        %5578 = vmatprep.mubr.bf16.mxu0 %v4361
        %5579 = vmatmul.mubr.bf16.gmra.mxu0 %v4360
        %v5580 = vpop.f32.mrf.mxu0
        %v5581 = vadd.f32 %v5420, %v5580
        %v5582 = vpop.f32.mrf.mxu0
        %v5583 = vpop.f32.mrf.mxu0
        %v5584 = vadd.f32 %v5423, %v5583
        %v5585 = vpop.f32.mrf.mxu0
        %5586 = vmatprep.mubr.bf16.mxu0 %v4370
        %5587 = vmatmul.mubr.bf16.gmra.mxu0 %v4369
        %v5588 = vpop.f32.mrf.mxu0
        %v5589 = vadd.f32 %v5428, %v5588
        %v5590 = vpop.f32.mrf.mxu0
        %v5591 = vpop.f32.mrf.mxu0
        %v5592 = vadd.f32 %v5431, %v5591
        %v5593 = vpop.f32.mrf.mxu0
        %5594 = vmatprep.mubr.bf16.mxu0 %v4379
        %5595 = vmatmul.mubr.bf16.gmra.mxu0 %v4378
        %v5596 = vpop.f32.mrf.mxu0
        %v5597 = vadd.f32 %v5436, %v5596
        %v5598 = vpop.f32.mrf.mxu0
        %v5599 = vpop.f32.mrf.mxu0
        %v5600 = vadd.f32 %v5439, %v5599
        %v5601 = vpop.f32.mrf.mxu0
        %5602 = vmatprep.mubr.bf16.mxu0 %v4388
        %5603 = vmatmul.mubr.bf16.gmra.mxu0 %v4387
        %v5604 = vpop.f32.mrf.mxu0
        %v5605 = vadd.f32 %v5444, %v5604
        %v5606 = vpop.f32.mrf.mxu0
        %v5607 = vpop.f32.mrf.mxu0
        %v5608 = vadd.f32 %v5447, %v5607
        %v5609 = vpop.f32.mrf.mxu0
        %5610 = vmatprep.mubr.bf16.mxu0 %v4397
        %5611 = vmatmul.mubr.bf16.gmra.mxu0 %v4396
        %v5612 = vpop.f32.mrf.mxu0
        %v5613 = vadd.f32 %v5452, %v5612
        %v5614 = vpop.f32.mrf.mxu0
        %v5615 = vpop.f32.mrf.mxu0
        %v5616 = vadd.f32 %v5455, %v5615
        %v5617 = vpop.f32.mrf.mxu0
        %5618 = vdwg.mxu0
        %5619 = vmatprep.subr.bf16.mxu0 0
        %5620 = vmatpush1.bf16.msra.mxu0 %v4902
        %5621 = vmatprep.subr.bf16.mxu0 0
        %5622 = vmatpush1.bf16.msra.mxu0 %v4901
        %5623 = vmatprep.subr.bf16.mxu0 0
        %5624 = vmatpush1.bf16.msra.mxu0 %v4900
        %5625 = vmatprep.subr.bf16.mxu0 0
        %5626 = vmatpush1.bf16.msra.mxu0 %v4899
        %5627 = vmatprep.subr.bf16.mxu0 0
        %5628 = vmatpush1.bf16.msra.mxu0 %v4898
        %5629 = vmatprep.subr.bf16.mxu0 0
        %5630 = vmatpush1.bf16.msra.mxu0 %v4897
        %5631 = vmatprep.subr.bf16.mxu0 0
        %5632 = vmatpush1.bf16.msra.mxu0 %v4896
        %5633 = vmatprep.subr.bf16.mxu0 0
        %5634 = vmatpush1.bf16.msra.mxu0 %v4895
        %5635 = vmatprep.subr.bf16.mxu0 0
        %5636 = vmatpush2.bf16.msra.mxu0 0
        %5637 = vmatprep.subr.bf16.mxu0 0
        %5638 = vmatpush2.bf16.msra.mxu0 0
        %5639 = vmatprep.subr.bf16.mxu0 0
        %5640 = vmatpush2.bf16.msra.mxu0 0
        %5641 = vmatprep.subr.bf16.mxu0 0
        %5642 = vmatpush2.bf16.msra.mxu0 0
        %5643 = vmatprep.subr.bf16.mxu0 0
        %5644 = vmatpush2.bf16.msra.mxu0 0
        %5645 = vmatprep.subr.bf16.mxu0 0
        %5646 = vmatpush2.bf16.msra.mxu0 0
        %5647 = vmatprep.subr.bf16.mxu0 0
        %5648 = vmatpush2.bf16.msra.mxu0 0
        %5649 = vmatprep.subr.bf16.mxu0 0
        %5650 = vmatpush2.bf16.msra.mxu0 0
        %5651 = vmatprep.mubr.bf16.mxu0 0
        %5652 = vmatmul.mubr.bf16.gmra.mxu0 %v4263
        %v5653 = vpop.f32.mrf.mxu0
        %v5654 = vadd.f32 %v5493, %v5653
        %v5655 = vpop.f32.mrf.mxu0
        %v5656 = vpop.f32.mrf.mxu0
        %v5657 = vadd.f32 %v5496, %v5656
        %v5658 = vpop.f32.mrf.mxu0
        %5659 = vmatprep.mubr.bf16.mxu0 0
        %5660 = vmatmul.mubr.bf16.gmra.mxu0 %v4272
        %v5661 = vpop.f32.mrf.mxu0
        %v5662 = vadd.f32 %v5501, %v5661
        %v5663 = vpop.f32.mrf.mxu0
        %v5664 = vpop.f32.mrf.mxu0
        %v5665 = vadd.f32 %v5504, %v5664
        %v5666 = vpop.f32.mrf.mxu0
        %5667 = vmatprep.mubr.bf16.mxu0 0
        %5668 = vmatmul.mubr.bf16.gmra.mxu0 %v4281
        %v5669 = vpop.f32.mrf.mxu0
        %v5670 = vadd.f32 %v5509, %v5669
        %v5671 = vpop.f32.mrf.mxu0
        %v5672 = vpop.f32.mrf.mxu0
        %v5673 = vadd.f32 %v5512, %v5672
        %v5674 = vpop.f32.mrf.mxu0
        %5675 = vmatprep.mubr.bf16.mxu0 0
        %5676 = vmatmul.mubr.bf16.gmra.mxu0 %v4290
        %v5677 = vpop.f32.mrf.mxu0
        %v5678 = vadd.f32 %v5517, %v5677
        %v5679 = vpop.f32.mrf.mxu0
        %v5680 = vpop.f32.mrf.mxu0
        %v5681 = vadd.f32 %v5520, %v5680
        %v5682 = vpop.f32.mrf.mxu0
        %5683 = vmatprep.mubr.bf16.mxu0 0
        %5684 = vmatmul.mubr.bf16.gmra.mxu0 %v4299
        %v5685 = vpop.f32.mrf.mxu0
        %v5686 = vadd.f32 %v5525, %v5685
        %v5687 = vpop.f32.mrf.mxu0
        %v5688 = vpop.f32.mrf.mxu0
        %v5689 = vadd.f32 %v5528, %v5688
        %v5690 = vpop.f32.mrf.mxu0
        %5691 = vmatprep.mubr.bf16.mxu0 0
        %5692 = vmatmul.mubr.bf16.gmra.mxu0 %v4308
        %v5693 = vpop.f32.mrf.mxu0
        %v5694 = vadd.f32 %v5533, %v5693
        %v5695 = vpop.f32.mrf.mxu0
        %v5696 = vpop.f32.mrf.mxu0
        %v5697 = vadd.f32 %v5536, %v5696
        %v5698 = vpop.f32.mrf.mxu0
        %5699 = vmatprep.mubr.bf16.mxu0 0
        %5700 = vmatmul.mubr.bf16.gmra.mxu0 %v4317
        %v5701 = vpop.f32.mrf.mxu0
        %v5702 = vadd.f32 %v5541, %v5701
        %v5703 = vpop.f32.mrf.mxu0
        %v5704 = vpop.f32.mrf.mxu0
        %v5705 = vadd.f32 %v5544, %v5704
        %v5706 = vpop.f32.mrf.mxu0
        %5707 = vmatprep.mubr.bf16.mxu0 0
        %5708 = vmatmul.mubr.bf16.gmra.mxu0 %v4326
        %v5709 = vpop.f32.mrf.mxu0
        %v5710 = vadd.f32 %v5549, %v5709
        %v5711 = vpop.f32.mrf.mxu0
        %v5712 = vpop.f32.mrf.mxu0
        %v5713 = vadd.f32 %v5552, %v5712
        %v5714 = vpop.f32.mrf.mxu0
        %5715 = vmatprep.mubr.bf16.mxu0 0
        %5716 = vmatmul.mubr.bf16.gmra.mxu0 %v4335
        %v5717 = vpop.f32.mrf.mxu0
        %v5718 = vadd.f32 %v5557, %v5717
        %v5719 = vpop.f32.mrf.mxu0
        %v5720 = vpop.f32.mrf.mxu0
        %v5721 = vadd.f32 %v5560, %v5720
        %v5722 = vpop.f32.mrf.mxu0
        %5723 = vmatprep.mubr.bf16.mxu0 0
        %5724 = vmatmul.mubr.bf16.gmra.mxu0 %v4344
        %v5725 = vpop.f32.mrf.mxu0
        %v5726 = vadd.f32 %v5565, %v5725
        %v5727 = vpop.f32.mrf.mxu0
        %v5728 = vpop.f32.mrf.mxu0
        %v5729 = vadd.f32 %v5568, %v5728
        %v5730 = vpop.f32.mrf.mxu0
        %5731 = vmatprep.mubr.bf16.mxu0 0
        %5732 = vmatmul.mubr.bf16.gmra.mxu0 %v4353
        %v5733 = vpop.f32.mrf.mxu0
        %v5734 = vadd.f32 %v5573, %v5733
        %v5735 = vpop.f32.mrf.mxu0
        %v5736 = vpop.f32.mrf.mxu0
        %v5737 = vadd.f32 %v5576, %v5736
        %v5738 = vpop.f32.mrf.mxu0
        %5739 = vmatprep.mubr.bf16.mxu0 0
        %5740 = vmatmul.mubr.bf16.gmra.mxu0 %v4362
        %v5741 = vpop.f32.mrf.mxu0
        %v5742 = vadd.f32 %v5581, %v5741
        %v5743 = vpop.f32.mrf.mxu0
        %v5744 = vpop.f32.mrf.mxu0
        %v5745 = vadd.f32 %v5584, %v5744
        %v5746 = vpop.f32.mrf.mxu0
        %5747 = vmatprep.mubr.bf16.mxu0 0
        %5748 = vmatmul.mubr.bf16.gmra.mxu0 %v4371
        %v5749 = vpop.f32.mrf.mxu0
        %v5750 = vadd.f32 %v5589, %v5749
        %v5751 = vpop.f32.mrf.mxu0
        %v5752 = vpop.f32.mrf.mxu0
        %v5753 = vadd.f32 %v5592, %v5752
        %v5754 = vpop.f32.mrf.mxu0
        %5755 = vmatprep.mubr.bf16.mxu0 0
        %5756 = vmatmul.mubr.bf16.gmra.mxu0 %v4380
        %v5757 = vpop.f32.mrf.mxu0
        %v5758 = vadd.f32 %v5597, %v5757
        %v5759 = vpop.f32.mrf.mxu0
        %v5760 = vpop.f32.mrf.mxu0
        %v5761 = vadd.f32 %v5600, %v5760
        %v5762 = vpop.f32.mrf.mxu0
        %5763 = vmatprep.mubr.bf16.mxu0 0
        %5764 = vmatmul.mubr.bf16.gmra.mxu0 %v4389
        %v5765 = vpop.f32.mrf.mxu0
        %v5766 = vadd.f32 %v5605, %v5765
        %v5767 = vpop.f32.mrf.mxu0
        %v5768 = vpop.f32.mrf.mxu0
        %v5769 = vadd.f32 %v5608, %v5768
        %v5770 = vpop.f32.mrf.mxu0
        %5771 = vmatprep.mubr.bf16.mxu0 0
        %5772 = vmatmul.mubr.bf16.gmra.mxu0 %v4398
        %v5773 = vpop.f32.mrf.mxu0
        %v5774 = vadd.f32 %v5613, %v5773
        %v5775 = vpop.f32.mrf.mxu0
        %v5776 = vpop.f32.mrf.mxu0
        %v5777 = vadd.f32 %v5616, %v5776
        %v5778 = vpop.f32.mrf.mxu0
        %5779 = vdwg.mxu0
        %v5780 = vld [vmem:[%s2] sm:$0x1]
        %v5782 = vlaneseq
        %v5783 = vshrl.u32 %v5782, 7
        %v5784 = vsub.s32 0, %v5783
        %v5785 = vrot.slane %v5780, %v5784
        %v5787 = vmul.f32 %v5654, %v5785
        %v5788 = vmul.f32 %v5657, %v5785
        %v5789 = vmul.f32 %v5662, %v5785
        %v5790 = vmul.f32 %v5665, %v5785
        %v5791 = vmul.f32 %v5670, %v5785
        %v5792 = vmul.f32 %v5673, %v5785
        %v5793 = vmul.f32 %v5678, %v5785
        %v5794 = vmul.f32 %v5681, %v5785
        %v5795 = vmul.f32 %v5686, %v5785
        %v5796 = vmul.f32 %v5689, %v5785
        %v5797 = vmul.f32 %v5694, %v5785
        %v5798 = vmul.f32 %v5697, %v5785
        %v5799 = vmul.f32 %v5702, %v5785
        %v5800 = vmul.f32 %v5705, %v5785
        %v5801 = vmul.f32 %v5710, %v5785
        %v5802 = vmul.f32 %v5713, %v5785
        %v5803 = vmul.f32 %v5718, %v5785
        %v5804 = vmul.f32 %v5721, %v5785
        %v5805 = vmul.f32 %v5726, %v5785
        %v5806 = vmul.f32 %v5729, %v5785
        %v5807 = vmul.f32 %v5734, %v5785
        %v5808 = vmul.f32 %v5737, %v5785
        %v5809 = vmul.f32 %v5742, %v5785
        %v5810 = vmul.f32 %v5745, %v5785
        %v5811 = vmul.f32 %v5750, %v5785
        %v5812 = vmul.f32 %v5753, %v5785
        %v5813 = vmul.f32 %v5758, %v5785
        %v5814 = vmul.f32 %v5761, %v5785
        %v5815 = vmul.f32 %v5766, %v5785
        %v5816 = vmul.f32 %v5769, %v5785
        %v5817 = vmul.f32 %v5774, %v5785
        %v5818 = vmul.f32 %v5777, %v5785
        %v5819 = vld [vmem:[%s3] sm:$0x1]
        %v5821 = vlaneseq
        %v5822 = vshrl.u32 %v5821, 7
        %v5823 = vsub.s32 0, %v5822
        %v5824 = vrot.slane %v5819, %v5823
        %v5826 = vadd.f32 %v5787, %v5824
        %v5827 = vadd.f32 %v5788, %v5824
        %v5828 = vadd.f32 %v5789, %v5824
        %v5829 = vadd.f32 %v5790, %v5824
        %v5830 = vadd.f32 %v5791, %v5824
        %v5831 = vadd.f32 %v5792, %v5824
        %v5832 = vadd.f32 %v5793, %v5824
        %v5833 = vadd.f32 %v5794, %v5824
        %v5834 = vadd.f32 %v5795, %v5824
        %v5835 = vadd.f32 %v5796, %v5824
        %v5836 = vadd.f32 %v5797, %v5824
        %v5837 = vadd.f32 %v5798, %v5824
        %v5838 = vadd.f32 %v5799, %v5824
        %v5839 = vadd.f32 %v5800, %v5824
        %v5840 = vadd.f32 %v5801, %v5824
        %v5841 = vadd.f32 %v5802, %v5824
        %v5842 = vadd.f32 %v5803, %v5824
        %v5843 = vadd.f32 %v5804, %v5824
        %v5844 = vadd.f32 %v5805, %v5824
        %v5845 = vadd.f32 %v5806, %v5824
        %v5846 = vadd.f32 %v5807, %v5824
        %v5847 = vadd.f32 %v5808, %v5824
        %v5848 = vadd.f32 %v5809, %v5824
        %v5849 = vadd.f32 %v5810, %v5824
        %v5850 = vadd.f32 %v5811, %v5824
        %v5851 = vadd.f32 %v5812, %v5824
        %v5852 = vadd.f32 %v5813, %v5824
        %v5853 = vadd.f32 %v5814, %v5824
        %v5854 = vadd.f32 %v5815, %v5824
        %v5855 = vadd.f32 %v5816, %v5824
        %v5856 = vadd.f32 %v5817, %v5824
        %v5857 = vadd.f32 %v5818, %v5824
        %v5858 = vmax.f32 %v5826, 0.0
        %v5859 = vmax.f32 %v5827, 0.0
        %v5860 = vmax.f32 %v5828, 0.0
        %v5861 = vmax.f32 %v5829, 0.0
        %v5862 = vmax.f32 %v5830, 0.0
        %v5863 = vmax.f32 %v5831, 0.0
        %v5864 = vmax.f32 %v5832, 0.0
        %v5865 = vmax.f32 %v5833, 0.0
        %v5866 = vmax.f32 %v5834, 0.0
        %v5867 = vmax.f32 %v5835, 0.0
        %v5868 = vmax.f32 %v5836, 0.0
        %v5869 = vmax.f32 %v5837, 0.0
        %v5870 = vmax.f32 %v5838, 0.0
        %v5871 = vmax.f32 %v5839, 0.0
        %v5872 = vmax.f32 %v5840, 0.0
        %v5873 = vmax.f32 %v5841, 0.0
        %v5874 = vmax.f32 %v5842, 0.0
        %v5875 = vmax.f32 %v5843, 0.0
        %v5876 = vmax.f32 %v5844, 0.0
        %v5877 = vmax.f32 %v5845, 0.0
        %v5878 = vmax.f32 %v5846, 0.0
        %v5879 = vmax.f32 %v5847, 0.0
        %v5880 = vmax.f32 %v5848, 0.0
        %v5881 = vmax.f32 %v5849, 0.0
        %v5882 = vmax.f32 %v5850, 0.0
        %v5883 = vmax.f32 %v5851, 0.0
        %v5884 = vmax.f32 %v5852, 0.0
        %v5885 = vmax.f32 %v5853, 0.0
        %v5886 = vmax.f32 %v5854, 0.0
        %v5887 = vmax.f32 %v5855, 0.0
        %v5888 = vmax.f32 %v5856, 0.0
        %v5889 = vmax.f32 %v5857, 0.0
        %v5890 = vpack.c.bf16 %v5859, %v5858
        %v5891 = vpack.c.bf16 %v5861, %v5860
        %v5892 = vpack.c.bf16 %v5863, %v5862
        %v5893 = vpack.c.bf16 %v5865, %v5864
        %v5894 = vpack.c.bf16 %v5867, %v5866
        %v5895 = vpack.c.bf16 %v5869, %v5868
        %v5896 = vpack.c.bf16 %v5871, %v5870
        %v5897 = vpack.c.bf16 %v5873, %v5872
        %v5898 = vpack.c.bf16 %v5875, %v5874
        %v5899 = vpack.c.bf16 %v5877, %v5876
        %v5900 = vpack.c.bf16 %v5879, %v5878
        %v5901 = vpack.c.bf16 %v5881, %v5880
        %v5902 = vpack.c.bf16 %v5883, %v5882
        %v5903 = vpack.c.bf16 %v5885, %v5884
        %v5904 = vpack.c.bf16 %v5887, %v5886
        %v5905 = vpack.c.bf16 %v5889, %v5888
        %v5922 = vunpack.c.l.b16 %v5890
        %v5923 = vunpack.c.h.b16 %v5890
        %v5924 = vunpack.c.l.b16 %v5891
        %v5925 = vunpack.c.h.b16 %v5891
        %v5926 = vunpack.c.l.b16 %v5892
        %v5927 = vunpack.c.h.b16 %v5892
        %v5928 = vunpack.c.l.b16 %v5893
        %v5929 = vunpack.c.h.b16 %v5893
        %v5930 = vunpack.c.l.b16 %v5894
        %v5931 = vunpack.c.h.b16 %v5894
        %v5932 = vunpack.c.l.b16 %v5895
        %v5933 = vunpack.c.h.b16 %v5895
        %v5934 = vunpack.c.l.b16 %v5896
        %v5935 = vunpack.c.h.b16 %v5896
        %v5936 = vunpack.c.l.b16 %v5897
        %v5937 = vunpack.c.h.b16 %v5897
        %v5938 = vunpack.c.l.b16 %v5898
        %v5939 = vunpack.c.h.b16 %v5898
        %v5940 = vunpack.c.l.b16 %v5899
        %v5941 = vunpack.c.h.b16 %v5899
        %v5942 = vunpack.c.l.b16 %v5900
        %v5943 = vunpack.c.h.b16 %v5900
        %v5944 = vunpack.c.l.b16 %v5901
        %v5945 = vunpack.c.h.b16 %v5901
        %v5946 = vunpack.c.l.b16 %v5902
        %v5947 = vunpack.c.h.b16 %v5902
        %v5948 = vunpack.c.l.b16 %v5903
        %v5949 = vunpack.c.h.b16 %v5903
        %v5950 = vunpack.c.l.b16 %v5904
        %v5951 = vunpack.c.h.b16 %v5904
        %v5952 = vunpack.c.l.b16 %v5905
        %v5953 = vunpack.c.h.b16 %v5905
        %v5954 = vpack.c.b16 %v5922, %v5922
        %v5955 = vpack.c.b16 %v5923, %v5923
        %v5956 = vpack.c.b16 %v5924, %v5924
        %v5957 = vpack.c.b16 %v5925, %v5925
        %v5958 = vpack.c.b16 %v5926, %v5926
        %v5959 = vpack.c.b16 %v5927, %v5927
        %v5960 = vpack.c.b16 %v5928, %v5928
        %v5961 = vpack.c.b16 %v5929, %v5929
        %v5962 = vpack.c.b16 %v5930, %v5930
        %v5963 = vpack.c.b16 %v5931, %v5931
        %v5964 = vpack.c.b16 %v5932, %v5932
        %v5965 = vpack.c.b16 %v5933, %v5933
        %v5966 = vpack.c.b16 %v5934, %v5934
        %v5967 = vpack.c.b16 %v5935, %v5935
        %v5968 = vpack.c.b16 %v5936, %v5936
        %v5969 = vpack.c.b16 %v5937, %v5937
        %v5970 = vpack.c.b16 %v5938, %v5938
        %v5971 = vpack.c.b16 %v5939, %v5939
        %v5972 = vpack.c.b16 %v5940, %v5940
        %v5973 = vpack.c.b16 %v5941, %v5941
        %v5974 = vpack.c.b16 %v5942, %v5942
        %v5975 = vpack.c.b16 %v5943, %v5943
        %v5976 = vpack.c.b16 %v5944, %v5944
        %v5977 = vpack.c.b16 %v5945, %v5945
        %v5978 = vpack.c.b16 %v5946, %v5946
        %v5979 = vpack.c.b16 %v5947, %v5947
        %v5980 = vpack.c.b16 %v5948, %v5948
        %v5981 = vpack.c.b16 %v5949, %v5949
        %v5982 = vpack.c.b16 %v5950, %v5950
        %v5983 = vpack.c.b16 %v5951, %v5951
        %v5984 = vpack.c.b16 %v5952, %v5952
        %v5985 = vpack.c.b16 %v5953, %v5953
        %v5987 = vshrl.u32 %v5954, 16
        %v5989 = vrot.slane %v5987, 7
        %v5990 = vshll.u32 %v5954, 16
        %v5992 = vor.u32 %v5989, %v5990
        %v5993 = vrot.slane %v5989, 4
        %v5995 = vshrl.u32 %v5955, 16
        %v5997 = vrot.slane %v5995, 7
        %v5998 = vshll.u32 %v5955, 16
        %v6000 = vor.u32 %v5997, %v5998
        %v6001 = vsel %vm564, %v5993, %v6000
        %v6002 = vrot.slane %v5997, 4
        %v6004 = vshrl.u32 %v5956, 16
        %v6006 = vrot.slane %v6004, 7
        %v6007 = vshll.u32 %v5956, 16
        %v6009 = vor.u32 %v6006, %v6007
        %v6010 = vrot.slane %v6006, 4
        %v6012 = vshrl.u32 %v5957, 16
        %v6014 = vrot.slane %v6012, 7
        %v6015 = vshll.u32 %v5957, 16
        %v6017 = vor.u32 %v6014, %v6015
        %v6018 = vsel %vm564, %v6010, %v6017
        %v6019 = vrot.slane %v6014, 4
        %v6021 = vshrl.u32 %v5958, 16
        %v6023 = vrot.slane %v6021, 7
        %v6024 = vshll.u32 %v5958, 16
        %v6026 = vor.u32 %v6023, %v6024
        %v6027 = vrot.slane %v6023, 4
        %v6029 = vshrl.u32 %v5959, 16
        %v6031 = vrot.slane %v6029, 7
        %v6032 = vshll.u32 %v5959, 16
        %v6034 = vor.u32 %v6031, %v6032
        %v6035 = vsel %vm564, %v6027, %v6034
        %v6036 = vrot.slane %v6031, 4
        %v6038 = vshrl.u32 %v5960, 16
        %v6040 = vrot.slane %v6038, 7
        %v6041 = vshll.u32 %v5960, 16
        %v6043 = vor.u32 %v6040, %v6041
        %v6044 = vrot.slane %v6040, 4
        %v6046 = vshrl.u32 %v5961, 16
        %v6048 = vrot.slane %v6046, 7
        %v6049 = vshll.u32 %v5961, 16
        %v6051 = vor.u32 %v6048, %v6049
        %v6052 = vsel %vm564, %v6044, %v6051
        %v6053 = vrot.slane %v6048, 4
        %v6055 = vshrl.u32 %v5962, 16
        %v6057 = vrot.slane %v6055, 7
        %v6058 = vshll.u32 %v5962, 16
        %v6060 = vor.u32 %v6057, %v6058
        %v6061 = vrot.slane %v6057, 4
        %v6063 = vshrl.u32 %v5963, 16
        %v6065 = vrot.slane %v6063, 7
        %v6066 = vshll.u32 %v5963, 16
        %v6068 = vor.u32 %v6065, %v6066
        %v6069 = vsel %vm564, %v6061, %v6068
        %v6070 = vrot.slane %v6065, 4
        %v6072 = vshrl.u32 %v5964, 16
        %v6074 = vrot.slane %v6072, 7
        %v6075 = vshll.u32 %v5964, 16
        %v6077 = vor.u32 %v6074, %v6075
        %v6078 = vrot.slane %v6074, 4
        %v6080 = vshrl.u32 %v5965, 16
        %v6082 = vrot.slane %v6080, 7
        %v6083 = vshll.u32 %v5965, 16
        %v6085 = vor.u32 %v6082, %v6083
        %v6086 = vsel %vm564, %v6078, %v6085
        %v6087 = vrot.slane %v6082, 4
        %v6089 = vshrl.u32 %v5966, 16
        %v6091 = vrot.slane %v6089, 7
        %v6092 = vshll.u32 %v5966, 16
        %v6094 = vor.u32 %v6091, %v6092
        %v6095 = vrot.slane %v6091, 4
        %v6097 = vshrl.u32 %v5967, 16
        %v6099 = vrot.slane %v6097, 7
        %v6100 = vshll.u32 %v5967, 16
        %v6102 = vor.u32 %v6099, %v6100
        %v6103 = vsel %vm564, %v6095, %v6102
        %v6104 = vrot.slane %v6099, 4
        %v6106 = vshrl.u32 %v5968, 16
        %v6108 = vrot.slane %v6106, 7
        %v6109 = vshll.u32 %v5968, 16
        %v6111 = vor.u32 %v6108, %v6109
        %v6112 = vrot.slane %v6108, 4
        %v6114 = vshrl.u32 %v5969, 16
        %v6116 = vrot.slane %v6114, 7
        %v6117 = vshll.u32 %v5969, 16
        %v6119 = vor.u32 %v6116, %v6117
        %v6120 = vsel %vm564, %v6112, %v6119
        %v6121 = vrot.slane %v6116, 4
        %v6123 = vshrl.u32 %v5970, 16
        %v6125 = vrot.slane %v6123, 7
        %v6126 = vshll.u32 %v5970, 16
        %v6128 = vor.u32 %v6125, %v6126
        %v6129 = vrot.slane %v6125, 4
        %v6131 = vshrl.u32 %v5971, 16
        %v6133 = vrot.slane %v6131, 7
        %v6134 = vshll.u32 %v5971, 16
        %v6136 = vor.u32 %v6133, %v6134
        %v6137 = vsel %vm564, %v6129, %v6136
        %v6138 = vrot.slane %v6133, 4
        %v6140 = vshrl.u32 %v5972, 16
        %v6142 = vrot.slane %v6140, 7
        %v6143 = vshll.u32 %v5972, 16
        %v6145 = vor.u32 %v6142, %v6143
        %v6146 = vrot.slane %v6142, 4
        %v6148 = vshrl.u32 %v5973, 16
        %v6150 = vrot.slane %v6148, 7
        %v6151 = vshll.u32 %v5973, 16
        %v6153 = vor.u32 %v6150, %v6151
        %v6154 = vsel %vm564, %v6146, %v6153
        %v6155 = vrot.slane %v6150, 4
        %v6157 = vshrl.u32 %v5974, 16
        %v6159 = vrot.slane %v6157, 7
        %v6160 = vshll.u32 %v5974, 16
        %v6162 = vor.u32 %v6159, %v6160
        %v6163 = vrot.slane %v6159, 4
        %v6165 = vshrl.u32 %v5975, 16
        %v6167 = vrot.slane %v6165, 7
        %v6168 = vshll.u32 %v5975, 16
        %v6170 = vor.u32 %v6167, %v6168
        %v6171 = vsel %vm564, %v6163, %v6170
        %v6172 = vrot.slane %v6167, 4
        %v6174 = vshrl.u32 %v5976, 16
        %v6176 = vrot.slane %v6174, 7
        %v6177 = vshll.u32 %v5976, 16
        %v6179 = vor.u32 %v6176, %v6177
        %v6180 = vrot.slane %v6176, 4
        %v6182 = vshrl.u32 %v5977, 16
        %v6184 = vrot.slane %v6182, 7
        %v6185 = vshll.u32 %v5977, 16
        %v6187 = vor.u32 %v6184, %v6185
        %v6188 = vsel %vm564, %v6180, %v6187
        %v6189 = vrot.slane %v6184, 4
        %v6191 = vshrl.u32 %v5978, 16
        %v6193 = vrot.slane %v6191, 7
        %v6194 = vshll.u32 %v5978, 16
        %v6196 = vor.u32 %v6193, %v6194
        %v6197 = vrot.slane %v6193, 4
        %v6199 = vshrl.u32 %v5979, 16
        %v6201 = vrot.slane %v6199, 7
        %v6202 = vshll.u32 %v5979, 16
        %v6204 = vor.u32 %v6201, %v6202
        %v6205 = vsel %vm564, %v6197, %v6204
        %v6206 = vrot.slane %v6201, 4
        %v6208 = vshrl.u32 %v5980, 16
        %v6210 = vrot.slane %v6208, 7
        %v6211 = vshll.u32 %v5980, 16
        %v6213 = vor.u32 %v6210, %v6211
        %v6214 = vrot.slane %v6210, 4
        %v6216 = vshrl.u32 %v5981, 16
        %v6218 = vrot.slane %v6216, 7
        %v6219 = vshll.u32 %v5981, 16
        %v6221 = vor.u32 %v6218, %v6219
        %v6222 = vsel %vm564, %v6214, %v6221
        %v6223 = vrot.slane %v6218, 4
        %v6225 = vshrl.u32 %v5982, 16
        %v6227 = vrot.slane %v6225, 7
        %v6228 = vshll.u32 %v5982, 16
        %v6230 = vor.u32 %v6227, %v6228
        %v6231 = vrot.slane %v6227, 4
        %v6233 = vshrl.u32 %v5983, 16
        %v6235 = vrot.slane %v6233, 7
        %v6236 = vshll.u32 %v5983, 16
        %v6238 = vor.u32 %v6235, %v6236
        %v6239 = vsel %vm564, %v6231, %v6238
        %v6240 = vrot.slane %v6235, 4
        %v6242 = vshrl.u32 %v5984, 16
        %v6244 = vrot.slane %v6242, 7
        %v6245 = vshll.u32 %v5984, 16
        %v6247 = vor.u32 %v6244, %v6245
        %v6248 = vrot.slane %v6244, 4
        %v6250 = vshrl.u32 %v5985, 16
        %v6252 = vrot.slane %v6250, 7
        %v6253 = vshll.u32 %v5985, 16
        %v6255 = vor.u32 %v6252, %v6253
        %v6256 = vsel %vm564, %v6248, %v6255
        %v6257 = vrot.slane %v6252, 4
        %v6306 = vld [vmem:[%s885] sm:$0xf]
        %v6307 = vsel %vm887, %v5992, %v6306
        %6308 = vst [vmem:[%s885] sm:$0xf] %v6307
        %6309 = vst [vmem:[%s885 + $0x4] sm:$0xf] %v6001
        %v6310 = vld [vmem:[%s885 + $0x8] sm:$0x1]
        %v6311 = vsel %vm324, %v6002, %v6310
        %6312 = vst [vmem:[%s885 + $0x8] sm:$0x1] %v6311
        %v6313 = vld [vmem:[%s885 + $0xc] sm:$0xf]
        %v6314 = vsel %vm887, %v6009, %v6313
        %6315 = vst [vmem:[%s885 + $0xc] sm:$0xf] %v6314
        %6316 = vst [vmem:[%s885 + $0x10] sm:$0xf] %v6018
        %v6317 = vld [vmem:[%s885 + $0x14] sm:$0x1]
        %v6318 = vsel %vm324, %v6019, %v6317
        %6319 = vst [vmem:[%s885 + $0x14] sm:$0x1] %v6318
        %v6320 = vld [vmem:[%s885 + $0x18] sm:$0xf]
        %v6321 = vsel %vm887, %v6026, %v6320
        %6322 = vst [vmem:[%s885 + $0x18] sm:$0xf] %v6321
        %6323 = vst [vmem:[%s885 + $0x1c] sm:$0xf] %v6035
        %v6324 = vld [vmem:[%s885 + $0x20] sm:$0x1]
        %v6325 = vsel %vm324, %v6036, %v6324
        %6326 = vst [vmem:[%s885 + $0x20] sm:$0x1] %v6325
        %v6327 = vld [vmem:[%s885 + $0x24] sm:$0xf]
        %v6328 = vsel %vm887, %v6043, %v6327
        %6329 = vst [vmem:[%s885 + $0x24] sm:$0xf] %v6328
        %6330 = vst [vmem:[%s885 + $0x28] sm:$0xf] %v6052
        %v6331 = vld [vmem:[%s885 + $0x2c] sm:$0x1]
        %v6332 = vsel %vm324, %v6053, %v6331
        %6333 = vst [vmem:[%s885 + $0x2c] sm:$0x1] %v6332
        %v6334 = vld [vmem:[%s885 + $0x30] sm:$0xf]
        %v6335 = vsel %vm887, %v6060, %v6334
        %6336 = vst [vmem:[%s885 + $0x30] sm:$0xf] %v6335
        %6337 = vst [vmem:[%s885 + $0x34] sm:$0xf] %v6069
        %v6338 = vld [vmem:[%s885 + $0x38] sm:$0x1]
        %v6339 = vsel %vm324, %v6070, %v6338
        %6340 = vst [vmem:[%s885 + $0x38] sm:$0x1] %v6339
        %v6341 = vld [vmem:[%s885 + $0x3c] sm:$0xf]
        %v6342 = vsel %vm887, %v6077, %v6341
        %6343 = vst [vmem:[%s885 + $0x3c] sm:$0xf] %v6342
        %6344 = vst [vmem:[%s885 + $0x40] sm:$0xf] %v6086
        %v6345 = vld [vmem:[%s885 + $0x44] sm:$0x1]
        %v6346 = vsel %vm324, %v6087, %v6345
        %6347 = vst [vmem:[%s885 + $0x44] sm:$0x1] %v6346
        %v6348 = vld [vmem:[%s885 + $0x48] sm:$0xf]
        %v6349 = vsel %vm887, %v6094, %v6348
        %6350 = vst [vmem:[%s885 + $0x48] sm:$0xf] %v6349
        %6351 = vst [vmem:[%s885 + $0x4c] sm:$0xf] %v6103
        %v6352 = vld [vmem:[%s885 + $0x50] sm:$0x1]
        %v6353 = vsel %vm324, %v6104, %v6352
        %6354 = vst [vmem:[%s885 + $0x50] sm:$0x1] %v6353
        %v6355 = vld [vmem:[%s885 + $0x54] sm:$0xf]
        %v6356 = vsel %vm887, %v6111, %v6355
        %6357 = vst [vmem:[%s885 + $0x54] sm:$0xf] %v6356
        %6358 = vst [vmem:[%s885 + $0x58] sm:$0xf] %v6120
        %v6359 = vld [vmem:[%s885 + $0x5c] sm:$0x1]
        %v6360 = vsel %vm324, %v6121, %v6359
        %6361 = vst [vmem:[%s885 + $0x5c] sm:$0x1] %v6360
        %v6362 = vld [vmem:[%s885 + $0x60] sm:$0xf]
        %v6363 = vsel %vm887, %v6128, %v6362
        %6364 = vst [vmem:[%s885 + $0x60] sm:$0xf] %v6363
        %6365 = vst [vmem:[%s885 + $0x64] sm:$0xf] %v6137
        %v6366 = vld [vmem:[%s885 + $0x68] sm:$0x1]
        %v6367 = vsel %vm324, %v6138, %v6366
        %6368 = vst [vmem:[%s885 + $0x68] sm:$0x1] %v6367
        %v6369 = vld [vmem:[%s885 + $0x6c] sm:$0xf]
        %v6370 = vsel %vm887, %v6145, %v6369
        %6371 = vst [vmem:[%s885 + $0x6c] sm:$0xf] %v6370
        %6372 = vst [vmem:[%s885 + $0x70] sm:$0xf] %v6154
        %v6373 = vld [vmem:[%s885 + $0x74] sm:$0x1]
        %v6374 = vsel %vm324, %v6155, %v6373
        %6375 = vst [vmem:[%s885 + $0x74] sm:$0x1] %v6374
        %v6376 = vld [vmem:[%s885 + $0x78] sm:$0xf]
        %v6377 = vsel %vm887, %v6162, %v6376
        %6378 = vst [vmem:[%s885 + $0x78] sm:$0xf] %v6377
        %6379 = vst [vmem:[%s885 + $0x7c] sm:$0xf] %v6171
        %v6380 = vld [vmem:[%s885 + $0x80] sm:$0x1]
        %v6381 = vsel %vm324, %v6172, %v6380
        %6382 = vst [vmem:[%s885 + $0x80] sm:$0x1] %v6381
        %v6383 = vld [vmem:[%s885 + $0x84] sm:$0xf]
        %v6384 = vsel %vm887, %v6179, %v6383
        %6385 = vst [vmem:[%s885 + $0x84] sm:$0xf] %v6384
        %6386 = vst [vmem:[%s885 + $0x88] sm:$0xf] %v6188
        %v6387 = vld [vmem:[%s885 + $0x8c] sm:$0x1]
        %v6388 = vsel %vm324, %v6189, %v6387
        %6389 = vst [vmem:[%s885 + $0x8c] sm:$0x1] %v6388
        %v6390 = vld [vmem:[%s885 + $0x90] sm:$0xf]
        %v6391 = vsel %vm887, %v6196, %v6390
        %6392 = vst [vmem:[%s885 + $0x90] sm:$0xf] %v6391
        %6393 = vst [vmem:[%s885 + $0x94] sm:$0xf] %v6205
        %v6394 = vld [vmem:[%s885 + $0x98] sm:$0x1]
        %v6395 = vsel %vm324, %v6206, %v6394
        %6396 = vst [vmem:[%s885 + $0x98] sm:$0x1] %v6395
        %v6397 = vld [vmem:[%s885 + $0x9c] sm:$0xf]
        %v6398 = vsel %vm887, %v6213, %v6397
        %6399 = vst [vmem:[%s885 + $0x9c] sm:$0xf] %v6398
        %6400 = vst [vmem:[%s885 + $0xa0] sm:$0xf] %v6222
        %v6401 = vld [vmem:[%s885 + $0xa4] sm:$0x1]
        %v6402 = vsel %vm324, %v6223, %v6401
        %6403 = vst [vmem:[%s885 + $0xa4] sm:$0x1] %v6402
        %v6404 = vld [vmem:[%s885 + $0xa8] sm:$0xf]
        %v6405 = vsel %vm887, %v6230, %v6404
        %6406 = vst [vmem:[%s885 + $0xa8] sm:$0xf] %v6405
        %6407 = vst [vmem:[%s885 + $0xac] sm:$0xf] %v6239
        %v6408 = vld [vmem:[%s885 + $0xb0] sm:$0x1]
        %v6409 = vsel %vm324, %v6240, %v6408
        %6410 = vst [vmem:[%s885 + $0xb0] sm:$0x1] %v6409
        %v6411 = vld [vmem:[%s885 + $0xb4] sm:$0xf]
        %v6412 = vsel %vm887, %v6247, %v6411
        %6413 = vst [vmem:[%s885 + $0xb4] sm:$0xf] %v6412
        %6414 = vst [vmem:[%s885 + $0xb8] sm:$0xf] %v6256
        %v6415 = vld [vmem:[%s885 + $0xbc] sm:$0x1]
        %v6416 = vsel %vm324, %v6257, %v6415
        %6417 = vst [vmem:[%s885 + $0xbc] sm:$0x1] %v6416
        %v6418 = vld [vmem:[#allocation2] sm:$0xf]
        %v6419 = vld [vmem:[#allocation2 + $0x4] sm:$0xf]
        %v6420 = vld [vmem:[#allocation2 + $0xc] sm:$0xf]
        %v6421 = vld [vmem:[#allocation2 + $0x10] sm:$0xf]
        %v6422 = vld [vmem:[#allocation2 + $0x18] sm:$0xf]
        %v6423 = vld [vmem:[#allocation2 + $0x1c] sm:$0xf]
        %v6424 = vld [vmem:[#allocation2 + $0x24] sm:$0xf]
        %v6425 = vld [vmem:[#allocation2 + $0x28] sm:$0xf]
        %v6426 = vld [vmem:[#allocation2 + $0x30] sm:$0xf]
        %v6427 = vld [vmem:[#allocation2 + $0x34] sm:$0xf]
        %v6428 = vld [vmem:[#allocation2 + $0x3c] sm:$0xf]
        %v6429 = vld [vmem:[#allocation2 + $0x40] sm:$0xf]
        %v6430 = vld [vmem:[#allocation2 + $0x48] sm:$0xf]
        %v6431 = vld [vmem:[#allocation2 + $0x4c] sm:$0xf]
        %v6432 = vld [vmem:[#allocation2 + $0x54] sm:$0xf]
        %v6433 = vld [vmem:[#allocation2 + $0x58] sm:$0xf]
        %v6434 = vld [vmem:[#allocation2 + $0x60] sm:$0xf]
        %v6435 = vld [vmem:[#allocation2 + $0x64] sm:$0xf]
        %v6436 = vld [vmem:[#allocation2 + $0x6c] sm:$0xf]
        %v6437 = vld [vmem:[#allocation2 + $0x70] sm:$0xf]
        %v6438 = vld [vmem:[#allocation2 + $0x78] sm:$0xf]
        %v6439 = vld [vmem:[#allocation2 + $0x7c] sm:$0xf]
        %v6440 = vld [vmem:[#allocation2 + $0x84] sm:$0xf]
        %v6441 = vld [vmem:[#allocation2 + $0x88] sm:$0xf]
        %v6442 = vld [vmem:[#allocation2 + $0x90] sm:$0xf]
        %v6443 = vld [vmem:[#allocation2 + $0x94] sm:$0xf]
        %v6444 = vld [vmem:[#allocation2 + $0x9c] sm:$0xf]
        %v6445 = vld [vmem:[#allocation2 + $0xa0] sm:$0xf]
        %v6446 = vld [vmem:[#allocation2 + $0xa8] sm:$0xf]
        %v6447 = vld [vmem:[#allocation2 + $0xac] sm:$0xf]
        %v6448 = vld [vmem:[#allocation2 + $0xb4] sm:$0xf]
        %v6449 = vld [vmem:[#allocation2 + $0xb8] sm:$0xf]
        %6450 = vst [vmem:[#allocation3] sm:$0xf] %v6418
        %6451 = vst [vmem:[#allocation3 + $0x24] sm:$0xf] %v6419
        %6452 = vst [vmem:[#allocation3 + $0x48] sm:$0xf] %v6420
        %6453 = vst [vmem:[#allocation3 + $0x6c] sm:$0xf] %v6421
        %6454 = vst [vmem:[#allocation3 + $0x90] sm:$0xf] %v6422
        %6455 = vst [vmem:[#allocation3 + $0xb4] sm:$0xf] %v6423
        %6456 = vst [vmem:[#allocation3 + $0xd8] sm:$0xf] %v6424
        %6457 = vst [vmem:[#allocation3 + $0xfc] sm:$0xf] %v6425
        %6458 = vst [vmem:[#allocation3 + $0x120] sm:$0xf] %v6426
        %6459 = vst [vmem:[#allocation3 + $0x144] sm:$0xf] %v6427
        %6460 = vst [vmem:[#allocation3 + $0x168] sm:$0xf] %v6428
        %6461 = vst [vmem:[#allocation3 + $0x18c] sm:$0xf] %v6429
        %6462 = vst [vmem:[#allocation3 + $0x1b0] sm:$0xf] %v6430
        %6463 = vst [vmem:[#allocation3 + $0x1d4] sm:$0xf] %v6431
        %6464 = vst [vmem:[#allocation3 + $0x1f8] sm:$0xf] %v6432
        %6465 = vst [vmem:[#allocation3 + $0x21c] sm:$0xf] %v6433
        %6466 = vst [vmem:[#allocation3 + $0x240] sm:$0xf] %v6434
        %6467 = vst [vmem:[#allocation3 + $0x264] sm:$0xf] %v6435
        %6468 = vst [vmem:[#allocation3 + $0x288] sm:$0xf] %v6436
        %6469 = vst [vmem:[#allocation3 + $0x2ac] sm:$0xf] %v6437
        %6470 = vst [vmem:[#allocation3 + $0x2d0] sm:$0xf] %v6438
        %6471 = vst [vmem:[#allocation3 + $0x2f4] sm:$0xf] %v6439
        %6472 = vst [vmem:[#allocation3 + $0x318] sm:$0xf] %v6440
        %6473 = vst [vmem:[#allocation3 + $0x33c] sm:$0xf] %v6441
        %6474 = vst [vmem:[#allocation3 + $0x360] sm:$0xf] %v6442
        %6475 = vst [vmem:[#allocation3 + $0x384] sm:$0xf] %v6443
        %6476 = vst [vmem:[#allocation3 + $0x3a8] sm:$0xf] %v6444
        %6477 = vst [vmem:[#allocation3 + $0x3cc] sm:$0xf] %v6445
        %6478 = vst [vmem:[#allocation3 + $0x3f0] sm:$0xf] %v6446
        %6479 = vst [vmem:[#allocation3 + $0x414] sm:$0xf] %v6447
        %6480 = vst [vmem:[#allocation3 + $0x438] sm:$0xf] %v6448
        %6481 = vst [vmem:[#allocation3 + $0x45c] sm:$0xf] %v6449
        %v6482 = vld [vmem:[#allocation2] sm:$0xf]
        %v6483 = vld [vmem:[#allocation2 + $0x4] sm:$0xf]
        %v6484 = vld [vmem:[#allocation2 + $0x8] sm:$0x1]
        %v6485 = vld [vmem:[#allocation2 + $0xc] sm:$0xf]
        %v6486 = vld [vmem:[#allocation2 + $0x10] sm:$0xf]
        %v6487 = vld [vmem:[#allocation2 + $0x14] sm:$0x1]
        %v6488 = vld [vmem:[#allocation2 + $0x18] sm:$0xf]
        %v6489 = vld [vmem:[#allocation2 + $0x1c] sm:$0xf]
        %v6490 = vld [vmem:[#allocation2 + $0x20] sm:$0x1]
        %v6491 = vld [vmem:[#allocation2 + $0x24] sm:$0xf]
        %v6492 = vld [vmem:[#allocation2 + $0x28] sm:$0xf]
        %v6493 = vld [vmem:[#allocation2 + $0x2c] sm:$0x1]
        %v6494 = vld [vmem:[#allocation2 + $0x30] sm:$0xf]
        %v6495 = vld [vmem:[#allocation2 + $0x34] sm:$0xf]
        %v6496 = vld [vmem:[#allocation2 + $0x38] sm:$0x1]
        %v6497 = vld [vmem:[#allocation2 + $0x3c] sm:$0xf]
        %v6498 = vld [vmem:[#allocation2 + $0x40] sm:$0xf]
        %v6499 = vld [vmem:[#allocation2 + $0x44] sm:$0x1]
        %v6500 = vld [vmem:[#allocation2 + $0x48] sm:$0xf]
        %v6501 = vld [vmem:[#allocation2 + $0x4c] sm:$0xf]
        %v6502 = vld [vmem:[#allocation2 + $0x50] sm:$0x1]
        %v6503 = vld [vmem:[#allocation2 + $0x54] sm:$0xf]
        %v6504 = vld [vmem:[#allocation2 + $0x58] sm:$0xf]
        %v6505 = vld [vmem:[#allocation2 + $0x5c] sm:$0x1]
        %v6506 = vld [vmem:[#allocation2 + $0x60] sm:$0xf]
        %v6507 = vld [vmem:[#allocation2 + $0x64] sm:$0xf]
        %v6508 = vld [vmem:[#allocation2 + $0x68] sm:$0x1]
        %v6509 = vld [vmem:[#allocation2 + $0x6c] sm:$0xf]
        %v6510 = vld [vmem:[#allocation2 + $0x70] sm:$0xf]
        %v6511 = vld [vmem:[#allocation2 + $0x74] sm:$0x1]
        %v6512 = vld [vmem:[#allocation2 + $0x78] sm:$0xf]
        %v6513 = vld [vmem:[#allocation2 + $0x7c] sm:$0xf]
        %v6514 = vld [vmem:[#allocation2 + $0x80] sm:$0x1]
        %v6515 = vld [vmem:[#allocation2 + $0x84] sm:$0xf]
        %v6516 = vld [vmem:[#allocation2 + $0x88] sm:$0xf]
        %v6517 = vld [vmem:[#allocation2 + $0x8c] sm:$0x1]
        %v6518 = vld [vmem:[#allocation2 + $0x90] sm:$0xf]
        %v6519 = vld [vmem:[#allocation2 + $0x94] sm:$0xf]
        %v6520 = vld [vmem:[#allocation2 + $0x98] sm:$0x1]
        %v6521 = vld [vmem:[#allocation2 + $0x9c] sm:$0xf]
        %v6522 = vld [vmem:[#allocation2 + $0xa0] sm:$0xf]
        %v6523 = vld [vmem:[#allocation2 + $0xa4] sm:$0x1]
        %v6524 = vld [vmem:[#allocation2 + $0xa8] sm:$0xf]
        %v6525 = vld [vmem:[#allocation2 + $0xac] sm:$0xf]
        %v6526 = vld [vmem:[#allocation2 + $0xb0] sm:$0x1]
        %v6527 = vld [vmem:[#allocation2 + $0xb4] sm:$0xf]
        %v6528 = vld [vmem:[#allocation2 + $0xb8] sm:$0xf]
        %v6529 = vld [vmem:[#allocation2 + $0xbc] sm:$0x1]
        %v6531 = vshrl.u32 %v6482, 16
        %v6533 = vrot.slane %v6531, 4
        %v6534 = vshll.u32 %v6482, 16
        %v6536 = vrot.slane %v6534, 5
        %v6537 = vor.u32 %v6533, %v6536
        %v6538 = vrot.slane %v6537, 4
        %v6540 = vshll.u32 %v6483, 16
        %v6542 = vrot.slane %v6540, 5
        %v6543 = vsel %vm1114, %v6538, %v6542
        %v6544 = vshrl.u32 %v6483, 16
        %v6546 = vrot.slane %v6544, 4
        %v6547 = vor.u32 %v6546, %v6542
        %v6548 = vrot.slane %v6547, 4
        %v6550 = vshll.u32 %v6484, 16
        %v6552 = vrot.slane %v6550, 5
        %v6553 = vsel %vm1114, %v6548, %v6552
        %v6555 = vshrl.u32 %v6485, 16
        %v6557 = vrot.slane %v6555, 4
        %v6558 = vshll.u32 %v6485, 16
        %v6560 = vrot.slane %v6558, 5
        %v6561 = vor.u32 %v6557, %v6560
        %v6562 = vrot.slane %v6561, 4
        %v6564 = vshll.u32 %v6486, 16
        %v6566 = vrot.slane %v6564, 5
        %v6567 = vsel %vm1114, %v6562, %v6566
        %v6568 = vshrl.u32 %v6486, 16
        %v6570 = vrot.slane %v6568, 4
        %v6571 = vor.u32 %v6570, %v6566
        %v6572 = vrot.slane %v6571, 4
        %v6574 = vshll.u32 %v6487, 16
        %v6576 = vrot.slane %v6574, 5
        %v6577 = vsel %vm1114, %v6572, %v6576
        %v6579 = vshrl.u32 %v6488, 16
        %v6581 = vrot.slane %v6579, 4
        %v6582 = vshll.u32 %v6488, 16
        %v6584 = vrot.slane %v6582, 5
        %v6585 = vor.u32 %v6581, %v6584
        %v6586 = vrot.slane %v6585, 4
        %v6588 = vshll.u32 %v6489, 16
        %v6590 = vrot.slane %v6588, 5
        %v6591 = vsel %vm1114, %v6586, %v6590
        %v6592 = vshrl.u32 %v6489, 16
        %v6594 = vrot.slane %v6592, 4
        %v6595 = vor.u32 %v6594, %v6590
        %v6596 = vrot.slane %v6595, 4
        %v6598 = vshll.u32 %v6490, 16
        %v6600 = vrot.slane %v6598, 5
        %v6601 = vsel %vm1114, %v6596, %v6600
        %v6603 = vshrl.u32 %v6491, 16
        %v6605 = vrot.slane %v6603, 4
        %v6606 = vshll.u32 %v6491, 16
        %v6608 = vrot.slane %v6606, 5
        %v6609 = vor.u32 %v6605, %v6608
        %v6610 = vrot.slane %v6609, 4
        %v6612 = vshll.u32 %v6492, 16
        %v6614 = vrot.slane %v6612, 5
        %v6615 = vsel %vm1114, %v6610, %v6614
        %v6616 = vshrl.u32 %v6492, 16
        %v6618 = vrot.slane %v6616, 4
        %v6619 = vor.u32 %v6618, %v6614
        %v6620 = vrot.slane %v6619, 4
        %v6622 = vshll.u32 %v6493, 16
        %v6624 = vrot.slane %v6622, 5
        %v6625 = vsel %vm1114, %v6620, %v6624
        %v6627 = vshrl.u32 %v6494, 16
        %v6629 = vrot.slane %v6627, 4
        %v6630 = vshll.u32 %v6494, 16
        %v6632 = vrot.slane %v6630, 5
        %v6633 = vor.u32 %v6629, %v6632
        %v6634 = vrot.slane %v6633, 4
        %v6636 = vshll.u32 %v6495, 16
        %v6638 = vrot.slane %v6636, 5
        %v6639 = vsel %vm1114, %v6634, %v6638
        %v6640 = vshrl.u32 %v6495, 16
        %v6642 = vrot.slane %v6640, 4
        %v6643 = vor.u32 %v6642, %v6638
        %v6644 = vrot.slane %v6643, 4
        %v6646 = vshll.u32 %v6496, 16
        %v6648 = vrot.slane %v6646, 5
        %v6649 = vsel %vm1114, %v6644, %v6648
        %v6651 = vshrl.u32 %v6497, 16
        %v6653 = vrot.slane %v6651, 4
        %v6654 = vshll.u32 %v6497, 16
        %v6656 = vrot.slane %v6654, 5
        %v6657 = vor.u32 %v6653, %v6656
        %v6658 = vrot.slane %v6657, 4
        %v6660 = vshll.u32 %v6498, 16
        %v6662 = vrot.slane %v6660, 5
        %v6663 = vsel %vm1114, %v6658, %v6662
        %v6664 = vshrl.u32 %v6498, 16
        %v6666 = vrot.slane %v6664, 4
        %v6667 = vor.u32 %v6666, %v6662
        %v6668 = vrot.slane %v6667, 4
        %v6670 = vshll.u32 %v6499, 16
        %v6672 = vrot.slane %v6670, 5
        %v6673 = vsel %vm1114, %v6668, %v6672
        %v6675 = vshrl.u32 %v6500, 16
        %v6677 = vrot.slane %v6675, 4
        %v6678 = vshll.u32 %v6500, 16
        %v6680 = vrot.slane %v6678, 5
        %v6681 = vor.u32 %v6677, %v6680
        %v6682 = vrot.slane %v6681, 4
        %v6684 = vshll.u32 %v6501, 16
        %v6686 = vrot.slane %v6684, 5
        %v6687 = vsel %vm1114, %v6682, %v6686
        %v6688 = vshrl.u32 %v6501, 16
        %v6690 = vrot.slane %v6688, 4
        %v6691 = vor.u32 %v6690, %v6686
        %v6692 = vrot.slane %v6691, 4
        %v6694 = vshll.u32 %v6502, 16
        %v6696 = vrot.slane %v6694, 5
        %v6697 = vsel %vm1114, %v6692, %v6696
        %v6699 = vshrl.u32 %v6503, 16
        %v6701 = vrot.slane %v6699, 4
        %v6702 = vshll.u32 %v6503, 16
        %v6704 = vrot.slane %v6702, 5
        %v6705 = vor.u32 %v6701, %v6704
        %v6706 = vrot.slane %v6705, 4
        %v6708 = vshll.u32 %v6504, 16
        %v6710 = vrot.slane %v6708, 5
        %v6711 = vsel %vm1114, %v6706, %v6710
        %v6712 = vshrl.u32 %v6504, 16
        %v6714 = vrot.slane %v6712, 4
        %v6715 = vor.u32 %v6714, %v6710
        %v6716 = vrot.slane %v6715, 4
        %v6718 = vshll.u32 %v6505, 16
        %v6720 = vrot.slane %v6718, 5
        %v6721 = vsel %vm1114, %v6716, %v6720
        %v6723 = vshrl.u32 %v6506, 16
        %v6725 = vrot.slane %v6723, 4
        %v6726 = vshll.u32 %v6506, 16
        %v6728 = vrot.slane %v6726, 5
        %v6729 = vor.u32 %v6725, %v6728
        %v6730 = vrot.slane %v6729, 4
        %v6732 = vshll.u32 %v6507, 16
        %v6734 = vrot.slane %v6732, 5
        %v6735 = vsel %vm1114, %v6730, %v6734
        %v6736 = vshrl.u32 %v6507, 16
        %v6738 = vrot.slane %v6736, 4
        %v6739 = vor.u32 %v6738, %v6734
        %v6740 = vrot.slane %v6739, 4
        %v6742 = vshll.u32 %v6508, 16
        %v6744 = vrot.slane %v6742, 5
        %v6745 = vsel %vm1114, %v6740, %v6744
        %v6747 = vshrl.u32 %v6509, 16
        %v6749 = vrot.slane %v6747, 4
        %v6750 = vshll.u32 %v6509, 16
        %v6752 = vrot.slane %v6750, 5
        %v6753 = vor.u32 %v6749, %v6752
        %v6754 = vrot.slane %v6753, 4
        %v6756 = vshll.u32 %v6510, 16
        %v6758 = vrot.slane %v6756, 5
        %v6759 = vsel %vm1114, %v6754, %v6758
        %v6760 = vshrl.u32 %v6510, 16
        %v6762 = vrot.slane %v6760, 4
        %v6763 = vor.u32 %v6762, %v6758
        %v6764 = vrot.slane %v6763, 4
        %v6766 = vshll.u32 %v6511, 16
        %v6768 = vrot.slane %v6766, 5
        %v6769 = vsel %vm1114, %v6764, %v6768
        %v6771 = vshrl.u32 %v6512, 16
        %v6773 = vrot.slane %v6771, 4
        %v6774 = vshll.u32 %v6512, 16
        %v6776 = vrot.slane %v6774, 5
        %v6777 = vor.u32 %v6773, %v6776
        %v6778 = vrot.slane %v6777, 4
        %v6780 = vshll.u32 %v6513, 16
        %v6782 = vrot.slane %v6780, 5
        %v6783 = vsel %vm1114, %v6778, %v6782
        %v6784 = vshrl.u32 %v6513, 16
        %v6786 = vrot.slane %v6784, 4
        %v6787 = vor.u32 %v6786, %v6782
        %v6788 = vrot.slane %v6787, 4
        %v6790 = vshll.u32 %v6514, 16
        %v6792 = vrot.slane %v6790, 5
        %v6793 = vsel %vm1114, %v6788, %v6792
        %v6795 = vshrl.u32 %v6515, 16
        %v6797 = vrot.slane %v6795, 4
        %v6798 = vshll.u32 %v6515, 16
        %v6800 = vrot.slane %v6798, 5
        %v6801 = vor.u32 %v6797, %v6800
        %v6802 = vrot.slane %v6801, 4
        %v6804 = vshll.u32 %v6516, 16
        %v6806 = vrot.slane %v6804, 5
        %v6807 = vsel %vm1114, %v6802, %v6806
        %v6808 = vshrl.u32 %v6516, 16
        %v6810 = vrot.slane %v6808, 4
        %v6811 = vor.u32 %v6810, %v6806
        %v6812 = vrot.slane %v6811, 4
        %v6814 = vshll.u32 %v6517, 16
        %v6816 = vrot.slane %v6814, 5
        %v6817 = vsel %vm1114, %v6812, %v6816
        %v6819 = vshrl.u32 %v6518, 16
        %v6821 = vrot.slane %v6819, 4
        %v6822 = vshll.u32 %v6518, 16
        %v6824 = vrot.slane %v6822, 5
        %v6825 = vor.u32 %v6821, %v6824
        %v6826 = vrot.slane %v6825, 4
        %v6828 = vshll.u32 %v6519, 16
        %v6830 = vrot.slane %v6828, 5
        %v6831 = vsel %vm1114, %v6826, %v6830
        %v6832 = vshrl.u32 %v6519, 16
        %v6834 = vrot.slane %v6832, 4
        %v6835 = vor.u32 %v6834, %v6830
        %v6836 = vrot.slane %v6835, 4
        %v6838 = vshll.u32 %v6520, 16
        %v6840 = vrot.slane %v6838, 5
        %v6841 = vsel %vm1114, %v6836, %v6840
        %v6843 = vshrl.u32 %v6521, 16
        %v6845 = vrot.slane %v6843, 4
        %v6846 = vshll.u32 %v6521, 16
        %v6848 = vrot.slane %v6846, 5
        %v6849 = vor.u32 %v6845, %v6848
        %v6850 = vrot.slane %v6849, 4
        %v6852 = vshll.u32 %v6522, 16
        %v6854 = vrot.slane %v6852, 5
        %v6855 = vsel %vm1114, %v6850, %v6854
        %v6856 = vshrl.u32 %v6522, 16
        %v6858 = vrot.slane %v6856, 4
        %v6859 = vor.u32 %v6858, %v6854
        %v6860 = vrot.slane %v6859, 4
        %v6862 = vshll.u32 %v6523, 16
        %v6864 = vrot.slane %v6862, 5
        %v6865 = vsel %vm1114, %v6860, %v6864
        %v6867 = vshrl.u32 %v6524, 16
        %v6869 = vrot.slane %v6867, 4
        %v6870 = vshll.u32 %v6524, 16
        %v6872 = vrot.slane %v6870, 5
        %v6873 = vor.u32 %v6869, %v6872
        %v6874 = vrot.slane %v6873, 4
        %v6876 = vshll.u32 %v6525, 16
        %v6878 = vrot.slane %v6876, 5
        %v6879 = vsel %vm1114, %v6874, %v6878
        %v6880 = vshrl.u32 %v6525, 16
        %v6882 = vrot.slane %v6880, 4
        %v6883 = vor.u32 %v6882, %v6878
        %v6884 = vrot.slane %v6883, 4
        %v6886 = vshll.u32 %v6526, 16
        %v6888 = vrot.slane %v6886, 5
        %v6889 = vsel %vm1114, %v6884, %v6888
        %v6891 = vshrl.u32 %v6527, 16
        %v6893 = vrot.slane %v6891, 4
        %v6894 = vshll.u32 %v6527, 16
        %v6896 = vrot.slane %v6894, 5
        %v6897 = vor.u32 %v6893, %v6896
        %v6898 = vrot.slane %v6897, 4
        %v6900 = vshll.u32 %v6528, 16
        %v6902 = vrot.slane %v6900, 5
        %v6903 = vsel %vm1114, %v6898, %v6902
        %v6904 = vshrl.u32 %v6528, 16
        %v6906 = vrot.slane %v6904, 4
        %v6907 = vor.u32 %v6906, %v6902
        %v6908 = vrot.slane %v6907, 4
        %v6910 = vshll.u32 %v6529, 16
        %v6912 = vrot.slane %v6910, 5
        %v6913 = vsel %vm1114, %v6908, %v6912
        %6946 = vst [vmem:[#allocation3 + $0x4] sm:$0xf] %v6543
        %6947 = vst [vmem:[#allocation3 + $0x28] sm:$0xf] %v6553
        %6948 = vst [vmem:[#allocation3 + $0x4c] sm:$0xf] %v6567
        %6949 = vst [vmem:[#allocation3 + $0x70] sm:$0xf] %v6577
        %6950 = vst [vmem:[#allocation3 + $0x94] sm:$0xf] %v6591
        %6951 = vst [vmem:[#allocation3 + $0xb8] sm:$0xf] %v6601
        %6952 = vst [vmem:[#allocation3 + $0xdc] sm:$0xf] %v6615
        %6953 = vst [vmem:[#allocation3 + $0x100] sm:$0xf] %v6625
        %6954 = vst [vmem:[#allocation3 + $0x124] sm:$0xf] %v6639
        %6955 = vst [vmem:[#allocation3 + $0x148] sm:$0xf] %v6649
        %6956 = vst [vmem:[#allocation3 + $0x16c] sm:$0xf] %v6663
        %6957 = vst [vmem:[#allocation3 + $0x190] sm:$0xf] %v6673
        %6958 = vst [vmem:[#allocation3 + $0x1b4] sm:$0xf] %v6687
        %6959 = vst [vmem:[#allocation3 + $0x1d8] sm:$0xf] %v6697
        %6960 = vst [vmem:[#allocation3 + $0x1fc] sm:$0xf] %v6711
        %6961 = vst [vmem:[#allocation3 + $0x220] sm:$0xf] %v6721
        %6962 = vst [vmem:[#allocation3 + $0x244] sm:$0xf] %v6735
        %6963 = vst [vmem:[#allocation3 + $0x268] sm:$0xf] %v6745
        %6964 = vst [vmem:[#allocation3 + $0x28c] sm:$0xf] %v6759
        %6965 = vst [vmem:[#allocation3 + $0x2b0] sm:$0xf] %v6769
        %6966 = vst [vmem:[#allocation3 + $0x2d4] sm:$0xf] %v6783
        %6967 = vst [vmem:[#allocation3 + $0x2f8] sm:$0xf] %v6793
        %6968 = vst [vmem:[#allocation3 + $0x31c] sm:$0xf] %v6807
        %6969 = vst [vmem:[#allocation3 + $0x340] sm:$0xf] %v6817
        %6970 = vst [vmem:[#allocation3 + $0x364] sm:$0xf] %v6831
        %6971 = vst [vmem:[#allocation3 + $0x388] sm:$0xf] %v6841
        %6972 = vst [vmem:[#allocation3 + $0x3ac] sm:$0xf] %v6855
        %6973 = vst [vmem:[#allocation3 + $0x3d0] sm:$0xf] %v6865
        %6974 = vst [vmem:[#allocation3 + $0x3f4] sm:$0xf] %v6879
        %6975 = vst [vmem:[#allocation3 + $0x418] sm:$0xf] %v6889
        %6976 = vst [vmem:[#allocation3 + $0x43c] sm:$0xf] %v6903
        %6977 = vst [vmem:[#allocation3 + $0x460] sm:$0xf] %v6913
        %v6978 = vld [vmem:[#allocation2] sm:$0xe]
        %v6979 = vld [vmem:[#allocation2 + $0x4] sm:$0xf]
        %v6980 = vld [vmem:[#allocation2 + $0x8] sm:$0x1]
        %v6981 = vld [vmem:[#allocation2 + $0xc] sm:$0xe]
        %v6982 = vld [vmem:[#allocation2 + $0x10] sm:$0xf]
        %v6983 = vld [vmem:[#allocation2 + $0x14] sm:$0x1]
        %v6984 = vld [vmem:[#allocation2 + $0x18] sm:$0xe]
        %v6985 = vld [vmem:[#allocation2 + $0x1c] sm:$0xf]
        %v6986 = vld [vmem:[#allocation2 + $0x20] sm:$0x1]
        %v6987 = vld [vmem:[#allocation2 + $0x24] sm:$0xe]
        %v6988 = vld [vmem:[#allocation2 + $0x28] sm:$0xf]
        %v6989 = vld [vmem:[#allocation2 + $0x2c] sm:$0x1]
        %v6990 = vld [vmem:[#allocation2 + $0x30] sm:$0xe]
        %v6991 = vld [vmem:[#allocation2 + $0x34] sm:$0xf]
        %v6992 = vld [vmem:[#allocation2 + $0x38] sm:$0x1]
        %v6993 = vld [vmem:[#allocation2 + $0x3c] sm:$0xe]
        %v6994 = vld [vmem:[#allocation2 + $0x40] sm:$0xf]
        %v6995 = vld [vmem:[#allocation2 + $0x44] sm:$0x1]
        %v6996 = vld [vmem:[#allocation2 + $0x48] sm:$0xe]
        %v6997 = vld [vmem:[#allocation2 + $0x4c] sm:$0xf]
        %v6998 = vld [vmem:[#allocation2 + $0x50] sm:$0x1]
        %v6999 = vld [vmem:[#allocation2 + $0x54] sm:$0xe]
        %v7000 = vld [vmem:[#allocation2 + $0x58] sm:$0xf]
        %v7001 = vld [vmem:[#allocation2 + $0x5c] sm:$0x1]
        %v7002 = vld [vmem:[#allocation2 + $0x60] sm:$0xe]
        %v7003 = vld [vmem:[#allocation2 + $0x64] sm:$0xf]
        %v7004 = vld [vmem:[#allocation2 + $0x68] sm:$0x1]
        %v7005 = vld [vmem:[#allocation2 + $0x6c] sm:$0xe]
        %v7006 = vld [vmem:[#allocation2 + $0x70] sm:$0xf]
        %v7007 = vld [vmem:[#allocation2 + $0x74] sm:$0x1]
        %v7008 = vld [vmem:[#allocation2 + $0x78] sm:$0xe]
        %v7009 = vld [vmem:[#allocation2 + $0x7c] sm:$0xf]
        %v7010 = vld [vmem:[#allocation2 + $0x80] sm:$0x1]
        %v7011 = vld [vmem:[#allocation2 + $0x84] sm:$0xe]
        %v7012 = vld [vmem:[#allocation2 + $0x88] sm:$0xf]
        %v7013 = vld [vmem:[#allocation2 + $0x8c] sm:$0x1]
        %v7014 = vld [vmem:[#allocation2 + $0x90] sm:$0xe]
        %v7015 = vld [vmem:[#allocation2 + $0x94] sm:$0xf]
        %v7016 = vld [vmem:[#allocation2 + $0x98] sm:$0x1]
        %v7017 = vld [vmem:[#allocation2 + $0x9c] sm:$0xe]
        %v7018 = vld [vmem:[#allocation2 + $0xa0] sm:$0xf]
        %v7019 = vld [vmem:[#allocation2 + $0xa4] sm:$0x1]
        %v7020 = vld [vmem:[#allocation2 + $0xa8] sm:$0xe]
        %v7021 = vld [vmem:[#allocation2 + $0xac] sm:$0xf]
        %v7022 = vld [vmem:[#allocation2 + $0xb0] sm:$0x1]
        %v7023 = vld [vmem:[#allocation2 + $0xb4] sm:$0xe]
        %v7024 = vld [vmem:[#allocation2 + $0xb8] sm:$0xf]
        %v7025 = vld [vmem:[#allocation2 + $0xbc] sm:$0x1]
        %v7074 = vrot.slane %v6978, 5
        %v7075 = vrot.slane %v7074, 4
        %v7076 = vrot.slane %v6979, 5
        %v7077 = vsel %vm1661, %v7075, %v7076
        %v7078 = vrot.slane %v7076, 4
        %v7079 = vrot.slane %v6980, 5
        %v7080 = vsel %vm1661, %v7078, %v7079
        %v7081 = vrot.slane %v6981, 5
        %v7082 = vrot.slane %v7081, 4
        %v7083 = vrot.slane %v6982, 5
        %v7084 = vsel %vm1661, %v7082, %v7083
        %v7085 = vrot.slane %v7083, 4
        %v7086 = vrot.slane %v6983, 5
        %v7087 = vsel %vm1661, %v7085, %v7086
        %v7088 = vrot.slane %v6984, 5
        %v7089 = vrot.slane %v7088, 4
        %v7090 = vrot.slane %v6985, 5
        %v7091 = vsel %vm1661, %v7089, %v7090
        %v7092 = vrot.slane %v7090, 4
        %v7093 = vrot.slane %v6986, 5
        %v7094 = vsel %vm1661, %v7092, %v7093
        %v7095 = vrot.slane %v6987, 5
        %v7096 = vrot.slane %v7095, 4
        %v7097 = vrot.slane %v6988, 5
        %v7098 = vsel %vm1661, %v7096, %v7097
        %v7099 = vrot.slane %v7097, 4
        %v7100 = vrot.slane %v6989, 5
        %v7101 = vsel %vm1661, %v7099, %v7100
        %v7102 = vrot.slane %v6990, 5
        %v7103 = vrot.slane %v7102, 4
        %v7104 = vrot.slane %v6991, 5
        %v7105 = vsel %vm1661, %v7103, %v7104
        %v7106 = vrot.slane %v7104, 4
        %v7107 = vrot.slane %v6992, 5
        %v7108 = vsel %vm1661, %v7106, %v7107
        %v7109 = vrot.slane %v6993, 5
        %v7110 = vrot.slane %v7109, 4
        %v7111 = vrot.slane %v6994, 5
        %v7112 = vsel %vm1661, %v7110, %v7111
        %v7113 = vrot.slane %v7111, 4
        %v7114 = vrot.slane %v6995, 5
        %v7115 = vsel %vm1661, %v7113, %v7114
        %v7116 = vrot.slane %v6996, 5
        %v7117 = vrot.slane %v7116, 4
        %v7118 = vrot.slane %v6997, 5
        %v7119 = vsel %vm1661, %v7117, %v7118
        %v7120 = vrot.slane %v7118, 4
        %v7121 = vrot.slane %v6998, 5
        %v7122 = vsel %vm1661, %v7120, %v7121
        %v7123 = vrot.slane %v6999, 5
        %v7124 = vrot.slane %v7123, 4
        %v7125 = vrot.slane %v7000, 5
        %v7126 = vsel %vm1661, %v7124, %v7125
        %v7127 = vrot.slane %v7125, 4
        %v7128 = vrot.slane %v7001, 5
        %v7129 = vsel %vm1661, %v7127, %v7128
        %v7130 = vrot.slane %v7002, 5
        %v7131 = vrot.slane %v7130, 4
        %v7132 = vrot.slane %v7003, 5
        %v7133 = vsel %vm1661, %v7131, %v7132
        %v7134 = vrot.slane %v7132, 4
        %v7135 = vrot.slane %v7004, 5
        %v7136 = vsel %vm1661, %v7134, %v7135
        %v7137 = vrot.slane %v7005, 5
        %v7138 = vrot.slane %v7137, 4
        %v7139 = vrot.slane %v7006, 5
        %v7140 = vsel %vm1661, %v7138, %v7139
        %v7141 = vrot.slane %v7139, 4
        %v7142 = vrot.slane %v7007, 5
        %v7143 = vsel %vm1661, %v7141, %v7142
        %v7144 = vrot.slane %v7008, 5
        %v7145 = vrot.slane %v7144, 4
        %v7146 = vrot.slane %v7009, 5
        %v7147 = vsel %vm1661, %v7145, %v7146
        %v7148 = vrot.slane %v7146, 4
        %v7149 = vrot.slane %v7010, 5
        %v7150 = vsel %vm1661, %v7148, %v7149
        %v7151 = vrot.slane %v7011, 5
        %v7152 = vrot.slane %v7151, 4
        %v7153 = vrot.slane %v7012, 5
        %v7154 = vsel %vm1661, %v7152, %v7153
        %v7155 = vrot.slane %v7153, 4
        %v7156 = vrot.slane %v7013, 5
        %v7157 = vsel %vm1661, %v7155, %v7156
        %v7158 = vrot.slane %v7014, 5
        %v7159 = vrot.slane %v7158, 4
        %v7160 = vrot.slane %v7015, 5
        %v7161 = vsel %vm1661, %v7159, %v7160
        %v7162 = vrot.slane %v7160, 4
        %v7163 = vrot.slane %v7016, 5
        %v7164 = vsel %vm1661, %v7162, %v7163
        %v7165 = vrot.slane %v7017, 5
        %v7166 = vrot.slane %v7165, 4
        %v7167 = vrot.slane %v7018, 5
        %v7168 = vsel %vm1661, %v7166, %v7167
        %v7169 = vrot.slane %v7167, 4
        %v7170 = vrot.slane %v7019, 5
        %v7171 = vsel %vm1661, %v7169, %v7170
        %v7172 = vrot.slane %v7020, 5
        %v7173 = vrot.slane %v7172, 4
        %v7174 = vrot.slane %v7021, 5
        %v7175 = vsel %vm1661, %v7173, %v7174
        %v7176 = vrot.slane %v7174, 4
        %v7177 = vrot.slane %v7022, 5
        %v7178 = vsel %vm1661, %v7176, %v7177
        %v7179 = vrot.slane %v7023, 5
        %v7180 = vrot.slane %v7179, 4
        %v7181 = vrot.slane %v7024, 5
        %v7182 = vsel %vm1661, %v7180, %v7181
        %v7183 = vrot.slane %v7181, 4
        %v7184 = vrot.slane %v7025, 5
        %v7185 = vsel %vm1661, %v7183, %v7184
        %7218 = vst [vmem:[#allocation3 + $0x8] sm:$0xf] %v7077
        %7219 = vst [vmem:[#allocation3 + $0x2c] sm:$0xf] %v7080
        %7220 = vst [vmem:[#allocation3 + $0x50] sm:$0xf] %v7084
        %7221 = vst [vmem:[#allocation3 + $0x74] sm:$0xf] %v7087
        %7222 = vst [vmem:[#allocation3 + $0x98] sm:$0xf] %v7091
        %7223 = vst [vmem:[#allocation3 + $0xbc] sm:$0xf] %v7094
        %7224 = vst [vmem:[#allocation3 + $0xe0] sm:$0xf] %v7098
        %7225 = vst [vmem:[#allocation3 + $0x104] sm:$0xf] %v7101
        %7226 = vst [vmem:[#allocation3 + $0x128] sm:$0xf] %v7105
        %7227 = vst [vmem:[#allocation3 + $0x14c] sm:$0xf] %v7108
        %7228 = vst [vmem:[#allocation3 + $0x170] sm:$0xf] %v7112
        %7229 = vst [vmem:[#allocation3 + $0x194] sm:$0xf] %v7115
        %7230 = vst [vmem:[#allocation3 + $0x1b8] sm:$0xf] %v7119
        %7231 = vst [vmem:[#allocation3 + $0x1dc] sm:$0xf] %v7122
        %7232 = vst [vmem:[#allocation3 + $0x200] sm:$0xf] %v7126
        %7233 = vst [vmem:[#allocation3 + $0x224] sm:$0xf] %v7129
        %7234 = vst [vmem:[#allocation3 + $0x248] sm:$0xf] %v7133
        %7235 = vst [vmem:[#allocation3 + $0x26c] sm:$0xf] %v7136
        %7236 = vst [vmem:[#allocation3 + $0x290] sm:$0xf] %v7140
        %7237 = vst [vmem:[#allocation3 + $0x2b4] sm:$0xf] %v7143
        %7238 = vst [vmem:[#allocation3 + $0x2d8] sm:$0xf] %v7147
        %7239 = vst [vmem:[#allocation3 + $0x2fc] sm:$0xf] %v7150
        %7240 = vst [vmem:[#allocation3 + $0x320] sm:$0xf] %v7154
        %7241 = vst [vmem:[#allocation3 + $0x344] sm:$0xf] %v7157
        %7242 = vst [vmem:[#allocation3 + $0x368] sm:$0xf] %v7161
        %7243 = vst [vmem:[#allocation3 + $0x38c] sm:$0xf] %v7164
        %7244 = vst [vmem:[#allocation3 + $0x3b0] sm:$0xf] %v7168
        %7245 = vst [vmem:[#allocation3 + $0x3d4] sm:$0xf] %v7171
        %7246 = vst [vmem:[#allocation3 + $0x3f8] sm:$0xf] %v7175
        %7247 = vst [vmem:[#allocation3 + $0x41c] sm:$0xf] %v7178
        %7248 = vst [vmem:[#allocation3 + $0x440] sm:$0xf] %v7182
        %7249 = vst [vmem:[#allocation3 + $0x464] sm:$0xf] %v7185
        %v7250 = vld [vmem:[%s885] sm:$0xf]
        %v7251 = vld [vmem:[%s885 + $0x4] sm:$0xf]
        %v7252 = vld [vmem:[%s885 + $0xc] sm:$0xf]
        %v7253 = vld [vmem:[%s885 + $0x10] sm:$0xf]
        %v7254 = vld [vmem:[%s885 + $0x18] sm:$0xf]
        %v7255 = vld [vmem:[%s885 + $0x1c] sm:$0xf]
        %v7256 = vld [vmem:[%s885 + $0x24] sm:$0xf]
        %v7257 = vld [vmem:[%s885 + $0x28] sm:$0xf]
        %v7258 = vld [vmem:[%s885 + $0x30] sm:$0xf]
        %v7259 = vld [vmem:[%s885 + $0x34] sm:$0xf]
        %v7260 = vld [vmem:[%s885 + $0x3c] sm:$0xf]
        %v7261 = vld [vmem:[%s885 + $0x40] sm:$0xf]
        %v7262 = vld [vmem:[%s885 + $0x48] sm:$0xf]
        %v7263 = vld [vmem:[%s885 + $0x4c] sm:$0xf]
        %v7264 = vld [vmem:[%s885 + $0x54] sm:$0xf]
        %v7265 = vld [vmem:[%s885 + $0x58] sm:$0xf]
        %v7266 = vld [vmem:[%s885 + $0x60] sm:$0xf]
        %v7267 = vld [vmem:[%s885 + $0x64] sm:$0xf]
        %v7268 = vld [vmem:[%s885 + $0x6c] sm:$0xf]
        %v7269 = vld [vmem:[%s885 + $0x70] sm:$0xf]
        %v7270 = vld [vmem:[%s885 + $0x78] sm:$0xf]
        %v7271 = vld [vmem:[%s885 + $0x7c] sm:$0xf]
        %v7272 = vld [vmem:[%s885 + $0x84] sm:$0xf]
        %v7273 = vld [vmem:[%s885 + $0x88] sm:$0xf]
        %v7274 = vld [vmem:[%s885 + $0x90] sm:$0xf]
        %v7275 = vld [vmem:[%s885 + $0x94] sm:$0xf]
        %v7276 = vld [vmem:[%s885 + $0x9c] sm:$0xf]
        %v7277 = vld [vmem:[%s885 + $0xa0] sm:$0xf]
        %v7278 = vld [vmem:[%s885 + $0xa8] sm:$0xf]
        %v7279 = vld [vmem:[%s885 + $0xac] sm:$0xf]
        %v7280 = vld [vmem:[%s885 + $0xb4] sm:$0xf]
        %v7281 = vld [vmem:[%s885 + $0xb8] sm:$0xf]
        %7282 = vst [vmem:[#allocation3 + $0xc] sm:$0xf] %v7250
        %7283 = vst [vmem:[#allocation3 + $0x30] sm:$0xf] %v7251
        %7284 = vst [vmem:[#allocation3 + $0x54] sm:$0xf] %v7252
        %7285 = vst [vmem:[#allocation3 + $0x78] sm:$0xf] %v7253
        %7286 = vst [vmem:[#allocation3 + $0x9c] sm:$0xf] %v7254
        %7287 = vst [vmem:[#allocation3 + $0xc0] sm:$0xf] %v7255
        %7288 = vst [vmem:[#allocation3 + $0xe4] sm:$0xf] %v7256
        %7289 = vst [vmem:[#allocation3 + $0x108] sm:$0xf] %v7257
        %7290 = vst [vmem:[#allocation3 + $0x12c] sm:$0xf] %v7258
        %7291 = vst [vmem:[#allocation3 + $0x150] sm:$0xf] %v7259
        %7292 = vst [vmem:[#allocation3 + $0x174] sm:$0xf] %v7260
        %7293 = vst [vmem:[#allocation3 + $0x198] sm:$0xf] %v7261
        %7294 = vst [vmem:[#allocation3 + $0x1bc] sm:$0xf] %v7262
        %7295 = vst [vmem:[#allocation3 + $0x1e0] sm:$0xf] %v7263
        %7296 = vst [vmem:[#allocation3 + $0x204] sm:$0xf] %v7264
        %7297 = vst [vmem:[#allocation3 + $0x228] sm:$0xf] %v7265
        %7298 = vst [vmem:[#allocation3 + $0x24c] sm:$0xf] %v7266
        %7299 = vst [vmem:[#allocation3 + $0x270] sm:$0xf] %v7267
        %7300 = vst [vmem:[#allocation3 + $0x294] sm:$0xf] %v7268
        %7301 = vst [vmem:[#allocation3 + $0x2b8] sm:$0xf] %v7269
        %7302 = vst [vmem:[#allocation3 + $0x2dc] sm:$0xf] %v7270
        %7303 = vst [vmem:[#allocation3 + $0x300] sm:$0xf] %v7271
        %7304 = vst [vmem:[#allocation3 + $0x324] sm:$0xf] %v7272
        %7305 = vst [vmem:[#allocation3 + $0x348] sm:$0xf] %v7273
        %7306 = vst [vmem:[#allocation3 + $0x36c] sm:$0xf] %v7274
        %7307 = vst [vmem:[#allocation3 + $0x390] sm:$0xf] %v7275
        %7308 = vst [vmem:[#allocation3 + $0x3b4] sm:$0xf] %v7276
        %7309 = vst [vmem:[#allocation3 + $0x3d8] sm:$0xf] %v7277
        %7310 = vst [vmem:[#allocation3 + $0x3fc] sm:$0xf] %v7278
        %7311 = vst [vmem:[#allocation3 + $0x420] sm:$0xf] %v7279
        %7312 = vst [vmem:[#allocation3 + $0x444] sm:$0xf] %v7280
        %7313 = vst [vmem:[#allocation3 + $0x468] sm:$0xf] %v7281
        %v7314 = vld [vmem:[%s885] sm:$0xf]
        %v7315 = vld [vmem:[%s885 + $0x4] sm:$0xf]
        %v7316 = vld [vmem:[%s885 + $0x8] sm:$0x1]
        %v7317 = vld [vmem:[%s885 + $0xc] sm:$0xf]
        %v7318 = vld [vmem:[%s885 + $0x10] sm:$0xf]
        %v7319 = vld [vmem:[%s885 + $0x14] sm:$0x1]
        %v7320 = vld [vmem:[%s885 + $0x18] sm:$0xf]
        %v7321 = vld [vmem:[%s885 + $0x1c] sm:$0xf]
        %v7322 = vld [vmem:[%s885 + $0x20] sm:$0x1]
        %v7323 = vld [vmem:[%s885 + $0x24] sm:$0xf]
        %v7324 = vld [vmem:[%s885 + $0x28] sm:$0xf]
        %v7325 = vld [vmem:[%s885 + $0x2c] sm:$0x1]
        %v7326 = vld [vmem:[%s885 + $0x30] sm:$0xf]
        %v7327 = vld [vmem:[%s885 + $0x34] sm:$0xf]
        %v7328 = vld [vmem:[%s885 + $0x38] sm:$0x1]
        %v7329 = vld [vmem:[%s885 + $0x3c] sm:$0xf]
        %v7330 = vld [vmem:[%s885 + $0x40] sm:$0xf]
        %v7331 = vld [vmem:[%s885 + $0x44] sm:$0x1]
        %v7332 = vld [vmem:[%s885 + $0x48] sm:$0xf]
        %v7333 = vld [vmem:[%s885 + $0x4c] sm:$0xf]
        %v7334 = vld [vmem:[%s885 + $0x50] sm:$0x1]
        %v7335 = vld [vmem:[%s885 + $0x54] sm:$0xf]
        %v7336 = vld [vmem:[%s885 + $0x58] sm:$0xf]
        %v7337 = vld [vmem:[%s885 + $0x5c] sm:$0x1]
        %v7338 = vld [vmem:[%s885 + $0x60] sm:$0xf]
        %v7339 = vld [vmem:[%s885 + $0x64] sm:$0xf]
        %v7340 = vld [vmem:[%s885 + $0x68] sm:$0x1]
        %v7341 = vld [vmem:[%s885 + $0x6c] sm:$0xf]
        %v7342 = vld [vmem:[%s885 + $0x70] sm:$0xf]
        %v7343 = vld [vmem:[%s885 + $0x74] sm:$0x1]
        %v7344 = vld [vmem:[%s885 + $0x78] sm:$0xf]
        %v7345 = vld [vmem:[%s885 + $0x7c] sm:$0xf]
        %v7346 = vld [vmem:[%s885 + $0x80] sm:$0x1]
        %v7347 = vld [vmem:[%s885 + $0x84] sm:$0xf]
        %v7348 = vld [vmem:[%s885 + $0x88] sm:$0xf]
        %v7349 = vld [vmem:[%s885 + $0x8c] sm:$0x1]
        %v7350 = vld [vmem:[%s885 + $0x90] sm:$0xf]
        %v7351 = vld [vmem:[%s885 + $0x94] sm:$0xf]
        %v7352 = vld [vmem:[%s885 + $0x98] sm:$0x1]
        %v7353 = vld [vmem:[%s885 + $0x9c] sm:$0xf]
        %v7354 = vld [vmem:[%s885 + $0xa0] sm:$0xf]
        %v7355 = vld [vmem:[%s885 + $0xa4] sm:$0x1]
        %v7356 = vld [vmem:[%s885 + $0xa8] sm:$0xf]
        %v7357 = vld [vmem:[%s885 + $0xac] sm:$0xf]
        %v7358 = vld [vmem:[%s885 + $0xb0] sm:$0x1]
        %v7359 = vld [vmem:[%s885 + $0xb4] sm:$0xf]
        %v7360 = vld [vmem:[%s885 + $0xb8] sm:$0xf]
        %v7361 = vld [vmem:[%s885 + $0xbc] sm:$0x1]
        %v7363 = vshrl.u32 %v7314, 16
        %v7365 = vrot.slane %v7363, 4
        %v7366 = vshll.u32 %v7314, 16
        %v7368 = vrot.slane %v7366, 5
        %v7369 = vor.u32 %v7365, %v7368
        %v7370 = vrot.slane %v7369, 4
        %v7372 = vshll.u32 %v7315, 16
        %v7374 = vrot.slane %v7372, 5
        %v7375 = vsel %vm1114, %v7370, %v7374
        %v7376 = vshrl.u32 %v7315, 16
        %v7378 = vrot.slane %v7376, 4
        %v7379 = vor.u32 %v7378, %v7374
        %v7380 = vrot.slane %v7379, 4
        %v7382 = vshll.u32 %v7316, 16
        %v7384 = vrot.slane %v7382, 5
        %v7385 = vsel %vm1114, %v7380, %v7384
        %v7387 = vshrl.u32 %v7317, 16
        %v7389 = vrot.slane %v7387, 4
        %v7390 = vshll.u32 %v7317, 16
        %v7392 = vrot.slane %v7390, 5
        %v7393 = vor.u32 %v7389, %v7392
        %v7394 = vrot.slane %v7393, 4
        %v7396 = vshll.u32 %v7318, 16
        %v7398 = vrot.slane %v7396, 5
        %v7399 = vsel %vm1114, %v7394, %v7398
        %v7400 = vshrl.u32 %v7318, 16
        %v7402 = vrot.slane %v7400, 4
        %v7403 = vor.u32 %v7402, %v7398
        %v7404 = vrot.slane %v7403, 4
        %v7406 = vshll.u32 %v7319, 16
        %v7408 = vrot.slane %v7406, 5
        %v7409 = vsel %vm1114, %v7404, %v7408
        %v7411 = vshrl.u32 %v7320, 16
        %v7413 = vrot.slane %v7411, 4
        %v7414 = vshll.u32 %v7320, 16
        %v7416 = vrot.slane %v7414, 5
        %v7417 = vor.u32 %v7413, %v7416
        %v7418 = vrot.slane %v7417, 4
        %v7420 = vshll.u32 %v7321, 16
        %v7422 = vrot.slane %v7420, 5
        %v7423 = vsel %vm1114, %v7418, %v7422
        %v7424 = vshrl.u32 %v7321, 16
        %v7426 = vrot.slane %v7424, 4
        %v7427 = vor.u32 %v7426, %v7422
        %v7428 = vrot.slane %v7427, 4
        %v7430 = vshll.u32 %v7322, 16
        %v7432 = vrot.slane %v7430, 5
        %v7433 = vsel %vm1114, %v7428, %v7432
        %v7435 = vshrl.u32 %v7323, 16
        %v7437 = vrot.slane %v7435, 4
        %v7438 = vshll.u32 %v7323, 16
        %v7440 = vrot.slane %v7438, 5
        %v7441 = vor.u32 %v7437, %v7440
        %v7442 = vrot.slane %v7441, 4
        %v7444 = vshll.u32 %v7324, 16
        %v7446 = vrot.slane %v7444, 5
        %v7447 = vsel %vm1114, %v7442, %v7446
        %v7448 = vshrl.u32 %v7324, 16
        %v7450 = vrot.slane %v7448, 4
        %v7451 = vor.u32 %v7450, %v7446
        %v7452 = vrot.slane %v7451, 4
        %v7454 = vshll.u32 %v7325, 16
        %v7456 = vrot.slane %v7454, 5
        %v7457 = vsel %vm1114, %v7452, %v7456
        %v7459 = vshrl.u32 %v7326, 16
        %v7461 = vrot.slane %v7459, 4
        %v7462 = vshll.u32 %v7326, 16
        %v7464 = vrot.slane %v7462, 5
        %v7465 = vor.u32 %v7461, %v7464
        %v7466 = vrot.slane %v7465, 4
        %v7468 = vshll.u32 %v7327, 16
        %v7470 = vrot.slane %v7468, 5
        %v7471 = vsel %vm1114, %v7466, %v7470
        %v7472 = vshrl.u32 %v7327, 16
        %v7474 = vrot.slane %v7472, 4
        %v7475 = vor.u32 %v7474, %v7470
        %v7476 = vrot.slane %v7475, 4
        %v7478 = vshll.u32 %v7328, 16
        %v7480 = vrot.slane %v7478, 5
        %v7481 = vsel %vm1114, %v7476, %v7480
        %v7483 = vshrl.u32 %v7329, 16
        %v7485 = vrot.slane %v7483, 4
        %v7486 = vshll.u32 %v7329, 16
        %v7488 = vrot.slane %v7486, 5
        %v7489 = vor.u32 %v7485, %v7488
        %v7490 = vrot.slane %v7489, 4
        %v7492 = vshll.u32 %v7330, 16
        %v7494 = vrot.slane %v7492, 5
        %v7495 = vsel %vm1114, %v7490, %v7494
        %v7496 = vshrl.u32 %v7330, 16
        %v7498 = vrot.slane %v7496, 4
        %v7499 = vor.u32 %v7498, %v7494
        %v7500 = vrot.slane %v7499, 4
        %v7502 = vshll.u32 %v7331, 16
        %v7504 = vrot.slane %v7502, 5
        %v7505 = vsel %vm1114, %v7500, %v7504
        %v7507 = vshrl.u32 %v7332, 16
        %v7509 = vrot.slane %v7507, 4
        %v7510 = vshll.u32 %v7332, 16
        %v7512 = vrot.slane %v7510, 5
        %v7513 = vor.u32 %v7509, %v7512
        %v7514 = vrot.slane %v7513, 4
        %v7516 = vshll.u32 %v7333, 16
        %v7518 = vrot.slane %v7516, 5
        %v7519 = vsel %vm1114, %v7514, %v7518
        %v7520 = vshrl.u32 %v7333, 16
        %v7522 = vrot.slane %v7520, 4
        %v7523 = vor.u32 %v7522, %v7518
        %v7524 = vrot.slane %v7523, 4
        %v7526 = vshll.u32 %v7334, 16
        %v7528 = vrot.slane %v7526, 5
        %v7529 = vsel %vm1114, %v7524, %v7528
        %v7531 = vshrl.u32 %v7335, 16
        %v7533 = vrot.slane %v7531, 4
        %v7534 = vshll.u32 %v7335, 16
        %v7536 = vrot.slane %v7534, 5
        %v7537 = vor.u32 %v7533, %v7536
        %v7538 = vrot.slane %v7537, 4
        %v7540 = vshll.u32 %v7336, 16
        %v7542 = vrot.slane %v7540, 5
        %v7543 = vsel %vm1114, %v7538, %v7542
        %v7544 = vshrl.u32 %v7336, 16
        %v7546 = vrot.slane %v7544, 4
        %v7547 = vor.u32 %v7546, %v7542
        %v7548 = vrot.slane %v7547, 4
        %v7550 = vshll.u32 %v7337, 16
        %v7552 = vrot.slane %v7550, 5
        %v7553 = vsel %vm1114, %v7548, %v7552
        %v7555 = vshrl.u32 %v7338, 16
        %v7557 = vrot.slane %v7555, 4
        %v7558 = vshll.u32 %v7338, 16
        %v7560 = vrot.slane %v7558, 5
        %v7561 = vor.u32 %v7557, %v7560
        %v7562 = vrot.slane %v7561, 4
        %v7564 = vshll.u32 %v7339, 16
        %v7566 = vrot.slane %v7564, 5
        %v7567 = vsel %vm1114, %v7562, %v7566
        %v7568 = vshrl.u32 %v7339, 16
        %v7570 = vrot.slane %v7568, 4
        %v7571 = vor.u32 %v7570, %v7566
        %v7572 = vrot.slane %v7571, 4
        %v7574 = vshll.u32 %v7340, 16
        %v7576 = vrot.slane %v7574, 5
        %v7577 = vsel %vm1114, %v7572, %v7576
        %v7579 = vshrl.u32 %v7341, 16
        %v7581 = vrot.slane %v7579, 4
        %v7582 = vshll.u32 %v7341, 16
        %v7584 = vrot.slane %v7582, 5
        %v7585 = vor.u32 %v7581, %v7584
        %v7586 = vrot.slane %v7585, 4
        %v7588 = vshll.u32 %v7342, 16
        %v7590 = vrot.slane %v7588, 5
        %v7591 = vsel %vm1114, %v7586, %v7590
        %v7592 = vshrl.u32 %v7342, 16
        %v7594 = vrot.slane %v7592, 4
        %v7595 = vor.u32 %v7594, %v7590
        %v7596 = vrot.slane %v7595, 4
        %v7598 = vshll.u32 %v7343, 16
        %v7600 = vrot.slane %v7598, 5
        %v7601 = vsel %vm1114, %v7596, %v7600
        %v7603 = vshrl.u32 %v7344, 16
        %v7605 = vrot.slane %v7603, 4
        %v7606 = vshll.u32 %v7344, 16
        %v7608 = vrot.slane %v7606, 5
        %v7609 = vor.u32 %v7605, %v7608
        %v7610 = vrot.slane %v7609, 4
        %v7612 = vshll.u32 %v7345, 16
        %v7614 = vrot.slane %v7612, 5
        %v7615 = vsel %vm1114, %v7610, %v7614
        %v7616 = vshrl.u32 %v7345, 16
        %v7618 = vrot.slane %v7616, 4
        %v7619 = vor.u32 %v7618, %v7614
        %v7620 = vrot.slane %v7619, 4
        %v7622 = vshll.u32 %v7346, 16
        %v7624 = vrot.slane %v7622, 5
        %v7625 = vsel %vm1114, %v7620, %v7624
        %v7627 = vshrl.u32 %v7347, 16
        %v7629 = vrot.slane %v7627, 4
        %v7630 = vshll.u32 %v7347, 16
        %v7632 = vrot.slane %v7630, 5
        %v7633 = vor.u32 %v7629, %v7632
        %v7634 = vrot.slane %v7633, 4
        %v7636 = vshll.u32 %v7348, 16
        %v7638 = vrot.slane %v7636, 5
        %v7639 = vsel %vm1114, %v7634, %v7638
        %v7640 = vshrl.u32 %v7348, 16
        %v7642 = vrot.slane %v7640, 4
        %v7643 = vor.u32 %v7642, %v7638
        %v7644 = vrot.slane %v7643, 4
        %v7646 = vshll.u32 %v7349, 16
        %v7648 = vrot.slane %v7646, 5
        %v7649 = vsel %vm1114, %v7644, %v7648
        %v7651 = vshrl.u32 %v7350, 16
        %v7653 = vrot.slane %v7651, 4
        %v7654 = vshll.u32 %v7350, 16
        %v7656 = vrot.slane %v7654, 5
        %v7657 = vor.u32 %v7653, %v7656
        %v7658 = vrot.slane %v7657, 4
        %v7660 = vshll.u32 %v7351, 16
        %v7662 = vrot.slane %v7660, 5
        %v7663 = vsel %vm1114, %v7658, %v7662
        %v7664 = vshrl.u32 %v7351, 16
        %v7666 = vrot.slane %v7664, 4
        %v7667 = vor.u32 %v7666, %v7662
        %v7668 = vrot.slane %v7667, 4
        %v7670 = vshll.u32 %v7352, 16
        %v7672 = vrot.slane %v7670, 5
        %v7673 = vsel %vm1114, %v7668, %v7672
        %v7675 = vshrl.u32 %v7353, 16
        %v7677 = vrot.slane %v7675, 4
        %v7678 = vshll.u32 %v7353, 16
        %v7680 = vrot.slane %v7678, 5
        %v7681 = vor.u32 %v7677, %v7680
        %v7682 = vrot.slane %v7681, 4
        %v7684 = vshll.u32 %v7354, 16
        %v7686 = vrot.slane %v7684, 5
        %v7687 = vsel %vm1114, %v7682, %v7686
        %v7688 = vshrl.u32 %v7354, 16
        %v7690 = vrot.slane %v7688, 4
        %v7691 = vor.u32 %v7690, %v7686
        %v7692 = vrot.slane %v7691, 4
        %v7694 = vshll.u32 %v7355, 16
        %v7696 = vrot.slane %v7694, 5
        %v7697 = vsel %vm1114, %v7692, %v7696
        %v7699 = vshrl.u32 %v7356, 16
        %v7701 = vrot.slane %v7699, 4
        %v7702 = vshll.u32 %v7356, 16
        %v7704 = vrot.slane %v7702, 5
        %v7705 = vor.u32 %v7701, %v7704
        %v7706 = vrot.slane %v7705, 4
        %v7708 = vshll.u32 %v7357, 16
        %v7710 = vrot.slane %v7708, 5
        %v7711 = vsel %vm1114, %v7706, %v7710
        %v7712 = vshrl.u32 %v7357, 16
        %v7714 = vrot.slane %v7712, 4
        %v7715 = vor.u32 %v7714, %v7710
        %v7716 = vrot.slane %v7715, 4
        %v7718 = vshll.u32 %v7358, 16
        %v7720 = vrot.slane %v7718, 5
        %v7721 = vsel %vm1114, %v7716, %v7720
        %v7723 = vshrl.u32 %v7359, 16
        %v7725 = vrot.slane %v7723, 4
        %v7726 = vshll.u32 %v7359, 16
        %v7728 = vrot.slane %v7726, 5
        %v7729 = vor.u32 %v7725, %v7728
        %v7730 = vrot.slane %v7729, 4
        %v7732 = vshll.u32 %v7360, 16
        %v7734 = vrot.slane %v7732, 5
        %v7735 = vsel %vm1114, %v7730, %v7734
        %v7736 = vshrl.u32 %v7360, 16
        %v7738 = vrot.slane %v7736, 4
        %v7739 = vor.u32 %v7738, %v7734
        %v7740 = vrot.slane %v7739, 4
        %v7742 = vshll.u32 %v7361, 16
        %v7744 = vrot.slane %v7742, 5
        %v7745 = vsel %vm1114, %v7740, %v7744
        %7778 = vst [vmem:[#allocation3 + $0x10] sm:$0xf] %v7375
        %7779 = vst [vmem:[#allocation3 + $0x34] sm:$0xf] %v7385
        %7780 = vst [vmem:[#allocation3 + $0x58] sm:$0xf] %v7399
        %7781 = vst [vmem:[#allocation3 + $0x7c] sm:$0xf] %v7409
        %7782 = vst [vmem:[#allocation3 + $0xa0] sm:$0xf] %v7423
        %7783 = vst [vmem:[#allocation3 + $0xc4] sm:$0xf] %v7433
        %7784 = vst [vmem:[#allocation3 + $0xe8] sm:$0xf] %v7447
        %7785 = vst [vmem:[#allocation3 + $0x10c] sm:$0xf] %v7457
        %7786 = vst [vmem:[#allocation3 + $0x130] sm:$0xf] %v7471
        %7787 = vst [vmem:[#allocation3 + $0x154] sm:$0xf] %v7481
        %7788 = vst [vmem:[#allocation3 + $0x178] sm:$0xf] %v7495
        %7789 = vst [vmem:[#allocation3 + $0x19c] sm:$0xf] %v7505
        %7790 = vst [vmem:[#allocation3 + $0x1c0] sm:$0xf] %v7519
        %7791 = vst [vmem:[#allocation3 + $0x1e4] sm:$0xf] %v7529
        %7792 = vst [vmem:[#allocation3 + $0x208] sm:$0xf] %v7543
        %7793 = vst [vmem:[#allocation3 + $0x22c] sm:$0xf] %v7553
        %7794 = vst [vmem:[#allocation3 + $0x250] sm:$0xf] %v7567
        %7795 = vst [vmem:[#allocation3 + $0x274] sm:$0xf] %v7577
        %7796 = vst [vmem:[#allocation3 + $0x298] sm:$0xf] %v7591
        %7797 = vst [vmem:[#allocation3 + $0x2bc] sm:$0xf] %v7601
        %7798 = vst [vmem:[#allocation3 + $0x2e0] sm:$0xf] %v7615
        %7799 = vst [vmem:[#allocation3 + $0x304] sm:$0xf] %v7625
        %7800 = vst [vmem:[#allocation3 + $0x328] sm:$0xf] %v7639
        %7801 = vst [vmem:[#allocation3 + $0x34c] sm:$0xf] %v7649
        %7802 = vst [vmem:[#allocation3 + $0x370] sm:$0xf] %v7663
        %7803 = vst [vmem:[#allocation3 + $0x394] sm:$0xf] %v7673
        %7804 = vst [vmem:[#allocation3 + $0x3b8] sm:$0xf] %v7687
        %7805 = vst [vmem:[#allocation3 + $0x3dc] sm:$0xf] %v7697
        %7806 = vst [vmem:[#allocation3 + $0x400] sm:$0xf] %v7711
        %7807 = vst [vmem:[#allocation3 + $0x424] sm:$0xf] %v7721
        %7808 = vst [vmem:[#allocation3 + $0x448] sm:$0xf] %v7735
        %7809 = vst [vmem:[#allocation3 + $0x46c] sm:$0xf] %v7745
        %v7810 = vld [vmem:[%s885] sm:$0xe]
        %v7811 = vld [vmem:[%s885 + $0x4] sm:$0xf]
        %v7812 = vld [vmem:[%s885 + $0x8] sm:$0x1]
        %v7813 = vld [vmem:[%s885 + $0xc] sm:$0xe]
        %v7814 = vld [vmem:[%s885 + $0x10] sm:$0xf]
        %v7815 = vld [vmem:[%s885 + $0x14] sm:$0x1]
        %v7816 = vld [vmem:[%s885 + $0x18] sm:$0xe]
        %v7817 = vld [vmem:[%s885 + $0x1c] sm:$0xf]
        %v7818 = vld [vmem:[%s885 + $0x20] sm:$0x1]
        %v7819 = vld [vmem:[%s885 + $0x24] sm:$0xe]
        %v7820 = vld [vmem:[%s885 + $0x28] sm:$0xf]
        %v7821 = vld [vmem:[%s885 + $0x2c] sm:$0x1]
        %v7822 = vld [vmem:[%s885 + $0x30] sm:$0xe]
        %v7823 = vld [vmem:[%s885 + $0x34] sm:$0xf]
        %v7824 = vld [vmem:[%s885 + $0x38] sm:$0x1]
        %v7825 = vld [vmem:[%s885 + $0x3c] sm:$0xe]
        %v7826 = vld [vmem:[%s885 + $0x40] sm:$0xf]
        %v7827 = vld [vmem:[%s885 + $0x44] sm:$0x1]
        %v7828 = vld [vmem:[%s885 + $0x48] sm:$0xe]
        %v7829 = vld [vmem:[%s885 + $0x4c] sm:$0xf]
        %v7830 = vld [vmem:[%s885 + $0x50] sm:$0x1]
        %v7831 = vld [vmem:[%s885 + $0x54] sm:$0xe]
        %v7832 = vld [vmem:[%s885 + $0x58] sm:$0xf]
        %v7833 = vld [vmem:[%s885 + $0x5c] sm:$0x1]
        %v7834 = vld [vmem:[%s885 + $0x60] sm:$0xe]
        %v7835 = vld [vmem:[%s885 + $0x64] sm:$0xf]
        %v7836 = vld [vmem:[%s885 + $0x68] sm:$0x1]
        %v7837 = vld [vmem:[%s885 + $0x6c] sm:$0xe]
        %v7838 = vld [vmem:[%s885 + $0x70] sm:$0xf]
        %v7839 = vld [vmem:[%s885 + $0x74] sm:$0x1]
        %v7840 = vld [vmem:[%s885 + $0x78] sm:$0xe]
        %v7841 = vld [vmem:[%s885 + $0x7c] sm:$0xf]
        %v7842 = vld [vmem:[%s885 + $0x80] sm:$0x1]
        %v7843 = vld [vmem:[%s885 + $0x84] sm:$0xe]
        %v7844 = vld [vmem:[%s885 + $0x88] sm:$0xf]
        %v7845 = vld [vmem:[%s885 + $0x8c] sm:$0x1]
        %v7846 = vld [vmem:[%s885 + $0x90] sm:$0xe]
        %v7847 = vld [vmem:[%s885 + $0x94] sm:$0xf]
        %v7848 = vld [vmem:[%s885 + $0x98] sm:$0x1]
        %v7849 = vld [vmem:[%s885 + $0x9c] sm:$0xe]
        %v7850 = vld [vmem:[%s885 + $0xa0] sm:$0xf]
        %v7851 = vld [vmem:[%s885 + $0xa4] sm:$0x1]
        %v7852 = vld [vmem:[%s885 + $0xa8] sm:$0xe]
        %v7853 = vld [vmem:[%s885 + $0xac] sm:$0xf]
        %v7854 = vld [vmem:[%s885 + $0xb0] sm:$0x1]
        %v7855 = vld [vmem:[%s885 + $0xb4] sm:$0xe]
        %v7856 = vld [vmem:[%s885 + $0xb8] sm:$0xf]
        %v7857 = vld [vmem:[%s885 + $0xbc] sm:$0x1]
        %v7906 = vrot.slane %v7810, 5
        %v7907 = vrot.slane %v7906, 4
        %v7908 = vrot.slane %v7811, 5
        %v7909 = vsel %vm1661, %v7907, %v7908
        %v7910 = vrot.slane %v7908, 4
        %v7911 = vrot.slane %v7812, 5
        %v7912 = vsel %vm1661, %v7910, %v7911
        %v7913 = vrot.slane %v7813, 5
        %v7914 = vrot.slane %v7913, 4
        %v7915 = vrot.slane %v7814, 5
        %v7916 = vsel %vm1661, %v7914, %v7915
        %v7917 = vrot.slane %v7915, 4
        %v7918 = vrot.slane %v7815, 5
        %v7919 = vsel %vm1661, %v7917, %v7918
        %v7920 = vrot.slane %v7816, 5
        %v7921 = vrot.slane %v7920, 4
        %v7922 = vrot.slane %v7817, 5
        %v7923 = vsel %vm1661, %v7921, %v7922
        %v7924 = vrot.slane %v7922, 4
        %v7925 = vrot.slane %v7818, 5
        %v7926 = vsel %vm1661, %v7924, %v7925
        %v7927 = vrot.slane %v7819, 5
        %v7928 = vrot.slane %v7927, 4
        %v7929 = vrot.slane %v7820, 5
        %v7930 = vsel %vm1661, %v7928, %v7929
        %v7931 = vrot.slane %v7929, 4
        %v7932 = vrot.slane %v7821, 5
        %v7933 = vsel %vm1661, %v7931, %v7932
        %v7934 = vrot.slane %v7822, 5
        %v7935 = vrot.slane %v7934, 4
        %v7936 = vrot.slane %v7823, 5
        %v7937 = vsel %vm1661, %v7935, %v7936
        %v7938 = vrot.slane %v7936, 4
        %v7939 = vrot.slane %v7824, 5
        %v7940 = vsel %vm1661, %v7938, %v7939
        %v7941 = vrot.slane %v7825, 5
        %v7942 = vrot.slane %v7941, 4
        %v7943 = vrot.slane %v7826, 5
        %v7944 = vsel %vm1661, %v7942, %v7943
        %v7945 = vrot.slane %v7943, 4
        %v7946 = vrot.slane %v7827, 5
        %v7947 = vsel %vm1661, %v7945, %v7946
        %v7948 = vrot.slane %v7828, 5
        %v7949 = vrot.slane %v7948, 4
        %v7950 = vrot.slane %v7829, 5
        %v7951 = vsel %vm1661, %v7949, %v7950
        %v7952 = vrot.slane %v7950, 4
        %v7953 = vrot.slane %v7830, 5
        %v7954 = vsel %vm1661, %v7952, %v7953
        %v7955 = vrot.slane %v7831, 5
        %v7956 = vrot.slane %v7955, 4
        %v7957 = vrot.slane %v7832, 5
        %v7958 = vsel %vm1661, %v7956, %v7957
        %v7959 = vrot.slane %v7957, 4
        %v7960 = vrot.slane %v7833, 5
        %v7961 = vsel %vm1661, %v7959, %v7960
        %v7962 = vrot.slane %v7834, 5
        %v7963 = vrot.slane %v7962, 4
        %v7964 = vrot.slane %v7835, 5
        %v7965 = vsel %vm1661, %v7963, %v7964
        %v7966 = vrot.slane %v7964, 4
        %v7967 = vrot.slane %v7836, 5
        %v7968 = vsel %vm1661, %v7966, %v7967
        %v7969 = vrot.slane %v7837, 5
        %v7970 = vrot.slane %v7969, 4
        %v7971 = vrot.slane %v7838, 5
        %v7972 = vsel %vm1661, %v7970, %v7971
        %v7973 = vrot.slane %v7971, 4
        %v7974 = vrot.slane %v7839, 5
        %v7975 = vsel %vm1661, %v7973, %v7974
        %v7976 = vrot.slane %v7840, 5
        %v7977 = vrot.slane %v7976, 4
        %v7978 = vrot.slane %v7841, 5
        %v7979 = vsel %vm1661, %v7977, %v7978
        %v7980 = vrot.slane %v7978, 4
        %v7981 = vrot.slane %v7842, 5
        %v7982 = vsel %vm1661, %v7980, %v7981
        %v7983 = vrot.slane %v7843, 5
        %v7984 = vrot.slane %v7983, 4
        %v7985 = vrot.slane %v7844, 5
        %v7986 = vsel %vm1661, %v7984, %v7985
        %v7987 = vrot.slane %v7985, 4
        %v7988 = vrot.slane %v7845, 5
        %v7989 = vsel %vm1661, %v7987, %v7988
        %v7990 = vrot.slane %v7846, 5
        %v7991 = vrot.slane %v7990, 4
        %v7992 = vrot.slane %v7847, 5
        %v7993 = vsel %vm1661, %v7991, %v7992
        %v7994 = vrot.slane %v7992, 4
        %v7995 = vrot.slane %v7848, 5
        %v7996 = vsel %vm1661, %v7994, %v7995
        %v7997 = vrot.slane %v7849, 5
        %v7998 = vrot.slane %v7997, 4
        %v7999 = vrot.slane %v7850, 5
        %v8000 = vsel %vm1661, %v7998, %v7999
        %v8001 = vrot.slane %v7999, 4
        %v8002 = vrot.slane %v7851, 5
        %v8003 = vsel %vm1661, %v8001, %v8002
        %v8004 = vrot.slane %v7852, 5
        %v8005 = vrot.slane %v8004, 4
        %v8006 = vrot.slane %v7853, 5
        %v8007 = vsel %vm1661, %v8005, %v8006
        %v8008 = vrot.slane %v8006, 4
        %v8009 = vrot.slane %v7854, 5
        %v8010 = vsel %vm1661, %v8008, %v8009
        %v8011 = vrot.slane %v7855, 5
        %v8012 = vrot.slane %v8011, 4
        %v8013 = vrot.slane %v7856, 5
        %v8014 = vsel %vm1661, %v8012, %v8013
        %v8015 = vrot.slane %v8013, 4
        %v8016 = vrot.slane %v7857, 5
        %v8017 = vsel %vm1661, %v8015, %v8016
        %8050 = vst [vmem:[#allocation3 + $0x14] sm:$0xf] %v7909
        %8051 = vst [vmem:[#allocation3 + $0x38] sm:$0xf] %v7912
        %8052 = vst [vmem:[#allocation3 + $0x5c] sm:$0xf] %v7916
        %8053 = vst [vmem:[#allocation3 + $0x80] sm:$0xf] %v7919
        %8054 = vst [vmem:[#allocation3 + $0xa4] sm:$0xf] %v7923
        %8055 = vst [vmem:[#allocation3 + $0xc8] sm:$0xf] %v7926
        %8056 = vst [vmem:[#allocation3 + $0xec] sm:$0xf] %v7930
        %8057 = vst [vmem:[#allocation3 + $0x110] sm:$0xf] %v7933
        %8058 = vst [vmem:[#allocation3 + $0x134] sm:$0xf] %v7937
        %8059 = vst [vmem:[#allocation3 + $0x158] sm:$0xf] %v7940
        %8060 = vst [vmem:[#allocation3 + $0x17c] sm:$0xf] %v7944
        %8061 = vst [vmem:[#allocation3 + $0x1a0] sm:$0xf] %v7947
        %8062 = vst [vmem:[#allocation3 + $0x1c4] sm:$0xf] %v7951
        %8063 = vst [vmem:[#allocation3 + $0x1e8] sm:$0xf] %v7954
        %8064 = vst [vmem:[#allocation3 + $0x20c] sm:$0xf] %v7958
        %8065 = vst [vmem:[#allocation3 + $0x230] sm:$0xf] %v7961
        %8066 = vst [vmem:[#allocation3 + $0x254] sm:$0xf] %v7965
        %8067 = vst [vmem:[#allocation3 + $0x278] sm:$0xf] %v7968
        %8068 = vst [vmem:[#allocation3 + $0x29c] sm:$0xf] %v7972
        %8069 = vst [vmem:[#allocation3 + $0x2c0] sm:$0xf] %v7975
        %8070 = vst [vmem:[#allocation3 + $0x2e4] sm:$0xf] %v7979
        %8071 = vst [vmem:[#allocation3 + $0x308] sm:$0xf] %v7982
        %8072 = vst [vmem:[#allocation3 + $0x32c] sm:$0xf] %v7986
        %8073 = vst [vmem:[#allocation3 + $0x350] sm:$0xf] %v7989
        %8074 = vst [vmem:[#allocation3 + $0x374] sm:$0xf] %v7993
        %8075 = vst [vmem:[#allocation3 + $0x398] sm:$0xf] %v7996
        %8076 = vst [vmem:[#allocation3 + $0x3bc] sm:$0xf] %v8000
        %8077 = vst [vmem:[#allocation3 + $0x3e0] sm:$0xf] %v8003
        %8078 = vst [vmem:[#allocation3 + $0x404] sm:$0xf] %v8007
        %8079 = vst [vmem:[#allocation3 + $0x428] sm:$0xf] %v8010
        %8080 = vst [vmem:[#allocation3 + $0x44c] sm:$0xf] %v8014
        %8081 = vst [vmem:[#allocation3 + $0x470] sm:$0xf] %v8017
        %v8082 = vld [vmem:[%s2670] sm:$0xf]
        %v8083 = vld [vmem:[%s2670 + $0x4] sm:$0xf]
        %v8084 = vld [vmem:[%s2670 + $0xc] sm:$0xf]
        %v8085 = vld [vmem:[%s2670 + $0x10] sm:$0xf]
        %v8086 = vld [vmem:[%s2670 + $0x18] sm:$0xf]
        %v8087 = vld [vmem:[%s2670 + $0x1c] sm:$0xf]
        %v8088 = vld [vmem:[%s2670 + $0x24] sm:$0xf]
        %v8089 = vld [vmem:[%s2670 + $0x28] sm:$0xf]
        %v8090 = vld [vmem:[%s2670 + $0x30] sm:$0xf]
        %v8091 = vld [vmem:[%s2670 + $0x34] sm:$0xf]
        %v8092 = vld [vmem:[%s2670 + $0x3c] sm:$0xf]
        %v8093 = vld [vmem:[%s2670 + $0x40] sm:$0xf]
        %v8094 = vld [vmem:[%s2670 + $0x48] sm:$0xf]
        %v8095 = vld [vmem:[%s2670 + $0x4c] sm:$0xf]
        %v8096 = vld [vmem:[%s2670 + $0x54] sm:$0xf]
        %v8097 = vld [vmem:[%s2670 + $0x58] sm:$0xf]
        %v8098 = vld [vmem:[%s2670 + $0x60] sm:$0xf]
        %v8099 = vld [vmem:[%s2670 + $0x64] sm:$0xf]
        %v8100 = vld [vmem:[%s2670 + $0x6c] sm:$0xf]
        %v8101 = vld [vmem:[%s2670 + $0x70] sm:$0xf]
        %v8102 = vld [vmem:[%s2670 + $0x78] sm:$0xf]
        %v8103 = vld [vmem:[%s2670 + $0x7c] sm:$0xf]
        %v8104 = vld [vmem:[%s2670 + $0x84] sm:$0xf]
        %v8105 = vld [vmem:[%s2670 + $0x88] sm:$0xf]
        %v8106 = vld [vmem:[%s2670 + $0x90] sm:$0xf]
        %v8107 = vld [vmem:[%s2670 + $0x94] sm:$0xf]
        %v8108 = vld [vmem:[%s2670 + $0x9c] sm:$0xf]
        %v8109 = vld [vmem:[%s2670 + $0xa0] sm:$0xf]
        %v8110 = vld [vmem:[%s2670 + $0xa8] sm:$0xf]
        %v8111 = vld [vmem:[%s2670 + $0xac] sm:$0xf]
        %v8112 = vld [vmem:[%s2670 + $0xb4] sm:$0xf]
        %v8113 = vld [vmem:[%s2670 + $0xb8] sm:$0xf]
        %8114 = vst [vmem:[#allocation3 + $0x18] sm:$0xf] %v8082
        %8115 = vst [vmem:[#allocation3 + $0x3c] sm:$0xf] %v8083
        %8116 = vst [vmem:[#allocation3 + $0x60] sm:$0xf] %v8084
        %8117 = vst [vmem:[#allocation3 + $0x84] sm:$0xf] %v8085
        %8118 = vst [vmem:[#allocation3 + $0xa8] sm:$0xf] %v8086
        %8119 = vst [vmem:[#allocation3 + $0xcc] sm:$0xf] %v8087
        %8120 = vst [vmem:[#allocation3 + $0xf0] sm:$0xf] %v8088
        %8121 = vst [vmem:[#allocation3 + $0x114] sm:$0xf] %v8089
        %8122 = vst [vmem:[#allocation3 + $0x138] sm:$0xf] %v8090
        %8123 = vst [vmem:[#allocation3 + $0x15c] sm:$0xf] %v8091
        %8124 = vst [vmem:[#allocation3 + $0x180] sm:$0xf] %v8092
        %8125 = vst [vmem:[#allocation3 + $0x1a4] sm:$0xf] %v8093
        %8126 = vst [vmem:[#allocation3 + $0x1c8] sm:$0xf] %v8094
        %8127 = vst [vmem:[#allocation3 + $0x1ec] sm:$0xf] %v8095
        %8128 = vst [vmem:[#allocation3 + $0x210] sm:$0xf] %v8096
        %8129 = vst [vmem:[#allocation3 + $0x234] sm:$0xf] %v8097
        %8130 = vst [vmem:[#allocation3 + $0x258] sm:$0xf] %v8098
        %8131 = vst [vmem:[#allocation3 + $0x27c] sm:$0xf] %v8099
        %8132 = vst [vmem:[#allocation3 + $0x2a0] sm:$0xf] %v8100
        %8133 = vst [vmem:[#allocation3 + $0x2c4] sm:$0xf] %v8101
        %8134 = vst [vmem:[#allocation3 + $0x2e8] sm:$0xf] %v8102
        %8135 = vst [vmem:[#allocation3 + $0x30c] sm:$0xf] %v8103
        %8136 = vst [vmem:[#allocation3 + $0x330] sm:$0xf] %v8104
        %8137 = vst [vmem:[#allocation3 + $0x354] sm:$0xf] %v8105
        %8138 = vst [vmem:[#allocation3 + $0x378] sm:$0xf] %v8106
        %8139 = vst [vmem:[#allocation3 + $0x39c] sm:$0xf] %v8107
        %8140 = vst [vmem:[#allocation3 + $0x3c0] sm:$0xf] %v8108
        %8141 = vst [vmem:[#allocation3 + $0x3e4] sm:$0xf] %v8109
        %8142 = vst [vmem:[#allocation3 + $0x408] sm:$0xf] %v8110
        %8143 = vst [vmem:[#allocation3 + $0x42c] sm:$0xf] %v8111
        %8144 = vst [vmem:[#allocation3 + $0x450] sm:$0xf] %v8112
        %8145 = vst [vmem:[#allocation3 + $0x474] sm:$0xf] %v8113
        %v8146 = vld [vmem:[%s2670] sm:$0xf]
        %v8147 = vld [vmem:[%s2670 + $0x4] sm:$0xf]
        %v8148 = vld [vmem:[%s2670 + $0x8] sm:$0x1]
        %v8149 = vld [vmem:[%s2670 + $0xc] sm:$0xf]
        %v8150 = vld [vmem:[%s2670 + $0x10] sm:$0xf]
        %v8151 = vld [vmem:[%s2670 + $0x14] sm:$0x1]
        %v8152 = vld [vmem:[%s2670 + $0x18] sm:$0xf]
        %v8153 = vld [vmem:[%s2670 + $0x1c] sm:$0xf]
        %v8154 = vld [vmem:[%s2670 + $0x20] sm:$0x1]
        %v8155 = vld [vmem:[%s2670 + $0x24] sm:$0xf]
        %v8156 = vld [vmem:[%s2670 + $0x28] sm:$0xf]
        %v8157 = vld [vmem:[%s2670 + $0x2c] sm:$0x1]
        %v8158 = vld [vmem:[%s2670 + $0x30] sm:$0xf]
        %v8159 = vld [vmem:[%s2670 + $0x34] sm:$0xf]
        %v8160 = vld [vmem:[%s2670 + $0x38] sm:$0x1]
        %v8161 = vld [vmem:[%s2670 + $0x3c] sm:$0xf]
        %v8162 = vld [vmem:[%s2670 + $0x40] sm:$0xf]
        %v8163 = vld [vmem:[%s2670 + $0x44] sm:$0x1]
        %v8164 = vld [vmem:[%s2670 + $0x48] sm:$0xf]
        %v8165 = vld [vmem:[%s2670 + $0x4c] sm:$0xf]
        %v8166 = vld [vmem:[%s2670 + $0x50] sm:$0x1]
        %v8167 = vld [vmem:[%s2670 + $0x54] sm:$0xf]
        %v8168 = vld [vmem:[%s2670 + $0x58] sm:$0xf]
        %v8169 = vld [vmem:[%s2670 + $0x5c] sm:$0x1]
        %v8170 = vld [vmem:[%s2670 + $0x60] sm:$0xf]
        %v8171 = vld [vmem:[%s2670 + $0x64] sm:$0xf]
        %v8172 = vld [vmem:[%s2670 + $0x68] sm:$0x1]
        %v8173 = vld [vmem:[%s2670 + $0x6c] sm:$0xf]
        %v8174 = vld [vmem:[%s2670 + $0x70] sm:$0xf]
        %v8175 = vld [vmem:[%s2670 + $0x74] sm:$0x1]
        %v8176 = vld [vmem:[%s2670 + $0x78] sm:$0xf]
        %v8177 = vld [vmem:[%s2670 + $0x7c] sm:$0xf]
        %v8178 = vld [vmem:[%s2670 + $0x80] sm:$0x1]
        %v8179 = vld [vmem:[%s2670 + $0x84] sm:$0xf]
        %v8180 = vld [vmem:[%s2670 + $0x88] sm:$0xf]
        %v8181 = vld [vmem:[%s2670 + $0x8c] sm:$0x1]
        %v8182 = vld [vmem:[%s2670 + $0x90] sm:$0xf]
        %v8183 = vld [vmem:[%s2670 + $0x94] sm:$0xf]
        %v8184 = vld [vmem:[%s2670 + $0x98] sm:$0x1]
        %v8185 = vld [vmem:[%s2670 + $0x9c] sm:$0xf]
        %v8186 = vld [vmem:[%s2670 + $0xa0] sm:$0xf]
        %v8187 = vld [vmem:[%s2670 + $0xa4] sm:$0x1]
        %v8188 = vld [vmem:[%s2670 + $0xa8] sm:$0xf]
        %v8189 = vld [vmem:[%s2670 + $0xac] sm:$0xf]
        %v8190 = vld [vmem:[%s2670 + $0xb0] sm:$0x1]
        %v8191 = vld [vmem:[%s2670 + $0xb4] sm:$0xf]
        %v8192 = vld [vmem:[%s2670 + $0xb8] sm:$0xf]
        %v8193 = vld [vmem:[%s2670 + $0xbc] sm:$0x1]
        %v8195 = vshrl.u32 %v8146, 16
        %v8197 = vrot.slane %v8195, 4
        %v8198 = vshll.u32 %v8146, 16
        %v8200 = vrot.slane %v8198, 5
        %v8201 = vor.u32 %v8197, %v8200
        %v8202 = vrot.slane %v8201, 4
        %v8204 = vshll.u32 %v8147, 16
        %v8206 = vrot.slane %v8204, 5
        %v8207 = vsel %vm1114, %v8202, %v8206
        %v8208 = vshrl.u32 %v8147, 16
        %v8210 = vrot.slane %v8208, 4
        %v8211 = vor.u32 %v8210, %v8206
        %v8212 = vrot.slane %v8211, 4
        %v8214 = vshll.u32 %v8148, 16
        %v8216 = vrot.slane %v8214, 5
        %v8217 = vsel %vm1114, %v8212, %v8216
        %v8219 = vshrl.u32 %v8149, 16
        %v8221 = vrot.slane %v8219, 4
        %v8222 = vshll.u32 %v8149, 16
        %v8224 = vrot.slane %v8222, 5
        %v8225 = vor.u32 %v8221, %v8224
        %v8226 = vrot.slane %v8225, 4
        %v8228 = vshll.u32 %v8150, 16
        %v8230 = vrot.slane %v8228, 5
        %v8231 = vsel %vm1114, %v8226, %v8230
        %v8232 = vshrl.u32 %v8150, 16
        %v8234 = vrot.slane %v8232, 4
        %v8235 = vor.u32 %v8234, %v8230
        %v8236 = vrot.slane %v8235, 4
        %v8238 = vshll.u32 %v8151, 16
        %v8240 = vrot.slane %v8238, 5
        %v8241 = vsel %vm1114, %v8236, %v8240
        %v8243 = vshrl.u32 %v8152, 16
        %v8245 = vrot.slane %v8243, 4
        %v8246 = vshll.u32 %v8152, 16
        %v8248 = vrot.slane %v8246, 5
        %v8249 = vor.u32 %v8245, %v8248
        %v8250 = vrot.slane %v8249, 4
        %v8252 = vshll.u32 %v8153, 16
        %v8254 = vrot.slane %v8252, 5
        %v8255 = vsel %vm1114, %v8250, %v8254
        %v8256 = vshrl.u32 %v8153, 16
        %v8258 = vrot.slane %v8256, 4
        %v8259 = vor.u32 %v8258, %v8254
        %v8260 = vrot.slane %v8259, 4
        %v8262 = vshll.u32 %v8154, 16
        %v8264 = vrot.slane %v8262, 5
        %v8265 = vsel %vm1114, %v8260, %v8264
        %v8267 = vshrl.u32 %v8155, 16
        %v8269 = vrot.slane %v8267, 4
        %v8270 = vshll.u32 %v8155, 16
        %v8272 = vrot.slane %v8270, 5
        %v8273 = vor.u32 %v8269, %v8272
        %v8274 = vrot.slane %v8273, 4
        %v8276 = vshll.u32 %v8156, 16
        %v8278 = vrot.slane %v8276, 5
        %v8279 = vsel %vm1114, %v8274, %v8278
        %v8280 = vshrl.u32 %v8156, 16
        %v8282 = vrot.slane %v8280, 4
        %v8283 = vor.u32 %v8282, %v8278
        %v8284 = vrot.slane %v8283, 4
        %v8286 = vshll.u32 %v8157, 16
        %v8288 = vrot.slane %v8286, 5
        %v8289 = vsel %vm1114, %v8284, %v8288
        %v8291 = vshrl.u32 %v8158, 16
        %v8293 = vrot.slane %v8291, 4
        %v8294 = vshll.u32 %v8158, 16
        %v8296 = vrot.slane %v8294, 5
        %v8297 = vor.u32 %v8293, %v8296
        %v8298 = vrot.slane %v8297, 4
        %v8300 = vshll.u32 %v8159, 16
        %v8302 = vrot.slane %v8300, 5
        %v8303 = vsel %vm1114, %v8298, %v8302
        %v8304 = vshrl.u32 %v8159, 16
        %v8306 = vrot.slane %v8304, 4
        %v8307 = vor.u32 %v8306, %v8302
        %v8308 = vrot.slane %v8307, 4
        %v8310 = vshll.u32 %v8160, 16
        %v8312 = vrot.slane %v8310, 5
        %v8313 = vsel %vm1114, %v8308, %v8312
        %v8315 = vshrl.u32 %v8161, 16
        %v8317 = vrot.slane %v8315, 4
        %v8318 = vshll.u32 %v8161, 16
        %v8320 = vrot.slane %v8318, 5
        %v8321 = vor.u32 %v8317, %v8320
        %v8322 = vrot.slane %v8321, 4
        %v8324 = vshll.u32 %v8162, 16
        %v8326 = vrot.slane %v8324, 5
        %v8327 = vsel %vm1114, %v8322, %v8326
        %v8328 = vshrl.u32 %v8162, 16
        %v8330 = vrot.slane %v8328, 4
        %v8331 = vor.u32 %v8330, %v8326
        %v8332 = vrot.slane %v8331, 4
        %v8334 = vshll.u32 %v8163, 16
        %v8336 = vrot.slane %v8334, 5
        %v8337 = vsel %vm1114, %v8332, %v8336
        %v8339 = vshrl.u32 %v8164, 16
        %v8341 = vrot.slane %v8339, 4
        %v8342 = vshll.u32 %v8164, 16
        %v8344 = vrot.slane %v8342, 5
        %v8345 = vor.u32 %v8341, %v8344
        %v8346 = vrot.slane %v8345, 4
        %v8348 = vshll.u32 %v8165, 16
        %v8350 = vrot.slane %v8348, 5
        %v8351 = vsel %vm1114, %v8346, %v8350
        %v8352 = vshrl.u32 %v8165, 16
        %v8354 = vrot.slane %v8352, 4
        %v8355 = vor.u32 %v8354, %v8350
        %v8356 = vrot.slane %v8355, 4
        %v8358 = vshll.u32 %v8166, 16
        %v8360 = vrot.slane %v8358, 5
        %v8361 = vsel %vm1114, %v8356, %v8360
        %v8363 = vshrl.u32 %v8167, 16
        %v8365 = vrot.slane %v8363, 4
        %v8366 = vshll.u32 %v8167, 16
        %v8368 = vrot.slane %v8366, 5
        %v8369 = vor.u32 %v8365, %v8368
        %v8370 = vrot.slane %v8369, 4
        %v8372 = vshll.u32 %v8168, 16
        %v8374 = vrot.slane %v8372, 5
        %v8375 = vsel %vm1114, %v8370, %v8374
        %v8376 = vshrl.u32 %v8168, 16
        %v8378 = vrot.slane %v8376, 4
        %v8379 = vor.u32 %v8378, %v8374
        %v8380 = vrot.slane %v8379, 4
        %v8382 = vshll.u32 %v8169, 16
        %v8384 = vrot.slane %v8382, 5
        %v8385 = vsel %vm1114, %v8380, %v8384
        %v8387 = vshrl.u32 %v8170, 16
        %v8389 = vrot.slane %v8387, 4
        %v8390 = vshll.u32 %v8170, 16
        %v8392 = vrot.slane %v8390, 5
        %v8393 = vor.u32 %v8389, %v8392
        %v8394 = vrot.slane %v8393, 4
        %v8396 = vshll.u32 %v8171, 16
        %v8398 = vrot.slane %v8396, 5
        %v8399 = vsel %vm1114, %v8394, %v8398
        %v8400 = vshrl.u32 %v8171, 16
        %v8402 = vrot.slane %v8400, 4
        %v8403 = vor.u32 %v8402, %v8398
        %v8404 = vrot.slane %v8403, 4
        %v8406 = vshll.u32 %v8172, 16
        %v8408 = vrot.slane %v8406, 5
        %v8409 = vsel %vm1114, %v8404, %v8408
        %v8411 = vshrl.u32 %v8173, 16
        %v8413 = vrot.slane %v8411, 4
        %v8414 = vshll.u32 %v8173, 16
        %v8416 = vrot.slane %v8414, 5
        %v8417 = vor.u32 %v8413, %v8416
        %v8418 = vrot.slane %v8417, 4
        %v8420 = vshll.u32 %v8174, 16
        %v8422 = vrot.slane %v8420, 5
        %v8423 = vsel %vm1114, %v8418, %v8422
        %v8424 = vshrl.u32 %v8174, 16
        %v8426 = vrot.slane %v8424, 4
        %v8427 = vor.u32 %v8426, %v8422
        %v8428 = vrot.slane %v8427, 4
        %v8430 = vshll.u32 %v8175, 16
        %v8432 = vrot.slane %v8430, 5
        %v8433 = vsel %vm1114, %v8428, %v8432
        %v8435 = vshrl.u32 %v8176, 16
        %v8437 = vrot.slane %v8435, 4
        %v8438 = vshll.u32 %v8176, 16
        %v8440 = vrot.slane %v8438, 5
        %v8441 = vor.u32 %v8437, %v8440
        %v8442 = vrot.slane %v8441, 4
        %v8444 = vshll.u32 %v8177, 16
        %v8446 = vrot.slane %v8444, 5
        %v8447 = vsel %vm1114, %v8442, %v8446
        %v8448 = vshrl.u32 %v8177, 16
        %v8450 = vrot.slane %v8448, 4
        %v8451 = vor.u32 %v8450, %v8446
        %v8452 = vrot.slane %v8451, 4
        %v8454 = vshll.u32 %v8178, 16
        %v8456 = vrot.slane %v8454, 5
        %v8457 = vsel %vm1114, %v8452, %v8456
        %v8459 = vshrl.u32 %v8179, 16
        %v8461 = vrot.slane %v8459, 4
        %v8462 = vshll.u32 %v8179, 16
        %v8464 = vrot.slane %v8462, 5
        %v8465 = vor.u32 %v8461, %v8464
        %v8466 = vrot.slane %v8465, 4
        %v8468 = vshll.u32 %v8180, 16
        %v8470 = vrot.slane %v8468, 5
        %v8471 = vsel %vm1114, %v8466, %v8470
        %v8472 = vshrl.u32 %v8180, 16
        %v8474 = vrot.slane %v8472, 4
        %v8475 = vor.u32 %v8474, %v8470
        %v8476 = vrot.slane %v8475, 4
        %v8478 = vshll.u32 %v8181, 16
        %v8480 = vrot.slane %v8478, 5
        %v8481 = vsel %vm1114, %v8476, %v8480
        %v8483 = vshrl.u32 %v8182, 16
        %v8485 = vrot.slane %v8483, 4
        %v8486 = vshll.u32 %v8182, 16
        %v8488 = vrot.slane %v8486, 5
        %v8489 = vor.u32 %v8485, %v8488
        %v8490 = vrot.slane %v8489, 4
        %v8492 = vshll.u32 %v8183, 16
        %v8494 = vrot.slane %v8492, 5
        %v8495 = vsel %vm1114, %v8490, %v8494
        %v8496 = vshrl.u32 %v8183, 16
        %v8498 = vrot.slane %v8496, 4
        %v8499 = vor.u32 %v8498, %v8494
        %v8500 = vrot.slane %v8499, 4
        %v8502 = vshll.u32 %v8184, 16
        %v8504 = vrot.slane %v8502, 5
        %v8505 = vsel %vm1114, %v8500, %v8504
        %v8507 = vshrl.u32 %v8185, 16
        %v8509 = vrot.slane %v8507, 4
        %v8510 = vshll.u32 %v8185, 16
        %v8512 = vrot.slane %v8510, 5
        %v8513 = vor.u32 %v8509, %v8512
        %v8514 = vrot.slane %v8513, 4
        %v8516 = vshll.u32 %v8186, 16
        %v8518 = vrot.slane %v8516, 5
        %v8519 = vsel %vm1114, %v8514, %v8518
        %v8520 = vshrl.u32 %v8186, 16
        %v8522 = vrot.slane %v8520, 4
        %v8523 = vor.u32 %v8522, %v8518
        %v8524 = vrot.slane %v8523, 4
        %v8526 = vshll.u32 %v8187, 16
        %v8528 = vrot.slane %v8526, 5
        %v8529 = vsel %vm1114, %v8524, %v8528
        %v8531 = vshrl.u32 %v8188, 16
        %v8533 = vrot.slane %v8531, 4
        %v8534 = vshll.u32 %v8188, 16
        %v8536 = vrot.slane %v8534, 5
        %v8537 = vor.u32 %v8533, %v8536
        %v8538 = vrot.slane %v8537, 4
        %v8540 = vshll.u32 %v8189, 16
        %v8542 = vrot.slane %v8540, 5
        %v8543 = vsel %vm1114, %v8538, %v8542
        %v8544 = vshrl.u32 %v8189, 16
        %v8546 = vrot.slane %v8544, 4
        %v8547 = vor.u32 %v8546, %v8542
        %v8548 = vrot.slane %v8547, 4
        %v8550 = vshll.u32 %v8190, 16
        %v8552 = vrot.slane %v8550, 5
        %v8553 = vsel %vm1114, %v8548, %v8552
        %v8555 = vshrl.u32 %v8191, 16
        %v8557 = vrot.slane %v8555, 4
        %v8558 = vshll.u32 %v8191, 16
        %v8560 = vrot.slane %v8558, 5
        %v8561 = vor.u32 %v8557, %v8560
        %v8562 = vrot.slane %v8561, 4
        %v8564 = vshll.u32 %v8192, 16
        %v8566 = vrot.slane %v8564, 5
        %v8567 = vsel %vm1114, %v8562, %v8566
        %v8568 = vshrl.u32 %v8192, 16
        %v8570 = vrot.slane %v8568, 4
        %v8571 = vor.u32 %v8570, %v8566
        %v8572 = vrot.slane %v8571, 4
        %v8574 = vshll.u32 %v8193, 16
        %v8576 = vrot.slane %v8574, 5
        %v8577 = vsel %vm1114, %v8572, %v8576
        %8610 = vst [vmem:[#allocation3 + $0x1c] sm:$0xf] %v8207
        %8611 = vst [vmem:[#allocation3 + $0x40] sm:$0xf] %v8217
        %8612 = vst [vmem:[#allocation3 + $0x64] sm:$0xf] %v8231
        %8613 = vst [vmem:[#allocation3 + $0x88] sm:$0xf] %v8241
        %8614 = vst [vmem:[#allocation3 + $0xac] sm:$0xf] %v8255
        %8615 = vst [vmem:[#allocation3 + $0xd0] sm:$0xf] %v8265
        %8616 = vst [vmem:[#allocation3 + $0xf4] sm:$0xf] %v8279
        %8617 = vst [vmem:[#allocation3 + $0x118] sm:$0xf] %v8289
        %8618 = vst [vmem:[#allocation3 + $0x13c] sm:$0xf] %v8303
        %8619 = vst [vmem:[#allocation3 + $0x160] sm:$0xf] %v8313
        %8620 = vst [vmem:[#allocation3 + $0x184] sm:$0xf] %v8327
        %8621 = vst [vmem:[#allocation3 + $0x1a8] sm:$0xf] %v8337
        %8622 = vst [vmem:[#allocation3 + $0x1cc] sm:$0xf] %v8351
        %8623 = vst [vmem:[#allocation3 + $0x1f0] sm:$0xf] %v8361
        %8624 = vst [vmem:[#allocation3 + $0x214] sm:$0xf] %v8375
        %8625 = vst [vmem:[#allocation3 + $0x238] sm:$0xf] %v8385
        %8626 = vst [vmem:[#allocation3 + $0x25c] sm:$0xf] %v8399
        %8627 = vst [vmem:[#allocation3 + $0x280] sm:$0xf] %v8409
        %8628 = vst [vmem:[#allocation3 + $0x2a4] sm:$0xf] %v8423
        %8629 = vst [vmem:[#allocation3 + $0x2c8] sm:$0xf] %v8433
        %8630 = vst [vmem:[#allocation3 + $0x2ec] sm:$0xf] %v8447
        %8631 = vst [vmem:[#allocation3 + $0x310] sm:$0xf] %v8457
        %8632 = vst [vmem:[#allocation3 + $0x334] sm:$0xf] %v8471
        %8633 = vst [vmem:[#allocation3 + $0x358] sm:$0xf] %v8481
        %8634 = vst [vmem:[#allocation3 + $0x37c] sm:$0xf] %v8495
        %8635 = vst [vmem:[#allocation3 + $0x3a0] sm:$0xf] %v8505
        %8636 = vst [vmem:[#allocation3 + $0x3c4] sm:$0xf] %v8519
        %8637 = vst [vmem:[#allocation3 + $0x3e8] sm:$0xf] %v8529
        %8638 = vst [vmem:[#allocation3 + $0x40c] sm:$0xf] %v8543
        %8639 = vst [vmem:[#allocation3 + $0x430] sm:$0xf] %v8553
        %8640 = vst [vmem:[#allocation3 + $0x454] sm:$0xf] %v8567
        %8641 = vst [vmem:[#allocation3 + $0x478] sm:$0xf] %v8577
        %v8642 = vld [vmem:[%s2670] sm:$0xe]
        %v8643 = vld [vmem:[%s2670 + $0x4] sm:$0xf]
        %v8644 = vld [vmem:[%s2670 + $0x8] sm:$0x1]
        %v8645 = vld [vmem:[%s2670 + $0xc] sm:$0xe]
        %v8646 = vld [vmem:[%s2670 + $0x10] sm:$0xf]
        %v8647 = vld [vmem:[%s2670 + $0x14] sm:$0x1]
        %v8648 = vld [vmem:[%s2670 + $0x18] sm:$0xe]
        %v8649 = vld [vmem:[%s2670 + $0x1c] sm:$0xf]
        %v8650 = vld [vmem:[%s2670 + $0x20] sm:$0x1]
        %v8651 = vld [vmem:[%s2670 + $0x24] sm:$0xe]
        %v8652 = vld [vmem:[%s2670 + $0x28] sm:$0xf]
        %v8653 = vld [vmem:[%s2670 + $0x2c] sm:$0x1]
        %v8654 = vld [vmem:[%s2670 + $0x30] sm:$0xe]
        %v8655 = vld [vmem:[%s2670 + $0x34] sm:$0xf]
        %v8656 = vld [vmem:[%s2670 + $0x38] sm:$0x1]
        %v8657 = vld [vmem:[%s2670 + $0x3c] sm:$0xe]
        %v8658 = vld [vmem:[%s2670 + $0x40] sm:$0xf]
        %v8659 = vld [vmem:[%s2670 + $0x44] sm:$0x1]
        %v8660 = vld [vmem:[%s2670 + $0x48] sm:$0xe]
        %v8661 = vld [vmem:[%s2670 + $0x4c] sm:$0xf]
        %v8662 = vld [vmem:[%s2670 + $0x50] sm:$0x1]
        %v8663 = vld [vmem:[%s2670 + $0x54] sm:$0xe]
        %v8664 = vld [vmem:[%s2670 + $0x58] sm:$0xf]
        %v8665 = vld [vmem:[%s2670 + $0x5c] sm:$0x1]
        %v8666 = vld [vmem:[%s2670 + $0x60] sm:$0xe]
        %v8667 = vld [vmem:[%s2670 + $0x64] sm:$0xf]
        %v8668 = vld [vmem:[%s2670 + $0x68] sm:$0x1]
        %v8669 = vld [vmem:[%s2670 + $0x6c] sm:$0xe]
        %v8670 = vld [vmem:[%s2670 + $0x70] sm:$0xf]
        %v8671 = vld [vmem:[%s2670 + $0x74] sm:$0x1]
        %v8672 = vld [vmem:[%s2670 + $0x78] sm:$0xe]
        %v8673 = vld [vmem:[%s2670 + $0x7c] sm:$0xf]
        %v8674 = vld [vmem:[%s2670 + $0x80] sm:$0x1]
        %v8675 = vld [vmem:[%s2670 + $0x84] sm:$0xe]
        %v8676 = vld [vmem:[%s2670 + $0x88] sm:$0xf]
        %v8677 = vld [vmem:[%s2670 + $0x8c] sm:$0x1]
        %v8678 = vld [vmem:[%s2670 + $0x90] sm:$0xe]
        %v8679 = vld [vmem:[%s2670 + $0x94] sm:$0xf]
        %v8680 = vld [vmem:[%s2670 + $0x98] sm:$0x1]
        %v8681 = vld [vmem:[%s2670 + $0x9c] sm:$0xe]
        %v8682 = vld [vmem:[%s2670 + $0xa0] sm:$0xf]
        %v8683 = vld [vmem:[%s2670 + $0xa4] sm:$0x1]
        %v8684 = vld [vmem:[%s2670 + $0xa8] sm:$0xe]
        %v8685 = vld [vmem:[%s2670 + $0xac] sm:$0xf]
        %v8686 = vld [vmem:[%s2670 + $0xb0] sm:$0x1]
        %v8687 = vld [vmem:[%s2670 + $0xb4] sm:$0xe]
        %v8688 = vld [vmem:[%s2670 + $0xb8] sm:$0xf]
        %v8689 = vld [vmem:[%s2670 + $0xbc] sm:$0x1]
        %v8738 = vrot.slane %v8642, 5
        %v8739 = vrot.slane %v8738, 4
        %v8740 = vrot.slane %v8643, 5
        %v8741 = vsel %vm1661, %v8739, %v8740
        %v8742 = vrot.slane %v8740, 4
        %v8743 = vrot.slane %v8644, 5
        %v8744 = vsel %vm1661, %v8742, %v8743
        %v8745 = vrot.slane %v8645, 5
        %v8746 = vrot.slane %v8745, 4
        %v8747 = vrot.slane %v8646, 5
        %v8748 = vsel %vm1661, %v8746, %v8747
        %v8749 = vrot.slane %v8747, 4
        %v8750 = vrot.slane %v8647, 5
        %v8751 = vsel %vm1661, %v8749, %v8750
        %v8752 = vrot.slane %v8648, 5
        %v8753 = vrot.slane %v8752, 4
        %v8754 = vrot.slane %v8649, 5
        %v8755 = vsel %vm1661, %v8753, %v8754
        %v8756 = vrot.slane %v8754, 4
        %v8757 = vrot.slane %v8650, 5
        %v8758 = vsel %vm1661, %v8756, %v8757
        %v8759 = vrot.slane %v8651, 5
        %v8760 = vrot.slane %v8759, 4
        %v8761 = vrot.slane %v8652, 5
        %v8762 = vsel %vm1661, %v8760, %v8761
        %v8763 = vrot.slane %v8761, 4
        %v8764 = vrot.slane %v8653, 5
        %v8765 = vsel %vm1661, %v8763, %v8764
        %v8766 = vrot.slane %v8654, 5
        %v8767 = vrot.slane %v8766, 4
        %v8768 = vrot.slane %v8655, 5
        %v8769 = vsel %vm1661, %v8767, %v8768
        %v8770 = vrot.slane %v8768, 4
        %v8771 = vrot.slane %v8656, 5
        %v8772 = vsel %vm1661, %v8770, %v8771
        %v8773 = vrot.slane %v8657, 5
        %v8774 = vrot.slane %v8773, 4
        %v8775 = vrot.slane %v8658, 5
        %v8776 = vsel %vm1661, %v8774, %v8775
        %v8777 = vrot.slane %v8775, 4
        %v8778 = vrot.slane %v8659, 5
        %v8779 = vsel %vm1661, %v8777, %v8778
        %v8780 = vrot.slane %v8660, 5
        %v8781 = vrot.slane %v8780, 4
        %v8782 = vrot.slane %v8661, 5
        %v8783 = vsel %vm1661, %v8781, %v8782
        %v8784 = vrot.slane %v8782, 4
        %v8785 = vrot.slane %v8662, 5
        %v8786 = vsel %vm1661, %v8784, %v8785
        %v8787 = vrot.slane %v8663, 5
        %v8788 = vrot.slane %v8787, 4
        %v8789 = vrot.slane %v8664, 5
        %v8790 = vsel %vm1661, %v8788, %v8789
        %v8791 = vrot.slane %v8789, 4
        %v8792 = vrot.slane %v8665, 5
        %v8793 = vsel %vm1661, %v8791, %v8792
        %v8794 = vrot.slane %v8666, 5
        %v8795 = vrot.slane %v8794, 4
        %v8796 = vrot.slane %v8667, 5
        %v8797 = vsel %vm1661, %v8795, %v8796
        %v8798 = vrot.slane %v8796, 4
        %v8799 = vrot.slane %v8668, 5
        %v8800 = vsel %vm1661, %v8798, %v8799
        %v8801 = vrot.slane %v8669, 5
        %v8802 = vrot.slane %v8801, 4
        %v8803 = vrot.slane %v8670, 5
        %v8804 = vsel %vm1661, %v8802, %v8803
        %v8805 = vrot.slane %v8803, 4
        %v8806 = vrot.slane %v8671, 5
        %v8807 = vsel %vm1661, %v8805, %v8806
        %v8808 = vrot.slane %v8672, 5
        %v8809 = vrot.slane %v8808, 4
        %v8810 = vrot.slane %v8673, 5
        %v8811 = vsel %vm1661, %v8809, %v8810
        %v8812 = vrot.slane %v8810, 4
        %v8813 = vrot.slane %v8674, 5
        %v8814 = vsel %vm1661, %v8812, %v8813
        %v8815 = vrot.slane %v8675, 5
        %v8816 = vrot.slane %v8815, 4
        %v8817 = vrot.slane %v8676, 5
        %v8818 = vsel %vm1661, %v8816, %v8817
        %v8819 = vrot.slane %v8817, 4
        %v8820 = vrot.slane %v8677, 5
        %v8821 = vsel %vm1661, %v8819, %v8820
        %v8822 = vrot.slane %v8678, 5
        %v8823 = vrot.slane %v8822, 4
        %v8824 = vrot.slane %v8679, 5
        %v8825 = vsel %vm1661, %v8823, %v8824
        %v8826 = vrot.slane %v8824, 4
        %v8827 = vrot.slane %v8680, 5
        %v8828 = vsel %vm1661, %v8826, %v8827
        %v8829 = vrot.slane %v8681, 5
        %v8830 = vrot.slane %v8829, 4
        %v8831 = vrot.slane %v8682, 5
        %v8832 = vsel %vm1661, %v8830, %v8831
        %v8833 = vrot.slane %v8831, 4
        %v8834 = vrot.slane %v8683, 5
        %v8835 = vsel %vm1661, %v8833, %v8834
        %v8836 = vrot.slane %v8684, 5
        %v8837 = vrot.slane %v8836, 4
        %v8838 = vrot.slane %v8685, 5
        %v8839 = vsel %vm1661, %v8837, %v8838
        %v8840 = vrot.slane %v8838, 4
        %v8841 = vrot.slane %v8686, 5
        %v8842 = vsel %vm1661, %v8840, %v8841
        %v8843 = vrot.slane %v8687, 5
        %v8844 = vrot.slane %v8843, 4
        %v8845 = vrot.slane %v8688, 5
        %v8846 = vsel %vm1661, %v8844, %v8845
        %v8847 = vrot.slane %v8845, 4
        %v8848 = vrot.slane %v8689, 5
        %v8849 = vsel %vm1661, %v8847, %v8848
        %8882 = vst [vmem:[#allocation3 + $0x20] sm:$0xf] %v8741
        %8883 = vst [vmem:[#allocation3 + $0x44] sm:$0xf] %v8744
        %8884 = vst [vmem:[#allocation3 + $0x68] sm:$0xf] %v8748
        %8885 = vst [vmem:[#allocation3 + $0x8c] sm:$0xf] %v8751
        %8886 = vst [vmem:[#allocation3 + $0xb0] sm:$0xf] %v8755
        %8887 = vst [vmem:[#allocation3 + $0xd4] sm:$0xf] %v8758
        %8888 = vst [vmem:[#allocation3 + $0xf8] sm:$0xf] %v8762
        %8889 = vst [vmem:[#allocation3 + $0x11c] sm:$0xf] %v8765
        %8890 = vst [vmem:[#allocation3 + $0x140] sm:$0xf] %v8769
        %8891 = vst [vmem:[#allocation3 + $0x164] sm:$0xf] %v8772
        %8892 = vst [vmem:[#allocation3 + $0x188] sm:$0xf] %v8776
        %8893 = vst [vmem:[#allocation3 + $0x1ac] sm:$0xf] %v8779
        %8894 = vst [vmem:[#allocation3 + $0x1d0] sm:$0xf] %v8783
        %8895 = vst [vmem:[#allocation3 + $0x1f4] sm:$0xf] %v8786
        %8896 = vst [vmem:[#allocation3 + $0x218] sm:$0xf] %v8790
        %8897 = vst [vmem:[#allocation3 + $0x23c] sm:$0xf] %v8793
        %8898 = vst [vmem:[#allocation3 + $0x260] sm:$0xf] %v8797
        %8899 = vst [vmem:[#allocation3 + $0x284] sm:$0xf] %v8800
        %8900 = vst [vmem:[#allocation3 + $0x2a8] sm:$0xf] %v8804
        %8901 = vst [vmem:[#allocation3 + $0x2cc] sm:$0xf] %v8807
        %8902 = vst [vmem:[#allocation3 + $0x2f0] sm:$0xf] %v8811
        %8903 = vst [vmem:[#allocation3 + $0x314] sm:$0xf] %v8814
        %8904 = vst [vmem:[#allocation3 + $0x338] sm:$0xf] %v8818
        %8905 = vst [vmem:[#allocation3 + $0x35c] sm:$0xf] %v8821
        %8906 = vst [vmem:[#allocation3 + $0x380] sm:$0xf] %v8825
        %8907 = vst [vmem:[#allocation3 + $0x3a4] sm:$0xf] %v8828
        %8908 = vst [vmem:[#allocation3 + $0x3c8] sm:$0xf] %v8832
        %8909 = vst [vmem:[#allocation3 + $0x3ec] sm:$0xf] %v8835
        %8910 = vst [vmem:[#allocation3 + $0x410] sm:$0xf] %v8839
        %8911 = vst [vmem:[#allocation3 + $0x434] sm:$0xf] %v8842
        %8912 = vst [vmem:[#allocation3 + $0x458] sm:$0xf] %v8846
        %8913 = vst [vmem:[#allocation3 + $0x47c] sm:$0xf] %v8849
        %v8914 = vld [vmem:[#allocation3] sm:$0xff]
        %v8915 = vld [vmem:[#allocation3 + $0x8] sm:$0xff]
        %v8916 = vld [vmem:[#allocation3 + $0x10] sm:$0xff]
        %v8917 = vld [vmem:[#allocation3 + $0x18] sm:$0xff]
        %v8918 = vld [vmem:[#allocation3 + $0x20] sm:$0xf]
        %v8919 = vld [vmem:[#allocation3 + $0x24] sm:$0xff]
        %v8920 = vld [vmem:[#allocation3 + $0x2c] sm:$0xff]
        %v8921 = vld [vmem:[#allocation3 + $0x34] sm:$0xff]
        %v8922 = vld [vmem:[#allocation3 + $0x3c] sm:$0xff]
        %v8923 = vld [vmem:[#allocation3 + $0x44] sm:$0xf]
        %v8924 = vld [vmem:[#allocation3 + $0x48] sm:$0xff]
        %v8925 = vld [vmem:[#allocation3 + $0x50] sm:$0xff]
        %v8926 = vld [vmem:[#allocation3 + $0x58] sm:$0xff]
        %v8927 = vld [vmem:[#allocation3 + $0x60] sm:$0xff]
        %v8928 = vld [vmem:[#allocation3 + $0x68] sm:$0xf]
        %v8929 = vld [vmem:[#allocation3 + $0x6c] sm:$0xff]
        %v8930 = vld [vmem:[#allocation3 + $0x74] sm:$0xff]
        %v8931 = vld [vmem:[#allocation3 + $0x7c] sm:$0xff]
        %v8932 = vld [vmem:[#allocation3 + $0x84] sm:$0xff]
        %v8933 = vld [vmem:[#allocation3 + $0x8c] sm:$0xf]
        %v8934 = vld [vmem:[#allocation3 + $0x90] sm:$0xff]
        %v8935 = vld [vmem:[#allocation3 + $0x98] sm:$0xff]
        %v8936 = vld [vmem:[#allocation3 + $0xa0] sm:$0xff]
        %v8937 = vld [vmem:[#allocation3 + $0xa8] sm:$0xff]
        %v8938 = vld [vmem:[#allocation3 + $0xb0] sm:$0xf]
        %v8939 = vld [vmem:[#allocation3 + $0xb4] sm:$0xff]
        %v8940 = vld [vmem:[#allocation3 + $0xbc] sm:$0xff]
        %v8941 = vld [vmem:[#allocation3 + $0xc4] sm:$0xff]
        %v8942 = vld [vmem:[#allocation3 + $0xcc] sm:$0xff]
        %v8943 = vld [vmem:[#allocation3 + $0xd4] sm:$0xf]
        %v8944 = vld [vmem:[#allocation3 + $0xd8] sm:$0xff]
        %v8945 = vld [vmem:[#allocation3 + $0xe0] sm:$0xff]
        %v8946 = vld [vmem:[#allocation3 + $0xe8] sm:$0xff]
        %v8947 = vld [vmem:[#allocation3 + $0xf0] sm:$0xff]
        %v8948 = vld [vmem:[#allocation3 + $0xf8] sm:$0xf]
        %v8949 = vld [vmem:[#allocation3 + $0xfc] sm:$0xff]
        %v8950 = vld [vmem:[#allocation3 + $0x104] sm:$0xff]
        %v8951 = vld [vmem:[#allocation3 + $0x10c] sm:$0xff]
        %v8952 = vld [vmem:[#allocation3 + $0x114] sm:$0xff]
        %v8953 = vld [vmem:[#allocation3 + $0x11c] sm:$0xf]
        %v8954 = vld [vmem:[#allocation3 + $0x120] sm:$0xff]
        %v8955 = vld [vmem:[#allocation3 + $0x128] sm:$0xff]
        %v8956 = vld [vmem:[#allocation3 + $0x130] sm:$0xff]
        %v8957 = vld [vmem:[#allocation3 + $0x138] sm:$0xff]
        %v8958 = vld [vmem:[#allocation3 + $0x140] sm:$0xf]
        %v8959 = vld [vmem:[#allocation3 + $0x144] sm:$0xff]
        %v8960 = vld [vmem:[#allocation3 + $0x14c] sm:$0xff]
        %v8961 = vld [vmem:[#allocation3 + $0x154] sm:$0xff]
        %v8962 = vld [vmem:[#allocation3 + $0x15c] sm:$0xff]
        %v8963 = vld [vmem:[#allocation3 + $0x164] sm:$0xf]
        %v8964 = vld [vmem:[#allocation3 + $0x168] sm:$0xff]
        %v8965 = vld [vmem:[#allocation3 + $0x170] sm:$0xff]
        %v8966 = vld [vmem:[#allocation3 + $0x178] sm:$0xff]
        %v8967 = vld [vmem:[#allocation3 + $0x180] sm:$0xff]
        %v8968 = vld [vmem:[#allocation3 + $0x188] sm:$0xf]
        %v8969 = vld [vmem:[#allocation3 + $0x18c] sm:$0xff]
        %v8970 = vld [vmem:[#allocation3 + $0x194] sm:$0xff]
        %v8971 = vld [vmem:[#allocation3 + $0x19c] sm:$0xff]
        %v8972 = vld [vmem:[#allocation3 + $0x1a4] sm:$0xff]
        %v8973 = vld [vmem:[#allocation3 + $0x1ac] sm:$0xf]
        %v8974 = vld [vmem:[#allocation3 + $0x1b0] sm:$0xff]
        %v8975 = vld [vmem:[#allocation3 + $0x1b8] sm:$0xff]
        %v8976 = vld [vmem:[#allocation3 + $0x1c0] sm:$0xff]
        %v8977 = vld [vmem:[#allocation3 + $0x1c8] sm:$0xff]
        %v8978 = vld [vmem:[#allocation3 + $0x1d0] sm:$0xf]
        %v8979 = vld [vmem:[#allocation3 + $0x1d4] sm:$0xff]
        %v8980 = vld [vmem:[#allocation3 + $0x1dc] sm:$0xff]
        %v8981 = vld [vmem:[#allocation3 + $0x1e4] sm:$0xff]
        %v8982 = vld [vmem:[#allocation3 + $0x1ec] sm:$0xff]
        %v8983 = vld [vmem:[#allocation3 + $0x1f4] sm:$0xf]
        %v8984 = vld [vmem:[#allocation3 + $0x1f8] sm:$0xff]
        %v8985 = vld [vmem:[#allocation3 + $0x200] sm:$0xff]
        %v8986 = vld [vmem:[#allocation3 + $0x208] sm:$0xff]
        %v8987 = vld [vmem:[#allocation3 + $0x210] sm:$0xff]
        %v8988 = vld [vmem:[#allocation3 + $0x218] sm:$0xf]
        %v8989 = vld [vmem:[#allocation3 + $0x21c] sm:$0xff]
        %v8990 = vld [vmem:[#allocation3 + $0x224] sm:$0xff]
        %v8991 = vld [vmem:[#allocation3 + $0x22c] sm:$0xff]
        %v8992 = vld [vmem:[#allocation3 + $0x234] sm:$0xff]
        %v8993 = vld [vmem:[#allocation3 + $0x23c] sm:$0xf]
        %v8994 = vld [vmem:[#allocation3 + $0x240] sm:$0xff]
        %v8995 = vld [vmem:[#allocation3 + $0x248] sm:$0xff]
        %v8996 = vld [vmem:[#allocation3 + $0x250] sm:$0xff]
        %v8997 = vld [vmem:[#allocation3 + $0x258] sm:$0xff]
        %v8998 = vld [vmem:[#allocation3 + $0x260] sm:$0xf]
        %v8999 = vld [vmem:[#allocation3 + $0x264] sm:$0xff]
        %v9000 = vld [vmem:[#allocation3 + $0x26c] sm:$0xff]
        %v9001 = vld [vmem:[#allocation3 + $0x274] sm:$0xff]
        %v9002 = vld [vmem:[#allocation3 + $0x27c] sm:$0xff]
        %v9003 = vld [vmem:[#allocation3 + $0x284] sm:$0xf]
        %v9004 = vld [vmem:[#allocation3 + $0x288] sm:$0xff]
        %v9005 = vld [vmem:[#allocation3 + $0x290] sm:$0xff]
        %v9006 = vld [vmem:[#allocation3 + $0x298] sm:$0xff]
        %v9007 = vld [vmem:[#allocation3 + $0x2a0] sm:$0xff]
        %v9008 = vld [vmem:[#allocation3 + $0x2a8] sm:$0xf]
        %v9009 = vld [vmem:[#allocation3 + $0x2ac] sm:$0xff]
        %v9010 = vld [vmem:[#allocation3 + $0x2b4] sm:$0xff]
        %v9011 = vld [vmem:[#allocation3 + $0x2bc] sm:$0xff]
        %v9012 = vld [vmem:[#allocation3 + $0x2c4] sm:$0xff]
        %v9013 = vld [vmem:[#allocation3 + $0x2cc] sm:$0xf]
        %v9014 = vld [vmem:[#allocation3 + $0x2d0] sm:$0xff]
        %v9015 = vld [vmem:[#allocation3 + $0x2d8] sm:$0xff]
        %v9016 = vld [vmem:[#allocation3 + $0x2e0] sm:$0xff]
        %v9017 = vld [vmem:[#allocation3 + $0x2e8] sm:$0xff]
        %v9018 = vld [vmem:[#allocation3 + $0x2f0] sm:$0xf]
        %v9019 = vld [vmem:[#allocation3 + $0x2f4] sm:$0xff]
        %v9020 = vld [vmem:[#allocation3 + $0x2fc] sm:$0xff]
        %v9021 = vld [vmem:[#allocation3 + $0x304] sm:$0xff]
        %v9022 = vld [vmem:[#allocation3 + $0x30c] sm:$0xff]
        %v9023 = vld [vmem:[#allocation3 + $0x314] sm:$0xf]
        %v9024 = vld [vmem:[#allocation3 + $0x318] sm:$0xff]
        %v9025 = vld [vmem:[#allocation3 + $0x320] sm:$0xff]
        %v9026 = vld [vmem:[#allocation3 + $0x328] sm:$0xff]
        %v9027 = vld [vmem:[#allocation3 + $0x330] sm:$0xff]
        %v9028 = vld [vmem:[#allocation3 + $0x338] sm:$0xf]
        %v9029 = vld [vmem:[#allocation3 + $0x33c] sm:$0xff]
        %v9030 = vld [vmem:[#allocation3 + $0x344] sm:$0xff]
        %v9031 = vld [vmem:[#allocation3 + $0x34c] sm:$0xff]
        %v9032 = vld [vmem:[#allocation3 + $0x354] sm:$0xff]
        %v9033 = vld [vmem:[#allocation3 + $0x35c] sm:$0xf]
        %v9034 = vld [vmem:[#allocation3 + $0x360] sm:$0xff]
        %v9035 = vld [vmem:[#allocation3 + $0x368] sm:$0xff]
        %v9036 = vld [vmem:[#allocation3 + $0x370] sm:$0xff]
        %v9037 = vld [vmem:[#allocation3 + $0x378] sm:$0xff]
        %v9038 = vld [vmem:[#allocation3 + $0x380] sm:$0xf]
        %v9039 = vld [vmem:[#allocation3 + $0x384] sm:$0xff]
        %v9040 = vld [vmem:[#allocation3 + $0x38c] sm:$0xff]
        %v9041 = vld [vmem:[#allocation3 + $0x394] sm:$0xff]
        %v9042 = vld [vmem:[#allocation3 + $0x39c] sm:$0xff]
        %v9043 = vld [vmem:[#allocation3 + $0x3a4] sm:$0xf]
        %v9044 = vld [vmem:[#allocation3 + $0x3a8] sm:$0xff]
        %v9045 = vld [vmem:[#allocation3 + $0x3b0] sm:$0xff]
        %v9046 = vld [vmem:[#allocation3 + $0x3b8] sm:$0xff]
        %v9047 = vld [vmem:[#allocation3 + $0x3c0] sm:$0xff]
        %v9048 = vld [vmem:[#allocation3 + $0x3c8] sm:$0xf]
        %v9049 = vld [vmem:[#allocation3 + $0x3cc] sm:$0xff]
        %v9050 = vld [vmem:[#allocation3 + $0x3d4] sm:$0xff]
        %v9051 = vld [vmem:[#allocation3 + $0x3dc] sm:$0xff]
        %v9052 = vld [vmem:[#allocation3 + $0x3e4] sm:$0xff]
        %v9053 = vld [vmem:[#allocation3 + $0x3ec] sm:$0xf]
        %v9054 = vld [vmem:[#allocation3 + $0x3f0] sm:$0xff]
        %v9055 = vld [vmem:[#allocation3 + $0x3f8] sm:$0xff]
        %v9056 = vld [vmem:[#allocation3 + $0x400] sm:$0xff]
        %v9057 = vld [vmem:[#allocation3 + $0x408] sm:$0xff]
        %v9058 = vld [vmem:[#allocation3 + $0x410] sm:$0xf]
        %v9059 = vld [vmem:[#allocation3 + $0x414] sm:$0xff]
        %v9060 = vld [vmem:[#allocation3 + $0x41c] sm:$0xff]
        %v9061 = vld [vmem:[#allocation3 + $0x424] sm:$0xff]
        %v9062 = vld [vmem:[#allocation3 + $0x42c] sm:$0xff]
        %v9063 = vld [vmem:[#allocation3 + $0x434] sm:$0xf]
        %v9064 = vld [vmem:[#allocation3 + $0x438] sm:$0xff]
        %v9065 = vld [vmem:[#allocation3 + $0x440] sm:$0xff]
        %v9066 = vld [vmem:[#allocation3 + $0x448] sm:$0xff]
        %v9067 = vld [vmem:[#allocation3 + $0x450] sm:$0xff]
        %v9068 = vld [vmem:[#allocation3 + $0x458] sm:$0xf]
        %v9069 = vld [vmem:[#allocation3 + $0x45c] sm:$0xff]
        %v9070 = vld [vmem:[#allocation3 + $0x464] sm:$0xff]
        %v9071 = vld [vmem:[#allocation3 + $0x46c] sm:$0xff]
        %v9072 = vld [vmem:[#allocation3 + $0x474] sm:$0xff]
        %v9073 = vld [vmem:[#allocation3 + $0x47c] sm:$0xf]
        %v9074 = vld [vmem:[#allocation9] sm:$0xf]
        %v9075 = vld [vmem:[#allocation9 + $0x4] sm:$0xf]
        %v9076 = vld [vmem:[#allocation9 + $0x8] sm:$0xf]
        %v9077 = vld [vmem:[#allocation9 + $0xc] sm:$0xf]
        %v9078 = vld [vmem:[#allocation9 + $0x10] sm:$0xf]
        %v9079 = vld [vmem:[#allocation9 + $0x14] sm:$0xf]
        %v9080 = vld [vmem:[#allocation9 + $0x18] sm:$0xf]
        %v9081 = vld [vmem:[#allocation9 + $0x1c] sm:$0xf]
        %v9082 = vld [vmem:[#allocation9 + $0x20] sm:$0xf]
        %v9083 = vld [vmem:[#allocation9 + $0x24] sm:$0xf]
        %v9084 = vld [vmem:[#allocation9 + $0x28] sm:$0xf]
        %v9085 = vld [vmem:[#allocation9 + $0x2c] sm:$0xf]
        %v9086 = vld [vmem:[#allocation9 + $0x30] sm:$0xf]
        %v9087 = vld [vmem:[#allocation9 + $0x34] sm:$0xf]
        %v9088 = vld [vmem:[#allocation9 + $0x38] sm:$0xf]
        %v9089 = vld [vmem:[#allocation9 + $0x3c] sm:$0xf]
        %v9090 = vld [vmem:[#allocation9 + $0x40] sm:$0xf]
        %v9091 = vld [vmem:[#allocation9 + $0x44] sm:$0xf]
        %v9092 = vld [vmem:[#allocation9 + $0x48] sm:$0xf]
        %v9093 = vld [vmem:[#allocation9 + $0x4c] sm:$0xf]
        %v9094 = vld [vmem:[#allocation9 + $0x50] sm:$0xf]
        %v9095 = vld [vmem:[#allocation9 + $0x54] sm:$0xf]
        %v9096 = vld [vmem:[#allocation9 + $0x58] sm:$0xf]
        %v9097 = vld [vmem:[#allocation9 + $0x5c] sm:$0xf]
        %v9098 = vld [vmem:[#allocation9 + $0x60] sm:$0xf]
        %v9099 = vld [vmem:[#allocation9 + $0x64] sm:$0xf]
        %v9100 = vld [vmem:[#allocation9 + $0x68] sm:$0xf]
        %v9101 = vld [vmem:[#allocation9 + $0x6c] sm:$0xf]
        %v9102 = vld [vmem:[#allocation9 + $0x70] sm:$0xf]
        %v9103 = vld [vmem:[#allocation9 + $0x74] sm:$0xf]
        %v9104 = vld [vmem:[#allocation9 + $0x78] sm:$0xf]
        %v9105 = vld [vmem:[#allocation9 + $0x7c] sm:$0xf]
        %v9106 = vld [vmem:[#allocation9 + $0x80] sm:$0xf]
        %v9107 = vld [vmem:[#allocation9 + $0x84] sm:$0xf]
        %v9108 = vld [vmem:[#allocation9 + $0x88] sm:$0xf]
        %v9109 = vld [vmem:[#allocation9 + $0x8c] sm:$0xf]
        %v9110 = vld [vmem:[#allocation9 + $0x90] sm:$0xf]
        %v9111 = vld [vmem:[#allocation9 + $0x94] sm:$0xf]
        %v9112 = vld [vmem:[#allocation9 + $0x98] sm:$0xf]
        %v9113 = vld [vmem:[#allocation9 + $0x9c] sm:$0xf]
        %v9114 = vld [vmem:[#allocation9 + $0xa0] sm:$0xf]
        %v9115 = vld [vmem:[#allocation9 + $0xa4] sm:$0xf]
        %v9116 = vld [vmem:[#allocation9 + $0xa8] sm:$0xf]
        %v9117 = vld [vmem:[#allocation9 + $0xac] sm:$0xf]
        %v9118 = vld [vmem:[#allocation9 + $0xb0] sm:$0xf]
        %v9119 = vld [vmem:[#allocation9 + $0xb4] sm:$0xf]
        %v9120 = vld [vmem:[#allocation9 + $0xb8] sm:$0xf]
        %v9121 = vld [vmem:[#allocation9 + $0xbc] sm:$0xf]
        %v9122 = vld [vmem:[#allocation9 + $0xc0] sm:$0xf]
        %v9123 = vld [vmem:[#allocation9 + $0xc4] sm:$0xf]
        %v9124 = vld [vmem:[#allocation9 + $0xc8] sm:$0xf]
        %v9125 = vld [vmem:[#allocation9 + $0xcc] sm:$0xf]
        %v9126 = vld [vmem:[#allocation9 + $0xd0] sm:$0xf]
        %v9127 = vld [vmem:[#allocation9 + $0xd4] sm:$0xf]
        %v9128 = vld [vmem:[#allocation9 + $0xd8] sm:$0xf]
        %v9129 = vld [vmem:[#allocation9 + $0xdc] sm:$0xf]
        %v9130 = vld [vmem:[#allocation9 + $0xe0] sm:$0xf]
        %v9131 = vld [vmem:[#allocation9 + $0xe4] sm:$0xf]
        %v9132 = vld [vmem:[#allocation9 + $0xe8] sm:$0xf]
        %v9133 = vld [vmem:[#allocation9 + $0xec] sm:$0xf]
        %v9134 = vld [vmem:[#allocation9 + $0xf0] sm:$0xf]
        %v9135 = vld [vmem:[#allocation9 + $0xf4] sm:$0xf]
        %v9136 = vld [vmem:[#allocation9 + $0xf8] sm:$0xf]
        %v9137 = vld [vmem:[#allocation9 + $0xfc] sm:$0xf]
        %v9138 = vld [vmem:[#allocation9 + $0x100] sm:$0xf]
        %v9139 = vld [vmem:[#allocation9 + $0x104] sm:$0xf]
        %v9140 = vld [vmem:[#allocation9 + $0x108] sm:$0xf]
        %v9141 = vld [vmem:[#allocation9 + $0x10c] sm:$0xf]
        %v9142 = vld [vmem:[#allocation9 + $0x110] sm:$0xf]
        %v9143 = vld [vmem:[#allocation9 + $0x114] sm:$0xf]
        %v9144 = vld [vmem:[#allocation9 + $0x118] sm:$0xf]
        %v9145 = vld [vmem:[#allocation9 + $0x11c] sm:$0xf]
        %v9146 = vld [vmem:[#allocation9 + $0x120] sm:$0xf]
        %v9147 = vld [vmem:[#allocation9 + $0x124] sm:$0xf]
        %v9148 = vld [vmem:[#allocation9 + $0x128] sm:$0xf]
        %v9149 = vld [vmem:[#allocation9 + $0x12c] sm:$0xf]
        %v9150 = vld [vmem:[#allocation9 + $0x130] sm:$0xf]
        %v9151 = vld [vmem:[#allocation9 + $0x134] sm:$0xf]
        %v9152 = vld [vmem:[#allocation9 + $0x138] sm:$0xf]
        %v9153 = vld [vmem:[#allocation9 + $0x13c] sm:$0xf]
        %v9154 = vld [vmem:[#allocation9 + $0x140] sm:$0xf]
        %v9155 = vld [vmem:[#allocation9 + $0x144] sm:$0xf]
        %v9156 = vld [vmem:[#allocation9 + $0x148] sm:$0xf]
        %v9157 = vld [vmem:[#allocation9 + $0x14c] sm:$0xf]
        %v9158 = vld [vmem:[#allocation9 + $0x150] sm:$0xf]
        %v9159 = vld [vmem:[#allocation9 + $0x154] sm:$0xf]
        %v9160 = vld [vmem:[#allocation9 + $0x158] sm:$0xf]
        %v9161 = vld [vmem:[#allocation9 + $0x15c] sm:$0xf]
        %v9162 = vld [vmem:[#allocation9 + $0x160] sm:$0xf]
        %v9163 = vld [vmem:[#allocation9 + $0x164] sm:$0xf]
        %v9164 = vld [vmem:[#allocation9 + $0x168] sm:$0xf]
        %v9165 = vld [vmem:[#allocation9 + $0x16c] sm:$0xf]
        %v9166 = vld [vmem:[#allocation9 + $0x170] sm:$0xf]
        %v9167 = vld [vmem:[#allocation9 + $0x174] sm:$0xf]
        %v9168 = vld [vmem:[#allocation9 + $0x178] sm:$0xf]
        %v9169 = vld [vmem:[#allocation9 + $0x17c] sm:$0xf]
        %v9170 = vld [vmem:[#allocation9 + $0x180] sm:$0xf]
        %v9171 = vld [vmem:[#allocation9 + $0x184] sm:$0xf]
        %v9172 = vld [vmem:[#allocation9 + $0x188] sm:$0xf]
        %v9173 = vld [vmem:[#allocation9 + $0x18c] sm:$0xf]
        %v9174 = vld [vmem:[#allocation9 + $0x190] sm:$0xf]
        %v9175 = vld [vmem:[#allocation9 + $0x194] sm:$0xf]
        %v9176 = vld [vmem:[#allocation9 + $0x198] sm:$0xf]
        %v9177 = vld [vmem:[#allocation9 + $0x19c] sm:$0xf]
        %v9178 = vld [vmem:[#allocation9 + $0x1a0] sm:$0xf]
        %v9179 = vld [vmem:[#allocation9 + $0x1a4] sm:$0xf]
        %v9180 = vld [vmem:[#allocation9 + $0x1a8] sm:$0xf]
        %v9181 = vld [vmem:[#allocation9 + $0x1ac] sm:$0xf]
        %v9182 = vld [vmem:[#allocation9 + $0x1b0] sm:$0xf]
        %v9183 = vld [vmem:[#allocation9 + $0x1b4] sm:$0xf]
        %v9184 = vld [vmem:[#allocation9 + $0x1b8] sm:$0xf]
        %v9185 = vld [vmem:[#allocation9 + $0x1bc] sm:$0xf]
        %v9186 = vld [vmem:[#allocation9 + $0x1c0] sm:$0xf]
        %v9187 = vld [vmem:[#allocation9 + $0x1c4] sm:$0xf]
        %v9188 = vld [vmem:[#allocation9 + $0x1c8] sm:$0xf]
        %v9189 = vld [vmem:[#allocation9 + $0x1cc] sm:$0xf]
        %v9190 = vld [vmem:[#allocation9 + $0x1d0] sm:$0xf]
        %v9191 = vld [vmem:[#allocation9 + $0x1d4] sm:$0xf]
        %v9192 = vld [vmem:[#allocation9 + $0x1d8] sm:$0xf]
        %v9193 = vld [vmem:[#allocation9 + $0x1dc] sm:$0xf]
        %v9194 = vld [vmem:[#allocation9 + $0x1e0] sm:$0xf]
        %v9195 = vld [vmem:[#allocation9 + $0x1e4] sm:$0xf]
        %v9196 = vld [vmem:[#allocation9 + $0x1e8] sm:$0xf]
        %v9197 = vld [vmem:[#allocation9 + $0x1ec] sm:$0xf]
        %v9198 = vld [vmem:[#allocation9 + $0x1f0] sm:$0xf]
        %v9199 = vld [vmem:[#allocation9 + $0x1f4] sm:$0xf]
        %v9200 = vld [vmem:[#allocation9 + $0x1f8] sm:$0xf]
        %v9201 = vld [vmem:[#allocation9 + $0x1fc] sm:$0xf]
        %v9202 = vld [vmem:[#allocation9 + $0x200] sm:$0xf]
        %v9203 = vld [vmem:[#allocation9 + $0x204] sm:$0xf]
        %v9204 = vld [vmem:[#allocation9 + $0x208] sm:$0xf]
        %v9205 = vld [vmem:[#allocation9 + $0x20c] sm:$0xf]
        %v9206 = vld [vmem:[#allocation9 + $0x210] sm:$0xf]
        %v9207 = vld [vmem:[#allocation9 + $0x214] sm:$0xf]
        %v9208 = vld [vmem:[#allocation9 + $0x218] sm:$0xf]
        %v9209 = vld [vmem:[#allocation9 + $0x21c] sm:$0xf]
        %v9210 = vld [vmem:[#allocation9 + $0x220] sm:$0xf]
        %v9211 = vld [vmem:[#allocation9 + $0x224] sm:$0xf]
        %v9212 = vld [vmem:[#allocation9 + $0x228] sm:$0xf]
        %v9213 = vld [vmem:[#allocation9 + $0x22c] sm:$0xf]
        %v9214 = vld [vmem:[#allocation9 + $0x230] sm:$0xf]
        %v9215 = vld [vmem:[#allocation9 + $0x234] sm:$0xf]
        %v9216 = vld [vmem:[#allocation9 + $0x238] sm:$0xf]
        %v9217 = vld [vmem:[#allocation9 + $0x23c] sm:$0xf]
        %v9378 = vunpack.c.l.b16 %v8914
        %v9379 = vunpack.c.h.b16 %v8914
        %v9380 = vunpack.c.l.b16 %v8915
        %v9381 = vunpack.c.h.b16 %v8915
        %v9382 = vunpack.c.l.b16 %v8916
        %v9383 = vunpack.c.h.b16 %v8916
        %v9384 = vunpack.c.l.b16 %v8917
        %v9385 = vunpack.c.h.b16 %v8917
        %v9386 = vunpack.c.l.b16 %v8918
        %v9387 = vunpack.c.l.b16 %v8919
        %v9388 = vunpack.c.h.b16 %v8919
        %v9389 = vunpack.c.l.b16 %v8920
        %v9390 = vunpack.c.h.b16 %v8920
        %v9391 = vunpack.c.l.b16 %v8921
        %v9392 = vunpack.c.h.b16 %v8921
        %v9393 = vunpack.c.l.b16 %v8922
        %v9394 = vunpack.c.h.b16 %v8922
        %v9395 = vunpack.c.l.b16 %v8923
        %v9396 = vunpack.c.l.b16 %v8924
        %v9397 = vunpack.c.h.b16 %v8924
        %v9398 = vunpack.c.l.b16 %v8925
        %v9399 = vunpack.c.h.b16 %v8925
        %v9400 = vunpack.c.l.b16 %v8926
        %v9401 = vunpack.c.h.b16 %v8926
        %v9402 = vunpack.c.l.b16 %v8927
        %v9403 = vunpack.c.h.b16 %v8927
        %v9404 = vunpack.c.l.b16 %v8928
        %v9405 = vunpack.c.l.b16 %v8929
        %v9406 = vunpack.c.h.b16 %v8929
        %v9407 = vunpack.c.l.b16 %v8930
        %v9408 = vunpack.c.h.b16 %v8930
        %v9409 = vunpack.c.l.b16 %v8931
        %v9410 = vunpack.c.h.b16 %v8931
        %v9411 = vunpack.c.l.b16 %v8932
        %v9412 = vunpack.c.h.b16 %v8932
        %v9413 = vunpack.c.l.b16 %v8933
        %v9414 = vunpack.c.l.b16 %v8934
        %v9415 = vunpack.c.h.b16 %v8934
        %v9416 = vunpack.c.l.b16 %v8935
        %v9417 = vunpack.c.h.b16 %v8935
        %v9418 = vunpack.c.l.b16 %v8936
        %v9419 = vunpack.c.h.b16 %v8936
        %v9420 = vunpack.c.l.b16 %v8937
        %v9421 = vunpack.c.h.b16 %v8937
        %v9422 = vunpack.c.l.b16 %v8938
        %v9423 = vunpack.c.l.b16 %v8939
        %v9424 = vunpack.c.h.b16 %v8939
        %v9425 = vunpack.c.l.b16 %v8940
        %v9426 = vunpack.c.h.b16 %v8940
        %v9427 = vunpack.c.l.b16 %v8941
        %v9428 = vunpack.c.h.b16 %v8941
        %v9429 = vunpack.c.l.b16 %v8942
        %v9430 = vunpack.c.h.b16 %v8942
        %v9431 = vunpack.c.l.b16 %v8943
        %v9432 = vunpack.c.l.b16 %v8944
        %v9433 = vunpack.c.h.b16 %v8944
        %v9434 = vunpack.c.l.b16 %v8945
        %v9435 = vunpack.c.h.b16 %v8945
        %v9436 = vunpack.c.l.b16 %v8946
        %v9437 = vunpack.c.h.b16 %v8946
        %v9438 = vunpack.c.l.b16 %v8947
        %v9439 = vunpack.c.h.b16 %v8947
        %v9440 = vunpack.c.l.b16 %v8948
        %v9441 = vunpack.c.l.b16 %v8949
        %v9442 = vunpack.c.h.b16 %v8949
        %v9443 = vunpack.c.l.b16 %v8950
        %v9444 = vunpack.c.h.b16 %v8950
        %v9445 = vunpack.c.l.b16 %v8951
        %v9446 = vunpack.c.h.b16 %v8951
        %v9447 = vunpack.c.l.b16 %v8952
        %v9448 = vunpack.c.h.b16 %v8952
        %v9449 = vunpack.c.l.b16 %v8953
        %v9450 = vunpack.c.l.b16 %v8954
        %v9451 = vunpack.c.h.b16 %v8954
        %v9452 = vunpack.c.l.b16 %v8955
        %v9453 = vunpack.c.h.b16 %v8955
        %v9454 = vunpack.c.l.b16 %v8956
        %v9455 = vunpack.c.h.b16 %v8956
        %v9456 = vunpack.c.l.b16 %v8957
        %v9457 = vunpack.c.h.b16 %v8957
        %v9458 = vunpack.c.l.b16 %v8958
        %v9459 = vunpack.c.l.b16 %v8959
        %v9460 = vunpack.c.h.b16 %v8959
        %v9461 = vunpack.c.l.b16 %v8960
        %v9462 = vunpack.c.h.b16 %v8960
        %v9463 = vunpack.c.l.b16 %v8961
        %v9464 = vunpack.c.h.b16 %v8961
        %v9465 = vunpack.c.l.b16 %v8962
        %v9466 = vunpack.c.h.b16 %v8962
        %v9467 = vunpack.c.l.b16 %v8963
        %v9468 = vunpack.c.l.b16 %v8964
        %v9469 = vunpack.c.h.b16 %v8964
        %v9470 = vunpack.c.l.b16 %v8965
        %v9471 = vunpack.c.h.b16 %v8965
        %v9472 = vunpack.c.l.b16 %v8966
        %v9473 = vunpack.c.h.b16 %v8966
        %v9474 = vunpack.c.l.b16 %v8967
        %v9475 = vunpack.c.h.b16 %v8967
        %v9476 = vunpack.c.l.b16 %v8968
        %v9477 = vunpack.c.l.b16 %v8969
        %v9478 = vunpack.c.h.b16 %v8969
        %v9479 = vunpack.c.l.b16 %v8970
        %v9480 = vunpack.c.h.b16 %v8970
        %v9481 = vunpack.c.l.b16 %v8971
        %v9482 = vunpack.c.h.b16 %v8971
        %v9483 = vunpack.c.l.b16 %v8972
        %v9484 = vunpack.c.h.b16 %v8972
        %v9485 = vunpack.c.l.b16 %v8973
        %v9486 = vunpack.c.l.b16 %v8974
        %v9487 = vunpack.c.h.b16 %v8974
        %v9488 = vunpack.c.l.b16 %v8975
        %v9489 = vunpack.c.h.b16 %v8975
        %v9490 = vunpack.c.l.b16 %v8976
        %v9491 = vunpack.c.h.b16 %v8976
        %v9492 = vunpack.c.l.b16 %v8977
        %v9493 = vunpack.c.h.b16 %v8977
        %v9494 = vunpack.c.l.b16 %v8978
        %v9495 = vunpack.c.l.b16 %v8979
        %v9496 = vunpack.c.h.b16 %v8979
        %v9497 = vunpack.c.l.b16 %v8980
        %v9498 = vunpack.c.h.b16 %v8980
        %v9499 = vunpack.c.l.b16 %v8981
        %v9500 = vunpack.c.h.b16 %v8981
        %v9501 = vunpack.c.l.b16 %v8982
        %v9502 = vunpack.c.h.b16 %v8982
        %v9503 = vunpack.c.l.b16 %v8983
        %v9504 = vunpack.c.l.b16 %v8984
        %v9505 = vunpack.c.h.b16 %v8984
        %v9506 = vunpack.c.l.b16 %v8985
        %v9507 = vunpack.c.h.b16 %v8985
        %v9508 = vunpack.c.l.b16 %v8986
        %v9509 = vunpack.c.h.b16 %v8986
        %v9510 = vunpack.c.l.b16 %v8987
        %v9511 = vunpack.c.h.b16 %v8987
        %v9512 = vunpack.c.l.b16 %v8988
        %v9513 = vunpack.c.l.b16 %v8989
        %v9514 = vunpack.c.h.b16 %v8989
        %v9515 = vunpack.c.l.b16 %v8990
        %v9516 = vunpack.c.h.b16 %v8990
        %v9517 = vunpack.c.l.b16 %v8991
        %v9518 = vunpack.c.h.b16 %v8991
        %v9519 = vunpack.c.l.b16 %v8992
        %v9520 = vunpack.c.h.b16 %v8992
        %v9521 = vunpack.c.l.b16 %v8993
        %v9522 = vunpack.c.l.b16 %v8994
        %v9523 = vunpack.c.h.b16 %v8994
        %v9524 = vunpack.c.l.b16 %v8995
        %v9525 = vunpack.c.h.b16 %v8995
        %v9526 = vunpack.c.l.b16 %v8996
        %v9527 = vunpack.c.h.b16 %v8996
        %v9528 = vunpack.c.l.b16 %v8997
        %v9529 = vunpack.c.h.b16 %v8997
        %v9530 = vunpack.c.l.b16 %v8998
        %v9531 = vunpack.c.l.b16 %v8999
        %v9532 = vunpack.c.h.b16 %v8999
        %v9533 = vunpack.c.l.b16 %v9000
        %v9534 = vunpack.c.h.b16 %v9000
        %v9535 = vunpack.c.l.b16 %v9001
        %v9536 = vunpack.c.h.b16 %v9001
        %v9537 = vunpack.c.l.b16 %v9002
        %v9538 = vunpack.c.h.b16 %v9002
        %v9539 = vunpack.c.l.b16 %v9003
        %v9540 = vunpack.c.l.b16 %v9004
        %v9541 = vunpack.c.h.b16 %v9004
        %v9542 = vunpack.c.l.b16 %v9005
        %v9543 = vunpack.c.h.b16 %v9005
        %v9544 = vunpack.c.l.b16 %v9006
        %v9545 = vunpack.c.h.b16 %v9006
        %v9546 = vunpack.c.l.b16 %v9007
        %v9547 = vunpack.c.h.b16 %v9007
        %v9548 = vunpack.c.l.b16 %v9008
        %v9549 = vunpack.c.l.b16 %v9009
        %v9550 = vunpack.c.h.b16 %v9009
        %v9551 = vunpack.c.l.b16 %v9010
        %v9552 = vunpack.c.h.b16 %v9010
        %v9553 = vunpack.c.l.b16 %v9011
        %v9554 = vunpack.c.h.b16 %v9011
        %v9555 = vunpack.c.l.b16 %v9012
        %v9556 = vunpack.c.h.b16 %v9012
        %v9557 = vunpack.c.l.b16 %v9013
        %v9558 = vunpack.c.l.b16 %v9014
        %v9559 = vunpack.c.h.b16 %v9014
        %v9560 = vunpack.c.l.b16 %v9015
        %v9561 = vunpack.c.h.b16 %v9015
        %v9562 = vunpack.c.l.b16 %v9016
        %v9563 = vunpack.c.h.b16 %v9016
        %v9564 = vunpack.c.l.b16 %v9017
        %v9565 = vunpack.c.h.b16 %v9017
        %v9566 = vunpack.c.l.b16 %v9018
        %v9567 = vunpack.c.l.b16 %v9019
        %v9568 = vunpack.c.h.b16 %v9019
        %v9569 = vunpack.c.l.b16 %v9020
        %v9570 = vunpack.c.h.b16 %v9020
        %v9571 = vunpack.c.l.b16 %v9021
        %v9572 = vunpack.c.h.b16 %v9021
        %v9573 = vunpack.c.l.b16 %v9022
        %v9574 = vunpack.c.h.b16 %v9022
        %v9575 = vunpack.c.l.b16 %v9023
        %v9576 = vunpack.c.l.b16 %v9024
        %v9577 = vunpack.c.h.b16 %v9024
        %v9578 = vunpack.c.l.b16 %v9025
        %v9579 = vunpack.c.h.b16 %v9025
        %v9580 = vunpack.c.l.b16 %v9026
        %v9581 = vunpack.c.h.b16 %v9026
        %v9582 = vunpack.c.l.b16 %v9027
        %v9583 = vunpack.c.h.b16 %v9027
        %v9584 = vunpack.c.l.b16 %v9028
        %v9585 = vunpack.c.l.b16 %v9029
        %v9586 = vunpack.c.h.b16 %v9029
        %v9587 = vunpack.c.l.b16 %v9030
        %v9588 = vunpack.c.h.b16 %v9030
        %v9589 = vunpack.c.l.b16 %v9031
        %v9590 = vunpack.c.h.b16 %v9031
        %v9591 = vunpack.c.l.b16 %v9032
        %v9592 = vunpack.c.h.b16 %v9032
        %v9593 = vunpack.c.l.b16 %v9033
        %v9594 = vunpack.c.l.b16 %v9034
        %v9595 = vunpack.c.h.b16 %v9034
        %v9596 = vunpack.c.l.b16 %v9035
        %v9597 = vunpack.c.h.b16 %v9035
        %v9598 = vunpack.c.l.b16 %v9036
        %v9599 = vunpack.c.h.b16 %v9036
        %v9600 = vunpack.c.l.b16 %v9037
        %v9601 = vunpack.c.h.b16 %v9037
        %v9602 = vunpack.c.l.b16 %v9038
        %v9603 = vunpack.c.l.b16 %v9039
        %v9604 = vunpack.c.h.b16 %v9039
        %v9605 = vunpack.c.l.b16 %v9040
        %v9606 = vunpack.c.h.b16 %v9040
        %v9607 = vunpack.c.l.b16 %v9041
        %v9608 = vunpack.c.h.b16 %v9041
        %v9609 = vunpack.c.l.b16 %v9042
        %v9610 = vunpack.c.h.b16 %v9042
        %v9611 = vunpack.c.l.b16 %v9043
        %v9612 = vunpack.c.l.b16 %v9044
        %v9613 = vunpack.c.h.b16 %v9044
        %v9614 = vunpack.c.l.b16 %v9045
        %v9615 = vunpack.c.h.b16 %v9045
        %v9616 = vunpack.c.l.b16 %v9046
        %v9617 = vunpack.c.h.b16 %v9046
        %v9618 = vunpack.c.l.b16 %v9047
        %v9619 = vunpack.c.h.b16 %v9047
        %v9620 = vunpack.c.l.b16 %v9048
        %v9621 = vunpack.c.l.b16 %v9049
        %v9622 = vunpack.c.h.b16 %v9049
        %v9623 = vunpack.c.l.b16 %v9050
        %v9624 = vunpack.c.h.b16 %v9050
        %v9625 = vunpack.c.l.b16 %v9051
        %v9626 = vunpack.c.h.b16 %v9051
        %v9627 = vunpack.c.l.b16 %v9052
        %v9628 = vunpack.c.h.b16 %v9052
        %v9629 = vunpack.c.l.b16 %v9053
        %v9630 = vunpack.c.l.b16 %v9054
        %v9631 = vunpack.c.h.b16 %v9054
        %v9632 = vunpack.c.l.b16 %v9055
        %v9633 = vunpack.c.h.b16 %v9055
        %v9634 = vunpack.c.l.b16 %v9056
        %v9635 = vunpack.c.h.b16 %v9056
        %v9636 = vunpack.c.l.b16 %v9057
        %v9637 = vunpack.c.h.b16 %v9057
        %v9638 = vunpack.c.l.b16 %v9058
        %v9639 = vunpack.c.l.b16 %v9059
        %v9640 = vunpack.c.h.b16 %v9059
        %v9641 = vunpack.c.l.b16 %v9060
        %v9642 = vunpack.c.h.b16 %v9060
        %v9643 = vunpack.c.l.b16 %v9061
        %v9644 = vunpack.c.h.b16 %v9061
        %v9645 = vunpack.c.l.b16 %v9062
        %v9646 = vunpack.c.h.b16 %v9062
        %v9647 = vunpack.c.l.b16 %v9063
        %v9648 = vunpack.c.l.b16 %v9064
        %v9649 = vunpack.c.h.b16 %v9064
        %v9650 = vunpack.c.l.b16 %v9065
        %v9651 = vunpack.c.h.b16 %v9065
        %v9652 = vunpack.c.l.b16 %v9066
        %v9653 = vunpack.c.h.b16 %v9066
        %v9654 = vunpack.c.l.b16 %v9067
        %v9655 = vunpack.c.h.b16 %v9067
        %v9656 = vunpack.c.l.b16 %v9068
        %v9657 = vunpack.c.l.b16 %v9069
        %v9658 = vunpack.c.h.b16 %v9069
        %v9659 = vunpack.c.l.b16 %v9070
        %v9660 = vunpack.c.h.b16 %v9070
        %v9661 = vunpack.c.l.b16 %v9071
        %v9662 = vunpack.c.h.b16 %v9071
        %v9663 = vunpack.c.l.b16 %v9072
        %v9664 = vunpack.c.h.b16 %v9072
        %v9665 = vunpack.c.l.b16 %v9073
        %v9666 = vpack.c.b16 %v9387, %v9378
        %v9667 = vpack.c.b16 %v9388, %v9379
        %v9668 = vpack.c.b16 %v9389, %v9380
        %v9669 = vpack.c.b16 %v9390, %v9381
        %v9670 = vpack.c.b16 %v9391, %v9382
        %v9671 = vpack.c.b16 %v9392, %v9383
        %v9672 = vpack.c.b16 %v9393, %v9384
        %v9673 = vpack.c.b16 %v9394, %v9385
        %v9674 = vpack.c.b16 %v9395, %v9386
        %v9675 = vpack.c.b16 %v9405, %v9396
        %v9676 = vpack.c.b16 %v9406, %v9397
        %v9677 = vpack.c.b16 %v9407, %v9398
        %v9678 = vpack.c.b16 %v9408, %v9399
        %v9679 = vpack.c.b16 %v9409, %v9400
        %v9680 = vpack.c.b16 %v9410, %v9401
        %v9681 = vpack.c.b16 %v9411, %v9402
        %v9682 = vpack.c.b16 %v9412, %v9403
        %v9683 = vpack.c.b16 %v9413, %v9404
        %v9684 = vpack.c.b16 %v9423, %v9414
        %v9685 = vpack.c.b16 %v9424, %v9415
        %v9686 = vpack.c.b16 %v9425, %v9416
        %v9687 = vpack.c.b16 %v9426, %v9417
        %v9688 = vpack.c.b16 %v9427, %v9418
        %v9689 = vpack.c.b16 %v9428, %v9419
        %v9690 = vpack.c.b16 %v9429, %v9420
        %v9691 = vpack.c.b16 %v9430, %v9421
        %v9692 = vpack.c.b16 %v9431, %v9422
        %v9693 = vpack.c.b16 %v9441, %v9432
        %v9694 = vpack.c.b16 %v9442, %v9433
        %v9695 = vpack.c.b16 %v9443, %v9434
        %v9696 = vpack.c.b16 %v9444, %v9435
        %v9697 = vpack.c.b16 %v9445, %v9436
        %v9698 = vpack.c.b16 %v9446, %v9437
        %v9699 = vpack.c.b16 %v9447, %v9438
        %v9700 = vpack.c.b16 %v9448, %v9439
        %v9701 = vpack.c.b16 %v9449, %v9440
        %v9702 = vpack.c.b16 %v9459, %v9450
        %v9703 = vpack.c.b16 %v9460, %v9451
        %v9704 = vpack.c.b16 %v9461, %v9452
        %v9705 = vpack.c.b16 %v9462, %v9453
        %v9706 = vpack.c.b16 %v9463, %v9454
        %v9707 = vpack.c.b16 %v9464, %v9455
        %v9708 = vpack.c.b16 %v9465, %v9456
        %v9709 = vpack.c.b16 %v9466, %v9457
        %v9710 = vpack.c.b16 %v9467, %v9458
        %v9711 = vpack.c.b16 %v9477, %v9468
        %v9712 = vpack.c.b16 %v9478, %v9469
        %v9713 = vpack.c.b16 %v9479, %v9470
        %v9714 = vpack.c.b16 %v9480, %v9471
        %v9715 = vpack.c.b16 %v9481, %v9472
        %v9716 = vpack.c.b16 %v9482, %v9473
        %v9717 = vpack.c.b16 %v9483, %v9474
        %v9718 = vpack.c.b16 %v9484, %v9475
        %v9719 = vpack.c.b16 %v9485, %v9476
        %v9720 = vpack.c.b16 %v9495, %v9486
        %v9721 = vpack.c.b16 %v9496, %v9487
        %v9722 = vpack.c.b16 %v9497, %v9488
        %v9723 = vpack.c.b16 %v9498, %v9489
        %v9724 = vpack.c.b16 %v9499, %v9490
        %v9725 = vpack.c.b16 %v9500, %v9491
        %v9726 = vpack.c.b16 %v9501, %v9492
        %v9727 = vpack.c.b16 %v9502, %v9493
        %v9728 = vpack.c.b16 %v9503, %v9494
        %v9729 = vpack.c.b16 %v9513, %v9504
        %v9730 = vpack.c.b16 %v9514, %v9505
        %v9731 = vpack.c.b16 %v9515, %v9506
        %v9732 = vpack.c.b16 %v9516, %v9507
        %v9733 = vpack.c.b16 %v9517, %v9508
        %v9734 = vpack.c.b16 %v9518, %v9509
        %v9735 = vpack.c.b16 %v9519, %v9510
        %v9736 = vpack.c.b16 %v9520, %v9511
        %v9737 = vpack.c.b16 %v9521, %v9512
        %v9738 = vpack.c.b16 %v9531, %v9522
        %v9739 = vpack.c.b16 %v9532, %v9523
        %v9740 = vpack.c.b16 %v9533, %v9524
        %v9741 = vpack.c.b16 %v9534, %v9525
        %v9742 = vpack.c.b16 %v9535, %v9526
        %v9743 = vpack.c.b16 %v9536, %v9527
        %v9744 = vpack.c.b16 %v9537, %v9528
        %v9745 = vpack.c.b16 %v9538, %v9529
        %v9746 = vpack.c.b16 %v9539, %v9530
        %v9747 = vpack.c.b16 %v9549, %v9540
        %v9748 = vpack.c.b16 %v9550, %v9541
        %v9749 = vpack.c.b16 %v9551, %v9542
        %v9750 = vpack.c.b16 %v9552, %v9543
        %v9751 = vpack.c.b16 %v9553, %v9544
        %v9752 = vpack.c.b16 %v9554, %v9545
        %v9753 = vpack.c.b16 %v9555, %v9546
        %v9754 = vpack.c.b16 %v9556, %v9547
        %v9755 = vpack.c.b16 %v9557, %v9548
        %v9756 = vpack.c.b16 %v9567, %v9558
        %v9757 = vpack.c.b16 %v9568, %v9559
        %v9758 = vpack.c.b16 %v9569, %v9560
        %v9759 = vpack.c.b16 %v9570, %v9561
        %v9760 = vpack.c.b16 %v9571, %v9562
        %v9761 = vpack.c.b16 %v9572, %v9563
        %v9762 = vpack.c.b16 %v9573, %v9564
        %v9763 = vpack.c.b16 %v9574, %v9565
        %v9764 = vpack.c.b16 %v9575, %v9566
        %v9765 = vpack.c.b16 %v9585, %v9576
        %v9766 = vpack.c.b16 %v9586, %v9577
        %v9767 = vpack.c.b16 %v9587, %v9578
        %v9768 = vpack.c.b16 %v9588, %v9579
        %v9769 = vpack.c.b16 %v9589, %v9580
        %v9770 = vpack.c.b16 %v9590, %v9581
        %v9771 = vpack.c.b16 %v9591, %v9582
        %v9772 = vpack.c.b16 %v9592, %v9583
        %v9773 = vpack.c.b16 %v9593, %v9584
        %v9774 = vpack.c.b16 %v9603, %v9594
        %v9775 = vpack.c.b16 %v9604, %v9595
        %v9776 = vpack.c.b16 %v9605, %v9596
        %v9777 = vpack.c.b16 %v9606, %v9597
        %v9778 = vpack.c.b16 %v9607, %v9598
        %v9779 = vpack.c.b16 %v9608, %v9599
        %v9780 = vpack.c.b16 %v9609, %v9600
        %v9781 = vpack.c.b16 %v9610, %v9601
        %v9782 = vpack.c.b16 %v9611, %v9602
        %v9783 = vpack.c.b16 %v9621, %v9612
        %v9784 = vpack.c.b16 %v9622, %v9613
        %v9785 = vpack.c.b16 %v9623, %v9614
        %v9786 = vpack.c.b16 %v9624, %v9615
        %v9787 = vpack.c.b16 %v9625, %v9616
        %v9788 = vpack.c.b16 %v9626, %v9617
        %v9789 = vpack.c.b16 %v9627, %v9618
        %v9790 = vpack.c.b16 %v9628, %v9619
        %v9791 = vpack.c.b16 %v9629, %v9620
        %v9792 = vpack.c.b16 %v9639, %v9630
        %v9793 = vpack.c.b16 %v9640, %v9631
        %v9794 = vpack.c.b16 %v9641, %v9632
        %v9795 = vpack.c.b16 %v9642, %v9633
        %v9796 = vpack.c.b16 %v9643, %v9634
        %v9797 = vpack.c.b16 %v9644, %v9635
        %v9798 = vpack.c.b16 %v9645, %v9636
        %v9799 = vpack.c.b16 %v9646, %v9637
        %v9800 = vpack.c.b16 %v9647, %v9638
        %v9801 = vpack.c.b16 %v9657, %v9648
        %v9802 = vpack.c.b16 %v9658, %v9649
        %v9803 = vpack.c.b16 %v9659, %v9650
        %v9804 = vpack.c.b16 %v9660, %v9651
        %v9805 = vpack.c.b16 %v9661, %v9652
        %v9806 = vpack.c.b16 %v9662, %v9653
        %v9807 = vpack.c.b16 %v9663, %v9654
        %v9808 = vpack.c.b16 %v9664, %v9655
        %v9809 = vpack.c.b16 %v9665, %v9656
        %v10098 = vunpack.c.l.b16 %v9074
        %v10099 = vunpack.c.l.b16 %v9075
        %v10100 = vunpack.c.l.b16 %v9076
        %v10101 = vunpack.c.l.b16 %v9077
        %v10102 = vunpack.c.l.b16 %v9078
        %v10103 = vunpack.c.l.b16 %v9079
        %v10104 = vunpack.c.l.b16 %v9080
        %v10105 = vunpack.c.l.b16 %v9081
        %v10106 = vunpack.c.l.b16 %v9082
        %v10107 = vunpack.c.l.b16 %v9083
        %v10108 = vunpack.c.l.b16 %v9084
        %v10109 = vunpack.c.l.b16 %v9085
        %v10110 = vunpack.c.l.b16 %v9086
        %v10111 = vunpack.c.l.b16 %v9087
        %v10112 = vunpack.c.l.b16 %v9088
        %v10113 = vunpack.c.l.b16 %v9089
        %v10114 = vunpack.c.l.b16 %v9090
        %v10115 = vunpack.c.l.b16 %v9091
        %v10116 = vunpack.c.l.b16 %v9092
        %v10117 = vunpack.c.l.b16 %v9093
        %v10118 = vunpack.c.l.b16 %v9094
        %v10119 = vunpack.c.l.b16 %v9095
        %v10120 = vunpack.c.l.b16 %v9096
        %v10121 = vunpack.c.l.b16 %v9097
        %v10122 = vunpack.c.l.b16 %v9098
        %v10123 = vunpack.c.l.b16 %v9099
        %v10124 = vunpack.c.l.b16 %v9100
        %v10125 = vunpack.c.l.b16 %v9101
        %v10126 = vunpack.c.l.b16 %v9102
        %v10127 = vunpack.c.l.b16 %v9103
        %v10128 = vunpack.c.l.b16 %v9104
        %v10129 = vunpack.c.l.b16 %v9105
        %v10130 = vunpack.c.l.b16 %v9106
        %v10131 = vunpack.c.l.b16 %v9107
        %v10132 = vunpack.c.l.b16 %v9108
        %v10133 = vunpack.c.l.b16 %v9109
        %v10134 = vunpack.c.l.b16 %v9110
        %v10135 = vunpack.c.l.b16 %v9111
        %v10136 = vunpack.c.l.b16 %v9112
        %v10137 = vunpack.c.l.b16 %v9113
        %v10138 = vunpack.c.l.b16 %v9114
        %v10139 = vunpack.c.l.b16 %v9115
        %v10140 = vunpack.c.l.b16 %v9116
        %v10141 = vunpack.c.l.b16 %v9117
        %v10142 = vunpack.c.l.b16 %v9118
        %v10143 = vunpack.c.l.b16 %v9119
        %v10144 = vunpack.c.l.b16 %v9120
        %v10145 = vunpack.c.l.b16 %v9121
        %v10146 = vunpack.c.l.b16 %v9122
        %v10147 = vunpack.c.l.b16 %v9123
        %v10148 = vunpack.c.l.b16 %v9124
        %v10149 = vunpack.c.l.b16 %v9125
        %v10150 = vunpack.c.l.b16 %v9126
        %v10151 = vunpack.c.l.b16 %v9127
        %v10152 = vunpack.c.l.b16 %v9128
        %v10153 = vunpack.c.l.b16 %v9129
        %v10154 = vunpack.c.l.b16 %v9130
        %v10155 = vunpack.c.l.b16 %v9131
        %v10156 = vunpack.c.l.b16 %v9132
        %v10157 = vunpack.c.l.b16 %v9133
        %v10158 = vunpack.c.l.b16 %v9134
        %v10159 = vunpack.c.l.b16 %v9135
        %v10160 = vunpack.c.l.b16 %v9136
        %v10161 = vunpack.c.l.b16 %v9137
        %v10162 = vunpack.c.l.b16 %v9138
        %v10163 = vunpack.c.l.b16 %v9139
        %v10164 = vunpack.c.l.b16 %v9140
        %v10165 = vunpack.c.l.b16 %v9141
        %v10166 = vunpack.c.l.b16 %v9142
        %v10167 = vunpack.c.l.b16 %v9143
        %v10168 = vunpack.c.l.b16 %v9144
        %v10169 = vunpack.c.l.b16 %v9145
        %v10170 = vunpack.c.l.b16 %v9146
        %v10171 = vunpack.c.l.b16 %v9147
        %v10172 = vunpack.c.l.b16 %v9148
        %v10173 = vunpack.c.l.b16 %v9149
        %v10174 = vunpack.c.l.b16 %v9150
        %v10175 = vunpack.c.l.b16 %v9151
        %v10176 = vunpack.c.l.b16 %v9152
        %v10177 = vunpack.c.l.b16 %v9153
        %v10178 = vunpack.c.l.b16 %v9154
        %v10179 = vunpack.c.l.b16 %v9155
        %v10180 = vunpack.c.l.b16 %v9156
        %v10181 = vunpack.c.l.b16 %v9157
        %v10182 = vunpack.c.l.b16 %v9158
        %v10183 = vunpack.c.l.b16 %v9159
        %v10184 = vunpack.c.l.b16 %v9160
        %v10185 = vunpack.c.l.b16 %v9161
        %v10186 = vunpack.c.l.b16 %v9162
        %v10187 = vunpack.c.l.b16 %v9163
        %v10188 = vunpack.c.l.b16 %v9164
        %v10189 = vunpack.c.l.b16 %v9165
        %v10190 = vunpack.c.l.b16 %v9166
        %v10191 = vunpack.c.l.b16 %v9167
        %v10192 = vunpack.c.l.b16 %v9168
        %v10193 = vunpack.c.l.b16 %v9169
        %v10194 = vunpack.c.l.b16 %v9170
        %v10195 = vunpack.c.l.b16 %v9171
        %v10196 = vunpack.c.l.b16 %v9172
        %v10197 = vunpack.c.l.b16 %v9173
        %v10198 = vunpack.c.l.b16 %v9174
        %v10199 = vunpack.c.l.b16 %v9175
        %v10200 = vunpack.c.l.b16 %v9176
        %v10201 = vunpack.c.l.b16 %v9177
        %v10202 = vunpack.c.l.b16 %v9178
        %v10203 = vunpack.c.l.b16 %v9179
        %v10204 = vunpack.c.l.b16 %v9180
        %v10205 = vunpack.c.l.b16 %v9181
        %v10206 = vunpack.c.l.b16 %v9182
        %v10207 = vunpack.c.l.b16 %v9183
        %v10208 = vunpack.c.l.b16 %v9184
        %v10209 = vunpack.c.l.b16 %v9185
        %v10210 = vunpack.c.l.b16 %v9186
        %v10211 = vunpack.c.l.b16 %v9187
        %v10212 = vunpack.c.l.b16 %v9188
        %v10213 = vunpack.c.l.b16 %v9189
        %v10214 = vunpack.c.l.b16 %v9190
        %v10215 = vunpack.c.l.b16 %v9191
        %v10216 = vunpack.c.l.b16 %v9192
        %v10217 = vunpack.c.l.b16 %v9193
        %v10218 = vunpack.c.l.b16 %v9194
        %v10219 = vunpack.c.l.b16 %v9195
        %v10220 = vunpack.c.l.b16 %v9196
        %v10221 = vunpack.c.l.b16 %v9197
        %v10222 = vunpack.c.l.b16 %v9198
        %v10223 = vunpack.c.l.b16 %v9199
        %v10224 = vunpack.c.l.b16 %v9200
        %v10225 = vunpack.c.l.b16 %v9201
        %v10226 = vunpack.c.l.b16 %v9202
        %v10227 = vunpack.c.l.b16 %v9203
        %v10228 = vunpack.c.l.b16 %v9204
        %v10229 = vunpack.c.l.b16 %v9205
        %v10230 = vunpack.c.l.b16 %v9206
        %v10231 = vunpack.c.l.b16 %v9207
        %v10232 = vunpack.c.l.b16 %v9208
        %v10233 = vunpack.c.l.b16 %v9209
        %v10234 = vunpack.c.l.b16 %v9210
        %v10235 = vunpack.c.l.b16 %v9211
        %v10236 = vunpack.c.l.b16 %v9212
        %v10237 = vunpack.c.l.b16 %v9213
        %v10238 = vunpack.c.l.b16 %v9214
        %v10239 = vunpack.c.l.b16 %v9215
        %v10240 = vunpack.c.l.b16 %v9216
        %v10241 = vunpack.c.l.b16 %v9217
        %v10242 = vpack.c.b16 %v10099, %v10098
        %v10243 = vpack.c.b16 %v10101, %v10100
        %v10244 = vpack.c.b16 %v10103, %v10102
        %v10245 = vpack.c.b16 %v10105, %v10104
        %v10246 = vpack.c.b16 %v10107, %v10106
        %v10247 = vpack.c.b16 %v10109, %v10108
        %v10248 = vpack.c.b16 %v10111, %v10110
        %v10249 = vpack.c.b16 %v10113, %v10112
        %v10250 = vpack.c.b16 %v10115, %v10114
        %v10251 = vpack.c.b16 %v10117, %v10116
        %v10252 = vpack.c.b16 %v10119, %v10118
        %v10253 = vpack.c.b16 %v10121, %v10120
        %v10254 = vpack.c.b16 %v10123, %v10122
        %v10255 = vpack.c.b16 %v10125, %v10124
        %v10256 = vpack.c.b16 %v10127, %v10126
        %v10257 = vpack.c.b16 %v10129, %v10128
        %v10258 = vpack.c.b16 %v10131, %v10130
        %v10259 = vpack.c.b16 %v10133, %v10132
        %v10260 = vpack.c.b16 %v10135, %v10134
        %v10261 = vpack.c.b16 %v10137, %v10136
        %v10262 = vpack.c.b16 %v10139, %v10138
        %v10263 = vpack.c.b16 %v10141, %v10140
        %v10264 = vpack.c.b16 %v10143, %v10142
        %v10265 = vpack.c.b16 %v10145, %v10144
        %v10266 = vpack.c.b16 %v10147, %v10146
        %v10267 = vpack.c.b16 %v10149, %v10148
        %v10268 = vpack.c.b16 %v10151, %v10150
        %v10269 = vpack.c.b16 %v10153, %v10152
        %v10270 = vpack.c.b16 %v10155, %v10154
        %v10271 = vpack.c.b16 %v10157, %v10156
        %v10272 = vpack.c.b16 %v10159, %v10158
        %v10273 = vpack.c.b16 %v10161, %v10160
        %v10274 = vpack.c.b16 %v10163, %v10162
        %v10275 = vpack.c.b16 %v10165, %v10164
        %v10276 = vpack.c.b16 %v10167, %v10166
        %v10277 = vpack.c.b16 %v10169, %v10168
        %v10278 = vpack.c.b16 %v10171, %v10170
        %v10279 = vpack.c.b16 %v10173, %v10172
        %v10280 = vpack.c.b16 %v10175, %v10174
        %v10281 = vpack.c.b16 %v10177, %v10176
        %v10282 = vpack.c.b16 %v10179, %v10178
        %v10283 = vpack.c.b16 %v10181, %v10180
        %v10284 = vpack.c.b16 %v10183, %v10182
        %v10285 = vpack.c.b16 %v10185, %v10184
        %v10286 = vpack.c.b16 %v10187, %v10186
        %v10287 = vpack.c.b16 %v10189, %v10188
        %v10288 = vpack.c.b16 %v10191, %v10190
        %v10289 = vpack.c.b16 %v10193, %v10192
        %v10290 = vpack.c.b16 %v10195, %v10194
        %v10291 = vpack.c.b16 %v10197, %v10196
        %v10292 = vpack.c.b16 %v10199, %v10198
        %v10293 = vpack.c.b16 %v10201, %v10200
        %v10294 = vpack.c.b16 %v10203, %v10202
        %v10295 = vpack.c.b16 %v10205, %v10204
        %v10296 = vpack.c.b16 %v10207, %v10206
        %v10297 = vpack.c.b16 %v10209, %v10208
        %v10298 = vpack.c.b16 %v10211, %v10210
        %v10299 = vpack.c.b16 %v10213, %v10212
        %v10300 = vpack.c.b16 %v10215, %v10214
        %v10301 = vpack.c.b16 %v10217, %v10216
        %v10302 = vpack.c.b16 %v10219, %v10218
        %v10303 = vpack.c.b16 %v10221, %v10220
        %v10304 = vpack.c.b16 %v10223, %v10222
        %v10305 = vpack.c.b16 %v10225, %v10224
        %v10306 = vpack.c.b16 %v10227, %v10226
        %v10307 = vpack.c.b16 %v10229, %v10228
        %v10308 = vpack.c.b16 %v10231, %v10230
        %v10309 = vpack.c.b16 %v10233, %v10232
        %v10310 = vpack.c.b16 %v10235, %v10234
        %v10311 = vpack.c.b16 %v10237, %v10236
        %v10312 = vpack.c.b16 %v10239, %v10238
        %v10313 = vpack.c.b16 %v10241, %v10240
        %10386 = vmatprep.subr.bf16.mxu0 0
        %10387 = vmatpush1.bf16.msra.mxu0 %v10249
        %10388 = vmatprep.subr.bf16.mxu0 0
        %10389 = vmatpush1.bf16.msra.mxu0 %v10248
        %10390 = vmatprep.subr.bf16.mxu0 0
        %10391 = vmatpush1.bf16.msra.mxu0 %v10247
        %10392 = vmatprep.subr.bf16.mxu0 0
        %10393 = vmatpush1.bf16.msra.mxu0 %v10246
        %10394 = vmatprep.subr.bf16.mxu0 0
        %10395 = vmatpush1.bf16.msra.mxu0 %v10245
        %10396 = vmatprep.subr.bf16.mxu0 0
        %10397 = vmatpush1.bf16.msra.mxu0 %v10244
        %10398 = vmatprep.subr.bf16.mxu0 0
        %10399 = vmatpush1.bf16.msra.mxu0 %v10243
        %10400 = vmatprep.subr.bf16.mxu0 0
        %10401 = vmatpush1.bf16.msra.mxu0 %v10242
        %10402 = vmatprep.subr.bf16.mxu0 0
        %10403 = vmatpush2.bf16.msra.mxu0 %v10257
        %10404 = vmatprep.subr.bf16.mxu0 0
        %10405 = vmatpush2.bf16.msra.mxu0 %v10256
        %10406 = vmatprep.subr.bf16.mxu0 0
        %10407 = vmatpush2.bf16.msra.mxu0 %v10255
        %10408 = vmatprep.subr.bf16.mxu0 0
        %10409 = vmatpush2.bf16.msra.mxu0 %v10254
        %10410 = vmatprep.subr.bf16.mxu0 0
        %10411 = vmatpush2.bf16.msra.mxu0 %v10253
        %10412 = vmatprep.subr.bf16.mxu0 0
        %10413 = vmatpush2.bf16.msra.mxu0 %v10252
        %10414 = vmatprep.subr.bf16.mxu0 0
        %10415 = vmatpush2.bf16.msra.mxu0 %v10251
        %10416 = vmatprep.subr.bf16.mxu0 0
        %10417 = vmatpush2.bf16.msra.mxu0 %v10250
        %10418 = vmatprep.mubr.bf16.mxu0 %v9667
        %10419 = vmatmul.mubr.bf16.gmra.mxu0 %v9666
        %v10420 = vpop.f32.mrf.mxu0
        %v10421 = vadd.f32 0.0, %v10420
        %v10422 = vpop.f32.mrf.mxu0
        %v10423 = vpop.f32.mrf.mxu0
        %v10424 = vadd.f32 0.0, %v10423
        %v10425 = vpop.f32.mrf.mxu0
        %10426 = vmatprep.mubr.bf16.mxu0 %v9676
        %10427 = vmatmul.mubr.bf16.gmra.mxu0 %v9675
        %v10428 = vpop.f32.mrf.mxu0
        %v10429 = vadd.f32 0.0, %v10428
        %v10430 = vpop.f32.mrf.mxu0
        %v10431 = vpop.f32.mrf.mxu0
        %v10432 = vadd.f32 0.0, %v10431
        %v10433 = vpop.f32.mrf.mxu0
        %10434 = vmatprep.mubr.bf16.mxu0 %v9685
        %10435 = vmatmul.mubr.bf16.gmra.mxu0 %v9684
        %v10436 = vpop.f32.mrf.mxu0
        %v10437 = vadd.f32 0.0, %v10436
        %v10438 = vpop.f32.mrf.mxu0
        %v10439 = vpop.f32.mrf.mxu0
        %v10440 = vadd.f32 0.0, %v10439
        %v10441 = vpop.f32.mrf.mxu0
        %10442 = vmatprep.mubr.bf16.mxu0 %v9694
        %10443 = vmatmul.mubr.bf16.gmra.mxu0 %v9693
        %v10444 = vpop.f32.mrf.mxu0
        %v10445 = vadd.f32 0.0, %v10444
        %v10446 = vpop.f32.mrf.mxu0
        %v10447 = vpop.f32.mrf.mxu0
        %v10448 = vadd.f32 0.0, %v10447
        %v10449 = vpop.f32.mrf.mxu0
        %10450 = vmatprep.mubr.bf16.mxu0 %v9703
        %10451 = vmatmul.mubr.bf16.gmra.mxu0 %v9702
        %v10452 = vpop.f32.mrf.mxu0
        %v10453 = vadd.f32 0.0, %v10452
        %v10454 = vpop.f32.mrf.mxu0
        %v10455 = vpop.f32.mrf.mxu0
        %v10456 = vadd.f32 0.0, %v10455
        %v10457 = vpop.f32.mrf.mxu0
        %10458 = vmatprep.mubr.bf16.mxu0 %v9712
        %10459 = vmatmul.mubr.bf16.gmra.mxu0 %v9711
        %v10460 = vpop.f32.mrf.mxu0
        %v10461 = vadd.f32 0.0, %v10460
        %v10462 = vpop.f32.mrf.mxu0
        %v10463 = vpop.f32.mrf.mxu0
        %v10464 = vadd.f32 0.0, %v10463
        %v10465 = vpop.f32.mrf.mxu0
        %10466 = vmatprep.mubr.bf16.mxu0 %v9721
        %10467 = vmatmul.mubr.bf16.gmra.mxu0 %v9720
        %v10468 = vpop.f32.mrf.mxu0
        %v10469 = vadd.f32 0.0, %v10468
        %v10470 = vpop.f32.mrf.mxu0
        %v10471 = vpop.f32.mrf.mxu0
        %v10472 = vadd.f32 0.0, %v10471
        %v10473 = vpop.f32.mrf.mxu0
        %10474 = vmatprep.mubr.bf16.mxu0 %v9730
        %10475 = vmatmul.mubr.bf16.gmra.mxu0 %v9729
        %v10476 = vpop.f32.mrf.mxu0
        %v10477 = vadd.f32 0.0, %v10476
        %v10478 = vpop.f32.mrf.mxu0
        %v10479 = vpop.f32.mrf.mxu0
        %v10480 = vadd.f32 0.0, %v10479
        %v10481 = vpop.f32.mrf.mxu0
        %10482 = vmatprep.mubr.bf16.mxu0 %v9739
        %10483 = vmatmul.mubr.bf16.gmra.mxu0 %v9738
        %v10484 = vpop.f32.mrf.mxu0
        %v10485 = vadd.f32 0.0, %v10484
        %v10486 = vpop.f32.mrf.mxu0
        %v10487 = vpop.f32.mrf.mxu0
        %v10488 = vadd.f32 0.0, %v10487
        %v10489 = vpop.f32.mrf.mxu0
        %10490 = vmatprep.mubr.bf16.mxu0 %v9748
        %10491 = vmatmul.mubr.bf16.gmra.mxu0 %v9747
        %v10492 = vpop.f32.mrf.mxu0
        %v10493 = vadd.f32 0.0, %v10492
        %v10494 = vpop.f32.mrf.mxu0
        %v10495 = vpop.f32.mrf.mxu0
        %v10496 = vadd.f32 0.0, %v10495
        %v10497 = vpop.f32.mrf.mxu0
        %10498 = vmatprep.mubr.bf16.mxu0 %v9757
        %10499 = vmatmul.mubr.bf16.gmra.mxu0 %v9756
        %v10500 = vpop.f32.mrf.mxu0
        %v10501 = vadd.f32 0.0, %v10500
        %v10502 = vpop.f32.mrf.mxu0
        %v10503 = vpop.f32.mrf.mxu0
        %v10504 = vadd.f32 0.0, %v10503
        %v10505 = vpop.f32.mrf.mxu0
        %10506 = vmatprep.mubr.bf16.mxu0 %v9766
        %10507 = vmatmul.mubr.bf16.gmra.mxu0 %v9765
        %v10508 = vpop.f32.mrf.mxu0
        %v10509 = vadd.f32 0.0, %v10508
        %v10510 = vpop.f32.mrf.mxu0
        %v10511 = vpop.f32.mrf.mxu0
        %v10512 = vadd.f32 0.0, %v10511
        %v10513 = vpop.f32.mrf.mxu0
        %10514 = vmatprep.mubr.bf16.mxu0 %v9775
        %10515 = vmatmul.mubr.bf16.gmra.mxu0 %v9774
        %v10516 = vpop.f32.mrf.mxu0
        %v10517 = vadd.f32 0.0, %v10516
        %v10518 = vpop.f32.mrf.mxu0
        %v10519 = vpop.f32.mrf.mxu0
        %v10520 = vadd.f32 0.0, %v10519
        %v10521 = vpop.f32.mrf.mxu0
        %10522 = vmatprep.mubr.bf16.mxu0 %v9784
        %10523 = vmatmul.mubr.bf16.gmra.mxu0 %v9783
        %v10524 = vpop.f32.mrf.mxu0
        %v10525 = vadd.f32 0.0, %v10524
        %v10526 = vpop.f32.mrf.mxu0
        %v10527 = vpop.f32.mrf.mxu0
        %v10528 = vadd.f32 0.0, %v10527
        %v10529 = vpop.f32.mrf.mxu0
        %10530 = vmatprep.mubr.bf16.mxu0 %v9793
        %10531 = vmatmul.mubr.bf16.gmra.mxu0 %v9792
        %v10532 = vpop.f32.mrf.mxu0
        %v10533 = vadd.f32 0.0, %v10532
        %v10534 = vpop.f32.mrf.mxu0
        %v10535 = vpop.f32.mrf.mxu0
        %v10536 = vadd.f32 0.0, %v10535
        %v10537 = vpop.f32.mrf.mxu0
        %10538 = vmatprep.mubr.bf16.mxu0 %v9802
        %10539 = vmatmul.mubr.bf16.gmra.mxu0 %v9801
        %v10540 = vpop.f32.mrf.mxu0
        %v10541 = vadd.f32 0.0, %v10540
        %v10542 = vpop.f32.mrf.mxu0
        %v10543 = vpop.f32.mrf.mxu0
        %v10544 = vadd.f32 0.0, %v10543
        %v10545 = vpop.f32.mrf.mxu0
        %10546 = vdwg.mxu0
        %10547 = vmatprep.subr.bf16.mxu0 0
        %10548 = vmatpush1.bf16.msra.mxu0 %v10265
        %10549 = vmatprep.subr.bf16.mxu0 0
        %10550 = vmatpush1.bf16.msra.mxu0 %v10264
        %10551 = vmatprep.subr.bf16.mxu0 0
        %10552 = vmatpush1.bf16.msra.mxu0 %v10263
        %10553 = vmatprep.subr.bf16.mxu0 0
        %10554 = vmatpush1.bf16.msra.mxu0 %v10262
        %10555 = vmatprep.subr.bf16.mxu0 0
        %10556 = vmatpush1.bf16.msra.mxu0 %v10261
        %10557 = vmatprep.subr.bf16.mxu0 0
        %10558 = vmatpush1.bf16.msra.mxu0 %v10260
        %10559 = vmatprep.subr.bf16.mxu0 0
        %10560 = vmatpush1.bf16.msra.mxu0 %v10259
        %10561 = vmatprep.subr.bf16.mxu0 0
        %10562 = vmatpush1.bf16.msra.mxu0 %v10258
        %10563 = vmatprep.subr.bf16.mxu0 0
        %10564 = vmatpush2.bf16.msra.mxu0 %v10273
        %10565 = vmatprep.subr.bf16.mxu0 0
        %10566 = vmatpush2.bf16.msra.mxu0 %v10272
        %10567 = vmatprep.subr.bf16.mxu0 0
        %10568 = vmatpush2.bf16.msra.mxu0 %v10271
        %10569 = vmatprep.subr.bf16.mxu0 0
        %10570 = vmatpush2.bf16.msra.mxu0 %v10270
        %10571 = vmatprep.subr.bf16.mxu0 0
        %10572 = vmatpush2.bf16.msra.mxu0 %v10269
        %10573 = vmatprep.subr.bf16.mxu0 0
        %10574 = vmatpush2.bf16.msra.mxu0 %v10268
        %10575 = vmatprep.subr.bf16.mxu0 0
        %10576 = vmatpush2.bf16.msra.mxu0 %v10267
        %10577 = vmatprep.subr.bf16.mxu0 0
        %10578 = vmatpush2.bf16.msra.mxu0 %v10266
        %10579 = vmatprep.mubr.bf16.mxu0 %v9669
        %10580 = vmatmul.mubr.bf16.gmra.mxu0 %v9668
        %v10581 = vpop.f32.mrf.mxu0
        %v10582 = vadd.f32 %v10421, %v10581
        %v10583 = vpop.f32.mrf.mxu0
        %v10584 = vpop.f32.mrf.mxu0
        %v10585 = vadd.f32 %v10424, %v10584
        %v10586 = vpop.f32.mrf.mxu0
        %10587 = vmatprep.mubr.bf16.mxu0 %v9678
        %10588 = vmatmul.mubr.bf16.gmra.mxu0 %v9677
        %v10589 = vpop.f32.mrf.mxu0
        %v10590 = vadd.f32 %v10429, %v10589
        %v10591 = vpop.f32.mrf.mxu0
        %v10592 = vpop.f32.mrf.mxu0
        %v10593 = vadd.f32 %v10432, %v10592
        %v10594 = vpop.f32.mrf.mxu0
        %10595 = vmatprep.mubr.bf16.mxu0 %v9687
        %10596 = vmatmul.mubr.bf16.gmra.mxu0 %v9686
        %v10597 = vpop.f32.mrf.mxu0
        %v10598 = vadd.f32 %v10437, %v10597
        %v10599 = vpop.f32.mrf.mxu0
        %v10600 = vpop.f32.mrf.mxu0
        %v10601 = vadd.f32 %v10440, %v10600
        %v10602 = vpop.f32.mrf.mxu0
        %10603 = vmatprep.mubr.bf16.mxu0 %v9696
        %10604 = vmatmul.mubr.bf16.gmra.mxu0 %v9695
        %v10605 = vpop.f32.mrf.mxu0
        %v10606 = vadd.f32 %v10445, %v10605
        %v10607 = vpop.f32.mrf.mxu0
        %v10608 = vpop.f32.mrf.mxu0
        %v10609 = vadd.f32 %v10448, %v10608
        %v10610 = vpop.f32.mrf.mxu0
        %10611 = vmatprep.mubr.bf16.mxu0 %v9705
        %10612 = vmatmul.mubr.bf16.gmra.mxu0 %v9704
        %v10613 = vpop.f32.mrf.mxu0
        %v10614 = vadd.f32 %v10453, %v10613
        %v10615 = vpop.f32.mrf.mxu0
        %v10616 = vpop.f32.mrf.mxu0
        %v10617 = vadd.f32 %v10456, %v10616
        %v10618 = vpop.f32.mrf.mxu0
        %10619 = vmatprep.mubr.bf16.mxu0 %v9714
        %10620 = vmatmul.mubr.bf16.gmra.mxu0 %v9713
        %v10621 = vpop.f32.mrf.mxu0
        %v10622 = vadd.f32 %v10461, %v10621
        %v10623 = vpop.f32.mrf.mxu0
        %v10624 = vpop.f32.mrf.mxu0
        %v10625 = vadd.f32 %v10464, %v10624
        %v10626 = vpop.f32.mrf.mxu0
        %10627 = vmatprep.mubr.bf16.mxu0 %v9723
        %10628 = vmatmul.mubr.bf16.gmra.mxu0 %v9722
        %v10629 = vpop.f32.mrf.mxu0
        %v10630 = vadd.f32 %v10469, %v10629
        %v10631 = vpop.f32.mrf.mxu0
        %v10632 = vpop.f32.mrf.mxu0
        %v10633 = vadd.f32 %v10472, %v10632
        %v10634 = vpop.f32.mrf.mxu0
        %10635 = vmatprep.mubr.bf16.mxu0 %v9732
        %10636 = vmatmul.mubr.bf16.gmra.mxu0 %v9731
        %v10637 = vpop.f32.mrf.mxu0
        %v10638 = vadd.f32 %v10477, %v10637
        %v10639 = vpop.f32.mrf.mxu0
        %v10640 = vpop.f32.mrf.mxu0
        %v10641 = vadd.f32 %v10480, %v10640
        %v10642 = vpop.f32.mrf.mxu0
        %10643 = vmatprep.mubr.bf16.mxu0 %v9741
        %10644 = vmatmul.mubr.bf16.gmra.mxu0 %v9740
        %v10645 = vpop.f32.mrf.mxu0
        %v10646 = vadd.f32 %v10485, %v10645
        %v10647 = vpop.f32.mrf.mxu0
        %v10648 = vpop.f32.mrf.mxu0
        %v10649 = vadd.f32 %v10488, %v10648
        %v10650 = vpop.f32.mrf.mxu0
        %10651 = vmatprep.mubr.bf16.mxu0 %v9750
        %10652 = vmatmul.mubr.bf16.gmra.mxu0 %v9749
        %v10653 = vpop.f32.mrf.mxu0
        %v10654 = vadd.f32 %v10493, %v10653
        %v10655 = vpop.f32.mrf.mxu0
        %v10656 = vpop.f32.mrf.mxu0
        %v10657 = vadd.f32 %v10496, %v10656
        %v10658 = vpop.f32.mrf.mxu0
        %10659 = vmatprep.mubr.bf16.mxu0 %v9759
        %10660 = vmatmul.mubr.bf16.gmra.mxu0 %v9758
        %v10661 = vpop.f32.mrf.mxu0
        %v10662 = vadd.f32 %v10501, %v10661
        %v10663 = vpop.f32.mrf.mxu0
        %v10664 = vpop.f32.mrf.mxu0
        %v10665 = vadd.f32 %v10504, %v10664
        %v10666 = vpop.f32.mrf.mxu0
        %10667 = vmatprep.mubr.bf16.mxu0 %v9768
        %10668 = vmatmul.mubr.bf16.gmra.mxu0 %v9767
        %v10669 = vpop.f32.mrf.mxu0
        %v10670 = vadd.f32 %v10509, %v10669
        %v10671 = vpop.f32.mrf.mxu0
        %v10672 = vpop.f32.mrf.mxu0
        %v10673 = vadd.f32 %v10512, %v10672
        %v10674 = vpop.f32.mrf.mxu0
        %10675 = vmatprep.mubr.bf16.mxu0 %v9777
        %10676 = vmatmul.mubr.bf16.gmra.mxu0 %v9776
        %v10677 = vpop.f32.mrf.mxu0
        %v10678 = vadd.f32 %v10517, %v10677
        %v10679 = vpop.f32.mrf.mxu0
        %v10680 = vpop.f32.mrf.mxu0
        %v10681 = vadd.f32 %v10520, %v10680
        %v10682 = vpop.f32.mrf.mxu0
        %10683 = vmatprep.mubr.bf16.mxu0 %v9786
        %10684 = vmatmul.mubr.bf16.gmra.mxu0 %v9785
        %v10685 = vpop.f32.mrf.mxu0
        %v10686 = vadd.f32 %v10525, %v10685
        %v10687 = vpop.f32.mrf.mxu0
        %v10688 = vpop.f32.mrf.mxu0
        %v10689 = vadd.f32 %v10528, %v10688
        %v10690 = vpop.f32.mrf.mxu0
        %10691 = vmatprep.mubr.bf16.mxu0 %v9795
        %10692 = vmatmul.mubr.bf16.gmra.mxu0 %v9794
        %v10693 = vpop.f32.mrf.mxu0
        %v10694 = vadd.f32 %v10533, %v10693
        %v10695 = vpop.f32.mrf.mxu0
        %v10696 = vpop.f32.mrf.mxu0
        %v10697 = vadd.f32 %v10536, %v10696
        %v10698 = vpop.f32.mrf.mxu0
        %10699 = vmatprep.mubr.bf16.mxu0 %v9804
        %10700 = vmatmul.mubr.bf16.gmra.mxu0 %v9803
        %v10701 = vpop.f32.mrf.mxu0
        %v10702 = vadd.f32 %v10541, %v10701
        %v10703 = vpop.f32.mrf.mxu0
        %v10704 = vpop.f32.mrf.mxu0
        %v10705 = vadd.f32 %v10544, %v10704
        %v10706 = vpop.f32.mrf.mxu0
        %10707 = vdwg.mxu0
        %10708 = vmatprep.subr.bf16.mxu0 0
        %10709 = vmatpush1.bf16.msra.mxu0 %v10281
        %10710 = vmatprep.subr.bf16.mxu0 0
        %10711 = vmatpush1.bf16.msra.mxu0 %v10280
        %10712 = vmatprep.subr.bf16.mxu0 0
        %10713 = vmatpush1.bf16.msra.mxu0 %v10279
        %10714 = vmatprep.subr.bf16.mxu0 0
        %10715 = vmatpush1.bf16.msra.mxu0 %v10278
        %10716 = vmatprep.subr.bf16.mxu0 0
        %10717 = vmatpush1.bf16.msra.mxu0 %v10277
        %10718 = vmatprep.subr.bf16.mxu0 0
        %10719 = vmatpush1.bf16.msra.mxu0 %v10276
        %10720 = vmatprep.subr.bf16.mxu0 0
        %10721 = vmatpush1.bf16.msra.mxu0 %v10275
        %10722 = vmatprep.subr.bf16.mxu0 0
        %10723 = vmatpush1.bf16.msra.mxu0 %v10274
        %10724 = vmatprep.subr.bf16.mxu0 0
        %10725 = vmatpush2.bf16.msra.mxu0 %v10289
        %10726 = vmatprep.subr.bf16.mxu0 0
        %10727 = vmatpush2.bf16.msra.mxu0 %v10288
        %10728 = vmatprep.subr.bf16.mxu0 0
        %10729 = vmatpush2.bf16.msra.mxu0 %v10287
        %10730 = vmatprep.subr.bf16.mxu0 0
        %10731 = vmatpush2.bf16.msra.mxu0 %v10286
        %10732 = vmatprep.subr.bf16.mxu0 0
        %10733 = vmatpush2.bf16.msra.mxu0 %v10285
        %10734 = vmatprep.subr.bf16.mxu0 0
        %10735 = vmatpush2.bf16.msra.mxu0 %v10284
        %10736 = vmatprep.subr.bf16.mxu0 0
        %10737 = vmatpush2.bf16.msra.mxu0 %v10283
        %10738 = vmatprep.subr.bf16.mxu0 0
        %10739 = vmatpush2.bf16.msra.mxu0 %v10282
        %10740 = vmatprep.mubr.bf16.mxu0 %v9671
        %10741 = vmatmul.mubr.bf16.gmra.mxu0 %v9670
        %v10742 = vpop.f32.mrf.mxu0
        %v10743 = vadd.f32 %v10582, %v10742
        %v10744 = vpop.f32.mrf.mxu0
        %v10745 = vpop.f32.mrf.mxu0
        %v10746 = vadd.f32 %v10585, %v10745
        %v10747 = vpop.f32.mrf.mxu0
        %10748 = vmatprep.mubr.bf16.mxu0 %v9680
        %10749 = vmatmul.mubr.bf16.gmra.mxu0 %v9679
        %v10750 = vpop.f32.mrf.mxu0
        %v10751 = vadd.f32 %v10590, %v10750
        %v10752 = vpop.f32.mrf.mxu0
        %v10753 = vpop.f32.mrf.mxu0
        %v10754 = vadd.f32 %v10593, %v10753
        %v10755 = vpop.f32.mrf.mxu0
        %10756 = vmatprep.mubr.bf16.mxu0 %v9689
        %10757 = vmatmul.mubr.bf16.gmra.mxu0 %v9688
        %v10758 = vpop.f32.mrf.mxu0
        %v10759 = vadd.f32 %v10598, %v10758
        %v10760 = vpop.f32.mrf.mxu0
        %v10761 = vpop.f32.mrf.mxu0
        %v10762 = vadd.f32 %v10601, %v10761
        %v10763 = vpop.f32.mrf.mxu0
        %10764 = vmatprep.mubr.bf16.mxu0 %v9698
        %10765 = vmatmul.mubr.bf16.gmra.mxu0 %v9697
        %v10766 = vpop.f32.mrf.mxu0
        %v10767 = vadd.f32 %v10606, %v10766
        %v10768 = vpop.f32.mrf.mxu0
        %v10769 = vpop.f32.mrf.mxu0
        %v10770 = vadd.f32 %v10609, %v10769
        %v10771 = vpop.f32.mrf.mxu0
        %10772 = vmatprep.mubr.bf16.mxu0 %v9707
        %10773 = vmatmul.mubr.bf16.gmra.mxu0 %v9706
        %v10774 = vpop.f32.mrf.mxu0
        %v10775 = vadd.f32 %v10614, %v10774
        %v10776 = vpop.f32.mrf.mxu0
        %v10777 = vpop.f32.mrf.mxu0
        %v10778 = vadd.f32 %v10617, %v10777
        %v10779 = vpop.f32.mrf.mxu0
        %10780 = vmatprep.mubr.bf16.mxu0 %v9716
        %10781 = vmatmul.mubr.bf16.gmra.mxu0 %v9715
        %v10782 = vpop.f32.mrf.mxu0
        %v10783 = vadd.f32 %v10622, %v10782
        %v10784 = vpop.f32.mrf.mxu0
        %v10785 = vpop.f32.mrf.mxu0
        %v10786 = vadd.f32 %v10625, %v10785
        %v10787 = vpop.f32.mrf.mxu0
        %10788 = vmatprep.mubr.bf16.mxu0 %v9725
        %10789 = vmatmul.mubr.bf16.gmra.mxu0 %v9724
        %v10790 = vpop.f32.mrf.mxu0
        %v10791 = vadd.f32 %v10630, %v10790
        %v10792 = vpop.f32.mrf.mxu0
        %v10793 = vpop.f32.mrf.mxu0
        %v10794 = vadd.f32 %v10633, %v10793
        %v10795 = vpop.f32.mrf.mxu0
        %10796 = vmatprep.mubr.bf16.mxu0 %v9734
        %10797 = vmatmul.mubr.bf16.gmra.mxu0 %v9733
        %v10798 = vpop.f32.mrf.mxu0
        %v10799 = vadd.f32 %v10638, %v10798
        %v10800 = vpop.f32.mrf.mxu0
        %v10801 = vpop.f32.mrf.mxu0
        %v10802 = vadd.f32 %v10641, %v10801
        %v10803 = vpop.f32.mrf.mxu0
        %10804 = vmatprep.mubr.bf16.mxu0 %v9743
        %10805 = vmatmul.mubr.bf16.gmra.mxu0 %v9742
        %v10806 = vpop.f32.mrf.mxu0
        %v10807 = vadd.f32 %v10646, %v10806
        %v10808 = vpop.f32.mrf.mxu0
        %v10809 = vpop.f32.mrf.mxu0
        %v10810 = vadd.f32 %v10649, %v10809
        %v10811 = vpop.f32.mrf.mxu0
        %10812 = vmatprep.mubr.bf16.mxu0 %v9752
        %10813 = vmatmul.mubr.bf16.gmra.mxu0 %v9751
        %v10814 = vpop.f32.mrf.mxu0
        %v10815 = vadd.f32 %v10654, %v10814
        %v10816 = vpop.f32.mrf.mxu0
        %v10817 = vpop.f32.mrf.mxu0
        %v10818 = vadd.f32 %v10657, %v10817
        %v10819 = vpop.f32.mrf.mxu0
        %10820 = vmatprep.mubr.bf16.mxu0 %v9761
        %10821 = vmatmul.mubr.bf16.gmra.mxu0 %v9760
        %v10822 = vpop.f32.mrf.mxu0
        %v10823 = vadd.f32 %v10662, %v10822
        %v10824 = vpop.f32.mrf.mxu0
        %v10825 = vpop.f32.mrf.mxu0
        %v10826 = vadd.f32 %v10665, %v10825
        %v10827 = vpop.f32.mrf.mxu0
        %10828 = vmatprep.mubr.bf16.mxu0 %v9770
        %10829 = vmatmul.mubr.bf16.gmra.mxu0 %v9769
        %v10830 = vpop.f32.mrf.mxu0
        %v10831 = vadd.f32 %v10670, %v10830
        %v10832 = vpop.f32.mrf.mxu0
        %v10833 = vpop.f32.mrf.mxu0
        %v10834 = vadd.f32 %v10673, %v10833
        %v10835 = vpop.f32.mrf.mxu0
        %10836 = vmatprep.mubr.bf16.mxu0 %v9779
        %10837 = vmatmul.mubr.bf16.gmra.mxu0 %v9778
        %v10838 = vpop.f32.mrf.mxu0
        %v10839 = vadd.f32 %v10678, %v10838
        %v10840 = vpop.f32.mrf.mxu0
        %v10841 = vpop.f32.mrf.mxu0
        %v10842 = vadd.f32 %v10681, %v10841
        %v10843 = vpop.f32.mrf.mxu0
        %10844 = vmatprep.mubr.bf16.mxu0 %v9788
        %10845 = vmatmul.mubr.bf16.gmra.mxu0 %v9787
        %v10846 = vpop.f32.mrf.mxu0
        %v10847 = vadd.f32 %v10686, %v10846
        %v10848 = vpop.f32.mrf.mxu0
        %v10849 = vpop.f32.mrf.mxu0
        %v10850 = vadd.f32 %v10689, %v10849
        %v10851 = vpop.f32.mrf.mxu0
        %10852 = vmatprep.mubr.bf16.mxu0 %v9797
        %10853 = vmatmul.mubr.bf16.gmra.mxu0 %v9796
        %v10854 = vpop.f32.mrf.mxu0
        %v10855 = vadd.f32 %v10694, %v10854
        %v10856 = vpop.f32.mrf.mxu0
        %v10857 = vpop.f32.mrf.mxu0
        %v10858 = vadd.f32 %v10697, %v10857
        %v10859 = vpop.f32.mrf.mxu0
        %10860 = vmatprep.mubr.bf16.mxu0 %v9806
        %10861 = vmatmul.mubr.bf16.gmra.mxu0 %v9805
        %v10862 = vpop.f32.mrf.mxu0
        %v10863 = vadd.f32 %v10702, %v10862
        %v10864 = vpop.f32.mrf.mxu0
        %v10865 = vpop.f32.mrf.mxu0
        %v10866 = vadd.f32 %v10705, %v10865
        %v10867 = vpop.f32.mrf.mxu0
        %10868 = vdwg.mxu0
        %10869 = vmatprep.subr.bf16.mxu0 0
        %10870 = vmatpush1.bf16.msra.mxu0 %v10297
        %10871 = vmatprep.subr.bf16.mxu0 0
        %10872 = vmatpush1.bf16.msra.mxu0 %v10296
        %10873 = vmatprep.subr.bf16.mxu0 0
        %10874 = vmatpush1.bf16.msra.mxu0 %v10295
        %10875 = vmatprep.subr.bf16.mxu0 0
        %10876 = vmatpush1.bf16.msra.mxu0 %v10294
        %10877 = vmatprep.subr.bf16.mxu0 0
        %10878 = vmatpush1.bf16.msra.mxu0 %v10293
        %10879 = vmatprep.subr.bf16.mxu0 0
        %10880 = vmatpush1.bf16.msra.mxu0 %v10292
        %10881 = vmatprep.subr.bf16.mxu0 0
        %10882 = vmatpush1.bf16.msra.mxu0 %v10291
        %10883 = vmatprep.subr.bf16.mxu0 0
        %10884 = vmatpush1.bf16.msra.mxu0 %v10290
        %10885 = vmatprep.subr.bf16.mxu0 0
        %10886 = vmatpush2.bf16.msra.mxu0 %v10305
        %10887 = vmatprep.subr.bf16.mxu0 0
        %10888 = vmatpush2.bf16.msra.mxu0 %v10304
        %10889 = vmatprep.subr.bf16.mxu0 0
        %10890 = vmatpush2.bf16.msra.mxu0 %v10303
        %10891 = vmatprep.subr.bf16.mxu0 0
        %10892 = vmatpush2.bf16.msra.mxu0 %v10302
        %10893 = vmatprep.subr.bf16.mxu0 0
        %10894 = vmatpush2.bf16.msra.mxu0 %v10301
        %10895 = vmatprep.subr.bf16.mxu0 0
        %10896 = vmatpush2.bf16.msra.mxu0 %v10300
        %10897 = vmatprep.subr.bf16.mxu0 0
        %10898 = vmatpush2.bf16.msra.mxu0 %v10299
        %10899 = vmatprep.subr.bf16.mxu0 0
        %10900 = vmatpush2.bf16.msra.mxu0 %v10298
        %10901 = vmatprep.mubr.bf16.mxu0 %v9673
        %10902 = vmatmul.mubr.bf16.gmra.mxu0 %v9672
        %v10903 = vpop.f32.mrf.mxu0
        %v10904 = vadd.f32 %v10743, %v10903
        %v10905 = vpop.f32.mrf.mxu0
        %v10906 = vpop.f32.mrf.mxu0
        %v10907 = vadd.f32 %v10746, %v10906
        %v10908 = vpop.f32.mrf.mxu0
        %10909 = vmatprep.mubr.bf16.mxu0 %v9682
        %10910 = vmatmul.mubr.bf16.gmra.mxu0 %v9681
        %v10911 = vpop.f32.mrf.mxu0
        %v10912 = vadd.f32 %v10751, %v10911
        %v10913 = vpop.f32.mrf.mxu0
        %v10914 = vpop.f32.mrf.mxu0
        %v10915 = vadd.f32 %v10754, %v10914
        %v10916 = vpop.f32.mrf.mxu0
        %10917 = vmatprep.mubr.bf16.mxu0 %v9691
        %10918 = vmatmul.mubr.bf16.gmra.mxu0 %v9690
        %v10919 = vpop.f32.mrf.mxu0
        %v10920 = vadd.f32 %v10759, %v10919
        %v10921 = vpop.f32.mrf.mxu0
        %v10922 = vpop.f32.mrf.mxu0
        %v10923 = vadd.f32 %v10762, %v10922
        %v10924 = vpop.f32.mrf.mxu0
        %10925 = vmatprep.mubr.bf16.mxu0 %v9700
        %10926 = vmatmul.mubr.bf16.gmra.mxu0 %v9699
        %v10927 = vpop.f32.mrf.mxu0
        %v10928 = vadd.f32 %v10767, %v10927
        %v10929 = vpop.f32.mrf.mxu0
        %v10930 = vpop.f32.mrf.mxu0
        %v10931 = vadd.f32 %v10770, %v10930
        %v10932 = vpop.f32.mrf.mxu0
        %10933 = vmatprep.mubr.bf16.mxu0 %v9709
        %10934 = vmatmul.mubr.bf16.gmra.mxu0 %v9708
        %v10935 = vpop.f32.mrf.mxu0
        %v10936 = vadd.f32 %v10775, %v10935
        %v10937 = vpop.f32.mrf.mxu0
        %v10938 = vpop.f32.mrf.mxu0
        %v10939 = vadd.f32 %v10778, %v10938
        %v10940 = vpop.f32.mrf.mxu0
        %10941 = vmatprep.mubr.bf16.mxu0 %v9718
        %10942 = vmatmul.mubr.bf16.gmra.mxu0 %v9717
        %v10943 = vpop.f32.mrf.mxu0
        %v10944 = vadd.f32 %v10783, %v10943
        %v10945 = vpop.f32.mrf.mxu0
        %v10946 = vpop.f32.mrf.mxu0
        %v10947 = vadd.f32 %v10786, %v10946
        %v10948 = vpop.f32.mrf.mxu0
        %10949 = vmatprep.mubr.bf16.mxu0 %v9727
        %10950 = vmatmul.mubr.bf16.gmra.mxu0 %v9726
        %v10951 = vpop.f32.mrf.mxu0
        %v10952 = vadd.f32 %v10791, %v10951
        %v10953 = vpop.f32.mrf.mxu0
        %v10954 = vpop.f32.mrf.mxu0
        %v10955 = vadd.f32 %v10794, %v10954
        %v10956 = vpop.f32.mrf.mxu0
        %10957 = vmatprep.mubr.bf16.mxu0 %v9736
        %10958 = vmatmul.mubr.bf16.gmra.mxu0 %v9735
        %v10959 = vpop.f32.mrf.mxu0
        %v10960 = vadd.f32 %v10799, %v10959
        %v10961 = vpop.f32.mrf.mxu0
        %v10962 = vpop.f32.mrf.mxu0
        %v10963 = vadd.f32 %v10802, %v10962
        %v10964 = vpop.f32.mrf.mxu0
        %10965 = vmatprep.mubr.bf16.mxu0 %v9745
        %10966 = vmatmul.mubr.bf16.gmra.mxu0 %v9744
        %v10967 = vpop.f32.mrf.mxu0
        %v10968 = vadd.f32 %v10807, %v10967
        %v10969 = vpop.f32.mrf.mxu0
        %v10970 = vpop.f32.mrf.mxu0
        %v10971 = vadd.f32 %v10810, %v10970
        %v10972 = vpop.f32.mrf.mxu0
        %10973 = vmatprep.mubr.bf16.mxu0 %v9754
        %10974 = vmatmul.mubr.bf16.gmra.mxu0 %v9753
        %v10975 = vpop.f32.mrf.mxu0
        %v10976 = vadd.f32 %v10815, %v10975
        %v10977 = vpop.f32.mrf.mxu0
        %v10978 = vpop.f32.mrf.mxu0
        %v10979 = vadd.f32 %v10818, %v10978
        %v10980 = vpop.f32.mrf.mxu0
        %10981 = vmatprep.mubr.bf16.mxu0 %v9763
        %10982 = vmatmul.mubr.bf16.gmra.mxu0 %v9762
        %v10983 = vpop.f32.mrf.mxu0
        %v10984 = vadd.f32 %v10823, %v10983
        %v10985 = vpop.f32.mrf.mxu0
        %v10986 = vpop.f32.mrf.mxu0
        %v10987 = vadd.f32 %v10826, %v10986
        %v10988 = vpop.f32.mrf.mxu0
        %10989 = vmatprep.mubr.bf16.mxu0 %v9772
        %10990 = vmatmul.mubr.bf16.gmra.mxu0 %v9771
        %v10991 = vpop.f32.mrf.mxu0
        %v10992 = vadd.f32 %v10831, %v10991
        %v10993 = vpop.f32.mrf.mxu0
        %v10994 = vpop.f32.mrf.mxu0
        %v10995 = vadd.f32 %v10834, %v10994
        %v10996 = vpop.f32.mrf.mxu0
        %10997 = vmatprep.mubr.bf16.mxu0 %v9781
        %10998 = vmatmul.mubr.bf16.gmra.mxu0 %v9780
        %v10999 = vpop.f32.mrf.mxu0
        %v11000 = vadd.f32 %v10839, %v10999
        %v11001 = vpop.f32.mrf.mxu0
        %v11002 = vpop.f32.mrf.mxu0
        %v11003 = vadd.f32 %v10842, %v11002
        %v11004 = vpop.f32.mrf.mxu0
        %11005 = vmatprep.mubr.bf16.mxu0 %v9790
        %11006 = vmatmul.mubr.bf16.gmra.mxu0 %v9789
        %v11007 = vpop.f32.mrf.mxu0
        %v11008 = vadd.f32 %v10847, %v11007
        %v11009 = vpop.f32.mrf.mxu0
        %v11010 = vpop.f32.mrf.mxu0
        %v11011 = vadd.f32 %v10850, %v11010
        %v11012 = vpop.f32.mrf.mxu0
        %11013 = vmatprep.mubr.bf16.mxu0 %v9799
        %11014 = vmatmul.mubr.bf16.gmra.mxu0 %v9798
        %v11015 = vpop.f32.mrf.mxu0
        %v11016 = vadd.f32 %v10855, %v11015
        %v11017 = vpop.f32.mrf.mxu0
        %v11018 = vpop.f32.mrf.mxu0
        %v11019 = vadd.f32 %v10858, %v11018
        %v11020 = vpop.f32.mrf.mxu0
        %11021 = vmatprep.mubr.bf16.mxu0 %v9808
        %11022 = vmatmul.mubr.bf16.gmra.mxu0 %v9807
        %v11023 = vpop.f32.mrf.mxu0
        %v11024 = vadd.f32 %v10863, %v11023
        %v11025 = vpop.f32.mrf.mxu0
        %v11026 = vpop.f32.mrf.mxu0
        %v11027 = vadd.f32 %v10866, %v11026
        %v11028 = vpop.f32.mrf.mxu0
        %11029 = vdwg.mxu0
        %11030 = vmatprep.subr.bf16.mxu0 0
        %11031 = vmatpush1.bf16.msra.mxu0 %v10313
        %11032 = vmatprep.subr.bf16.mxu0 0
        %11033 = vmatpush1.bf16.msra.mxu0 %v10312
        %11034 = vmatprep.subr.bf16.mxu0 0
        %11035 = vmatpush1.bf16.msra.mxu0 %v10311
        %11036 = vmatprep.subr.bf16.mxu0 0
        %11037 = vmatpush1.bf16.msra.mxu0 %v10310
        %11038 = vmatprep.subr.bf16.mxu0 0
        %11039 = vmatpush1.bf16.msra.mxu0 %v10309
        %11040 = vmatprep.subr.bf16.mxu0 0
        %11041 = vmatpush1.bf16.msra.mxu0 %v10308
        %11042 = vmatprep.subr.bf16.mxu0 0
        %11043 = vmatpush1.bf16.msra.mxu0 %v10307
        %11044 = vmatprep.subr.bf16.mxu0 0
        %11045 = vmatpush1.bf16.msra.mxu0 %v10306
        %11046 = vmatprep.subr.bf16.mxu0 0
        %11047 = vmatpush2.bf16.msra.mxu0 0
        %11048 = vmatprep.subr.bf16.mxu0 0
        %11049 = vmatpush2.bf16.msra.mxu0 0
        %11050 = vmatprep.subr.bf16.mxu0 0
        %11051 = vmatpush2.bf16.msra.mxu0 0
        %11052 = vmatprep.subr.bf16.mxu0 0
        %11053 = vmatpush2.bf16.msra.mxu0 0
        %11054 = vmatprep.subr.bf16.mxu0 0
        %11055 = vmatpush2.bf16.msra.mxu0 0
        %11056 = vmatprep.subr.bf16.mxu0 0
        %11057 = vmatpush2.bf16.msra.mxu0 0
        %11058 = vmatprep.subr.bf16.mxu0 0
        %11059 = vmatpush2.bf16.msra.mxu0 0
        %11060 = vmatprep.subr.bf16.mxu0 0
        %11061 = vmatpush2.bf16.msra.mxu0 0
        %11062 = vmatprep.mubr.bf16.mxu0 0
        %11063 = vmatmul.mubr.bf16.gmra.mxu0 %v9674
        %v11064 = vpop.f32.mrf.mxu0
        %v11065 = vadd.f32 %v10904, %v11064
        %v11066 = vpop.f32.mrf.mxu0
        %v11067 = vpop.f32.mrf.mxu0
        %v11068 = vadd.f32 %v10907, %v11067
        %v11069 = vpop.f32.mrf.mxu0
        %11070 = vmatprep.mubr.bf16.mxu0 0
        %11071 = vmatmul.mubr.bf16.gmra.mxu0 %v9683
        %v11072 = vpop.f32.mrf.mxu0
        %v11073 = vadd.f32 %v10912, %v11072
        %v11074 = vpop.f32.mrf.mxu0
        %v11075 = vpop.f32.mrf.mxu0
        %v11076 = vadd.f32 %v10915, %v11075
        %v11077 = vpop.f32.mrf.mxu0
        %11078 = vmatprep.mubr.bf16.mxu0 0
        %11079 = vmatmul.mubr.bf16.gmra.mxu0 %v9692
        %v11080 = vpop.f32.mrf.mxu0
        %v11081 = vadd.f32 %v10920, %v11080
        %v11082 = vpop.f32.mrf.mxu0
        %v11083 = vpop.f32.mrf.mxu0
        %v11084 = vadd.f32 %v10923, %v11083
        %v11085 = vpop.f32.mrf.mxu0
        %11086 = vmatprep.mubr.bf16.mxu0 0
        %11087 = vmatmul.mubr.bf16.gmra.mxu0 %v9701
        %v11088 = vpop.f32.mrf.mxu0
        %v11089 = vadd.f32 %v10928, %v11088
        %v11090 = vpop.f32.mrf.mxu0
        %v11091 = vpop.f32.mrf.mxu0
        %v11092 = vadd.f32 %v10931, %v11091
        %v11093 = vpop.f32.mrf.mxu0
        %11094 = vmatprep.mubr.bf16.mxu0 0
        %11095 = vmatmul.mubr.bf16.gmra.mxu0 %v9710
        %v11096 = vpop.f32.mrf.mxu0
        %v11097 = vadd.f32 %v10936, %v11096
        %v11098 = vpop.f32.mrf.mxu0
        %v11099 = vpop.f32.mrf.mxu0
        %v11100 = vadd.f32 %v10939, %v11099
        %v11101 = vpop.f32.mrf.mxu0
        %11102 = vmatprep.mubr.bf16.mxu0 0
        %11103 = vmatmul.mubr.bf16.gmra.mxu0 %v9719
        %v11104 = vpop.f32.mrf.mxu0
        %v11105 = vadd.f32 %v10944, %v11104
        %v11106 = vpop.f32.mrf.mxu0
        %v11107 = vpop.f32.mrf.mxu0
        %v11108 = vadd.f32 %v10947, %v11107
        %v11109 = vpop.f32.mrf.mxu0
        %11110 = vmatprep.mubr.bf16.mxu0 0
        %11111 = vmatmul.mubr.bf16.gmra.mxu0 %v9728
        %v11112 = vpop.f32.mrf.mxu0
        %v11113 = vadd.f32 %v10952, %v11112
        %v11114 = vpop.f32.mrf.mxu0
        %v11115 = vpop.f32.mrf.mxu0
        %v11116 = vadd.f32 %v10955, %v11115
        %v11117 = vpop.f32.mrf.mxu0
        %11118 = vmatprep.mubr.bf16.mxu0 0
        %11119 = vmatmul.mubr.bf16.gmra.mxu0 %v9737
        %v11120 = vpop.f32.mrf.mxu0
        %v11121 = vadd.f32 %v10960, %v11120
        %v11122 = vpop.f32.mrf.mxu0
        %v11123 = vpop.f32.mrf.mxu0
        %v11124 = vadd.f32 %v10963, %v11123
        %v11125 = vpop.f32.mrf.mxu0
        %11126 = vmatprep.mubr.bf16.mxu0 0
        %11127 = vmatmul.mubr.bf16.gmra.mxu0 %v9746
        %v11128 = vpop.f32.mrf.mxu0
        %v11129 = vadd.f32 %v10968, %v11128
        %v11130 = vpop.f32.mrf.mxu0
        %v11131 = vpop.f32.mrf.mxu0
        %v11132 = vadd.f32 %v10971, %v11131
        %v11133 = vpop.f32.mrf.mxu0
        %11134 = vmatprep.mubr.bf16.mxu0 0
        %11135 = vmatmul.mubr.bf16.gmra.mxu0 %v9755
        %v11136 = vpop.f32.mrf.mxu0
        %v11137 = vadd.f32 %v10976, %v11136
        %v11138 = vpop.f32.mrf.mxu0
        %v11139 = vpop.f32.mrf.mxu0
        %v11140 = vadd.f32 %v10979, %v11139
        %v11141 = vpop.f32.mrf.mxu0
        %11142 = vmatprep.mubr.bf16.mxu0 0
        %11143 = vmatmul.mubr.bf16.gmra.mxu0 %v9764
        %v11144 = vpop.f32.mrf.mxu0
        %v11145 = vadd.f32 %v10984, %v11144
        %v11146 = vpop.f32.mrf.mxu0
        %v11147 = vpop.f32.mrf.mxu0
        %v11148 = vadd.f32 %v10987, %v11147
        %v11149 = vpop.f32.mrf.mxu0
        %11150 = vmatprep.mubr.bf16.mxu0 0
        %11151 = vmatmul.mubr.bf16.gmra.mxu0 %v9773
        %v11152 = vpop.f32.mrf.mxu0
        %v11153 = vadd.f32 %v10992, %v11152
        %v11154 = vpop.f32.mrf.mxu0
        %v11155 = vpop.f32.mrf.mxu0
        %v11156 = vadd.f32 %v10995, %v11155
        %v11157 = vpop.f32.mrf.mxu0
        %11158 = vmatprep.mubr.bf16.mxu0 0
        %11159 = vmatmul.mubr.bf16.gmra.mxu0 %v9782
        %v11160 = vpop.f32.mrf.mxu0
        %v11161 = vadd.f32 %v11000, %v11160
        %v11162 = vpop.f32.mrf.mxu0
        %v11163 = vpop.f32.mrf.mxu0
        %v11164 = vadd.f32 %v11003, %v11163
        %v11165 = vpop.f32.mrf.mxu0
        %11166 = vmatprep.mubr.bf16.mxu0 0
        %11167 = vmatmul.mubr.bf16.gmra.mxu0 %v9791
        %v11168 = vpop.f32.mrf.mxu0
        %v11169 = vadd.f32 %v11008, %v11168
        %v11170 = vpop.f32.mrf.mxu0
        %v11171 = vpop.f32.mrf.mxu0
        %v11172 = vadd.f32 %v11011, %v11171
        %v11173 = vpop.f32.mrf.mxu0
        %11174 = vmatprep.mubr.bf16.mxu0 0
        %11175 = vmatmul.mubr.bf16.gmra.mxu0 %v9800
        %v11176 = vpop.f32.mrf.mxu0
        %v11177 = vadd.f32 %v11016, %v11176
        %v11178 = vpop.f32.mrf.mxu0
        %v11179 = vpop.f32.mrf.mxu0
        %v11180 = vadd.f32 %v11019, %v11179
        %v11181 = vpop.f32.mrf.mxu0
        %11182 = vmatprep.mubr.bf16.mxu0 0
        %11183 = vmatmul.mubr.bf16.gmra.mxu0 %v9809
        %v11184 = vpop.f32.mrf.mxu0
        %v11185 = vadd.f32 %v11024, %v11184
        %v11186 = vpop.f32.mrf.mxu0
        %v11187 = vpop.f32.mrf.mxu0
        %v11188 = vadd.f32 %v11027, %v11187
        %v11189 = vpop.f32.mrf.mxu0
        %11190 = vdwg.mxu0
        %v11191 = vlaneseq
        %v11192 = vand.u32 %v11191, 127
        %vm11193 = vcmp.lt.s32.totalorder %v11192, 32
        %v11194 = vsel %vm11193, %v11065, -1e+30
        %v11195 = vsel %vm11193, %v11068, -1e+30
        %v11196 = vsel %vm11193, %v11073, -1e+30
        %v11197 = vsel %vm11193, %v11076, -1e+30
        %v11198 = vsel %vm11193, %v11081, -1e+30
        %v11199 = vsel %vm11193, %v11084, -1e+30
        %v11200 = vsel %vm11193, %v11089, -1e+30
        %v11201 = vsel %vm11193, %v11092, -1e+30
        %v11202 = vsel %vm11193, %v11097, -1e+30
        %v11203 = vsel %vm11193, %v11100, -1e+30
        %v11204 = vsel %vm11193, %v11105, -1e+30
        %v11205 = vsel %vm11193, %v11108, -1e+30
        %v11206 = vsel %vm11193, %v11113, -1e+30
        %v11207 = vsel %vm11193, %v11116, -1e+30
        %v11208 = vsel %vm11193, %v11121, -1e+30
        %v11209 = vsel %vm11193, %v11124, -1e+30
        %v11210 = vsel %vm11193, %v11129, -1e+30
        %v11211 = vsel %vm11193, %v11132, -1e+30
        %v11212 = vsel %vm11193, %v11137, -1e+30
        %v11213 = vsel %vm11193, %v11140, -1e+30
        %v11214 = vsel %vm11193, %v11145, -1e+30
        %v11215 = vsel %vm11193, %v11148, -1e+30
        %v11216 = vsel %vm11193, %v11153, -1e+30
        %v11217 = vsel %vm11193, %v11156, -1e+30
        %v11218 = vsel %vm11193, %v11161, -1e+30
        %v11219 = vsel %vm11193, %v11164, -1e+30
        %v11220 = vsel %vm11193, %v11169, -1e+30
        %v11221 = vsel %vm11193, %v11172, -1e+30
        %v11222 = vsel %vm11193, %v11177, -1e+30
        %v11223 = vsel %vm11193, %v11180, -1e+30
        %v11224 = vsel %vm11193, %v11185, -1e+30
        %v11225 = vsel %vm11193, %v11188, -1e+30
        %11226 = vmax.xlane.f32.xlu0 %v11194
        %v11227 = vpop.xlane.xlu0 %11226
        %11228 = vmax.xlane.f32.xlu0 %v11195
        %v11229 = vpop.xlane.xlu0 %11228
        %11230 = vmax.xlane.f32.xlu0 %v11196
        %v11231 = vpop.xlane.xlu0 %11230
        %11232 = vmax.xlane.f32.xlu0 %v11197
        %v11233 = vpop.xlane.xlu0 %11232
        %11234 = vmax.xlane.f32.xlu0 %v11198
        %v11235 = vpop.xlane.xlu0 %11234
        %11236 = vmax.xlane.f32.xlu0 %v11199
        %v11237 = vpop.xlane.xlu0 %11236
        %11238 = vmax.xlane.f32.xlu0 %v11200
        %v11239 = vpop.xlane.xlu0 %11238
        %11240 = vmax.xlane.f32.xlu0 %v11201
        %v11241 = vpop.xlane.xlu0 %11240
        %11242 = vmax.xlane.f32.xlu0 %v11202
        %v11243 = vpop.xlane.xlu0 %11242
        %11244 = vmax.xlane.f32.xlu0 %v11203
        %v11245 = vpop.xlane.xlu0 %11244
        %11246 = vmax.xlane.f32.xlu0 %v11204
        %v11247 = vpop.xlane.xlu0 %11246
        %11248 = vmax.xlane.f32.xlu0 %v11205
        %v11249 = vpop.xlane.xlu0 %11248
        %11250 = vmax.xlane.f32.xlu0 %v11206
        %v11251 = vpop.xlane.xlu0 %11250
        %11252 = vmax.xlane.f32.xlu0 %v11207
        %v11253 = vpop.xlane.xlu0 %11252
        %11254 = vmax.xlane.f32.xlu0 %v11208
        %v11255 = vpop.xlane.xlu0 %11254
        %11256 = vmax.xlane.f32.xlu0 %v11209
        %v11257 = vpop.xlane.xlu0 %11256
        %11258 = vmax.xlane.f32.xlu0 %v11210
        %v11259 = vpop.xlane.xlu0 %11258
        %11260 = vmax.xlane.f32.xlu0 %v11211
        %v11261 = vpop.xlane.xlu0 %11260
        %11262 = vmax.xlane.f32.xlu0 %v11212
        %v11263 = vpop.xlane.xlu0 %11262
        %11264 = vmax.xlane.f32.xlu0 %v11213
        %v11265 = vpop.xlane.xlu0 %11264
        %11266 = vmax.xlane.f32.xlu0 %v11214
        %v11267 = vpop.xlane.xlu0 %11266
        %11268 = vmax.xlane.f32.xlu0 %v11215
        %v11269 = vpop.xlane.xlu0 %11268
        %11270 = vmax.xlane.f32.xlu0 %v11216
        %v11271 = vpop.xlane.xlu0 %11270
        %11272 = vmax.xlane.f32.xlu0 %v11217
        %v11273 = vpop.xlane.xlu0 %11272
        %11274 = vmax.xlane.f32.xlu0 %v11218
        %v11275 = vpop.xlane.xlu0 %11274
        %11276 = vmax.xlane.f32.xlu0 %v11219
        %v11277 = vpop.xlane.xlu0 %11276
        %11278 = vmax.xlane.f32.xlu0 %v11220
        %v11279 = vpop.xlane.xlu0 %11278
        %11280 = vmax.xlane.f32.xlu0 %v11221
        %v11281 = vpop.xlane.xlu0 %11280
        %11282 = vmax.xlane.f32.xlu0 %v11222
        %v11283 = vpop.xlane.xlu0 %11282
        %11284 = vmax.xlane.f32.xlu0 %v11223
        %v11285 = vpop.xlane.xlu0 %11284
        %11286 = vmax.xlane.f32.xlu0 %v11224
        %v11287 = vpop.xlane.xlu0 %11286
        %11288 = vmax.xlane.f32.xlu0 %v11225
        %v11289 = vpop.xlane.xlu0 %11288
        %v11290 = vsub.f32 %v11194, %v11227
        %v11291 = vsub.f32 %v11195, %v11229
        %v11292 = vsub.f32 %v11196, %v11231
        %v11293 = vsub.f32 %v11197, %v11233
        %v11294 = vsub.f32 %v11198, %v11235
        %v11295 = vsub.f32 %v11199, %v11237
        %v11296 = vsub.f32 %v11200, %v11239
        %v11297 = vsub.f32 %v11201, %v11241
        %v11298 = vsub.f32 %v11202, %v11243
        %v11299 = vsub.f32 %v11203, %v11245
        %v11300 = vsub.f32 %v11204, %v11247
        %v11301 = vsub.f32 %v11205, %v11249
        %v11302 = vsub.f32 %v11206, %v11251
        %v11303 = vsub.f32 %v11207, %v11253
        %v11304 = vsub.f32 %v11208, %v11255
        %v11305 = vsub.f32 %v11209, %v11257
        %v11306 = vsub.f32 %v11210, %v11259
        %v11307 = vsub.f32 %v11211, %v11261
        %v11308 = vsub.f32 %v11212, %v11263
        %v11309 = vsub.f32 %v11213, %v11265
        %v11310 = vsub.f32 %v11214, %v11267
        %v11311 = vsub.f32 %v11215, %v11269
        %v11312 = vsub.f32 %v11216, %v11271
        %v11313 = vsub.f32 %v11217, %v11273
        %v11314 = vsub.f32 %v11218, %v11275
        %v11315 = vsub.f32 %v11219, %v11277
        %v11316 = vsub.f32 %v11220, %v11279
        %v11317 = vsub.f32 %v11221, %v11281
        %v11318 = vsub.f32 %v11222, %v11283
        %v11319 = vsub.f32 %v11223, %v11285
        %v11320 = vsub.f32 %v11224, %v11287
        %v11321 = vsub.f32 %v11225, %v11289
        %v11322 = vmul.f32 %v11290, 1.442695
        %v11323 = vpow.pop %v11322
        %v11324 = vmul.f32 %v11291, 1.442695
        %v11325 = vpow.pop %v11324
        %v11326 = vmul.f32 %v11292, 1.442695
        %v11327 = vpow.pop %v11326
        %v11328 = vmul.f32 %v11293, 1.442695
        %v11329 = vpow.pop %v11328
        %v11330 = vmul.f32 %v11294, 1.442695
        %v11331 = vpow.pop %v11330
        %v11332 = vmul.f32 %v11295, 1.442695
        %v11333 = vpow.pop %v11332
        %v11334 = vmul.f32 %v11296, 1.442695
        %v11335 = vpow.pop %v11334
        %v11336 = vmul.f32 %v11297, 1.442695
        %v11337 = vpow.pop %v11336
        %v11338 = vmul.f32 %v11298, 1.442695
        %v11339 = vpow.pop %v11338
        %v11340 = vmul.f32 %v11299, 1.442695
        %v11341 = vpow.pop %v11340
        %v11342 = vmul.f32 %v11300, 1.442695
        %v11343 = vpow.pop %v11342
        %v11344 = vmul.f32 %v11301, 1.442695
        %v11345 = vpow.pop %v11344
        %v11346 = vmul.f32 %v11302, 1.442695
        %v11347 = vpow.pop %v11346
        %v11348 = vmul.f32 %v11303, 1.442695
        %v11349 = vpow.pop %v11348
        %v11350 = vmul.f32 %v11304, 1.442695
        %v11351 = vpow.pop %v11350
        %v11352 = vmul.f32 %v11305, 1.442695
        %v11353 = vpow.pop %v11352
        %v11354 = vmul.f32 %v11306, 1.442695
        %v11355 = vpow.pop %v11354
        %v11356 = vmul.f32 %v11307, 1.442695
        %v11357 = vpow.pop %v11356
        %v11358 = vmul.f32 %v11308, 1.442695
        %v11359 = vpow.pop %v11358
        %v11360 = vmul.f32 %v11309, 1.442695
        %v11361 = vpow.pop %v11360
        %v11362 = vmul.f32 %v11310, 1.442695
        %v11363 = vpow.pop %v11362
        %v11364 = vmul.f32 %v11311, 1.442695
        %v11365 = vpow.pop %v11364
        %v11366 = vmul.f32 %v11312, 1.442695
        %v11367 = vpow.pop %v11366
        %v11368 = vmul.f32 %v11313, 1.442695
        %v11369 = vpow.pop %v11368
        %v11370 = vmul.f32 %v11314, 1.442695
        %v11371 = vpow.pop %v11370
        %v11372 = vmul.f32 %v11315, 1.442695
        %v11373 = vpow.pop %v11372
        %v11374 = vmul.f32 %v11316, 1.442695
        %v11375 = vpow.pop %v11374
        %v11376 = vmul.f32 %v11317, 1.442695
        %v11377 = vpow.pop %v11376
        %v11378 = vmul.f32 %v11318, 1.442695
        %v11379 = vpow.pop %v11378
        %v11380 = vmul.f32 %v11319, 1.442695
        %v11381 = vpow.pop %v11380
        %v11382 = vmul.f32 %v11320, 1.442695
        %v11383 = vpow.pop %v11382
        %v11384 = vmul.f32 %v11321, 1.442695
        %v11385 = vpow.pop %v11384
        %11386 = vadd.xlane.f32.xlu0 %v11323
        %v11387 = vpop.xlane.xlu0 %11386
        %11388 = vadd.xlane.f32.xlu0 %v11325
        %v11389 = vpop.xlane.xlu0 %11388
        %11390 = vadd.xlane.f32.xlu0 %v11327
        %v11391 = vpop.xlane.xlu0 %11390
        %11392 = vadd.xlane.f32.xlu0 %v11329
        %v11393 = vpop.xlane.xlu0 %11392
        %11394 = vadd.xlane.f32.xlu0 %v11331
        %v11395 = vpop.xlane.xlu0 %11394
        %11396 = vadd.xlane.f32.xlu0 %v11333
        %v11397 = vpop.xlane.xlu0 %11396
        %11398 = vadd.xlane.f32.xlu0 %v11335
        %v11399 = vpop.xlane.xlu0 %11398
        %11400 = vadd.xlane.f32.xlu0 %v11337
        %v11401 = vpop.xlane.xlu0 %11400
        %11402 = vadd.xlane.f32.xlu0 %v11339
        %v11403 = vpop.xlane.xlu0 %11402
        %11404 = vadd.xlane.f32.xlu0 %v11341
        %v11405 = vpop.xlane.xlu0 %11404
        %11406 = vadd.xlane.f32.xlu0 %v11343
        %v11407 = vpop.xlane.xlu0 %11406
        %11408 = vadd.xlane.f32.xlu0 %v11345
        %v11409 = vpop.xlane.xlu0 %11408
        %11410 = vadd.xlane.f32.xlu0 %v11347
        %v11411 = vpop.xlane.xlu0 %11410
        %11412 = vadd.xlane.f32.xlu0 %v11349
        %v11413 = vpop.xlane.xlu0 %11412
        %11414 = vadd.xlane.f32.xlu0 %v11351
        %v11415 = vpop.xlane.xlu0 %11414
        %11416 = vadd.xlane.f32.xlu0 %v11353
        %v11417 = vpop.xlane.xlu0 %11416
        %11418 = vadd.xlane.f32.xlu0 %v11355
        %v11419 = vpop.xlane.xlu0 %11418
        %11420 = vadd.xlane.f32.xlu0 %v11357
        %v11421 = vpop.xlane.xlu0 %11420
        %11422 = vadd.xlane.f32.xlu0 %v11359
        %v11423 = vpop.xlane.xlu0 %11422
        %11424 = vadd.xlane.f32.xlu0 %v11361
        %v11425 = vpop.xlane.xlu0 %11424
        %11426 = vadd.xlane.f32.xlu0 %v11363
        %v11427 = vpop.xlane.xlu0 %11426
        %11428 = vadd.xlane.f32.xlu0 %v11365
        %v11429 = vpop.xlane.xlu0 %11428
        %11430 = vadd.xlane.f32.xlu0 %v11367
        %v11431 = vpop.xlane.xlu0 %11430
        %11432 = vadd.xlane.f32.xlu0 %v11369
        %v11433 = vpop.xlane.xlu0 %11432
        %11434 = vadd.xlane.f32.xlu0 %v11371
        %v11435 = vpop.xlane.xlu0 %11434
        %11436 = vadd.xlane.f32.xlu0 %v11373
        %v11437 = vpop.xlane.xlu0 %11436
        %11438 = vadd.xlane.f32.xlu0 %v11375
        %v11439 = vpop.xlane.xlu0 %11438
        %11440 = vadd.xlane.f32.xlu0 %v11377
        %v11441 = vpop.xlane.xlu0 %11440
        %11442 = vadd.xlane.f32.xlu0 %v11379
        %v11443 = vpop.xlane.xlu0 %11442
        %11444 = vadd.xlane.f32.xlu0 %v11381
        %v11445 = vpop.xlane.xlu0 %11444
        %11446 = vadd.xlane.f32.xlu0 %v11383
        %v11447 = vpop.xlane.xlu0 %11446
        %11448 = vadd.xlane.f32.xlu0 %v11385
        %v11449 = vpop.xlane.xlu0 %11448
        %v11450 = vrcp.pop %v11387
        %v11451 = vrcp.pop %v11389
        %v11452 = vrcp.pop %v11391
        %v11453 = vrcp.pop %v11393
        %v11454 = vrcp.pop %v11395
        %v11455 = vrcp.pop %v11397
        %v11456 = vrcp.pop %v11399
        %v11457 = vrcp.pop %v11401
        %v11458 = vrcp.pop %v11403
        %v11459 = vrcp.pop %v11405
        %v11460 = vrcp.pop %v11407
        %v11461 = vrcp.pop %v11409
        %v11462 = vrcp.pop %v11411
        %v11463 = vrcp.pop %v11413
        %v11464 = vrcp.pop %v11415
        %v11465 = vrcp.pop %v11417
        %v11466 = vrcp.pop %v11419
        %v11467 = vrcp.pop %v11421
        %v11468 = vrcp.pop %v11423
        %v11469 = vrcp.pop %v11425
        %v11470 = vrcp.pop %v11427
        %v11471 = vrcp.pop %v11429
        %v11472 = vrcp.pop %v11431
        %v11473 = vrcp.pop %v11433
        %v11474 = vrcp.pop %v11435
        %v11475 = vrcp.pop %v11437
        %v11476 = vrcp.pop %v11439
        %v11477 = vrcp.pop %v11441
        %v11478 = vrcp.pop %v11443
        %v11479 = vrcp.pop %v11445
        %v11480 = vrcp.pop %v11447
        %v11481 = vrcp.pop %v11449
        %v11482 = vmul.f32 %v11323, %v11450
        %v11483 = vmul.f32 %v11325, %v11451
        %v11484 = vmul.f32 %v11327, %v11452
        %v11485 = vmul.f32 %v11329, %v11453
        %v11486 = vmul.f32 %v11331, %v11454
        %v11487 = vmul.f32 %v11333, %v11455
        %v11488 = vmul.f32 %v11335, %v11456
        %v11489 = vmul.f32 %v11337, %v11457
        %v11490 = vmul.f32 %v11339, %v11458
        %v11491 = vmul.f32 %v11341, %v11459
        %v11492 = vmul.f32 %v11343, %v11460
        %v11493 = vmul.f32 %v11345, %v11461
        %v11494 = vmul.f32 %v11347, %v11462
        %v11495 = vmul.f32 %v11349, %v11463
        %v11496 = vmul.f32 %v11351, %v11464
        %v11497 = vmul.f32 %v11353, %v11465
        %v11498 = vmul.f32 %v11355, %v11466
        %v11499 = vmul.f32 %v11357, %v11467
        %v11500 = vmul.f32 %v11359, %v11468
        %v11501 = vmul.f32 %v11361, %v11469
        %v11502 = vmul.f32 %v11363, %v11470
        %v11503 = vmul.f32 %v11365, %v11471
        %v11504 = vmul.f32 %v11367, %v11472
        %v11505 = vmul.f32 %v11369, %v11473
        %v11506 = vmul.f32 %v11371, %v11474
        %v11507 = vmul.f32 %v11373, %v11475
        %v11508 = vmul.f32 %v11375, %v11476
        %v11509 = vmul.f32 %v11377, %v11477
        %v11510 = vmul.f32 %v11379, %v11478
        %v11511 = vmul.f32 %v11381, %v11479
        %v11512 = vmul.f32 %v11383, %v11480
        %v11513 = vmul.f32 %v11385, %v11481
        %v11514 = vpack.c.bf16 %v11483, %v11482
        %v11515 = vpack.c.bf16 %v11485, %v11484
        %v11516 = vpack.c.bf16 %v11487, %v11486
        %v11517 = vpack.c.bf16 %v11489, %v11488
        %v11518 = vpack.c.bf16 %v11491, %v11490
        %v11519 = vpack.c.bf16 %v11493, %v11492
        %v11520 = vpack.c.bf16 %v11495, %v11494
        %v11521 = vpack.c.bf16 %v11497, %v11496
        %v11522 = vpack.c.bf16 %v11499, %v11498
        %v11523 = vpack.c.bf16 %v11501, %v11500
        %v11524 = vpack.c.bf16 %v11503, %v11502
        %v11525 = vpack.c.bf16 %v11505, %v11504
        %v11526 = vpack.c.bf16 %v11507, %v11506
        %v11527 = vpack.c.bf16 %v11509, %v11508
        %v11528 = vpack.c.bf16 %v11511, %v11510
        %v11529 = vpack.c.bf16 %v11513, %v11512
        %v11530 = vld [vmem:[#allocation10] sm:$0xf]
        %v11531 = vld [vmem:[#allocation10 + $0x4] sm:$0xf]
        %v11532 = vld [vmem:[#allocation10 + $0x8] sm:$0xf]
        %v11533 = vld [vmem:[#allocation10 + $0xc] sm:$0xf]
        %v11534 = vld [vmem:[#allocation10 + $0x10] sm:$0xf]
        %v11535 = vld [vmem:[#allocation10 + $0x14] sm:$0xf]
        %v11536 = vld [vmem:[#allocation10 + $0x18] sm:$0xf]
        %v11537 = vld [vmem:[#allocation10 + $0x1c] sm:$0xf]
        %v11538 = vld [vmem:[#allocation10 + $0x20] sm:$0xf]
        %v11539 = vld [vmem:[#allocation10 + $0x24] sm:$0xf]
        %v11540 = vld [vmem:[#allocation10 + $0x28] sm:$0xf]
        %v11541 = vld [vmem:[#allocation10 + $0x2c] sm:$0xf]
        %v11542 = vld [vmem:[#allocation10 + $0x30] sm:$0xf]
        %v11543 = vld [vmem:[#allocation10 + $0x34] sm:$0xf]
        %v11544 = vld [vmem:[#allocation10 + $0x38] sm:$0xf]
        %v11545 = vld [vmem:[#allocation10 + $0x3c] sm:$0xf]
        %v11562 = vunpack.c.l.b16 %v11530
        %v11563 = vunpack.c.l.b16 %v11531
        %v11564 = vunpack.c.l.b16 %v11532
        %v11565 = vunpack.c.l.b16 %v11533
        %v11566 = vunpack.c.l.b16 %v11534
        %v11567 = vunpack.c.l.b16 %v11535
        %v11568 = vunpack.c.l.b16 %v11536
        %v11569 = vunpack.c.l.b16 %v11537
        %v11570 = vunpack.c.l.b16 %v11538
        %v11571 = vunpack.c.l.b16 %v11539
        %v11572 = vunpack.c.l.b16 %v11540
        %v11573 = vunpack.c.l.b16 %v11541
        %v11574 = vunpack.c.l.b16 %v11542
        %v11575 = vunpack.c.l.b16 %v11543
        %v11576 = vunpack.c.l.b16 %v11544
        %v11577 = vunpack.c.l.b16 %v11545
        %v11578 = vpack.c.b16 %v11563, %v11562
        %v11579 = vpack.c.b16 %v11565, %v11564
        %v11580 = vpack.c.b16 %v11567, %v11566
        %v11581 = vpack.c.b16 %v11569, %v11568
        %v11582 = vpack.c.b16 %v11571, %v11570
        %v11583 = vpack.c.b16 %v11573, %v11572
        %v11584 = vpack.c.b16 %v11575, %v11574
        %v11585 = vpack.c.b16 %v11577, %v11576
        %11594 = vmatprep.subr.bf16.mxu0 0
        %11595 = vmatpush1.bf16.msra.mxu0 %v11585
        %11596 = vmatprep.subr.bf16.mxu0 0
        %11597 = vmatpush1.bf16.msra.mxu0 %v11584
        %11598 = vmatprep.subr.bf16.mxu0 0
        %11599 = vmatpush1.bf16.msra.mxu0 %v11583
        %11600 = vmatprep.subr.bf16.mxu0 0
        %11601 = vmatpush1.bf16.msra.mxu0 %v11582
        %11602 = vmatprep.subr.bf16.mxu0 0
        %11603 = vmatpush1.bf16.msra.mxu0 %v11581
        %11604 = vmatprep.subr.bf16.mxu0 0
        %11605 = vmatpush1.bf16.msra.mxu0 %v11580
        %11606 = vmatprep.subr.bf16.mxu0 0
        %11607 = vmatpush1.bf16.msra.mxu0 %v11579
        %11608 = vmatprep.subr.bf16.mxu0 0
        %11609 = vmatpush1.bf16.msra.mxu0 %v11578
        %11610 = vmatprep.subr.bf16.mxu0 0
        %11611 = vmatpush2.bf16.msra.mxu0 0
        %11612 = vmatprep.subr.bf16.mxu0 0
        %11613 = vmatpush2.bf16.msra.mxu0 0
        %11614 = vmatprep.subr.bf16.mxu0 0
        %11615 = vmatpush2.bf16.msra.mxu0 0
        %11616 = vmatprep.subr.bf16.mxu0 0
        %11617 = vmatpush2.bf16.msra.mxu0 0
        %11618 = vmatprep.subr.bf16.mxu0 0
        %11619 = vmatpush2.bf16.msra.mxu0 0
        %11620 = vmatprep.subr.bf16.mxu0 0
        %11621 = vmatpush2.bf16.msra.mxu0 0
        %11622 = vmatprep.subr.bf16.mxu0 0
        %11623 = vmatpush2.bf16.msra.mxu0 0
        %11624 = vmatprep.subr.bf16.mxu0 0
        %11625 = vmatpush2.bf16.msra.mxu0 0
        %11626 = vmatprep.mubr.bf16.mxu0 0
        %11627 = vmatmul.mubr.bf16.gmra.mxu0 %v11514
        %v11628 = vpop.f32.mrf.mxu0
        %v11629 = vadd.f32 %v435, %v11628
        %v11630 = vpop.f32.mrf.mxu0
        %v11631 = vpop.f32.mrf.mxu0
        %v11632 = vadd.f32 %v436, %v11631
        %v11633 = vpop.f32.mrf.mxu0
        %11634 = vmatprep.mubr.bf16.mxu0 0
        %11635 = vmatmul.mubr.bf16.gmra.mxu0 %v11515
        %v11636 = vpop.f32.mrf.mxu0
        %v11637 = vadd.f32 %v437, %v11636
        %v11638 = vpop.f32.mrf.mxu0
        %v11639 = vpop.f32.mrf.mxu0
        %v11640 = vadd.f32 %v438, %v11639
        %v11641 = vpop.f32.mrf.mxu0
        %11642 = vmatprep.mubr.bf16.mxu0 0
        %11643 = vmatmul.mubr.bf16.gmra.mxu0 %v11516
        %v11644 = vpop.f32.mrf.mxu0
        %v11645 = vadd.f32 %v439, %v11644
        %v11646 = vpop.f32.mrf.mxu0
        %v11647 = vpop.f32.mrf.mxu0
        %v11648 = vadd.f32 %v440, %v11647
        %v11649 = vpop.f32.mrf.mxu0
        %11650 = vmatprep.mubr.bf16.mxu0 0
        %11651 = vmatmul.mubr.bf16.gmra.mxu0 %v11517
        %v11652 = vpop.f32.mrf.mxu0
        %v11653 = vadd.f32 %v441, %v11652
        %v11654 = vpop.f32.mrf.mxu0
        %v11655 = vpop.f32.mrf.mxu0
        %v11656 = vadd.f32 %v442, %v11655
        %v11657 = vpop.f32.mrf.mxu0
        %11658 = vmatprep.mubr.bf16.mxu0 0
        %11659 = vmatmul.mubr.bf16.gmra.mxu0 %v11518
        %v11660 = vpop.f32.mrf.mxu0
        %v11661 = vadd.f32 %v443, %v11660
        %v11662 = vpop.f32.mrf.mxu0
        %v11663 = vpop.f32.mrf.mxu0
        %v11664 = vadd.f32 %v444, %v11663
        %v11665 = vpop.f32.mrf.mxu0
        %11666 = vmatprep.mubr.bf16.mxu0 0
        %11667 = vmatmul.mubr.bf16.gmra.mxu0 %v11519
        %v11668 = vpop.f32.mrf.mxu0
        %v11669 = vadd.f32 %v445, %v11668
        %v11670 = vpop.f32.mrf.mxu0
        %v11671 = vpop.f32.mrf.mxu0
        %v11672 = vadd.f32 %v446, %v11671
        %v11673 = vpop.f32.mrf.mxu0
        %11674 = vmatprep.mubr.bf16.mxu0 0
        %11675 = vmatmul.mubr.bf16.gmra.mxu0 %v11520
        %v11676 = vpop.f32.mrf.mxu0
        %v11677 = vadd.f32 %v447, %v11676
        %v11678 = vpop.f32.mrf.mxu0
        %v11679 = vpop.f32.mrf.mxu0
        %v11680 = vadd.f32 %v448, %v11679
        %v11681 = vpop.f32.mrf.mxu0
        %11682 = vmatprep.mubr.bf16.mxu0 0
        %11683 = vmatmul.mubr.bf16.gmra.mxu0 %v11521
        %v11684 = vpop.f32.mrf.mxu0
        %v11685 = vadd.f32 %v449, %v11684
        %v11686 = vpop.f32.mrf.mxu0
        %v11687 = vpop.f32.mrf.mxu0
        %v11688 = vadd.f32 %v450, %v11687
        %v11689 = vpop.f32.mrf.mxu0
        %11690 = vmatprep.mubr.bf16.mxu0 0
        %11691 = vmatmul.mubr.bf16.gmra.mxu0 %v11522
        %v11692 = vpop.f32.mrf.mxu0
        %v11693 = vadd.f32 %v451, %v11692
        %v11694 = vpop.f32.mrf.mxu0
        %v11695 = vpop.f32.mrf.mxu0
        %v11696 = vadd.f32 %v452, %v11695
        %v11697 = vpop.f32.mrf.mxu0
        %11698 = vmatprep.mubr.bf16.mxu0 0
        %11699 = vmatmul.mubr.bf16.gmra.mxu0 %v11523
        %v11700 = vpop.f32.mrf.mxu0
        %v11701 = vadd.f32 %v453, %v11700
        %v11702 = vpop.f32.mrf.mxu0
        %v11703 = vpop.f32.mrf.mxu0
        %v11704 = vadd.f32 %v454, %v11703
        %v11705 = vpop.f32.mrf.mxu0
        %11706 = vmatprep.mubr.bf16.mxu0 0
        %11707 = vmatmul.mubr.bf16.gmra.mxu0 %v11524
        %v11708 = vpop.f32.mrf.mxu0
        %v11709 = vadd.f32 %v455, %v11708
        %v11710 = vpop.f32.mrf.mxu0
        %v11711 = vpop.f32.mrf.mxu0
        %v11712 = vadd.f32 %v456, %v11711
        %v11713 = vpop.f32.mrf.mxu0
        %11714 = vmatprep.mubr.bf16.mxu0 0
        %11715 = vmatmul.mubr.bf16.gmra.mxu0 %v11525
        %v11716 = vpop.f32.mrf.mxu0
        %v11717 = vadd.f32 %v457, %v11716
        %v11718 = vpop.f32.mrf.mxu0
        %v11719 = vpop.f32.mrf.mxu0
        %v11720 = vadd.f32 %v458, %v11719
        %v11721 = vpop.f32.mrf.mxu0
        %11722 = vmatprep.mubr.bf16.mxu0 0
        %11723 = vmatmul.mubr.bf16.gmra.mxu0 %v11526
        %v11724 = vpop.f32.mrf.mxu0
        %v11725 = vadd.f32 %v459, %v11724
        %v11726 = vpop.f32.mrf.mxu0
        %v11727 = vpop.f32.mrf.mxu0
        %v11728 = vadd.f32 %v460, %v11727
        %v11729 = vpop.f32.mrf.mxu0
        %11730 = vmatprep.mubr.bf16.mxu0 0
        %11731 = vmatmul.mubr.bf16.gmra.mxu0 %v11527
        %v11732 = vpop.f32.mrf.mxu0
        %v11733 = vadd.f32 %v461, %v11732
        %v11734 = vpop.f32.mrf.mxu0
        %v11735 = vpop.f32.mrf.mxu0
        %v11736 = vadd.f32 %v462, %v11735
        %v11737 = vpop.f32.mrf.mxu0
        %11738 = vmatprep.mubr.bf16.mxu0 0
        %11739 = vmatmul.mubr.bf16.gmra.mxu0 %v11528
        %v11740 = vpop.f32.mrf.mxu0
        %v11741 = vadd.f32 %v463, %v11740
        %v11742 = vpop.f32.mrf.mxu0
        %v11743 = vpop.f32.mrf.mxu0
        %v11744 = vadd.f32 %v464, %v11743
        %v11745 = vpop.f32.mrf.mxu0
        %11746 = vmatprep.mubr.bf16.mxu0 0
        %11747 = vmatmul.mubr.bf16.gmra.mxu0 %v11529
        %v11748 = vpop.f32.mrf.mxu0
        %v11749 = vadd.f32 %v465, %v11748
        %v11750 = vpop.f32.mrf.mxu0
        %v11751 = vpop.f32.mrf.mxu0
        %v11752 = vadd.f32 %v466, %v11751
        %v11753 = vpop.f32.mrf.mxu0
        %11754 = vdwg.mxu0
        %v11755 = vmax.f32 %v11629, 0.0
        %v11756 = vmax.f32 %v11632, 0.0
        %v11757 = vmax.f32 %v11637, 0.0
        %v11758 = vmax.f32 %v11640, 0.0
        %v11759 = vmax.f32 %v11645, 0.0
        %v11760 = vmax.f32 %v11648, 0.0
        %v11761 = vmax.f32 %v11653, 0.0
        %v11762 = vmax.f32 %v11656, 0.0
        %v11763 = vmax.f32 %v11661, 0.0
        %v11764 = vmax.f32 %v11664, 0.0
        %v11765 = vmax.f32 %v11669, 0.0
        %v11766 = vmax.f32 %v11672, 0.0
        %v11767 = vmax.f32 %v11677, 0.0
        %v11768 = vmax.f32 %v11680, 0.0
        %v11769 = vmax.f32 %v11685, 0.0
        %v11770 = vmax.f32 %v11688, 0.0
        %v11771 = vmax.f32 %v11693, 0.0
        %v11772 = vmax.f32 %v11696, 0.0
        %v11773 = vmax.f32 %v11701, 0.0
        %v11774 = vmax.f32 %v11704, 0.0
        %v11775 = vmax.f32 %v11709, 0.0
        %v11776 = vmax.f32 %v11712, 0.0
        %v11777 = vmax.f32 %v11717, 0.0
        %v11778 = vmax.f32 %v11720, 0.0
        %v11779 = vmax.f32 %v11725, 0.0
        %v11780 = vmax.f32 %v11728, 0.0
        %v11781 = vmax.f32 %v11733, 0.0
        %v11782 = vmax.f32 %v11736, 0.0
        %v11783 = vmax.f32 %v11741, 0.0
        %v11784 = vmax.f32 %v11744, 0.0
        %v11785 = vmax.f32 %v11749, 0.0
        %v11786 = vmax.f32 %v11752, 0.0
        %11787 = vst [vmem:[%s313] sm:$0xff] %v11755
        %11788 = vst [vmem:[%s313 + $0x8] sm:$0xff] %v11756
        %11789 = vst [vmem:[%s313 + $0x10] sm:$0xff] %v11757
        %11790 = vst [vmem:[%s313 + $0x18] sm:$0xff] %v11758
        %11791 = vst [vmem:[%s313 + $0x20] sm:$0xff] %v11759
        %11792 = vst [vmem:[%s313 + $0x28] sm:$0xff] %v11760
        %11793 = vst [vmem:[%s313 + $0x30] sm:$0xff] %v11761
        %11794 = vst [vmem:[%s313 + $0x38] sm:$0xff] %v11762
        %11795 = vst [vmem:[%s313 + $0x40] sm:$0xff] %v11763
        %11796 = vst [vmem:[%s313 + $0x48] sm:$0xff] %v11764
        %11797 = vst [vmem:[%s313 + $0x50] sm:$0xff] %v11765
        %11798 = vst [vmem:[%s313 + $0x58] sm:$0xff] %v11766
        %11799 = vst [vmem:[%s313 + $0x60] sm:$0xff] %v11767
        %11800 = vst [vmem:[%s313 + $0x68] sm:$0xff] %v11768
        %11801 = vst [vmem:[%s313 + $0x70] sm:$0xff] %v11769
        %11802 = vst [vmem:[%s313 + $0x78] sm:$0xff] %v11770
        %11803 = vst [vmem:[%s313 + $0x80] sm:$0xff] %v11771
        %11804 = vst [vmem:[%s313 + $0x88] sm:$0xff] %v11772
        %11805 = vst [vmem:[%s313 + $0x90] sm:$0xff] %v11773
        %11806 = vst [vmem:[%s313 + $0x98] sm:$0xff] %v11774
        %11807 = vst [vmem:[%s313 + $0xa0] sm:$0xff] %v11775
        %11808 = vst [vmem:[%s313 + $0xa8] sm:$0xff] %v11776
        %11809 = vst [vmem:[%s313 + $0xb0] sm:$0xff] %v11777
        %11810 = vst [vmem:[%s313 + $0xb8] sm:$0xff] %v11778
        %11811 = vst [vmem:[%s313 + $0xc0] sm:$0xff] %v11779
        %11812 = vst [vmem:[%s313 + $0xc8] sm:$0xff] %v11780
        %11813 = vst [vmem:[%s313 + $0xd0] sm:$0xff] %v11781
        %11814 = vst [vmem:[%s313 + $0xd8] sm:$0xff] %v11782
        %11815 = vst [vmem:[%s313 + $0xe0] sm:$0xff] %v11783
        %11816 = vst [vmem:[%s313 + $0xe8] sm:$0xff] %v11784
        %11817 = vst [vmem:[%s313 + $0xf0] sm:$0xff] %v11785
        %11818 = vst [vmem:[%s313 + $0xf8] sm:$0xff] %v11786
        %s11819 = sand.u32 %s164, 1
        %s11820 = scalar_lea.sflag [#allocation6], %s11819
        %s11821 = sand.u32 %s164, 1
        %s11822 = smul.addr %s11821, 256
        %s11823 = scalar_lea.vmem [#allocation12], %s11822
        // Predicated region
        $region61: #{tpu_custom_call.1} parent=43 // pred_check
          %p11824 = pneg %p174
        $region62: #{tpu_custom_call.1} parent=43 // pred_check_branch
          %11826 = sbr.rel (%p11824) target = $region64
        $region63: #{tpu_custom_call.1} parent=43 // pred_region
          %s11828 = ssub.s32 4096, 4096
          %11829 = vsyncadd %s11820, %s11828
          %s11830 = smul.addr %s25, 32
          %s11831 = smul.addr %s11830, 128
          %s11832 = scalar_lea.hbm %s6, %s11831
          %s11833 = sshll.u32 %s11823, 4
          %s11834 = int_to_ptr.vmem [resolvable:$true] %s11833
          %11839 = dma.vmem_to_hbm [thread:$0]  %s11834, 4096, %s11832, %s11820, 128, 128, 8
        $region64: #{tpu_custom_call.1} parent=43 // pred_fallthru
          _
      $region44: #{tpu_custom_call.1} parent=5 // pred_fallthru
        _
      %p11840 = scmp.le.s32.totalorder 2, %s20
      // Predicated region
      $region65: #{tpu_custom_call.1} parent=5 // pred_check
        %p11841 = pneg %p11840
      $region66: #{tpu_custom_call.1} parent=5 // pred_check_branch
        %11843 = sbr.rel (%p11841) target = $region68
      $region67: #{tpu_custom_call.1} parent=5 // pred_region
        %s11844 = ssub.s32 %s20, 2
        // Predicated region
        $region69: #{tpu_custom_call.1} parent=67 // pred_check
          %p11845 = pneg %p180
        $region70: #{tpu_custom_call.1} parent=67 // pred_check_branch
          %11847 = sbr.rel (%p11845) target = $region72
        $region71: #{tpu_custom_call.1} parent=67 // pred_region
          %s11848 = sand.u32 %s165, 1
          %s11849 = scalar_lea.sflag [#allocation6], %s11848
          %s11850 = sand.u32 %s165, 1
          %s11851 = smul.addr %s11850, 256
          %s11852 = scalar_lea.vmem [#allocation12], %s11851
          %11853 = dma.done %s11849, 4096
        $region72: #{tpu_custom_call.1} parent=67 // pred_fallthru
          _
      $region68: #{tpu_custom_call.1} parent=5 // pred_fallthru
        _
    $region6: #{tpu_custom_call.1} parent=1 // loop_footer
      %s24 = sadd.s32 1, %s20
    $region7: #{tpu_custom_call.1} parent=1 // loop_footer_branch
      %19 = sbr.rel target = $region3
    $region8: #{tpu_custom_call.1} parent=1 // loop_exit
      _
    %11854 = vsyncpa [#allocation5], 1
    %s11855 = scalar_lea.sflag [#allocation5], 1
    %11856 = vsyncpa %s11855, 1
    %11857 = vsyncpa [#allocation8], 1
    %11858 = vsyncpa [#allocation11], 1
    %11859 = vsyncpa [#allocation6], 1
    %s11860 = scalar_lea.sflag [#allocation6], 1
    %11861 = vsyncpa %s11860, 1

</llo_original>
